<compile_context>
chip_gen: v7x
topology: tpu7x:2x2x1
jax: 0.10.0
libtpu: 0.0.40
codegen_flags: <defaults>
</compile_context>

<pallas_src>
import functools

import numpy as np
import jax
import jax.numpy as jnp
from jax.experimental import pallas as pl
from jax.experimental.pallas import tpu as pltpu


# ------------------------- constant gather matrices -------------------------

def _gather_matrix(h, w, k, stride, pad):
    """0/1 matrix S of shape (k*k*Ho*Wo, h*w).

    Row (t*Ho*Wo + i*Wo + j), with tap t = kh*k + kw, selects input pixel
    (stride*i + kh - pad, stride*j + kw - pad) and is all-zero when that tap
    falls into the zero padding.  S @ X (X: (h*w, Cin), rows in (row, col)
    order) therefore produces every shifted/strided activation copy needed
    for im2col, entirely on the MXU (no strided slices, no concatenation).
    """
    ho = (h + 2 * pad - k) // stride + 1
    wo = (w + 2 * pad - k) // stride + 1
    s = np.zeros((k * k * ho * wo, h * w), np.float32)
    for kh in range(k):
        for kw in range(k):
            t = kh * k + kw
            for i in range(ho):
                for j in range(wo):
                    r = stride * i + kh - pad
                    c = stride * j + kw - pad
                    if 0 <= r < h and 0 <= c < w:
                        s[t * ho * wo + i * wo + j, r * w + c] = 1.0
    return s, ho, wo


# --------------------------- fused Pallas forward ----------------------------

def encoder1_forward(params, x_nchw, n_res_layers):
    n, cin, hh, ww = x_nchw.shape
    k1 = params["w1"].shape[0]            # 4  (stride-2 convs)
    k3 = params["w3"].shape[0]            # 3  (stride-1 conv / residual conv)
    c1 = params["w1"].shape[-1]           # h_dim // 2
    c2 = params["w2"].shape[-1]           # h_dim
    res_h = params["res_w3"].shape[-1]    # res_h_dim

    # Conv geometry + constant gather matrices (built once at trace time).
    s1, h1o, w1o = _gather_matrix(hh, ww, k1, 2, 1)
    s2, h2o, w2o = _gather_matrix(h1o, w1o, k1, 2, 1)
    s3, h3o, w3o = _gather_matrix(h2o, w2o, k3, 1, 1)   # reused by residual 3x3
    p0, p1, p2 = hh * ww, h1o * w1o, h2o * w2o

    # Activations as (N, H*W, C) with rows in (row, col) order; conv weights
    # as (taps, Cin, Cout).  NOTE: weights are stored (KH, KW, Cin, Cout); real
    # PyTorch weights (Cout, Cin, KH, KW) would need a (2, 3, 1, 0) transpose.
    x_rows = jnp.transpose(x_nchw, (0, 2, 3, 1)).reshape(n, p0, cin)
    w1 = params["w1"].reshape(k1 * k1, cin, c1)
    w2 = params["w2"].reshape(k1 * k1, c1, c2)
    w3 = params["w3"].reshape(k3 * k3, c2, c2)
    wr3 = params["res_w3"].reshape(k3 * k3, c2, res_h)
    wr1 = params["res_w1"].reshape(res_h, c2)
    b1, b2, b3 = params["b1"], params["b2"], params["b3"]

    def kernel(x_ref, s1_ref, s2_ref, s3_ref,
               w1_ref, b1_ref, w2_ref, b2_ref, w3_ref, b3_ref,
               wr3_ref, wr1_ref,
               skip1_ref, skip2_ref, skip3_ref, out_ref):

        def conv(inp, s_ref, w_ref, bias, po, apply_relu):
            taps = s_ref.shape[0] // po
            # In-kernel im2col: one MXU gather with the constant 0/1 matrix,
            # then per-tap weight matmuls accumulated in f32.
            g = jnp.dot(s_ref[...], inp, preferred_element_type=jnp.float32)
            acc = jnp.dot(g[0:po, :], w_ref[0],
                          preferred_element_type=jnp.float32)
            for t in range(1, taps):
                acc = acc + jnp.dot(g[t * po:(t + 1) * po, :], w_ref[t],
                                    preferred_element_type=jnp.float32)
            if bias is not None:
                acc = acc + bias
            if apply_relu:
                acc = jnp.maximum(acc, 0.0)
            return acc

        x = x_ref[0]                                              # (H*W, Cin)
        h1 = conv(x, s1_ref, w1_ref, b1_ref[...], p1, True)       # conv1+ReLU
        skip1_ref[0] = h1
        h2 = conv(h1, s2_ref, w2_ref, b2_ref[...], p2, True)      # conv2+ReLU
        skip2_ref[0] = h2
        h3 = conv(h2, s3_ref, w3_ref, b3_ref[...], p2, True)      # conv3+ReLU
        skip3_ref[0] = h3

        # Residual stack.  The reference repo builds [layer] * n_res_layers,
        # so ONE shared (bias-free) weight pair is applied n times.
        r = h3
        for _ in range(n_res_layers):
            t = jnp.maximum(r, 0.0)
            hmid = conv(t, s3_ref, wr3_ref, None, p2, True)       # 3x3 + ReLU
            r = r + jnp.dot(hmid, wr1_ref[...],
                            preferred_element_type=jnp.float32)   # 1x1 + skip
        out_ref[0] = jnp.maximum(r, 0.0)                          # stack ReLU

    def full(a):
        # Whole-array block, same block for every grid step (fetched once).
        if a.ndim == 2:
            return pl.BlockSpec(a.shape, lambda i: (0, 0))
        return pl.BlockSpec(a.shape, lambda i: (0, 0, 0))

    def per_batch(p, c):
        return pl.BlockSpec((1, p, c), lambda i: (i, 0, 0))

    skip1, skip2, skip3, out = pl.pallas_call(
        kernel,
        grid=(n,),
        in_specs=[per_batch(p0, cin),
                  full(s1), full(s2), full(s3),
                  full(w1), full(b1), full(w2), full(b2), full(w3), full(b3),
                  full(wr3), full(wr1)],
        out_specs=(per_batch(p1, c1), per_batch(p2, c2),
                   per_batch(p2, c2), per_batch(p2, c2)),
        out_shape=(jax.ShapeDtypeStruct((n, p1, c1), jnp.float32),
                   jax.ShapeDtypeStruct((n, p2, c2), jnp.float32),
                   jax.ShapeDtypeStruct((n, p2, c2), jnp.float32),
                   jax.ShapeDtypeStruct((n, p2, c2), jnp.float32)),
        compiler_params=pltpu.CompilerParams(
            dimension_semantics=("parallel",)),
    )(x_rows, s1, s2, s3, w1, b1, w2, b2, w3, b3, wr3, wr1)

    def to_nchw(t, ho, wo):
        return jnp.transpose(t.reshape(n, ho, wo, t.shape[-1]), (0, 3, 1, 2))

    return (to_nchw(out, h3o, w3o),
            [to_nchw(skip1, h1o, w1o), to_nchw(skip2, h2o, w2o),
             to_nchw(skip3, h3o, w3o)])


# ------------------------------- params / ref --------------------------------

def init_encoder_params(key, in_dim, h_dim, res_h_dim):
    ks = jax.random.split(key, 8)
    scale = 0.1
    return {
        "w1": scale * jax.random.normal(ks[0], (4, 4, in_dim, h_dim // 2), jnp.float32),
        "b1": scale * jax.random.normal(ks[1], (1, h_dim // 2), jnp.float32),
        "w2": scale * jax.random.normal(ks[2], (4, 4, h_dim // 2, h_dim), jnp.float32),
        "b2": scale * jax.random.normal(ks[3], (1, h_dim), jnp.float32),
        "w3": scale * jax.random.normal(ks[4], (3, 3, h_dim, h_dim), jnp.float32),
        "b3": scale * jax.random.normal(ks[5], (1, h_dim), jnp.float32),
        # Shared residual-layer weights (ResidualStack reuses one layer n times).
        "res_w3": scale * jax.random.normal(ks[6], (3, 3, h_dim, res_h_dim), jnp.float32),
        "res_w1": scale * jax.random.normal(ks[7], (1, 1, res_h_dim, h_dim), jnp.float32),
    }


def _conv_ref(x_nhwc, w_hwio, b, stride, pad):
    y = jax.lax.conv_general_dilated(
        x_nhwc, w_hwio, (stride, stride), [(pad, pad), (pad, pad)],
        dimension_numbers=("NHWC", "HWIO", "NHWC"),
        precision=jax.lax.Precision.HIGHEST)
    return y if b is None else y + b.reshape(1, 1, 1, -1)


def encoder1_reference(params, x_nchw, n_res_layers):
    x = jnp.transpose(x_nchw, (0, 2, 3, 1))
    s1 = jax.nn.relu(_conv_ref(x, params["w1"], params["b1"], 2, 1))
    s2 = jax.nn.relu(_conv_ref(s1, params["w2"], params["b2"], 2, 1))
    s3 = jax.nn.relu(_conv_ref(s2, params["w3"], params["b3"], 1, 1))
    r = s3
    for _ in range(n_res_layers):
        t = jax.nn.relu(r)
        t = jax.nn.relu(_conv_ref(t, params["res_w3"], None, 1, 1))
        r = r + _conv_ref(t, params["res_w1"], None, 1, 0)
    out = jax.nn.relu(r)
    to_nchw = lambda a: jnp.transpose(a, (0, 3, 1, 2))
    return to_nchw(out), [to_nchw(s1), to_nchw(s2), to_nchw(s3)]


# ----------------------------------- main ------------------------------------

if __name__ == "__main__":
    in_dim, h_dim, n_res_layers, res_h_dim = 4, 32, 2, 16
    batch, spatial = 2, 16

    key = jax.random.PRNGKey(0)
    kx, kp = jax.random.split(key)
    x = jax.random.normal(kx, (batch, in_dim, spatial, spatial), jnp.float32)  # NCHW
    params = init_encoder_params(kp, in_dim, h_dim, res_h_dim)

    fwd = jax.jit(functools.partial(encoder1_forward, n_res_layers=n_res_layers))
    out, skips = fwd(params, x)
    out = jax.block_until_ready(out)
    skips = [jax.block_until_ready(s) for s in skips]

    # Shape / sanity checks.
    assert out.shape == (batch, h_dim, spatial // 4, spatial // 4)
    assert skips[0].shape == (batch, h_dim // 2, spatial // 2, spatial // 2)
    assert skips[1].shape == (batch, h_dim, spatial // 4, spatial // 4)
    assert skips[2].shape == (batch, h_dim, spatial // 4, spatial // 4)
    assert bool(jnp.all(jnp.isfinite(out)))

    # Numerical check against a pure-JAX/XLA reference (loose tolerance to be
    # robust to MXU f32 pass configuration; structural bugs would be O(0.1-1)).
    ref_out, ref_skips = encoder1_reference(params, x, n_res_layers)
    for got, want in [(out, ref_out)] + list(zip(skips, ref_skips)):
        np.testing.assert_allclose(np.asarray(got), np.asarray(want),
                                   rtol=2e-2, atol=2e-2)

    print("KERNEL_OK")
</pallas_src>

<mosaic_0001>
module attributes {stable_mosaic.version = 11 : i64} {
  func.func @kernel(%arg0: i32, %arg1: memref<1x256x4xf32, #tpu.memory_space<vmem>>, %arg2: memref<1024x256xf32, #tpu.memory_space<vmem>>, %arg3: memref<256x64xf32, #tpu.memory_space<vmem>>, %arg4: memref<144x16xf32, #tpu.memory_space<vmem>>, %arg5: memref<16x4x16xf32, #tpu.memory_space<vmem>>, %arg6: memref<1x16xf32, #tpu.memory_space<vmem>>, %arg7: memref<16x16x32xf32, #tpu.memory_space<vmem>>, %arg8: memref<1x32xf32, #tpu.memory_space<vmem>>, %arg9: memref<9x32x32xf32, #tpu.memory_space<vmem>>, %arg10: memref<1x32xf32, #tpu.memory_space<vmem>>, %arg11: memref<9x32x16xf32, #tpu.memory_space<vmem>>, %arg12: memref<16x32xf32, #tpu.memory_space<vmem>>, %arg13: memref<1x64x16xf32, #tpu.memory_space<vmem>>, %arg14: memref<1x16x32xf32, #tpu.memory_space<vmem>>, %arg15: memref<1x16x32xf32, #tpu.memory_space<vmem>>, %arg16: memref<1x16x32xf32, #tpu.memory_space<vmem>>) attributes {dimension_semantics = [#tpu.dimension_semantics<parallel>], iteration_bounds = array<i64: 2>, scalar_prefetch = 0 : i64, scratch_operands = 0 : i64, tpu.core_type = #tpu.core_type<tc>, window_params = [{transform_indices = @transform_0, window_bounds = array<i64: 1, 256, 4>}, {pipeline_mode = #tpu.pipeline_mode<synchronous>, transform_indices = @transform_1, window_bounds = array<i64: 1024, 256>}, {pipeline_mode = #tpu.pipeline_mode<synchronous>, transform_indices = @transform_2, window_bounds = array<i64: 256, 64>}, {pipeline_mode = #tpu.pipeline_mode<synchronous>, transform_indices = @transform_3, window_bounds = array<i64: 144, 16>}, {pipeline_mode = #tpu.pipeline_mode<synchronous>, transform_indices = @transform_4, window_bounds = array<i64: 16, 4, 16>}, {pipeline_mode = #tpu.pipeline_mode<synchronous>, transform_indices = @transform_5, window_bounds = array<i64: 1, 16>}, {pipeline_mode = #tpu.pipeline_mode<synchronous>, transform_indices = @transform_6, window_bounds = array<i64: 16, 16, 32>}, {pipeline_mode = #tpu.pipeline_mode<synchronous>, transform_indices = @transform_7, window_bounds = array<i64: 1, 32>}, {pipeline_mode = #tpu.pipeline_mode<synchronous>, transform_indices = @transform_8, window_bounds = array<i64: 9, 32, 32>}, {pipeline_mode = #tpu.pipeline_mode<synchronous>, transform_indices = @transform_9, window_bounds = array<i64: 1, 32>}, {pipeline_mode = #tpu.pipeline_mode<synchronous>, transform_indices = @transform_10, window_bounds = array<i64: 9, 32, 16>}, {pipeline_mode = #tpu.pipeline_mode<synchronous>, transform_indices = @transform_11, window_bounds = array<i64: 16, 32>}, {transform_indices = @transform_12, window_bounds = array<i64: 1, 64, 16>}, {transform_indices = @transform_13, window_bounds = array<i64: 1, 16, 32>}, {transform_indices = @transform_14, window_bounds = array<i64: 1, 16, 32>}, {transform_indices = @transform_15, window_bounds = array<i64: 1, 16, 32>}]} {
    %c0 = arith.constant 0 : index
    %c0_0 = arith.constant 0 : index
    %c0_1 = arith.constant 0 : index
    %0 = vector.load %arg1[%c0, %c0_0, %c0_1] : memref<1x256x4xf32, #tpu.memory_space<vmem>>, vector<1x256x4xf32>
    %1 = vector.shape_cast %0 : vector<1x256x4xf32> to vector<256x4xf32>
    %c0_2 = arith.constant 0 : index
    %c0_3 = arith.constant 0 : index
    %2 = vector.load %arg6[%c0_2, %c0_3] : memref<1x16xf32, #tpu.memory_space<vmem>>, vector<1x16xf32>
    %c0_4 = arith.constant 0 : index
    %c0_5 = arith.constant 0 : index
    %3 = vector.load %arg2[%c0_4, %c0_5] : memref<1024x256xf32, #tpu.memory_space<vmem>>, vector<1024x256xf32>
    %cst = arith.constant dense<0.000000e+00> : vector<1024x4xf32>
    %4 = tpu.matmul %3, %1, %cst {dimension_numbers = #tpu.dot_dimension_numbers<[1], [0], [0], [1], [0, 0, 1, 1], [], []>} : vector<1024x256xf32>, vector<256x4xf32>, vector<1024x4xf32> -> vector<1024x4xf32>
    %5 = vector.extract_strided_slice %4 {offsets = [0, 0], sizes = [64, 4], strides = [1, 1]} : vector<1024x4xf32> to vector<64x4xf32>
    %c0_6 = arith.constant 0 : index
    %c0_7 = arith.constant 0 : index
    %c0_8 = arith.constant 0 : index
    %6 = vector.load %arg5[%c0_6, %c0_7, %c0_8] : memref<16x4x16xf32, #tpu.memory_space<vmem>>, vector<1x4x16xf32>
    %7 = vector.shape_cast %6 : vector<1x4x16xf32> to vector<4x16xf32>
    %cst_9 = arith.constant dense<0.000000e+00> : vector<64x16xf32>
    %8 = tpu.matmul %5, %7, %cst_9 {dimension_numbers = #tpu.dot_dimension_numbers<[1], [0], [0], [1], [0, 0, 1, 1], [], []>} : vector<64x4xf32>, vector<4x16xf32>, vector<64x16xf32> -> vector<64x16xf32>
    %9 = vector.extract_strided_slice %4 {offsets = [64, 0], sizes = [64, 4], strides = [1, 1]} : vector<1024x4xf32> to vector<64x4xf32>
    %c1 = arith.constant 1 : index
    %c0_10 = arith.constant 0 : index
    %c0_11 = arith.constant 0 : index
    %10 = vector.load %arg5[%c1, %c0_10, %c0_11] : memref<16x4x16xf32, #tpu.memory_space<vmem>>, vector<1x4x16xf32>
    %11 = vector.shape_cast %10 : vector<1x4x16xf32> to vector<4x16xf32>
    %cst_12 = arith.constant dense<0.000000e+00> : vector<64x16xf32>
    %12 = tpu.matmul %9, %11, %cst_12 {dimension_numbers = #tpu.dot_dimension_numbers<[1], [0], [0], [1], [0, 0, 1, 1], [], []>} : vector<64x4xf32>, vector<4x16xf32>, vector<64x16xf32> -> vector<64x16xf32>
    %13 = arith.addf %8, %12 : vector<64x16xf32>
    %14 = vector.extract_strided_slice %4 {offsets = [128, 0], sizes = [64, 4], strides = [1, 1]} : vector<1024x4xf32> to vector<64x4xf32>
    %c2 = arith.constant 2 : index
    %c0_13 = arith.constant 0 : index
    %c0_14 = arith.constant 0 : index
    %15 = vector.load %arg5[%c2, %c0_13, %c0_14] : memref<16x4x16xf32, #tpu.memory_space<vmem>>, vector<1x4x16xf32>
    %16 = vector.shape_cast %15 : vector<1x4x16xf32> to vector<4x16xf32>
    %cst_15 = arith.constant dense<0.000000e+00> : vector<64x16xf32>
    %17 = tpu.matmul %14, %16, %cst_15 {dimension_numbers = #tpu.dot_dimension_numbers<[1], [0], [0], [1], [0, 0, 1, 1], [], []>} : vector<64x4xf32>, vector<4x16xf32>, vector<64x16xf32> -> vector<64x16xf32>
    %18 = arith.addf %13, %17 : vector<64x16xf32>
    %19 = vector.extract_strided_slice %4 {offsets = [192, 0], sizes = [64, 4], strides = [1, 1]} : vector<1024x4xf32> to vector<64x4xf32>
    %c3 = arith.constant 3 : index
    %c0_16 = arith.constant 0 : index
    %c0_17 = arith.constant 0 : index
    %20 = vector.load %arg5[%c3, %c0_16, %c0_17] : memref<16x4x16xf32, #tpu.memory_space<vmem>>, vector<1x4x16xf32>
    %21 = vector.shape_cast %20 : vector<1x4x16xf32> to vector<4x16xf32>
    %cst_18 = arith.constant dense<0.000000e+00> : vector<64x16xf32>
    %22 = tpu.matmul %19, %21, %cst_18 {dimension_numbers = #tpu.dot_dimension_numbers<[1], [0], [0], [1], [0, 0, 1, 1], [], []>} : vector<64x4xf32>, vector<4x16xf32>, vector<64x16xf32> -> vector<64x16xf32>
    %23 = arith.addf %18, %22 : vector<64x16xf32>
    %24 = vector.extract_strided_slice %4 {offsets = [256, 0], sizes = [64, 4], strides = [1, 1]} : vector<1024x4xf32> to vector<64x4xf32>
    %c4 = arith.constant 4 : index
    %c0_19 = arith.constant 0 : index
    %c0_20 = arith.constant 0 : index
    %25 = vector.load %arg5[%c4, %c0_19, %c0_20] : memref<16x4x16xf32, #tpu.memory_space<vmem>>, vector<1x4x16xf32>
    %26 = vector.shape_cast %25 : vector<1x4x16xf32> to vector<4x16xf32>
    %cst_21 = arith.constant dense<0.000000e+00> : vector<64x16xf32>
    %27 = tpu.matmul %24, %26, %cst_21 {dimension_numbers = #tpu.dot_dimension_numbers<[1], [0], [0], [1], [0, 0, 1, 1], [], []>} : vector<64x4xf32>, vector<4x16xf32>, vector<64x16xf32> -> vector<64x16xf32>
    %28 = arith.addf %23, %27 : vector<64x16xf32>
    %29 = vector.extract_strided_slice %4 {offsets = [320, 0], sizes = [64, 4], strides = [1, 1]} : vector<1024x4xf32> to vector<64x4xf32>
    %c5 = arith.constant 5 : index
    %c0_22 = arith.constant 0 : index
    %c0_23 = arith.constant 0 : index
    %30 = vector.load %arg5[%c5, %c0_22, %c0_23] : memref<16x4x16xf32, #tpu.memory_space<vmem>>, vector<1x4x16xf32>
    %31 = vector.shape_cast %30 : vector<1x4x16xf32> to vector<4x16xf32>
    %cst_24 = arith.constant dense<0.000000e+00> : vector<64x16xf32>
    %32 = tpu.matmul %29, %31, %cst_24 {dimension_numbers = #tpu.dot_dimension_numbers<[1], [0], [0], [1], [0, 0, 1, 1], [], []>} : vector<64x4xf32>, vector<4x16xf32>, vector<64x16xf32> -> vector<64x16xf32>
    %33 = arith.addf %28, %32 : vector<64x16xf32>
    %34 = vector.extract_strided_slice %4 {offsets = [384, 0], sizes = [64, 4], strides = [1, 1]} : vector<1024x4xf32> to vector<64x4xf32>
    %c6 = arith.constant 6 : index
    %c0_25 = arith.constant 0 : index
    %c0_26 = arith.constant 0 : index
    %35 = vector.load %arg5[%c6, %c0_25, %c0_26] : memref<16x4x16xf32, #tpu.memory_space<vmem>>, vector<1x4x16xf32>
    %36 = vector.shape_cast %35 : vector<1x4x16xf32> to vector<4x16xf32>
    %cst_27 = arith.constant dense<0.000000e+00> : vector<64x16xf32>
    %37 = tpu.matmul %34, %36, %cst_27 {dimension_numbers = #tpu.dot_dimension_numbers<[1], [0], [0], [1], [0, 0, 1, 1], [], []>} : vector<64x4xf32>, vector<4x16xf32>, vector<64x16xf32> -> vector<64x16xf32>
    %38 = arith.addf %33, %37 : vector<64x16xf32>
    %39 = vector.extract_strided_slice %4 {offsets = [448, 0], sizes = [64, 4], strides = [1, 1]} : vector<1024x4xf32> to vector<64x4xf32>
    %c7 = arith.constant 7 : index
    %c0_28 = arith.constant 0 : index
    %c0_29 = arith.constant 0 : index
    %40 = vector.load %arg5[%c7, %c0_28, %c0_29] : memref<16x4x16xf32, #tpu.memory_space<vmem>>, vector<1x4x16xf32>
    %41 = vector.shape_cast %40 : vector<1x4x16xf32> to vector<4x16xf32>
    %cst_30 = arith.constant dense<0.000000e+00> : vector<64x16xf32>
    %42 = tpu.matmul %39, %41, %cst_30 {dimension_numbers = #tpu.dot_dimension_numbers<[1], [0], [0], [1], [0, 0, 1, 1], [], []>} : vector<64x4xf32>, vector<4x16xf32>, vector<64x16xf32> -> vector<64x16xf32>
    %43 = arith.addf %38, %42 : vector<64x16xf32>
    %44 = vector.extract_strided_slice %4 {offsets = [512, 0], sizes = [64, 4], strides = [1, 1]} : vector<1024x4xf32> to vector<64x4xf32>
    %c8 = arith.constant 8 : index
    %c0_31 = arith.constant 0 : index
    %c0_32 = arith.constant 0 : index
    %45 = vector.load %arg5[%c8, %c0_31, %c0_32] : memref<16x4x16xf32, #tpu.memory_space<vmem>>, vector<1x4x16xf32>
    %46 = vector.shape_cast %45 : vector<1x4x16xf32> to vector<4x16xf32>
    %cst_33 = arith.constant dense<0.000000e+00> : vector<64x16xf32>
    %47 = tpu.matmul %44, %46, %cst_33 {dimension_numbers = #tpu.dot_dimension_numbers<[1], [0], [0], [1], [0, 0, 1, 1], [], []>} : vector<64x4xf32>, vector<4x16xf32>, vector<64x16xf32> -> vector<64x16xf32>
    %48 = arith.addf %43, %47 : vector<64x16xf32>
    %49 = vector.extract_strided_slice %4 {offsets = [576, 0], sizes = [64, 4], strides = [1, 1]} : vector<1024x4xf32> to vector<64x4xf32>
    %c9 = arith.constant 9 : index
    %c0_34 = arith.constant 0 : index
    %c0_35 = arith.constant 0 : index
    %50 = vector.load %arg5[%c9, %c0_34, %c0_35] : memref<16x4x16xf32, #tpu.memory_space<vmem>>, vector<1x4x16xf32>
    %51 = vector.shape_cast %50 : vector<1x4x16xf32> to vector<4x16xf32>
    %cst_36 = arith.constant dense<0.000000e+00> : vector<64x16xf32>
    %52 = tpu.matmul %49, %51, %cst_36 {dimension_numbers = #tpu.dot_dimension_numbers<[1], [0], [0], [1], [0, 0, 1, 1], [], []>} : vector<64x4xf32>, vector<4x16xf32>, vector<64x16xf32> -> vector<64x16xf32>
    %53 = arith.addf %48, %52 : vector<64x16xf32>
    %54 = vector.extract_strided_slice %4 {offsets = [640, 0], sizes = [64, 4], strides = [1, 1]} : vector<1024x4xf32> to vector<64x4xf32>
    %c10 = arith.constant 10 : index
    %c0_37 = arith.constant 0 : index
    %c0_38 = arith.constant 0 : index
    %55 = vector.load %arg5[%c10, %c0_37, %c0_38] : memref<16x4x16xf32, #tpu.memory_space<vmem>>, vector<1x4x16xf32>
    %56 = vector.shape_cast %55 : vector<1x4x16xf32> to vector<4x16xf32>
    %cst_39 = arith.constant dense<0.000000e+00> : vector<64x16xf32>
    %57 = tpu.matmul %54, %56, %cst_39 {dimension_numbers = #tpu.dot_dimension_numbers<[1], [0], [0], [1], [0, 0, 1, 1], [], []>} : vector<64x4xf32>, vector<4x16xf32>, vector<64x16xf32> -> vector<64x16xf32>
    %58 = arith.addf %53, %57 : vector<64x16xf32>
    %59 = vector.extract_strided_slice %4 {offsets = [704, 0], sizes = [64, 4], strides = [1, 1]} : vector<1024x4xf32> to vector<64x4xf32>
    %c11 = arith.constant 11 : index
    %c0_40 = arith.constant 0 : index
    %c0_41 = arith.constant 0 : index
    %60 = vector.load %arg5[%c11, %c0_40, %c0_41] : memref<16x4x16xf32, #tpu.memory_space<vmem>>, vector<1x4x16xf32>
    %61 = vector.shape_cast %60 : vector<1x4x16xf32> to vector<4x16xf32>
    %cst_42 = arith.constant dense<0.000000e+00> : vector<64x16xf32>
    %62 = tpu.matmul %59, %61, %cst_42 {dimension_numbers = #tpu.dot_dimension_numbers<[1], [0], [0], [1], [0, 0, 1, 1], [], []>} : vector<64x4xf32>, vector<4x16xf32>, vector<64x16xf32> -> vector<64x16xf32>
    %63 = arith.addf %58, %62 : vector<64x16xf32>
    %64 = vector.extract_strided_slice %4 {offsets = [768, 0], sizes = [64, 4], strides = [1, 1]} : vector<1024x4xf32> to vector<64x4xf32>
    %c12 = arith.constant 12 : index
    %c0_43 = arith.constant 0 : index
    %c0_44 = arith.constant 0 : index
    %65 = vector.load %arg5[%c12, %c0_43, %c0_44] : memref<16x4x16xf32, #tpu.memory_space<vmem>>, vector<1x4x16xf32>
    %66 = vector.shape_cast %65 : vector<1x4x16xf32> to vector<4x16xf32>
    %cst_45 = arith.constant dense<0.000000e+00> : vector<64x16xf32>
    %67 = tpu.matmul %64, %66, %cst_45 {dimension_numbers = #tpu.dot_dimension_numbers<[1], [0], [0], [1], [0, 0, 1, 1], [], []>} : vector<64x4xf32>, vector<4x16xf32>, vector<64x16xf32> -> vector<64x16xf32>
    %68 = arith.addf %63, %67 : vector<64x16xf32>
    %69 = vector.extract_strided_slice %4 {offsets = [832, 0], sizes = [64, 4], strides = [1, 1]} : vector<1024x4xf32> to vector<64x4xf32>
    %c13 = arith.constant 13 : index
    %c0_46 = arith.constant 0 : index
    %c0_47 = arith.constant 0 : index
    %70 = vector.load %arg5[%c13, %c0_46, %c0_47] : memref<16x4x16xf32, #tpu.memory_space<vmem>>, vector<1x4x16xf32>
    %71 = vector.shape_cast %70 : vector<1x4x16xf32> to vector<4x16xf32>
    %cst_48 = arith.constant dense<0.000000e+00> : vector<64x16xf32>
    %72 = tpu.matmul %69, %71, %cst_48 {dimension_numbers = #tpu.dot_dimension_numbers<[1], [0], [0], [1], [0, 0, 1, 1], [], []>} : vector<64x4xf32>, vector<4x16xf32>, vector<64x16xf32> -> vector<64x16xf32>
    %73 = arith.addf %68, %72 : vector<64x16xf32>
    %74 = vector.extract_strided_slice %4 {offsets = [896, 0], sizes = [64, 4], strides = [1, 1]} : vector<1024x4xf32> to vector<64x4xf32>
    %c14 = arith.constant 14 : index
    %c0_49 = arith.constant 0 : index
    %c0_50 = arith.constant 0 : index
    %75 = vector.load %arg5[%c14, %c0_49, %c0_50] : memref<16x4x16xf32, #tpu.memory_space<vmem>>, vector<1x4x16xf32>
    %76 = vector.shape_cast %75 : vector<1x4x16xf32> to vector<4x16xf32>
    %cst_51 = arith.constant dense<0.000000e+00> : vector<64x16xf32>
    %77 = tpu.matmul %74, %76, %cst_51 {dimension_numbers = #tpu.dot_dimension_numbers<[1], [0], [0], [1], [0, 0, 1, 1], [], []>} : vector<64x4xf32>, vector<4x16xf32>, vector<64x16xf32> -> vector<64x16xf32>
    %78 = arith.addf %73, %77 : vector<64x16xf32>
    %79 = vector.extract_strided_slice %4 {offsets = [960, 0], sizes = [64, 4], strides = [1, 1]} : vector<1024x4xf32> to vector<64x4xf32>
    %c15 = arith.constant 15 : index
    %c0_52 = arith.constant 0 : index
    %c0_53 = arith.constant 0 : index
    %80 = vector.load %arg5[%c15, %c0_52, %c0_53] : memref<16x4x16xf32, #tpu.memory_space<vmem>>, vector<1x4x16xf32>
    %81 = vector.shape_cast %80 : vector<1x4x16xf32> to vector<4x16xf32>
    %cst_54 = arith.constant dense<0.000000e+00> : vector<64x16xf32>
    %82 = tpu.matmul %79, %81, %cst_54 {dimension_numbers = #tpu.dot_dimension_numbers<[1], [0], [0], [1], [0, 0, 1, 1], [], []>} : vector<64x4xf32>, vector<4x16xf32>, vector<64x16xf32> -> vector<64x16xf32>
    %83 = arith.addf %78, %82 : vector<64x16xf32>
    %84 = vector.broadcast %2 : vector<1x16xf32> to vector<64x16xf32>
    %85 = arith.addf %83, %84 : vector<64x16xf32>
    %cst_55 = arith.constant 0.000000e+00 : f32
    %86 = vector.broadcast %cst_55 : f32 to vector<64x16xf32>
    %87 = arith.maximumf %85, %86 : vector<64x16xf32>
    %c0_56 = arith.constant 0 : index
    %c0_57 = arith.constant 0 : index
    %c0_58 = arith.constant 0 : index
    %88 = vector.load %arg13[%c0_56, %c0_57, %c0_58] : memref<1x64x16xf32, #tpu.memory_space<vmem>>, vector<1x64x16xf32>
    %89 = vector.shape_cast %88 : vector<1x64x16xf32> to vector<64x16xf32>
    %90 = vector.shape_cast %87 : vector<64x16xf32> to vector<1x64x16xf32>
    tpu.vector_store %arg13[%c0_56, %c0_57, %c0_58], %90 {strides = array<i32>} : memref<1x64x16xf32, #tpu.memory_space<vmem>>, vector<1x64x16xf32>,
    %c0_59 = arith.constant 0 : index
    %c0_60 = arith.constant 0 : index
    %91 = vector.load %arg8[%c0_59, %c0_60] : memref<1x32xf32, #tpu.memory_space<vmem>>, vector<1x32xf32>
    %c0_61 = arith.constant 0 : index
    %c0_62 = arith.constant 0 : index
    %92 = vector.load %arg3[%c0_61, %c0_62] : memref<256x64xf32, #tpu.memory_space<vmem>>, vector<256x64xf32>
    %cst_63 = arith.constant dense<0.000000e+00> : vector<256x16xf32>
    %93 = tpu.matmul %92, %87, %cst_63 {dimension_numbers = #tpu.dot_dimension_numbers<[1], [0], [0], [1], [0, 0, 1, 1], [], []>} : vector<256x64xf32>, vector<64x16xf32>, vector<256x16xf32> -> vector<256x16xf32>
    %94 = vector.extract_strided_slice %93 {offsets = [0, 0], sizes = [16, 16], strides = [1, 1]} : vector<256x16xf32> to vector<16x16xf32>
    %c0_64 = arith.constant 0 : index
    %c0_65 = arith.constant 0 : index
    %c0_66 = arith.constant 0 : index
    %95 = vector.load %arg7[%c0_64, %c0_65, %c0_66] : memref<16x16x32xf32, #tpu.memory_space<vmem>>, vector<1x16x32xf32>
    %96 = vector.shape_cast %95 : vector<1x16x32xf32> to vector<16x32xf32>
    %cst_67 = arith.constant dense<0.000000e+00> : vector<16x32xf32>
    %97 = tpu.matmul %94, %96, %cst_67 {dimension_numbers = #tpu.dot_dimension_numbers<[1], [0], [0], [1], [0, 0, 1, 1], [], []>} : vector<16x16xf32>, vector<16x32xf32>, vector<16x32xf32> -> vector<16x32xf32>
    %98 = vector.extract_strided_slice %93 {offsets = [16, 0], sizes = [16, 16], strides = [1, 1]} : vector<256x16xf32> to vector<16x16xf32>
    %c1_68 = arith.constant 1 : index
    %c0_69 = arith.constant 0 : index
    %c0_70 = arith.constant 0 : index
    %99 = vector.load %arg7[%c1_68, %c0_69, %c0_70] : memref<16x16x32xf32, #tpu.memory_space<vmem>>, vector<1x16x32xf32>
    %100 = vector.shape_cast %99 : vector<1x16x32xf32> to vector<16x32xf32>
    %cst_71 = arith.constant dense<0.000000e+00> : vector<16x32xf32>
    %101 = tpu.matmul %98, %100, %cst_71 {dimension_numbers = #tpu.dot_dimension_numbers<[1], [0], [0], [1], [0, 0, 1, 1], [], []>} : vector<16x16xf32>, vector<16x32xf32>, vector<16x32xf32> -> vector<16x32xf32>
    %102 = arith.addf %97, %101 : vector<16x32xf32>
    %103 = vector.extract_strided_slice %93 {offsets = [32, 0], sizes = [16, 16], strides = [1, 1]} : vector<256x16xf32> to vector<16x16xf32>
    %c2_72 = arith.constant 2 : index
    %c0_73 = arith.constant 0 : index
    %c0_74 = arith.constant 0 : index
    %104 = vector.load %arg7[%c2_72, %c0_73, %c0_74] : memref<16x16x32xf32, #tpu.memory_space<vmem>>, vector<1x16x32xf32>
    %105 = vector.shape_cast %104 : vector<1x16x32xf32> to vector<16x32xf32>
    %cst_75 = arith.constant dense<0.000000e+00> : vector<16x32xf32>
    %106 = tpu.matmul %103, %105, %cst_75 {dimension_numbers = #tpu.dot_dimension_numbers<[1], [0], [0], [1], [0, 0, 1, 1], [], []>} : vector<16x16xf32>, vector<16x32xf32>, vector<16x32xf32> -> vector<16x32xf32>
    %107 = arith.addf %102, %106 : vector<16x32xf32>
    %108 = vector.extract_strided_slice %93 {offsets = [48, 0], sizes = [16, 16], strides = [1, 1]} : vector<256x16xf32> to vector<16x16xf32>
    %c3_76 = arith.constant 3 : index
    %c0_77 = arith.constant 0 : index
    %c0_78 = arith.constant 0 : index
    %109 = vector.load %arg7[%c3_76, %c0_77, %c0_78] : memref<16x16x32xf32, #tpu.memory_space<vmem>>, vector<1x16x32xf32>
    %110 = vector.shape_cast %109 : vector<1x16x32xf32> to vector<16x32xf32>
    %cst_79 = arith.constant dense<0.000000e+00> : vector<16x32xf32>
    %111 = tpu.matmul %108, %110, %cst_79 {dimension_numbers = #tpu.dot_dimension_numbers<[1], [0], [0], [1], [0, 0, 1, 1], [], []>} : vector<16x16xf32>, vector<16x32xf32>, vector<16x32xf32> -> vector<16x32xf32>
    %112 = arith.addf %107, %111 : vector<16x32xf32>
    %113 = vector.extract_strided_slice %93 {offsets = [64, 0], sizes = [16, 16], strides = [1, 1]} : vector<256x16xf32> to vector<16x16xf32>
    %c4_80 = arith.constant 4 : index
    %c0_81 = arith.constant 0 : index
    %c0_82 = arith.constant 0 : index
    %114 = vector.load %arg7[%c4_80, %c0_81, %c0_82] : memref<16x16x32xf32, #tpu.memory_space<vmem>>, vector<1x16x32xf32>
    %115 = vector.shape_cast %114 : vector<1x16x32xf32> to vector<16x32xf32>
    %cst_83 = arith.constant dense<0.000000e+00> : vector<16x32xf32>
    %116 = tpu.matmul %113, %115, %cst_83 {dimension_numbers = #tpu.dot_dimension_numbers<[1], [0], [0], [1], [0, 0, 1, 1], [], []>} : vector<16x16xf32>, vector<16x32xf32>, vector<16x32xf32> -> vector<16x32xf32>
    %117 = arith.addf %112, %116 : vector<16x32xf32>
    %118 = vector.extract_strided_slice %93 {offsets = [80, 0], sizes = [16, 16], strides = [1, 1]} : vector<256x16xf32> to vector<16x16xf32>
    %c5_84 = arith.constant 5 : index
    %c0_85 = arith.constant 0 : index
    %c0_86 = arith.constant 0 : index
    %119 = vector.load %arg7[%c5_84, %c0_85, %c0_86] : memref<16x16x32xf32, #tpu.memory_space<vmem>>, vector<1x16x32xf32>
    %120 = vector.shape_cast %119 : vector<1x16x32xf32> to vector<16x32xf32>
    %cst_87 = arith.constant dense<0.000000e+00> : vector<16x32xf32>
    %121 = tpu.matmul %118, %120, %cst_87 {dimension_numbers = #tpu.dot_dimension_numbers<[1], [0], [0], [1], [0, 0, 1, 1], [], []>} : vector<16x16xf32>, vector<16x32xf32>, vector<16x32xf32> -> vector<16x32xf32>
    %122 = arith.addf %117, %121 : vector<16x32xf32>
    %123 = vector.extract_strided_slice %93 {offsets = [96, 0], sizes = [16, 16], strides = [1, 1]} : vector<256x16xf32> to vector<16x16xf32>
    %c6_88 = arith.constant 6 : index
    %c0_89 = arith.constant 0 : index
    %c0_90 = arith.constant 0 : index
    %124 = vector.load %arg7[%c6_88, %c0_89, %c0_90] : memref<16x16x32xf32, #tpu.memory_space<vmem>>, vector<1x16x32xf32>
    %125 = vector.shape_cast %124 : vector<1x16x32xf32> to vector<16x32xf32>
    %cst_91 = arith.constant dense<0.000000e+00> : vector<16x32xf32>
    %126 = tpu.matmul %123, %125, %cst_91 {dimension_numbers = #tpu.dot_dimension_numbers<[1], [0], [0], [1], [0, 0, 1, 1], [], []>} : vector<16x16xf32>, vector<16x32xf32>, vector<16x32xf32> -> vector<16x32xf32>
    %127 = arith.addf %122, %126 : vector<16x32xf32>
    %128 = vector.extract_strided_slice %93 {offsets = [112, 0], sizes = [16, 16], strides = [1, 1]} : vector<256x16xf32> to vector<16x16xf32>
    %c7_92 = arith.constant 7 : index
    %c0_93 = arith.constant 0 : index
    %c0_94 = arith.constant 0 : index
    %129 = vector.load %arg7[%c7_92, %c0_93, %c0_94] : memref<16x16x32xf32, #tpu.memory_space<vmem>>, vector<1x16x32xf32>
    %130 = vector.shape_cast %129 : vector<1x16x32xf32> to vector<16x32xf32>
    %cst_95 = arith.constant dense<0.000000e+00> : vector<16x32xf32>
    %131 = tpu.matmul %128, %130, %cst_95 {dimension_numbers = #tpu.dot_dimension_numbers<[1], [0], [0], [1], [0, 0, 1, 1], [], []>} : vector<16x16xf32>, vector<16x32xf32>, vector<16x32xf32> -> vector<16x32xf32>
    %132 = arith.addf %127, %131 : vector<16x32xf32>
    %133 = vector.extract_strided_slice %93 {offsets = [128, 0], sizes = [16, 16], strides = [1, 1]} : vector<256x16xf32> to vector<16x16xf32>
    %c8_96 = arith.constant 8 : index
    %c0_97 = arith.constant 0 : index
    %c0_98 = arith.constant 0 : index
    %134 = vector.load %arg7[%c8_96, %c0_97, %c0_98] : memref<16x16x32xf32, #tpu.memory_space<vmem>>, vector<1x16x32xf32>
    %135 = vector.shape_cast %134 : vector<1x16x32xf32> to vector<16x32xf32>
    %cst_99 = arith.constant dense<0.000000e+00> : vector<16x32xf32>
    %136 = tpu.matmul %133, %135, %cst_99 {dimension_numbers = #tpu.dot_dimension_numbers<[1], [0], [0], [1], [0, 0, 1, 1], [], []>} : vector<16x16xf32>, vector<16x32xf32>, vector<16x32xf32> -> vector<16x32xf32>
    %137 = arith.addf %132, %136 : vector<16x32xf32>
    %138 = vector.extract_strided_slice %93 {offsets = [144, 0], sizes = [16, 16], strides = [1, 1]} : vector<256x16xf32> to vector<16x16xf32>
    %c9_100 = arith.constant 9 : index
    %c0_101 = arith.constant 0 : index
    %c0_102 = arith.constant 0 : index
    %139 = vector.load %arg7[%c9_100, %c0_101, %c0_102] : memref<16x16x32xf32, #tpu.memory_space<vmem>>, vector<1x16x32xf32>
    %140 = vector.shape_cast %139 : vector<1x16x32xf32> to vector<16x32xf32>
    %cst_103 = arith.constant dense<0.000000e+00> : vector<16x32xf32>
    %141 = tpu.matmul %138, %140, %cst_103 {dimension_numbers = #tpu.dot_dimension_numbers<[1], [0], [0], [1], [0, 0, 1, 1], [], []>} : vector<16x16xf32>, vector<16x32xf32>, vector<16x32xf32> -> vector<16x32xf32>
    %142 = arith.addf %137, %141 : vector<16x32xf32>
    %143 = vector.extract_strided_slice %93 {offsets = [160, 0], sizes = [16, 16], strides = [1, 1]} : vector<256x16xf32> to vector<16x16xf32>
    %c10_104 = arith.constant 10 : index
    %c0_105 = arith.constant 0 : index
    %c0_106 = arith.constant 0 : index
    %144 = vector.load %arg7[%c10_104, %c0_105, %c0_106] : memref<16x16x32xf32, #tpu.memory_space<vmem>>, vector<1x16x32xf32>
    %145 = vector.shape_cast %144 : vector<1x16x32xf32> to vector<16x32xf32>
    %cst_107 = arith.constant dense<0.000000e+00> : vector<16x32xf32>
    %146 = tpu.matmul %143, %145, %cst_107 {dimension_numbers = #tpu.dot_dimension_numbers<[1], [0], [0], [1], [0, 0, 1, 1], [], []>} : vector<16x16xf32>, vector<16x32xf32>, vector<16x32xf32> -> vector<16x32xf32>
    %147 = arith.addf %142, %146 : vector<16x32xf32>
    %148 = vector.extract_strided_slice %93 {offsets = [176, 0], sizes = [16, 16], strides = [1, 1]} : vector<256x16xf32> to vector<16x16xf32>
    %c11_108 = arith.constant 11 : index
    %c0_109 = arith.constant 0 : index
    %c0_110 = arith.constant 0 : index
    %149 = vector.load %arg7[%c11_108, %c0_109, %c0_110] : memref<16x16x32xf32, #tpu.memory_space<vmem>>, vector<1x16x32xf32>
    %150 = vector.shape_cast %149 : vector<1x16x32xf32> to vector<16x32xf32>
    %cst_111 = arith.constant dense<0.000000e+00> : vector<16x32xf32>
    %151 = tpu.matmul %148, %150, %cst_111 {dimension_numbers = #tpu.dot_dimension_numbers<[1], [0], [0], [1], [0, 0, 1, 1], [], []>} : vector<16x16xf32>, vector<16x32xf32>, vector<16x32xf32> -> vector<16x32xf32>
    %152 = arith.addf %147, %151 : vector<16x32xf32>
    %153 = vector.extract_strided_slice %93 {offsets = [192, 0], sizes = [16, 16], strides = [1, 1]} : vector<256x16xf32> to vector<16x16xf32>
    %c12_112 = arith.constant 12 : index
    %c0_113 = arith.constant 0 : index
    %c0_114 = arith.constant 0 : index
    %154 = vector.load %arg7[%c12_112, %c0_113, %c0_114] : memref<16x16x32xf32, #tpu.memory_space<vmem>>, vector<1x16x32xf32>
    %155 = vector.shape_cast %154 : vector<1x16x32xf32> to vector<16x32xf32>
    %cst_115 = arith.constant dense<0.000000e+00> : vector<16x32xf32>
    %156 = tpu.matmul %153, %155, %cst_115 {dimension_numbers = #tpu.dot_dimension_numbers<[1], [0], [0], [1], [0, 0, 1, 1], [], []>} : vector<16x16xf32>, vector<16x32xf32>, vector<16x32xf32> -> vector<16x32xf32>
    %157 = arith.addf %152, %156 : vector<16x32xf32>
    %158 = vector.extract_strided_slice %93 {offsets = [208, 0], sizes = [16, 16], strides = [1, 1]} : vector<256x16xf32> to vector<16x16xf32>
    %c13_116 = arith.constant 13 : index
    %c0_117 = arith.constant 0 : index
    %c0_118 = arith.constant 0 : index
    %159 = vector.load %arg7[%c13_116, %c0_117, %c0_118] : memref<16x16x32xf32, #tpu.memory_space<vmem>>, vector<1x16x32xf32>
    %160 = vector.shape_cast %159 : vector<1x16x32xf32> to vector<16x32xf32>
    %cst_119 = arith.constant dense<0.000000e+00> : vector<16x32xf32>
    %161 = tpu.matmul %158, %160, %cst_119 {dimension_numbers = #tpu.dot_dimension_numbers<[1], [0], [0], [1], [0, 0, 1, 1], [], []>} : vector<16x16xf32>, vector<16x32xf32>, vector<16x32xf32> -> vector<16x32xf32>
    %162 = arith.addf %157, %161 : vector<16x32xf32>
    %163 = vector.extract_strided_slice %93 {offsets = [224, 0], sizes = [16, 16], strides = [1, 1]} : vector<256x16xf32> to vector<16x16xf32>
    %c14_120 = arith.constant 14 : index
    %c0_121 = arith.constant 0 : index
    %c0_122 = arith.constant 0 : index
    %164 = vector.load %arg7[%c14_120, %c0_121, %c0_122] : memref<16x16x32xf32, #tpu.memory_space<vmem>>, vector<1x16x32xf32>
    %165 = vector.shape_cast %164 : vector<1x16x32xf32> to vector<16x32xf32>
    %cst_123 = arith.constant dense<0.000000e+00> : vector<16x32xf32>
    %166 = tpu.matmul %163, %165, %cst_123 {dimension_numbers = #tpu.dot_dimension_numbers<[1], [0], [0], [1], [0, 0, 1, 1], [], []>} : vector<16x16xf32>, vector<16x32xf32>, vector<16x32xf32> -> vector<16x32xf32>
    %167 = arith.addf %162, %166 : vector<16x32xf32>
    %168 = vector.extract_strided_slice %93 {offsets = [240, 0], sizes = [16, 16], strides = [1, 1]} : vector<256x16xf32> to vector<16x16xf32>
    %c15_124 = arith.constant 15 : index
    %c0_125 = arith.constant 0 : index
    %c0_126 = arith.constant 0 : index
    %169 = vector.load %arg7[%c15_124, %c0_125, %c0_126] : memref<16x16x32xf32, #tpu.memory_space<vmem>>, vector<1x16x32xf32>
    %170 = vector.shape_cast %169 : vector<1x16x32xf32> to vector<16x32xf32>
    %cst_127 = arith.constant dense<0.000000e+00> : vector<16x32xf32>
    %171 = tpu.matmul %168, %170, %cst_127 {dimension_numbers = #tpu.dot_dimension_numbers<[1], [0], [0], [1], [0, 0, 1, 1], [], []>} : vector<16x16xf32>, vector<16x32xf32>, vector<16x32xf32> -> vector<16x32xf32>
    %172 = arith.addf %167, %171 : vector<16x32xf32>
    %173 = vector.broadcast %91 : vector<1x32xf32> to vector<16x32xf32>
    %174 = arith.addf %172, %173 : vector<16x32xf32>
    %cst_128 = arith.constant 0.000000e+00 : f32
    %175 = vector.broadcast %cst_128 : f32 to vector<16x32xf32>
    %176 = arith.maximumf %174, %175 : vector<16x32xf32>
    %c0_129 = arith.constant 0 : index
    %c0_130 = arith.constant 0 : index
    %c0_131 = arith.constant 0 : index
    %177 = vector.load %arg14[%c0_129, %c0_130, %c0_131] : memref<1x16x32xf32, #tpu.memory_space<vmem>>, vector<1x16x32xf32>
    %178 = vector.shape_cast %177 : vector<1x16x32xf32> to vector<16x32xf32>
    %179 = vector.shape_cast %176 : vector<16x32xf32> to vector<1x16x32xf32>
    tpu.vector_store %arg14[%c0_129, %c0_130, %c0_131], %179 {strides = array<i32>} : memref<1x16x32xf32, #tpu.memory_space<vmem>>, vector<1x16x32xf32>,
    %c0_132 = arith.constant 0 : index
    %c0_133 = arith.constant 0 : index
    %180 = vector.load %arg10[%c0_132, %c0_133] : memref<1x32xf32, #tpu.memory_space<vmem>>, vector<1x32xf32>
    %c0_134 = arith.constant 0 : index
    %c0_135 = arith.constant 0 : index
    %181 = vector.load %arg4[%c0_134, %c0_135] : memref<144x16xf32, #tpu.memory_space<vmem>>, vector<144x16xf32>
    %cst_136 = arith.constant dense<0.000000e+00> : vector<144x32xf32>
    %182 = tpu.matmul %181, %176, %cst_136 {dimension_numbers = #tpu.dot_dimension_numbers<[1], [0], [0], [1], [0, 0, 1, 1], [], []>} : vector<144x16xf32>, vector<16x32xf32>, vector<144x32xf32> -> vector<144x32xf32>
    %183 = vector.extract_strided_slice %182 {offsets = [0, 0], sizes = [16, 32], strides = [1, 1]} : vector<144x32xf32> to vector<16x32xf32>
    %c0_137 = arith.constant 0 : index
    %c0_138 = arith.constant 0 : index
    %c0_139 = arith.constant 0 : index
    %184 = vector.load %arg9[%c0_137, %c0_138, %c0_139] : memref<9x32x32xf32, #tpu.memory_space<vmem>>, vector<1x32x32xf32>
    %185 = vector.shape_cast %184 : vector<1x32x32xf32> to vector<32x32xf32>
    %cst_140 = arith.constant dense<0.000000e+00> : vector<16x32xf32>
    %186 = tpu.matmul %183, %185, %cst_140 {dimension_numbers = #tpu.dot_dimension_numbers<[1], [0], [0], [1], [0, 0, 1, 1], [], []>} : vector<16x32xf32>, vector<32x32xf32>, vector<16x32xf32> -> vector<16x32xf32>
    %187 = vector.extract_strided_slice %182 {offsets = [16, 0], sizes = [16, 32], strides = [1, 1]} : vector<144x32xf32> to vector<16x32xf32>
    %c1_141 = arith.constant 1 : index
    %c0_142 = arith.constant 0 : index
    %c0_143 = arith.constant 0 : index
    %188 = vector.load %arg9[%c1_141, %c0_142, %c0_143] : memref<9x32x32xf32, #tpu.memory_space<vmem>>, vector<1x32x32xf32>
    %189 = vector.shape_cast %188 : vector<1x32x32xf32> to vector<32x32xf32>
    %cst_144 = arith.constant dense<0.000000e+00> : vector<16x32xf32>
    %190 = tpu.matmul %187, %189, %cst_144 {dimension_numbers = #tpu.dot_dimension_numbers<[1], [0], [0], [1], [0, 0, 1, 1], [], []>} : vector<16x32xf32>, vector<32x32xf32>, vector<16x32xf32> -> vector<16x32xf32>
    %191 = arith.addf %186, %190 : vector<16x32xf32>
    %192 = vector.extract_strided_slice %182 {offsets = [32, 0], sizes = [16, 32], strides = [1, 1]} : vector<144x32xf32> to vector<16x32xf32>
    %c2_145 = arith.constant 2 : index
    %c0_146 = arith.constant 0 : index
    %c0_147 = arith.constant 0 : index
    %193 = vector.load %arg9[%c2_145, %c0_146, %c0_147] : memref<9x32x32xf32, #tpu.memory_space<vmem>>, vector<1x32x32xf32>
    %194 = vector.shape_cast %193 : vector<1x32x32xf32> to vector<32x32xf32>
    %cst_148 = arith.constant dense<0.000000e+00> : vector<16x32xf32>
    %195 = tpu.matmul %192, %194, %cst_148 {dimension_numbers = #tpu.dot_dimension_numbers<[1], [0], [0], [1], [0, 0, 1, 1], [], []>} : vector<16x32xf32>, vector<32x32xf32>, vector<16x32xf32> -> vector<16x32xf32>
    %196 = arith.addf %191, %195 : vector<16x32xf32>
    %197 = vector.extract_strided_slice %182 {offsets = [48, 0], sizes = [16, 32], strides = [1, 1]} : vector<144x32xf32> to vector<16x32xf32>
    %c3_149 = arith.constant 3 : index
    %c0_150 = arith.constant 0 : index
    %c0_151 = arith.constant 0 : index
    %198 = vector.load %arg9[%c3_149, %c0_150, %c0_151] : memref<9x32x32xf32, #tpu.memory_space<vmem>>, vector<1x32x32xf32>
    %199 = vector.shape_cast %198 : vector<1x32x32xf32> to vector<32x32xf32>
    %cst_152 = arith.constant dense<0.000000e+00> : vector<16x32xf32>
    %200 = tpu.matmul %197, %199, %cst_152 {dimension_numbers = #tpu.dot_dimension_numbers<[1], [0], [0], [1], [0, 0, 1, 1], [], []>} : vector<16x32xf32>, vector<32x32xf32>, vector<16x32xf32> -> vector<16x32xf32>
    %201 = arith.addf %196, %200 : vector<16x32xf32>
    %202 = vector.extract_strided_slice %182 {offsets = [64, 0], sizes = [16, 32], strides = [1, 1]} : vector<144x32xf32> to vector<16x32xf32>
    %c4_153 = arith.constant 4 : index
    %c0_154 = arith.constant 0 : index
    %c0_155 = arith.constant 0 : index
    %203 = vector.load %arg9[%c4_153, %c0_154, %c0_155] : memref<9x32x32xf32, #tpu.memory_space<vmem>>, vector<1x32x32xf32>
    %204 = vector.shape_cast %203 : vector<1x32x32xf32> to vector<32x32xf32>
    %cst_156 = arith.constant dense<0.000000e+00> : vector<16x32xf32>
    %205 = tpu.matmul %202, %204, %cst_156 {dimension_numbers = #tpu.dot_dimension_numbers<[1], [0], [0], [1], [0, 0, 1, 1], [], []>} : vector<16x32xf32>, vector<32x32xf32>, vector<16x32xf32> -> vector<16x32xf32>
    %206 = arith.addf %201, %205 : vector<16x32xf32>
    %207 = vector.extract_strided_slice %182 {offsets = [80, 0], sizes = [16, 32], strides = [1, 1]} : vector<144x32xf32> to vector<16x32xf32>
    %c5_157 = arith.constant 5 : index
    %c0_158 = arith.constant 0 : index
    %c0_159 = arith.constant 0 : index
    %208 = vector.load %arg9[%c5_157, %c0_158, %c0_159] : memref<9x32x32xf32, #tpu.memory_space<vmem>>, vector<1x32x32xf32>
    %209 = vector.shape_cast %208 : vector<1x32x32xf32> to vector<32x32xf32>
    %cst_160 = arith.constant dense<0.000000e+00> : vector<16x32xf32>
    %210 = tpu.matmul %207, %209, %cst_160 {dimension_numbers = #tpu.dot_dimension_numbers<[1], [0], [0], [1], [0, 0, 1, 1], [], []>} : vector<16x32xf32>, vector<32x32xf32>, vector<16x32xf32> -> vector<16x32xf32>
    %211 = arith.addf %206, %210 : vector<16x32xf32>
    %212 = vector.extract_strided_slice %182 {offsets = [96, 0], sizes = [16, 32], strides = [1, 1]} : vector<144x32xf32> to vector<16x32xf32>
    %c6_161 = arith.constant 6 : index
    %c0_162 = arith.constant 0 : index
    %c0_163 = arith.constant 0 : index
    %213 = vector.load %arg9[%c6_161, %c0_162, %c0_163] : memref<9x32x32xf32, #tpu.memory_space<vmem>>, vector<1x32x32xf32>
    %214 = vector.shape_cast %213 : vector<1x32x32xf32> to vector<32x32xf32>
    %cst_164 = arith.constant dense<0.000000e+00> : vector<16x32xf32>
    %215 = tpu.matmul %212, %214, %cst_164 {dimension_numbers = #tpu.dot_dimension_numbers<[1], [0], [0], [1], [0, 0, 1, 1], [], []>} : vector<16x32xf32>, vector<32x32xf32>, vector<16x32xf32> -> vector<16x32xf32>
    %216 = arith.addf %211, %215 : vector<16x32xf32>
    %217 = vector.extract_strided_slice %182 {offsets = [112, 0], sizes = [16, 32], strides = [1, 1]} : vector<144x32xf32> to vector<16x32xf32>
    %c7_165 = arith.constant 7 : index
    %c0_166 = arith.constant 0 : index
    %c0_167 = arith.constant 0 : index
    %218 = vector.load %arg9[%c7_165, %c0_166, %c0_167] : memref<9x32x32xf32, #tpu.memory_space<vmem>>, vector<1x32x32xf32>
    %219 = vector.shape_cast %218 : vector<1x32x32xf32> to vector<32x32xf32>
    %cst_168 = arith.constant dense<0.000000e+00> : vector<16x32xf32>
    %220 = tpu.matmul %217, %219, %cst_168 {dimension_numbers = #tpu.dot_dimension_numbers<[1], [0], [0], [1], [0, 0, 1, 1], [], []>} : vector<16x32xf32>, vector<32x32xf32>, vector<16x32xf32> -> vector<16x32xf32>
    %221 = arith.addf %216, %220 : vector<16x32xf32>
    %222 = vector.extract_strided_slice %182 {offsets = [128, 0], sizes = [16, 32], strides = [1, 1]} : vector<144x32xf32> to vector<16x32xf32>
    %c8_169 = arith.constant 8 : index
    %c0_170 = arith.constant 0 : index
    %c0_171 = arith.constant 0 : index
    %223 = vector.load %arg9[%c8_169, %c0_170, %c0_171] : memref<9x32x32xf32, #tpu.memory_space<vmem>>, vector<1x32x32xf32>
    %224 = vector.shape_cast %223 : vector<1x32x32xf32> to vector<32x32xf32>
    %cst_172 = arith.constant dense<0.000000e+00> : vector<16x32xf32>
    %225 = tpu.matmul %222, %224, %cst_172 {dimension_numbers = #tpu.dot_dimension_numbers<[1], [0], [0], [1], [0, 0, 1, 1], [], []>} : vector<16x32xf32>, vector<32x32xf32>, vector<16x32xf32> -> vector<16x32xf32>
    %226 = arith.addf %221, %225 : vector<16x32xf32>
    %227 = vector.broadcast %180 : vector<1x32xf32> to vector<16x32xf32>
    %228 = arith.addf %226, %227 : vector<16x32xf32>
    %cst_173 = arith.constant 0.000000e+00 : f32
    %229 = vector.broadcast %cst_173 : f32 to vector<16x32xf32>
    %230 = arith.maximumf %228, %229 : vector<16x32xf32>
    %c0_174 = arith.constant 0 : index
    %c0_175 = arith.constant 0 : index
    %c0_176 = arith.constant 0 : index
    %231 = vector.load %arg15[%c0_174, %c0_175, %c0_176] : memref<1x16x32xf32, #tpu.memory_space<vmem>>, vector<1x16x32xf32>
    %232 = vector.shape_cast %231 : vector<1x16x32xf32> to vector<16x32xf32>
    %233 = vector.shape_cast %230 : vector<16x32xf32> to vector<1x16x32xf32>
    tpu.vector_store %arg15[%c0_174, %c0_175, %c0_176], %233 {strides = array<i32>} : memref<1x16x32xf32, #tpu.memory_space<vmem>>, vector<1x16x32xf32>,
    %cst_177 = arith.constant 0.000000e+00 : f32
    %234 = vector.broadcast %cst_177 : f32 to vector<16x32xf32>
    %235 = arith.maximumf %230, %234 : vector<16x32xf32>
    %c0_178 = arith.constant 0 : index
    %c0_179 = arith.constant 0 : index
    %236 = vector.load %arg4[%c0_178, %c0_179] : memref<144x16xf32, #tpu.memory_space<vmem>>, vector<144x16xf32>
    %cst_180 = arith.constant dense<0.000000e+00> : vector<144x32xf32>
    %237 = tpu.matmul %236, %235, %cst_180 {dimension_numbers = #tpu.dot_dimension_numbers<[1], [0], [0], [1], [0, 0, 1, 1], [], []>} : vector<144x16xf32>, vector<16x32xf32>, vector<144x32xf32> -> vector<144x32xf32>
    %238 = vector.extract_strided_slice %237 {offsets = [0, 0], sizes = [16, 32], strides = [1, 1]} : vector<144x32xf32> to vector<16x32xf32>
    %c0_181 = arith.constant 0 : index
    %c0_182 = arith.constant 0 : index
    %c0_183 = arith.constant 0 : index
    %239 = vector.load %arg11[%c0_181, %c0_182, %c0_183] : memref<9x32x16xf32, #tpu.memory_space<vmem>>, vector<1x32x16xf32>
    %240 = vector.shape_cast %239 : vector<1x32x16xf32> to vector<32x16xf32>
    %cst_184 = arith.constant dense<0.000000e+00> : vector<16x16xf32>
    %241 = tpu.matmul %238, %240, %cst_184 {dimension_numbers = #tpu.dot_dimension_numbers<[1], [0], [0], [1], [0, 0, 1, 1], [], []>} : vector<16x32xf32>, vector<32x16xf32>, vector<16x16xf32> -> vector<16x16xf32>
    %242 = vector.extract_strided_slice %237 {offsets = [16, 0], sizes = [16, 32], strides = [1, 1]} : vector<144x32xf32> to vector<16x32xf32>
    %c1_185 = arith.constant 1 : index
    %c0_186 = arith.constant 0 : index
    %c0_187 = arith.constant 0 : index
    %243 = vector.load %arg11[%c1_185, %c0_186, %c0_187] : memref<9x32x16xf32, #tpu.memory_space<vmem>>, vector<1x32x16xf32>
    %244 = vector.shape_cast %243 : vector<1x32x16xf32> to vector<32x16xf32>
    %cst_188 = arith.constant dense<0.000000e+00> : vector<16x16xf32>
    %245 = tpu.matmul %242, %244, %cst_188 {dimension_numbers = #tpu.dot_dimension_numbers<[1], [0], [0], [1], [0, 0, 1, 1], [], []>} : vector<16x32xf32>, vector<32x16xf32>, vector<16x16xf32> -> vector<16x16xf32>
    %246 = arith.addf %241, %245 : vector<16x16xf32>
    %247 = vector.extract_strided_slice %237 {offsets = [32, 0], sizes = [16, 32], strides = [1, 1]} : vector<144x32xf32> to vector<16x32xf32>
    %c2_189 = arith.constant 2 : index
    %c0_190 = arith.constant 0 : index
    %c0_191 = arith.constant 0 : index
    %248 = vector.load %arg11[%c2_189, %c0_190, %c0_191] : memref<9x32x16xf32, #tpu.memory_space<vmem>>, vector<1x32x16xf32>
    %249 = vector.shape_cast %248 : vector<1x32x16xf32> to vector<32x16xf32>
    %cst_192 = arith.constant dense<0.000000e+00> : vector<16x16xf32>
    %250 = tpu.matmul %247, %249, %cst_192 {dimension_numbers = #tpu.dot_dimension_numbers<[1], [0], [0], [1], [0, 0, 1, 1], [], []>} : vector<16x32xf32>, vector<32x16xf32>, vector<16x16xf32> -> vector<16x16xf32>
    %251 = arith.addf %246, %250 : vector<16x16xf32>
    %252 = vector.extract_strided_slice %237 {offsets = [48, 0], sizes = [16, 32], strides = [1, 1]} : vector<144x32xf32> to vector<16x32xf32>
    %c3_193 = arith.constant 3 : index
    %c0_194 = arith.constant 0 : index
    %c0_195 = arith.constant 0 : index
    %253 = vector.load %arg11[%c3_193, %c0_194, %c0_195] : memref<9x32x16xf32, #tpu.memory_space<vmem>>, vector<1x32x16xf32>
    %254 = vector.shape_cast %253 : vector<1x32x16xf32> to vector<32x16xf32>
    %cst_196 = arith.constant dense<0.000000e+00> : vector<16x16xf32>
    %255 = tpu.matmul %252, %254, %cst_196 {dimension_numbers = #tpu.dot_dimension_numbers<[1], [0], [0], [1], [0, 0, 1, 1], [], []>} : vector<16x32xf32>, vector<32x16xf32>, vector<16x16xf32> -> vector<16x16xf32>
    %256 = arith.addf %251, %255 : vector<16x16xf32>
    %257 = vector.extract_strided_slice %237 {offsets = [64, 0], sizes = [16, 32], strides = [1, 1]} : vector<144x32xf32> to vector<16x32xf32>
    %c4_197 = arith.constant 4 : index
    %c0_198 = arith.constant 0 : index
    %c0_199 = arith.constant 0 : index
    %258 = vector.load %arg11[%c4_197, %c0_198, %c0_199] : memref<9x32x16xf32, #tpu.memory_space<vmem>>, vector<1x32x16xf32>
    %259 = vector.shape_cast %258 : vector<1x32x16xf32> to vector<32x16xf32>
    %cst_200 = arith.constant dense<0.000000e+00> : vector<16x16xf32>
    %260 = tpu.matmul %257, %259, %cst_200 {dimension_numbers = #tpu.dot_dimension_numbers<[1], [0], [0], [1], [0, 0, 1, 1], [], []>} : vector<16x32xf32>, vector<32x16xf32>, vector<16x16xf32> -> vector<16x16xf32>
    %261 = arith.addf %256, %260 : vector<16x16xf32>
    %262 = vector.extract_strided_slice %237 {offsets = [80, 0], sizes = [16, 32], strides = [1, 1]} : vector<144x32xf32> to vector<16x32xf32>
    %c5_201 = arith.constant 5 : index
    %c0_202 = arith.constant 0 : index
    %c0_203 = arith.constant 0 : index
    %263 = vector.load %arg11[%c5_201, %c0_202, %c0_203] : memref<9x32x16xf32, #tpu.memory_space<vmem>>, vector<1x32x16xf32>
    %264 = vector.shape_cast %263 : vector<1x32x16xf32> to vector<32x16xf32>
    %cst_204 = arith.constant dense<0.000000e+00> : vector<16x16xf32>
    %265 = tpu.matmul %262, %264, %cst_204 {dimension_numbers = #tpu.dot_dimension_numbers<[1], [0], [0], [1], [0, 0, 1, 1], [], []>} : vector<16x32xf32>, vector<32x16xf32>, vector<16x16xf32> -> vector<16x16xf32>
    %266 = arith.addf %261, %265 : vector<16x16xf32>
    %267 = vector.extract_strided_slice %237 {offsets = [96, 0], sizes = [16, 32], strides = [1, 1]} : vector<144x32xf32> to vector<16x32xf32>
    %c6_205 = arith.constant 6 : index
    %c0_206 = arith.constant 0 : index
    %c0_207 = arith.constant 0 : index
    %268 = vector.load %arg11[%c6_205, %c0_206, %c0_207] : memref<9x32x16xf32, #tpu.memory_space<vmem>>, vector<1x32x16xf32>
    %269 = vector.shape_cast %268 : vector<1x32x16xf32> to vector<32x16xf32>
    %cst_208 = arith.constant dense<0.000000e+00> : vector<16x16xf32>
    %270 = tpu.matmul %267, %269, %cst_208 {dimension_numbers = #tpu.dot_dimension_numbers<[1], [0], [0], [1], [0, 0, 1, 1], [], []>} : vector<16x32xf32>, vector<32x16xf32>, vector<16x16xf32> -> vector<16x16xf32>
    %271 = arith.addf %266, %270 : vector<16x16xf32>
    %272 = vector.extract_strided_slice %237 {offsets = [112, 0], sizes = [16, 32], strides = [1, 1]} : vector<144x32xf32> to vector<16x32xf32>
    %c7_209 = arith.constant 7 : index
    %c0_210 = arith.constant 0 : index
    %c0_211 = arith.constant 0 : index
    %273 = vector.load %arg11[%c7_209, %c0_210, %c0_211] : memref<9x32x16xf32, #tpu.memory_space<vmem>>, vector<1x32x16xf32>
    %274 = vector.shape_cast %273 : vector<1x32x16xf32> to vector<32x16xf32>
    %cst_212 = arith.constant dense<0.000000e+00> : vector<16x16xf32>
    %275 = tpu.matmul %272, %274, %cst_212 {dimension_numbers = #tpu.dot_dimension_numbers<[1], [0], [0], [1], [0, 0, 1, 1], [], []>} : vector<16x32xf32>, vector<32x16xf32>, vector<16x16xf32> -> vector<16x16xf32>
    %276 = arith.addf %271, %275 : vector<16x16xf32>
    %277 = vector.extract_strided_slice %237 {offsets = [128, 0], sizes = [16, 32], strides = [1, 1]} : vector<144x32xf32> to vector<16x32xf32>
    %c8_213 = arith.constant 8 : index
    %c0_214 = arith.constant 0 : index
    %c0_215 = arith.constant 0 : index
    %278 = vector.load %arg11[%c8_213, %c0_214, %c0_215] : memref<9x32x16xf32, #tpu.memory_space<vmem>>, vector<1x32x16xf32>
    %279 = vector.shape_cast %278 : vector<1x32x16xf32> to vector<32x16xf32>
    %cst_216 = arith.constant dense<0.000000e+00> : vector<16x16xf32>
    %280 = tpu.matmul %277, %279, %cst_216 {dimension_numbers = #tpu.dot_dimension_numbers<[1], [0], [0], [1], [0, 0, 1, 1], [], []>} : vector<16x32xf32>, vector<32x16xf32>, vector<16x16xf32> -> vector<16x16xf32>
    %281 = arith.addf %276, %280 : vector<16x16xf32>
    %cst_217 = arith.constant 0.000000e+00 : f32
    %282 = vector.broadcast %cst_217 : f32 to vector<16x16xf32>
    %283 = arith.maximumf %281, %282 : vector<16x16xf32>
    %c0_218 = arith.constant 0 : index
    %c0_219 = arith.constant 0 : index
    %284 = vector.load %arg12[%c0_218, %c0_219] : memref<16x32xf32, #tpu.memory_space<vmem>>, vector<16x32xf32>
    %cst_220 = arith.constant dense<0.000000e+00> : vector<16x32xf32>
    %285 = tpu.matmul %283, %284, %cst_220 {dimension_numbers = #tpu.dot_dimension_numbers<[1], [0], [0], [1], [0, 0, 1, 1], [], []>} : vector<16x16xf32>, vector<16x32xf32>, vector<16x32xf32> -> vector<16x32xf32>
    %286 = arith.addf %230, %285 : vector<16x32xf32>
    %cst_221 = arith.constant 0.000000e+00 : f32
    %287 = vector.broadcast %cst_221 : f32 to vector<16x32xf32>
    %288 = arith.maximumf %286, %287 : vector<16x32xf32>
    %c0_222 = arith.constant 0 : index
    %c0_223 = arith.constant 0 : index
    %289 = vector.load %arg4[%c0_222, %c0_223] : memref<144x16xf32, #tpu.memory_space<vmem>>, vector<144x16xf32>
    %cst_224 = arith.constant dense<0.000000e+00> : vector<144x32xf32>
    %290 = tpu.matmul %289, %288, %cst_224 {dimension_numbers = #tpu.dot_dimension_numbers<[1], [0], [0], [1], [0, 0, 1, 1], [], []>} : vector<144x16xf32>, vector<16x32xf32>, vector<144x32xf32> -> vector<144x32xf32>
    %291 = vector.extract_strided_slice %290 {offsets = [0, 0], sizes = [16, 32], strides = [1, 1]} : vector<144x32xf32> to vector<16x32xf32>
    %c0_225 = arith.constant 0 : index
    %c0_226 = arith.constant 0 : index
    %c0_227 = arith.constant 0 : index
    %292 = vector.load %arg11[%c0_225, %c0_226, %c0_227] : memref<9x32x16xf32, #tpu.memory_space<vmem>>, vector<1x32x16xf32>
    %293 = vector.shape_cast %292 : vector<1x32x16xf32> to vector<32x16xf32>
    %cst_228 = arith.constant dense<0.000000e+00> : vector<16x16xf32>
    %294 = tpu.matmul %291, %293, %cst_228 {dimension_numbers = #tpu.dot_dimension_numbers<[1], [0], [0], [1], [0, 0, 1, 1], [], []>} : vector<16x32xf32>, vector<32x16xf32>, vector<16x16xf32> -> vector<16x16xf32>
    %295 = vector.extract_strided_slice %290 {offsets = [16, 0], sizes = [16, 32], strides = [1, 1]} : vector<144x32xf32> to vector<16x32xf32>
    %c1_229 = arith.constant 1 : index
    %c0_230 = arith.constant 0 : index
    %c0_231 = arith.constant 0 : index
    %296 = vector.load %arg11[%c1_229, %c0_230, %c0_231] : memref<9x32x16xf32, #tpu.memory_space<vmem>>, vector<1x32x16xf32>
    %297 = vector.shape_cast %296 : vector<1x32x16xf32> to vector<32x16xf32>
    %cst_232 = arith.constant dense<0.000000e+00> : vector<16x16xf32>
    %298 = tpu.matmul %295, %297, %cst_232 {dimension_numbers = #tpu.dot_dimension_numbers<[1], [0], [0], [1], [0, 0, 1, 1], [], []>} : vector<16x32xf32>, vector<32x16xf32>, vector<16x16xf32> -> vector<16x16xf32>
    %299 = arith.addf %294, %298 : vector<16x16xf32>
    %300 = vector.extract_strided_slice %290 {offsets = [32, 0], sizes = [16, 32], strides = [1, 1]} : vector<144x32xf32> to vector<16x32xf32>
    %c2_233 = arith.constant 2 : index
    %c0_234 = arith.constant 0 : index
    %c0_235 = arith.constant 0 : index
    %301 = vector.load %arg11[%c2_233, %c0_234, %c0_235] : memref<9x32x16xf32, #tpu.memory_space<vmem>>, vector<1x32x16xf32>
    %302 = vector.shape_cast %301 : vector<1x32x16xf32> to vector<32x16xf32>
    %cst_236 = arith.constant dense<0.000000e+00> : vector<16x16xf32>
    %303 = tpu.matmul %300, %302, %cst_236 {dimension_numbers = #tpu.dot_dimension_numbers<[1], [0], [0], [1], [0, 0, 1, 1], [], []>} : vector<16x32xf32>, vector<32x16xf32>, vector<16x16xf32> -> vector<16x16xf32>
    %304 = arith.addf %299, %303 : vector<16x16xf32>
    %305 = vector.extract_strided_slice %290 {offsets = [48, 0], sizes = [16, 32], strides = [1, 1]} : vector<144x32xf32> to vector<16x32xf32>
    %c3_237 = arith.constant 3 : index
    %c0_238 = arith.constant 0 : index
    %c0_239 = arith.constant 0 : index
    %306 = vector.load %arg11[%c3_237, %c0_238, %c0_239] : memref<9x32x16xf32, #tpu.memory_space<vmem>>, vector<1x32x16xf32>
    %307 = vector.shape_cast %306 : vector<1x32x16xf32> to vector<32x16xf32>
    %cst_240 = arith.constant dense<0.000000e+00> : vector<16x16xf32>
    %308 = tpu.matmul %305, %307, %cst_240 {dimension_numbers = #tpu.dot_dimension_numbers<[1], [0], [0], [1], [0, 0, 1, 1], [], []>} : vector<16x32xf32>, vector<32x16xf32>, vector<16x16xf32> -> vector<16x16xf32>
    %309 = arith.addf %304, %308 : vector<16x16xf32>
    %310 = vector.extract_strided_slice %290 {offsets = [64, 0], sizes = [16, 32], strides = [1, 1]} : vector<144x32xf32> to vector<16x32xf32>
    %c4_241 = arith.constant 4 : index
    %c0_242 = arith.constant 0 : index
    %c0_243 = arith.constant 0 : index
    %311 = vector.load %arg11[%c4_241, %c0_242, %c0_243] : memref<9x32x16xf32, #tpu.memory_space<vmem>>, vector<1x32x16xf32>
    %312 = vector.shape_cast %311 : vector<1x32x16xf32> to vector<32x16xf32>
    %cst_244 = arith.constant dense<0.000000e+00> : vector<16x16xf32>
    %313 = tpu.matmul %310, %312, %cst_244 {dimension_numbers = #tpu.dot_dimension_numbers<[1], [0], [0], [1], [0, 0, 1, 1], [], []>} : vector<16x32xf32>, vector<32x16xf32>, vector<16x16xf32> -> vector<16x16xf32>
    %314 = arith.addf %309, %313 : vector<16x16xf32>
    %315 = vector.extract_strided_slice %290 {offsets = [80, 0], sizes = [16, 32], strides = [1, 1]} : vector<144x32xf32> to vector<16x32xf32>
    %c5_245 = arith.constant 5 : index
    %c0_246 = arith.constant 0 : index
    %c0_247 = arith.constant 0 : index
    %316 = vector.load %arg11[%c5_245, %c0_246, %c0_247] : memref<9x32x16xf32, #tpu.memory_space<vmem>>, vector<1x32x16xf32>
    %317 = vector.shape_cast %316 : vector<1x32x16xf32> to vector<32x16xf32>
    %cst_248 = arith.constant dense<0.000000e+00> : vector<16x16xf32>
    %318 = tpu.matmul %315, %317, %cst_248 {dimension_numbers = #tpu.dot_dimension_numbers<[1], [0], [0], [1], [0, 0, 1, 1], [], []>} : vector<16x32xf32>, vector<32x16xf32>, vector<16x16xf32> -> vector<16x16xf32>
    %319 = arith.addf %314, %318 : vector<16x16xf32>
    %320 = vector.extract_strided_slice %290 {offsets = [96, 0], sizes = [16, 32], strides = [1, 1]} : vector<144x32xf32> to vector<16x32xf32>
    %c6_249 = arith.constant 6 : index
    %c0_250 = arith.constant 0 : index
    %c0_251 = arith.constant 0 : index
    %321 = vector.load %arg11[%c6_249, %c0_250, %c0_251] : memref<9x32x16xf32, #tpu.memory_space<vmem>>, vector<1x32x16xf32>
    %322 = vector.shape_cast %321 : vector<1x32x16xf32> to vector<32x16xf32>
    %cst_252 = arith.constant dense<0.000000e+00> : vector<16x16xf32>
    %323 = tpu.matmul %320, %322, %cst_252 {dimension_numbers = #tpu.dot_dimension_numbers<[1], [0], [0], [1], [0, 0, 1, 1], [], []>} : vector<16x32xf32>, vector<32x16xf32>, vector<16x16xf32> -> vector<16x16xf32>
    %324 = arith.addf %319, %323 : vector<16x16xf32>
    %325 = vector.extract_strided_slice %290 {offsets = [112, 0], sizes = [16, 32], strides = [1, 1]} : vector<144x32xf32> to vector<16x32xf32>
    %c7_253 = arith.constant 7 : index
    %c0_254 = arith.constant 0 : index
    %c0_255 = arith.constant 0 : index
    %326 = vector.load %arg11[%c7_253, %c0_254, %c0_255] : memref<9x32x16xf32, #tpu.memory_space<vmem>>, vector<1x32x16xf32>
    %327 = vector.shape_cast %326 : vector<1x32x16xf32> to vector<32x16xf32>
    %cst_256 = arith.constant dense<0.000000e+00> : vector<16x16xf32>
    %328 = tpu.matmul %325, %327, %cst_256 {dimension_numbers = #tpu.dot_dimension_numbers<[1], [0], [0], [1], [0, 0, 1, 1], [], []>} : vector<16x32xf32>, vector<32x16xf32>, vector<16x16xf32> -> vector<16x16xf32>
    %329 = arith.addf %324, %328 : vector<16x16xf32>
    %330 = vector.extract_strided_slice %290 {offsets = [128, 0], sizes = [16, 32], strides = [1, 1]} : vector<144x32xf32> to vector<16x32xf32>
    %c8_257 = arith.constant 8 : index
    %c0_258 = arith.constant 0 : index
    %c0_259 = arith.constant 0 : index
    %331 = vector.load %arg11[%c8_257, %c0_258, %c0_259] : memref<9x32x16xf32, #tpu.memory_space<vmem>>, vector<1x32x16xf32>
    %332 = vector.shape_cast %331 : vector<1x32x16xf32> to vector<32x16xf32>
    %cst_260 = arith.constant dense<0.000000e+00> : vector<16x16xf32>
    %333 = tpu.matmul %330, %332, %cst_260 {dimension_numbers = #tpu.dot_dimension_numbers<[1], [0], [0], [1], [0, 0, 1, 1], [], []>} : vector<16x32xf32>, vector<32x16xf32>, vector<16x16xf32> -> vector<16x16xf32>
    %334 = arith.addf %329, %333 : vector<16x16xf32>
    %cst_261 = arith.constant 0.000000e+00 : f32
    %335 = vector.broadcast %cst_261 : f32 to vector<16x16xf32>
    %336 = arith.maximumf %334, %335 : vector<16x16xf32>
    %c0_262 = arith.constant 0 : index
    %c0_263 = arith.constant 0 : index
    %337 = vector.load %arg12[%c0_262, %c0_263] : memref<16x32xf32, #tpu.memory_space<vmem>>, vector<16x32xf32>
    %cst_264 = arith.constant dense<0.000000e+00> : vector<16x32xf32>
    %338 = tpu.matmul %336, %337, %cst_264 {dimension_numbers = #tpu.dot_dimension_numbers<[1], [0], [0], [1], [0, 0, 1, 1], [], []>} : vector<16x16xf32>, vector<16x32xf32>, vector<16x32xf32> -> vector<16x32xf32>
    %339 = arith.addf %286, %338 : vector<16x32xf32>
    %cst_265 = arith.constant 0.000000e+00 : f32
    %340 = vector.broadcast %cst_265 : f32 to vector<16x32xf32>
    %341 = arith.maximumf %339, %340 : vector<16x32xf32>
    %c0_266 = arith.constant 0 : index
    %c0_267 = arith.constant 0 : index
    %c0_268 = arith.constant 0 : index
    %342 = vector.load %arg16[%c0_266, %c0_267, %c0_268] : memref<1x16x32xf32, #tpu.memory_space<vmem>>, vector<1x16x32xf32>
    %343 = vector.shape_cast %342 : vector<1x16x32xf32> to vector<16x32xf32>
    %344 = vector.shape_cast %341 : vector<16x32xf32> to vector<1x16x32xf32>
    tpu.vector_store %arg16[%c0_266, %c0_267, %c0_268], %344 {strides = array<i32>} : memref<1x16x32xf32, #tpu.memory_space<vmem>>, vector<1x16x32xf32>,
    return
  }
  func.func @transform_0(%arg0: i32) -> (i32, i32, i32) {
    %c0_i32 = arith.constant 0 : i32
    %c0_i32_0 = arith.constant 0 : i32
    %c0_i32_1 = arith.constant 0 : i32
    return %arg0, %c0_i32, %c0_i32_0 : i32, i32, i32
  }
  func.func @transform_1(%arg0: i32) -> (i32, i32) {
    %c0_i32 = arith.constant 0 : i32
    %c0_i32_0 = arith.constant 0 : i32
    %c0_i32_1 = arith.constant 0 : i32
    return %c0_i32, %c0_i32_0 : i32, i32
  }
  func.func @transform_2(%arg0: i32) -> (i32, i32) {
    %c0_i32 = arith.constant 0 : i32
    %c0_i32_0 = arith.constant 0 : i32
    %c0_i32_1 = arith.constant 0 : i32
    return %c0_i32, %c0_i32_0 : i32, i32
  }
  func.func @transform_3(%arg0: i32) -> (i32, i32) {
    %c0_i32 = arith.constant 0 : i32
    %c0_i32_0 = arith.constant 0 : i32
    %c0_i32_1 = arith.constant 0 : i32
    return %c0_i32, %c0_i32_0 : i32, i32
  }
  func.func @transform_4(%arg0: i32) -> (i32, i32, i32) {
    %c0_i32 = arith.constant 0 : i32
    %c0_i32_0 = arith.constant 0 : i32
    %c0_i32_1 = arith.constant 0 : i32
    %c0_i32_2 = arith.constant 0 : i32
    return %c0_i32, %c0_i32_0, %c0_i32_1 : i32, i32, i32
  }
  func.func @transform_5(%arg0: i32) -> (i32, i32) {
    %c0_i32 = arith.constant 0 : i32
    %c0_i32_0 = arith.constant 0 : i32
    %c0_i32_1 = arith.constant 0 : i32
    return %c0_i32, %c0_i32_0 : i32, i32
  }
  func.func @transform_6(%arg0: i32) -> (i32, i32, i32) {
    %c0_i32 = arith.constant 0 : i32
    %c0_i32_0 = arith.constant 0 : i32
    %c0_i32_1 = arith.constant 0 : i32
    %c0_i32_2 = arith.constant 0 : i32
    return %c0_i32, %c0_i32_0, %c0_i32_1 : i32, i32, i32
  }
  func.func @transform_7(%arg0: i32) -> (i32, i32) {
    %c0_i32 = arith.constant 0 : i32
    %c0_i32_0 = arith.constant 0 : i32
    %c0_i32_1 = arith.constant 0 : i32
    return %c0_i32, %c0_i32_0 : i32, i32
  }
  func.func @transform_8(%arg0: i32) -> (i32, i32, i32) {
    %c0_i32 = arith.constant 0 : i32
    %c0_i32_0 = arith.constant 0 : i32
    %c0_i32_1 = arith.constant 0 : i32
    %c0_i32_2 = arith.constant 0 : i32
    return %c0_i32, %c0_i32_0, %c0_i32_1 : i32, i32, i32
  }
  func.func @transform_9(%arg0: i32) -> (i32, i32) {
    %c0_i32 = arith.constant 0 : i32
    %c0_i32_0 = arith.constant 0 : i32
    %c0_i32_1 = arith.constant 0 : i32
    return %c0_i32, %c0_i32_0 : i32, i32
  }
  func.func @transform_10(%arg0: i32) -> (i32, i32, i32) {
    %c0_i32 = arith.constant 0 : i32
    %c0_i32_0 = arith.constant 0 : i32
    %c0_i32_1 = arith.constant 0 : i32
    %c0_i32_2 = arith.constant 0 : i32
    return %c0_i32, %c0_i32_0, %c0_i32_1 : i32, i32, i32
  }
  func.func @transform_11(%arg0: i32) -> (i32, i32) {
    %c0_i32 = arith.constant 0 : i32
    %c0_i32_0 = arith.constant 0 : i32
    %c0_i32_1 = arith.constant 0 : i32
    return %c0_i32, %c0_i32_0 : i32, i32
  }
  func.func @transform_12(%arg0: i32) -> (i32, i32, i32) {
    %c0_i32 = arith.constant 0 : i32
    %c0_i32_0 = arith.constant 0 : i32
    %c0_i32_1 = arith.constant 0 : i32
    return %arg0, %c0_i32, %c0_i32_0 : i32, i32, i32
  }
  func.func @transform_13(%arg0: i32) -> (i32, i32, i32) {
    %c0_i32 = arith.constant 0 : i32
    %c0_i32_0 = arith.constant 0 : i32
    %c0_i32_1 = arith.constant 0 : i32
    return %arg0, %c0_i32, %c0_i32_0 : i32, i32, i32
  }
  func.func @transform_14(%arg0: i32) -> (i32, i32, i32) {
    %c0_i32 = arith.constant 0 : i32
    %c0_i32_0 = arith.constant 0 : i32
    %c0_i32_1 = arith.constant 0 : i32
    return %arg0, %c0_i32, %c0_i32_0 : i32, i32, i32
  }
  func.func @transform_15(%arg0: i32) -> (i32, i32, i32) {
    %c0_i32 = arith.constant 0 : i32
    %c0_i32_0 = arith.constant 0 : i32
    %c0_i32_1 = arith.constant 0 : i32
    return %arg0, %c0_i32, %c0_i32_0 : i32, i32, i32
  }
}

</mosaic_0001>

<llo_original>
// kernel: encoder1_forward.1
$region0: #{encoder1_forward.1}
  #allocation0 [shape = 'u32[]', space=smem, size = 0x4, offset = 0x4, fixed_abs, tag = 'smem constant byte address 0x4 - core index']
  #allocation1 [shape = 'u32[144,128]{1,0:T(1,128)}', space=vmem, size = 0x12000, scoped, tag = 'internal scratch']
  %s0 = inlined_call_operand.vmem [shape: f32[2,256,4], index: 0, kind: input, shape index: {}]
  %s1 = inlined_call_operand.hbm [shape: f32[1024,256], index: 1, kind: input, shape index: {}]
  %s2 = inlined_call_operand.vmem [shape: f32[256,64], index: 2, kind: input, shape index: {}]
  %s3 = inlined_call_operand.vmem [shape: f32[144,16], index: 3, kind: input, shape index: {}]
  %s4 = inlined_call_operand.hbm [shape: f32[16,4,16], index: 4, kind: input, shape index: {}]
  %s5 = inlined_call_operand.vmem [shape: f32[1,16], index: 5, kind: input, shape index: {}]
  %s6 = inlined_call_operand.vmem [shape: f32[16,16,32], index: 6, kind: input, shape index: {}]
  %s7 = inlined_call_operand.vmem [shape: f32[1,32], index: 7, kind: input, shape index: {}]
  %s8 = inlined_call_operand.vmem [shape: f32[9,32,32], index: 8, kind: input, shape index: {}]
  %s9 = inlined_call_operand.vmem [shape: f32[1,32], index: 9, kind: input, shape index: {}]
  %s10 = inlined_call_operand.vmem [shape: f32[9,32,16], index: 10, kind: input, shape index: {}]
  %s11 = inlined_call_operand.vmem [shape: f32[16,32], index: 11, kind: input, shape index: {}]
  %s12 = inlined_call_operand.hbm [shape: f32[2,64,16], index: 12, kind: output, shape index: {0}]
  %s13 = inlined_call_operand.hbm [shape: f32[2,16,32], index: 13, kind: output, shape index: {1}]
  %s14 = inlined_call_operand.hbm [shape: f32[2,16,32], index: 14, kind: output, shape index: {2}]
  %s15 = inlined_call_operand.hbm [shape: f32[2,16,32], index: 15, kind: output, shape index: {3}]
  %16 = xla_tuple %s12, %s13, %s14, %s15
  %s17 = sld [smem:[#allocation0]]
  $region113: #{encoder1_forward.1} parent=0
    _
  %s19 = ssub.s32 1, %s17
  %s20 = scalar_select 0, %s19, %s17
  $region1: #{encoder1_forward.1} parent=0
    #allocation2 [shape = 'u8[1048576]{0}', space=vmem, size = 0x100000, scoped, tag = 'input window, operand 1, single buffered']
    #allocation3 [shape = 's32[2]{0}', space=sflag, size = 0x8, scoped, tag = 'scoped memory for encoder1_forward.1']
    #allocation4 [shape = 's32[2]{0}', space=sflag, size = 0x8, scoped, tag = 'scoped memory for encoder1_forward.1']
    #allocation5 [shape = 'u8[32768]{0}', space=vmem, size = 0x8000, scoped, tag = 'input window, operand 4, single buffered']
    #allocation6 [shape = 's32[1]{0}', space=sflag, size = 0x4, scoped, tag = 'scoped memory for encoder1_forward.1']
    #allocation7 [shape = 'u8[65536]{0}', space=vmem, size = 0x10000, scoped, tag = 'output window, operand 0']
    #allocation8 [shape = 'u8[16384]{0}', space=vmem, size = 0x4000, scoped, tag = 'output window, operand 1']
    #allocation9 [shape = 's32[2]{0}', space=sflag, size = 0x8, scoped, tag = 'scoped memory for encoder1_forward.1']
    #allocation10 [shape = 'u8[16384]{0}', space=vmem, size = 0x4000, scoped, tag = 'output window, operand 2']
    #allocation11 [shape = 'u8[16384]{0}', space=vmem, size = 0x4000, scoped, tag = 'output window, operand 3']
    #allocation12 [shape = 's32[2]{0}', space=sflag, size = 0x8, scoped, tag = 'scoped memory for encoder1_forward.1']
    %21 = vsyncpa [#allocation3], 0
    %22 = vsyncpa [#allocation6], 0
    %23 = vsyncpa [#allocation4], 0
    %s24 = scalar_lea.sflag [#allocation4], 1
    %25 = vsyncpa %s24, 0
    %26 = vsyncpa [#allocation9], 0
    %s27 = scalar_lea.sflag [#allocation9], 1
    %28 = vsyncpa %s27, 0
    %29 = vsyncpa [#allocation12], 0
    %s30 = scalar_lea.sflag [#allocation12], 1
    %31 = vsyncpa %s30, 0
    loop: start=0, step=1, limit=4
    $region2: #{encoder1_forward.1} parent=1 // loop_pre_header
      _
    $region3: #{encoder1_forward.1} parent=1 // loop_header
      %s33 = sphi 0, %s37
      %p34 = scmp.ge.s32.totalorder %s33, 4
      %s43 = sphi 0, %s45
      %s46 = sphi 0, %s43
      %s47 = sphi 0, %s46
      %s63 = sphi 0, %s47
      %s67 = sphi 0, %s67
      %s69 = sphi 0, %s67
      %s70 = sphi 0, %s69
      %s84 = sphi 0, %s70
      %s88 = sphi 0, %s88
      %s90 = sphi 0, %s88
      %s91 = sphi 0, %s90
      %s105 = sphi 0, %s91
      %s109 = sphi 0, %s109
      %s111 = sphi 0, %s109
      %s112 = sphi 0, %s111
      %s126 = sphi 0, %s112
      %s130 = sphi 0, %s130
      %s132 = sphi 0, %s130
      %s133 = sphi 0, %s132
      %s147 = sphi 0, %s133
      %s151 = sphi 0, %s151
      %s153 = sphi 0, %s151
      %s154 = sphi 0, %s153
      %s168 = sphi 0, %s154
      %s172 = sphi 0, %s172
      %s174 = sphi 0, %s172
      %s175 = sphi 0, %s174
      %s189 = sphi 0, %s175
      %s193 = sphi 0, %s193
      %s195 = sphi 0, %s193
      %s196 = sphi 0, %s195
      %s210 = sphi 0, %s196
      %s214 = sphi 0, %s214
      %s216 = sphi 0, %s214
      %s217 = sphi 0, %s216
      %s231 = sphi 0, %s217
      %s235 = sphi 0, %s235
      %s237 = sphi 0, %s235
      %s238 = sphi 0, %s237
      %s252 = sphi 0, %s238
      %s256 = sphi 0, %s256
      %s258 = sphi 0, %s256
      %s259 = sphi 0, %s258
      %s273 = sphi 0, %s259
      %s277 = sphi 0, %s277
      %s279 = sphi 0, %s277
      %s280 = sphi 0, %s279
      %s294 = sphi 0, %s280
      %s300 = sphi 0, %s302
      %s303 = sphi 0, %s300
      %s304 = sphi 0, %s303
      %s320 = sphi 0, %s304
      %s326 = sphi 0, %s328
      %s329 = sphi 0, %s326
      %s330 = sphi 0, %s329
      %s346 = sphi 0, %s330
      %s352 = sphi 0, %s354
      %s355 = sphi 0, %s352
      %s356 = sphi 0, %s355
      %s372 = sphi 0, %s356
      %s378 = sphi 0, %s380
      %s381 = sphi 0, %s378
      %s382 = sphi 0, %s381
      %s398 = sphi 0, %s382
    $region4: #{encoder1_forward.1} parent=1 // loop_header_branch
      %36 = sbr.rel (%p34) target = $region8
    $region5: #{encoder1_forward.1} parent=1 // loop_body
      %s38 = ssub.s32 %s33, 1
      %s39 = ssub.s32 %s33, 2
      %s40 = sadd.s32 %s33, 1
      %s41 = ssub.s32 %s33, %s40
      %p42 = scmp.eq.s32.totalorder %s41, 0
      %s44 = sadd.s32 %s43, 1
      %s45 = scalar_select %p42, %s43, %s44
      %p48 = pneg %p42
      %p49 = scmp.eq.s32.totalorder %s33, 1
      %p50 = por %p48, %p49
      %p51 = scmp.ne.s32.totalorder %s43, %s46
      %p52 = scmp.eq.s32.totalorder %s33, 0
      %p53 = por %p51, %p52
      %p54 = scmp.ne.s32.totalorder %s43, %s46
      %p55 = scmp.eq.s32.totalorder %s38, 1
      %p56 = por %p54, %p55
      %p57 = scmp.ne.s32.totalorder %s46, %s47
      %p58 = scmp.eq.s32.totalorder %s38, 0
      %p59 = por %p57, %p58
      %p60 = scmp.ne.s32.totalorder %s46, %s47
      %p61 = scmp.eq.s32.totalorder %s39, 1
      %p62 = por %p60, %p61
      %p64 = scmp.ne.s32.totalorder %s47, %s63
      %p65 = scmp.eq.s32.totalorder %s39, 0
      %p66 = por %p64, %p65
      %s68 = sadd.s32 %s67, 1
      %p71 = scmp.eq.s32.totalorder %s33, 1
      %p72 = scmp.ne.s32.totalorder %s67, %s69
      %p73 = scmp.eq.s32.totalorder %s33, 0
      %p74 = por %p72, %p73
      %p75 = scmp.ne.s32.totalorder %s67, %s69
      %p76 = scmp.eq.s32.totalorder %s38, 1
      %p77 = por %p75, %p76
      %p78 = scmp.ne.s32.totalorder %s69, %s70
      %p79 = scmp.eq.s32.totalorder %s38, 0
      %p80 = por %p78, %p79
      %p81 = scmp.ne.s32.totalorder %s69, %s70
      %p82 = scmp.eq.s32.totalorder %s39, 1
      %p83 = por %p81, %p82
      %p85 = scmp.ne.s32.totalorder %s70, %s84
      %p86 = scmp.eq.s32.totalorder %s39, 0
      %p87 = por %p85, %p86
      %s89 = sadd.s32 %s88, 1
      %p92 = scmp.eq.s32.totalorder %s33, 1
      %p93 = scmp.ne.s32.totalorder %s88, %s90
      %p94 = scmp.eq.s32.totalorder %s33, 0
      %p95 = por %p93, %p94
      %p96 = scmp.ne.s32.totalorder %s88, %s90
      %p97 = scmp.eq.s32.totalorder %s38, 1
      %p98 = por %p96, %p97
      %p99 = scmp.ne.s32.totalorder %s90, %s91
      %p100 = scmp.eq.s32.totalorder %s38, 0
      %p101 = por %p99, %p100
      %p102 = scmp.ne.s32.totalorder %s90, %s91
      %p103 = scmp.eq.s32.totalorder %s39, 1
      %p104 = por %p102, %p103
      %p106 = scmp.ne.s32.totalorder %s91, %s105
      %p107 = scmp.eq.s32.totalorder %s39, 0
      %p108 = por %p106, %p107
      %s110 = sadd.s32 %s109, 1
      %p113 = scmp.eq.s32.totalorder %s33, 1
      %p114 = scmp.ne.s32.totalorder %s109, %s111
      %p115 = scmp.eq.s32.totalorder %s33, 0
      %p116 = por %p114, %p115
      %p117 = scmp.ne.s32.totalorder %s109, %s111
      %p118 = scmp.eq.s32.totalorder %s38, 1
      %p119 = por %p117, %p118
      %p120 = scmp.ne.s32.totalorder %s111, %s112
      %p121 = scmp.eq.s32.totalorder %s38, 0
      %p122 = por %p120, %p121
      %p123 = scmp.ne.s32.totalorder %s111, %s112
      %p124 = scmp.eq.s32.totalorder %s39, 1
      %p125 = por %p123, %p124
      %p127 = scmp.ne.s32.totalorder %s112, %s126
      %p128 = scmp.eq.s32.totalorder %s39, 0
      %p129 = por %p127, %p128
      %s131 = sadd.s32 %s130, 1
      %p134 = scmp.eq.s32.totalorder %s33, 1
      %p135 = scmp.ne.s32.totalorder %s130, %s132
      %p136 = scmp.eq.s32.totalorder %s33, 0
      %p137 = por %p135, %p136
      %p138 = scmp.ne.s32.totalorder %s130, %s132
      %p139 = scmp.eq.s32.totalorder %s38, 1
      %p140 = por %p138, %p139
      %p141 = scmp.ne.s32.totalorder %s132, %s133
      %p142 = scmp.eq.s32.totalorder %s38, 0
      %p143 = por %p141, %p142
      %p144 = scmp.ne.s32.totalorder %s132, %s133
      %p145 = scmp.eq.s32.totalorder %s39, 1
      %p146 = por %p144, %p145
      %p148 = scmp.ne.s32.totalorder %s133, %s147
      %p149 = scmp.eq.s32.totalorder %s39, 0
      %p150 = por %p148, %p149
      %s152 = sadd.s32 %s151, 1
      %p155 = scmp.eq.s32.totalorder %s33, 1
      %p156 = scmp.ne.s32.totalorder %s151, %s153
      %p157 = scmp.eq.s32.totalorder %s33, 0
      %p158 = por %p156, %p157
      %p159 = scmp.ne.s32.totalorder %s151, %s153
      %p160 = scmp.eq.s32.totalorder %s38, 1
      %p161 = por %p159, %p160
      %p162 = scmp.ne.s32.totalorder %s153, %s154
      %p163 = scmp.eq.s32.totalorder %s38, 0
      %p164 = por %p162, %p163
      %p165 = scmp.ne.s32.totalorder %s153, %s154
      %p166 = scmp.eq.s32.totalorder %s39, 1
      %p167 = por %p165, %p166
      %p169 = scmp.ne.s32.totalorder %s154, %s168
      %p170 = scmp.eq.s32.totalorder %s39, 0
      %p171 = por %p169, %p170
      %s173 = sadd.s32 %s172, 1
      %p176 = scmp.eq.s32.totalorder %s33, 1
      %p177 = scmp.ne.s32.totalorder %s172, %s174
      %p178 = scmp.eq.s32.totalorder %s33, 0
      %p179 = por %p177, %p178
      %p180 = scmp.ne.s32.totalorder %s172, %s174
      %p181 = scmp.eq.s32.totalorder %s38, 1
      %p182 = por %p180, %p181
      %p183 = scmp.ne.s32.totalorder %s174, %s175
      %p184 = scmp.eq.s32.totalorder %s38, 0
      %p185 = por %p183, %p184
      %p186 = scmp.ne.s32.totalorder %s174, %s175
      %p187 = scmp.eq.s32.totalorder %s39, 1
      %p188 = por %p186, %p187
      %p190 = scmp.ne.s32.totalorder %s175, %s189
      %p191 = scmp.eq.s32.totalorder %s39, 0
      %p192 = por %p190, %p191
      %s194 = sadd.s32 %s193, 1
      %p197 = scmp.eq.s32.totalorder %s33, 1
      %p198 = scmp.ne.s32.totalorder %s193, %s195
      %p199 = scmp.eq.s32.totalorder %s33, 0
      %p200 = por %p198, %p199
      %p201 = scmp.ne.s32.totalorder %s193, %s195
      %p202 = scmp.eq.s32.totalorder %s38, 1
      %p203 = por %p201, %p202
      %p204 = scmp.ne.s32.totalorder %s195, %s196
      %p205 = scmp.eq.s32.totalorder %s38, 0
      %p206 = por %p204, %p205
      %p207 = scmp.ne.s32.totalorder %s195, %s196
      %p208 = scmp.eq.s32.totalorder %s39, 1
      %p209 = por %p207, %p208
      %p211 = scmp.ne.s32.totalorder %s196, %s210
      %p212 = scmp.eq.s32.totalorder %s39, 0
      %p213 = por %p211, %p212
      %s215 = sadd.s32 %s214, 1
      %p218 = scmp.eq.s32.totalorder %s33, 1
      %p219 = scmp.ne.s32.totalorder %s214, %s216
      %p220 = scmp.eq.s32.totalorder %s33, 0
      %p221 = por %p219, %p220
      %p222 = scmp.ne.s32.totalorder %s214, %s216
      %p223 = scmp.eq.s32.totalorder %s38, 1
      %p224 = por %p222, %p223
      %p225 = scmp.ne.s32.totalorder %s216, %s217
      %p226 = scmp.eq.s32.totalorder %s38, 0
      %p227 = por %p225, %p226
      %p228 = scmp.ne.s32.totalorder %s216, %s217
      %p229 = scmp.eq.s32.totalorder %s39, 1
      %p230 = por %p228, %p229
      %p232 = scmp.ne.s32.totalorder %s217, %s231
      %p233 = scmp.eq.s32.totalorder %s39, 0
      %p234 = por %p232, %p233
      %s236 = sadd.s32 %s235, 1
      %p239 = scmp.eq.s32.totalorder %s33, 1
      %p240 = scmp.ne.s32.totalorder %s235, %s237
      %p241 = scmp.eq.s32.totalorder %s33, 0
      %p242 = por %p240, %p241
      %p243 = scmp.ne.s32.totalorder %s235, %s237
      %p244 = scmp.eq.s32.totalorder %s38, 1
      %p245 = por %p243, %p244
      %p246 = scmp.ne.s32.totalorder %s237, %s238
      %p247 = scmp.eq.s32.totalorder %s38, 0
      %p248 = por %p246, %p247
      %p249 = scmp.ne.s32.totalorder %s237, %s238
      %p250 = scmp.eq.s32.totalorder %s39, 1
      %p251 = por %p249, %p250
      %p253 = scmp.ne.s32.totalorder %s238, %s252
      %p254 = scmp.eq.s32.totalorder %s39, 0
      %p255 = por %p253, %p254
      %s257 = sadd.s32 %s256, 1
      %p260 = scmp.eq.s32.totalorder %s33, 1
      %p261 = scmp.ne.s32.totalorder %s256, %s258
      %p262 = scmp.eq.s32.totalorder %s33, 0
      %p263 = por %p261, %p262
      %p264 = scmp.ne.s32.totalorder %s256, %s258
      %p265 = scmp.eq.s32.totalorder %s38, 1
      %p266 = por %p264, %p265
      %p267 = scmp.ne.s32.totalorder %s258, %s259
      %p268 = scmp.eq.s32.totalorder %s38, 0
      %p269 = por %p267, %p268
      %p270 = scmp.ne.s32.totalorder %s258, %s259
      %p271 = scmp.eq.s32.totalorder %s39, 1
      %p272 = por %p270, %p271
      %p274 = scmp.ne.s32.totalorder %s259, %s273
      %p275 = scmp.eq.s32.totalorder %s39, 0
      %p276 = por %p274, %p275
      %s278 = sadd.s32 %s277, 1
      %p281 = scmp.eq.s32.totalorder %s33, 1
      %p282 = scmp.ne.s32.totalorder %s277, %s279
      %p283 = scmp.eq.s32.totalorder %s33, 0
      %p284 = por %p282, %p283
      %p285 = scmp.ne.s32.totalorder %s277, %s279
      %p286 = scmp.eq.s32.totalorder %s38, 1
      %p287 = por %p285, %p286
      %p288 = scmp.ne.s32.totalorder %s279, %s280
      %p289 = scmp.eq.s32.totalorder %s38, 0
      %p290 = por %p288, %p289
      %p291 = scmp.ne.s32.totalorder %s279, %s280
      %p292 = scmp.eq.s32.totalorder %s39, 1
      %p293 = por %p291, %p292
      %p295 = scmp.ne.s32.totalorder %s280, %s294
      %p296 = scmp.eq.s32.totalorder %s39, 0
      %p297 = por %p295, %p296
      %s298 = ssub.s32 %s33, %s40
      %p299 = scmp.eq.s32.totalorder %s298, 0
      %s301 = sadd.s32 %s300, 1
      %s302 = scalar_select %p299, %s300, %s301
      %p305 = pneg %p299
      %p306 = scmp.eq.s32.totalorder %s33, 1
      %p307 = por %p305, %p306
      %p308 = scmp.ne.s32.totalorder %s300, %s303
      %p309 = scmp.eq.s32.totalorder %s33, 0
      %p310 = por %p308, %p309
      %p311 = scmp.ne.s32.totalorder %s300, %s303
      %p312 = scmp.eq.s32.totalorder %s38, 1
      %p313 = por %p311, %p312
      %p314 = scmp.ne.s32.totalorder %s303, %s304
      %p315 = scmp.eq.s32.totalorder %s38, 0
      %p316 = por %p314, %p315
      %p317 = scmp.ne.s32.totalorder %s303, %s304
      %p318 = scmp.eq.s32.totalorder %s39, 1
      %p319 = por %p317, %p318
      %p321 = scmp.ne.s32.totalorder %s304, %s320
      %p322 = scmp.eq.s32.totalorder %s39, 0
      %p323 = por %p321, %p322
      %s324 = ssub.s32 %s33, %s40
      %p325 = scmp.eq.s32.totalorder %s324, 0
      %s327 = sadd.s32 %s326, 1
      %s328 = scalar_select %p325, %s326, %s327
      %p331 = pneg %p325
      %p332 = scmp.eq.s32.totalorder %s33, 1
      %p333 = por %p331, %p332
      %p334 = scmp.ne.s32.totalorder %s326, %s329
      %p335 = scmp.eq.s32.totalorder %s33, 0
      %p336 = por %p334, %p335
      %p337 = scmp.ne.s32.totalorder %s326, %s329
      %p338 = scmp.eq.s32.totalorder %s38, 1
      %p339 = por %p337, %p338
      %p340 = scmp.ne.s32.totalorder %s329, %s330
      %p341 = scmp.eq.s32.totalorder %s38, 0
      %p342 = por %p340, %p341
      %p343 = scmp.ne.s32.totalorder %s329, %s330
      %p344 = scmp.eq.s32.totalorder %s39, 1
      %p345 = por %p343, %p344
      %p347 = scmp.ne.s32.totalorder %s330, %s346
      %p348 = scmp.eq.s32.totalorder %s39, 0
      %p349 = por %p347, %p348
      %s350 = ssub.s32 %s33, %s40
      %p351 = scmp.eq.s32.totalorder %s350, 0
      %s353 = sadd.s32 %s352, 1
      %s354 = scalar_select %p351, %s352, %s353
      %p357 = pneg %p351
      %p358 = scmp.eq.s32.totalorder %s33, 1
      %p359 = por %p357, %p358
      %p360 = scmp.ne.s32.totalorder %s352, %s355
      %p361 = scmp.eq.s32.totalorder %s33, 0
      %p362 = por %p360, %p361
      %p363 = scmp.ne.s32.totalorder %s352, %s355
      %p364 = scmp.eq.s32.totalorder %s38, 1
      %p365 = por %p363, %p364
      %p366 = scmp.ne.s32.totalorder %s355, %s356
      %p367 = scmp.eq.s32.totalorder %s38, 0
      %p368 = por %p366, %p367
      %p369 = scmp.ne.s32.totalorder %s355, %s356
      %p370 = scmp.eq.s32.totalorder %s39, 1
      %p371 = por %p369, %p370
      %p373 = scmp.ne.s32.totalorder %s356, %s372
      %p374 = scmp.eq.s32.totalorder %s39, 0
      %p375 = por %p373, %p374
      %s376 = ssub.s32 %s33, %s40
      %p377 = scmp.eq.s32.totalorder %s376, 0
      %s379 = sadd.s32 %s378, 1
      %s380 = scalar_select %p377, %s378, %s379
      %p383 = pneg %p377
      %p384 = scmp.eq.s32.totalorder %s33, 1
      %p385 = por %p383, %p384
      %p386 = scmp.ne.s32.totalorder %s378, %s381
      %p387 = scmp.eq.s32.totalorder %s33, 0
      %p388 = por %p386, %p387
      %p389 = scmp.ne.s32.totalorder %s378, %s381
      %p390 = scmp.eq.s32.totalorder %s38, 1
      %p391 = por %p389, %p390
      %p392 = scmp.ne.s32.totalorder %s381, %s382
      %p393 = scmp.eq.s32.totalorder %s38, 0
      %p394 = por %p392, %p393
      %p395 = scmp.ne.s32.totalorder %s381, %s382
      %p396 = scmp.eq.s32.totalorder %s39, 1
      %p397 = por %p395, %p396
      %p399 = scmp.ne.s32.totalorder %s382, %s398
      %p400 = scmp.eq.s32.totalorder %s39, 0
      %p401 = por %p399, %p400
      %p402 = scmp.le.s32.totalorder 1, %s33
      %p403 = scmp.lt.s32.totalorder %s33, 3
      %p404 = pnand %p402, %p403
      %p405 = pneg %p404
      // Predicated region
      $region9: #{encoder1_forward.1} parent=5 // pred_check
        _
      $region10: #{encoder1_forward.1} parent=5 // pred_check_branch
        %407 = sbr.rel (%p404) target = $region12
      $region11: #{encoder1_forward.1} parent=5 // pred_region
        %s408 = ssub.s32 %s33, 1
        // Predicated region
        $region13: #{encoder1_forward.1} parent=11 // pred_check
          %p409 = pneg %p80
        $region14: #{encoder1_forward.1} parent=11 // pred_check_branch
          %411 = sbr.rel (%p409) target = $region16
        $region15: #{encoder1_forward.1} parent=11 // pred_region
          %s413 = ssub.s32 32768, 32768
          %414 = vsyncadd [#allocation3], %s413
          %s415 = sshll.u32 [#allocation2], 4
          %s416 = int_to_ptr.vmem [resolvable:$true] %s415
          %421 = dma.hbm_to_vmem [thread:$0]  %s1, 32768, %s416, [#allocation3], 256, 256, 16
        $region16: #{encoder1_forward.1} parent=11 // pred_fallthru
          _
        // Predicated region
        $region17: #{encoder1_forward.1} parent=11 // pred_check
          %p422 = pneg %p101
        $region18: #{encoder1_forward.1} parent=11 // pred_check_branch
          %424 = sbr.rel (%p422) target = $region20
        $region19: #{encoder1_forward.1} parent=11 // pred_region
          _
        $region20: #{encoder1_forward.1} parent=11 // pred_fallthru
          _
        // Predicated region
        $region21: #{encoder1_forward.1} parent=11 // pred_check
          %p425 = pneg %p122
        $region22: #{encoder1_forward.1} parent=11 // pred_check_branch
          %427 = sbr.rel (%p425) target = $region24
        $region23: #{encoder1_forward.1} parent=11 // pred_region
          _
        $region24: #{encoder1_forward.1} parent=11 // pred_fallthru
          _
        // Predicated region
        $region25: #{encoder1_forward.1} parent=11 // pred_check
          %p428 = pneg %p143
        $region26: #{encoder1_forward.1} parent=11 // pred_check_branch
          %430 = sbr.rel (%p428) target = $region28
        $region27: #{encoder1_forward.1} parent=11 // pred_region
          %s432 = ssub.s32 1024, 1024
          %433 = vsyncadd [#allocation6], %s432
          %s434 = sshll.u32 [#allocation5], 4
          %s435 = int_to_ptr.vmem [resolvable:$true] %s434
          %440 = dma.hbm_to_vmem [thread:$0]  %s4, 1024, %s435, [#allocation6], 64, 64, 4
        $region28: #{encoder1_forward.1} parent=11 // pred_fallthru
          _
        // Predicated region
        $region29: #{encoder1_forward.1} parent=11 // pred_check
          %p441 = pneg %p164
        $region30: #{encoder1_forward.1} parent=11 // pred_check_branch
          %443 = sbr.rel (%p441) target = $region32
        $region31: #{encoder1_forward.1} parent=11 // pred_region
          _
        $region32: #{encoder1_forward.1} parent=11 // pred_fallthru
          _
        // Predicated region
        $region33: #{encoder1_forward.1} parent=11 // pred_check
          %p444 = pneg %p185
        $region34: #{encoder1_forward.1} parent=11 // pred_check_branch
          %446 = sbr.rel (%p444) target = $region36
        $region35: #{encoder1_forward.1} parent=11 // pred_region
          _
        $region36: #{encoder1_forward.1} parent=11 // pred_fallthru
          _
        // Predicated region
        $region37: #{encoder1_forward.1} parent=11 // pred_check
          %p447 = pneg %p206
        $region38: #{encoder1_forward.1} parent=11 // pred_check_branch
          %449 = sbr.rel (%p447) target = $region40
        $region39: #{encoder1_forward.1} parent=11 // pred_region
          _
        $region40: #{encoder1_forward.1} parent=11 // pred_fallthru
          _
        // Predicated region
        $region41: #{encoder1_forward.1} parent=11 // pred_check
          %p450 = pneg %p227
        $region42: #{encoder1_forward.1} parent=11 // pred_check_branch
          %452 = sbr.rel (%p450) target = $region44
        $region43: #{encoder1_forward.1} parent=11 // pred_region
          _
        $region44: #{encoder1_forward.1} parent=11 // pred_fallthru
          _
        // Predicated region
        $region45: #{encoder1_forward.1} parent=11 // pred_check
          %p453 = pneg %p248
        $region46: #{encoder1_forward.1} parent=11 // pred_check_branch
          %455 = sbr.rel (%p453) target = $region48
        $region47: #{encoder1_forward.1} parent=11 // pred_region
          _
        $region48: #{encoder1_forward.1} parent=11 // pred_fallthru
          _
        // Predicated region
        $region49: #{encoder1_forward.1} parent=11 // pred_check
          %p456 = pneg %p269
        $region50: #{encoder1_forward.1} parent=11 // pred_check_branch
          %458 = sbr.rel (%p456) target = $region52
        $region51: #{encoder1_forward.1} parent=11 // pred_region
          _
        $region52: #{encoder1_forward.1} parent=11 // pred_fallthru
          _
        // Predicated region
        $region53: #{encoder1_forward.1} parent=11 // pred_check
          %p459 = pneg %p290
        $region54: #{encoder1_forward.1} parent=11 // pred_check_branch
          %461 = sbr.rel (%p459) target = $region56
        $region55: #{encoder1_forward.1} parent=11 // pred_region
          _
        $region56: #{encoder1_forward.1} parent=11 // pred_fallthru
          _
      $region12: #{encoder1_forward.1} parent=5 // pred_fallthru
        _
      %p462 = scmp.lt.s32.totalorder %s33, 2
      // Predicated region
      $region57: #{encoder1_forward.1} parent=5 // pred_check
        %p463 = pneg %p462
      $region58: #{encoder1_forward.1} parent=5 // pred_check_branch
        %465 = sbr.rel (%p463) target = $region60
      $region59: #{encoder1_forward.1} parent=5 // pred_region
        // Predicated region
        $region61: #{encoder1_forward.1} parent=59 // pred_check
          %p466 = pneg %p53
        $region62: #{encoder1_forward.1} parent=59 // pred_check_branch
          %468 = sbr.rel (%p466) target = $region64
        $region63: #{encoder1_forward.1} parent=59 // pred_region
          %p469 = scmp.lt.s32.totalorder %s33, 1
          %s470 = scalar_select %p469, %s33, 1
          %s471 = smul.addr %s470, 32
          %s472 = smul.addr %s471, 8
          %s473 = scalar_lea.vmem %s0, %s472
        $region64: #{encoder1_forward.1} parent=59 // pred_fallthru
          _
      $region60: #{encoder1_forward.1} parent=5 // pred_fallthru
        _
      %p474 = scmp.le.s32.totalorder 1, %s33
      %p475 = scmp.lt.s32.totalorder %s33, 3
      %p476 = pnand %p474, %p475
      %p477 = pneg %p476
      // Predicated region
      $region65: #{encoder1_forward.1} parent=5 // pred_check
        _
      $region66: #{encoder1_forward.1} parent=5 // pred_check_branch
        %479 = sbr.rel (%p476) target = $region68
      $region67: #{encoder1_forward.1} parent=5 // pred_region
        %s480 = ssub.s32 %s33, 1
        // Predicated region
        $region69: #{encoder1_forward.1} parent=67 // pred_check
          %p481 = pneg %p80
        $region70: #{encoder1_forward.1} parent=67 // pred_check_branch
          %483 = sbr.rel (%p481) target = $region72
        $region71: #{encoder1_forward.1} parent=67 // pred_region
          %484 = dma.done [#allocation3], 32768
        $region72: #{encoder1_forward.1} parent=67 // pred_fallthru
          _
        // Predicated region
        $region73: #{encoder1_forward.1} parent=67 // pred_check
          %p485 = pneg %p143
        $region74: #{encoder1_forward.1} parent=67 // pred_check_branch
          %487 = sbr.rel (%p485) target = $region76
        $region75: #{encoder1_forward.1} parent=67 // pred_region
          %488 = dma.done [#allocation6], 1024
        $region76: #{encoder1_forward.1} parent=67 // pred_fallthru
          _
        %p489 = scmp.lt.s32.totalorder %s38, 1
        %s490 = scalar_select %p489, %s38, 1
        %s491 = smul.addr %s490, 32
        %s492 = smul.addr %s491, 8
        %s493 = scalar_lea.vmem %s0, %s492
        %p494 = pneg %p59
        %p495 = pneg %p56
        %p496 = pneg %p80
        %p497 = pneg %p77
        %p498 = pneg %p101
        %p499 = pneg %p98
        %p500 = pneg %p122
        %p501 = pneg %p119
        %p502 = pneg %p143
        %p503 = pneg %p140
        %p504 = pneg %p164
        %p505 = pneg %p161
        %p506 = pneg %p185
        %p507 = pneg %p182
        %p508 = pneg %p206
        %p509 = pneg %p203
        %p510 = pneg %p227
        %p511 = pneg %p224
        %p512 = pneg %p248
        %p513 = pneg %p245
        %p514 = pneg %p269
        %p515 = pneg %p266
        %p516 = pneg %p290
        %p517 = pneg %p287
        %p518 = pneg %p316
        %p519 = pneg %p313
        %s520 = sand.u32 %s303, 1
        %s521 = scalar_lea.sflag [#allocation4], %s520
        %s522 = sand.u32 %s303, 1
        %s523 = smul.addr %s522, 64
        %s524 = scalar_lea.vmem [#allocation7], %s523
        %p525 = pneg %p342
        %p526 = pneg %p339
        %s527 = sand.u32 %s38, 1
        %s528 = scalar_lea.sflag [#allocation9], %s527
        %s529 = sand.u32 %s329, 1
        %s530 = smul.addr %s529, 16
        %s531 = scalar_lea.vmem [#allocation8], %s530
        %p532 = pneg %p368
        %p533 = pneg %p365
        %s534 = sand.u32 %s38, 1
        %s535 = scalar_lea.sflag [#allocation9], %s534
        %s536 = sand.u32 %s355, 1
        %s537 = smul.addr %s536, 16
        %s538 = scalar_lea.vmem [#allocation10], %s537
        %p539 = pneg %p394
        %p540 = pneg %p391
        %s541 = sand.u32 %s381, 1
        %s542 = scalar_lea.sflag [#allocation12], %s541
        %s543 = sand.u32 %s381, 1
        %s544 = smul.addr %s543, 16
        %s545 = scalar_lea.vmem [#allocation11], %s544
        %p546 = scmp.lt.s32.totalorder %s38, 1
        %s547 = scalar_select %p546, %s38, 1
        %s548 = smul.addr %s547, 32
        %s549 = smul.addr %s548, 8
        %s550 = scalar_lea.vmem %s0, %s549
        %v551 = vld [vmem:[%s550] sm:$0xff]
        %v552 = vld [vmem:[%s550 + $0x8] sm:$0xff]
        %v553 = vld [vmem:[%s550 + $0x10] sm:$0xff]
        %v554 = vld [vmem:[%s550 + $0x18] sm:$0xff]
        %v555 = vld [vmem:[%s550 + $0x20] sm:$0xff]
        %v556 = vld [vmem:[%s550 + $0x28] sm:$0xff]
        %v557 = vld [vmem:[%s550 + $0x30] sm:$0xff]
        %v558 = vld [vmem:[%s550 + $0x38] sm:$0xff]
        %v559 = vld [vmem:[%s550 + $0x40] sm:$0xff]
        %v560 = vld [vmem:[%s550 + $0x48] sm:$0xff]
        %v561 = vld [vmem:[%s550 + $0x50] sm:$0xff]
        %v562 = vld [vmem:[%s550 + $0x58] sm:$0xff]
        %v563 = vld [vmem:[%s550 + $0x60] sm:$0xff]
        %v564 = vld [vmem:[%s550 + $0x68] sm:$0xff]
        %v565 = vld [vmem:[%s550 + $0x70] sm:$0xff]
        %v566 = vld [vmem:[%s550 + $0x78] sm:$0xff]
        %v567 = vld [vmem:[%s550 + $0x80] sm:$0xff]
        %v568 = vld [vmem:[%s550 + $0x88] sm:$0xff]
        %v569 = vld [vmem:[%s550 + $0x90] sm:$0xff]
        %v570 = vld [vmem:[%s550 + $0x98] sm:$0xff]
        %v571 = vld [vmem:[%s550 + $0xa0] sm:$0xff]
        %v572 = vld [vmem:[%s550 + $0xa8] sm:$0xff]
        %v573 = vld [vmem:[%s550 + $0xb0] sm:$0xff]
        %v574 = vld [vmem:[%s550 + $0xb8] sm:$0xff]
        %v575 = vld [vmem:[%s550 + $0xc0] sm:$0xff]
        %v576 = vld [vmem:[%s550 + $0xc8] sm:$0xff]
        %v577 = vld [vmem:[%s550 + $0xd0] sm:$0xff]
        %v578 = vld [vmem:[%s550 + $0xd8] sm:$0xff]
        %v579 = vld [vmem:[%s550 + $0xe0] sm:$0xff]
        %v580 = vld [vmem:[%s550 + $0xe8] sm:$0xff]
        %v581 = vld [vmem:[%s550 + $0xf0] sm:$0xff]
        %v582 = vld [vmem:[%s550 + $0xf8] sm:$0xff]
        %v583 = vld [vmem:[%s5] sm:$0x1]
        %v584 = vld [vmem:[#allocation2] sm:$0xff]
        %v585 = vld [vmem:[#allocation2 + $0x8] sm:$0xff]
        %v586 = vld [vmem:[#allocation2 + $0x10] sm:$0xff]
        %v587 = vld [vmem:[#allocation2 + $0x18] sm:$0xff]
        %v588 = vld [vmem:[#allocation2 + $0x20] sm:$0xff]
        %v589 = vld [vmem:[#allocation2 + $0x28] sm:$0xff]
        %v590 = vld [vmem:[#allocation2 + $0x30] sm:$0xff]
        %v591 = vld [vmem:[#allocation2 + $0x38] sm:$0xff]
        %v592 = vld [vmem:[#allocation2 + $0x40] sm:$0xff]
        %v593 = vld [vmem:[#allocation2 + $0x48] sm:$0xff]
        %v594 = vld [vmem:[#allocation2 + $0x50] sm:$0xff]
        %v595 = vld [vmem:[#allocation2 + $0x58] sm:$0xff]
        %v596 = vld [vmem:[#allocation2 + $0x60] sm:$0xff]
        %v597 = vld [vmem:[#allocation2 + $0x68] sm:$0xff]
        %v598 = vld [vmem:[#allocation2 + $0x70] sm:$0xff]
        %v599 = vld [vmem:[#allocation2 + $0x78] sm:$0xff]
        %v600 = vld [vmem:[#allocation2 + $0x80] sm:$0xff]
        %v601 = vld [vmem:[#allocation2 + $0x88] sm:$0xff]
        %v602 = vld [vmem:[#allocation2 + $0x90] sm:$0xff]
        %v603 = vld [vmem:[#allocation2 + $0x98] sm:$0xff]
        %v604 = vld [vmem:[#allocation2 + $0xa0] sm:$0xff]
        %v605 = vld [vmem:[#allocation2 + $0xa8] sm:$0xff]
        %v606 = vld [vmem:[#allocation2 + $0xb0] sm:$0xff]
        %v607 = vld [vmem:[#allocation2 + $0xb8] sm:$0xff]
        %v608 = vld [vmem:[#allocation2 + $0xc0] sm:$0xff]
        %v609 = vld [vmem:[#allocation2 + $0xc8] sm:$0xff]
        %v610 = vld [vmem:[#allocation2 + $0xd0] sm:$0xff]
        %v611 = vld [vmem:[#allocation2 + $0xd8] sm:$0xff]
        %v612 = vld [vmem:[#allocation2 + $0xe0] sm:$0xff]
        %v613 = vld [vmem:[#allocation2 + $0xe8] sm:$0xff]
        %v614 = vld [vmem:[#allocation2 + $0xf0] sm:$0xff]
        %v615 = vld [vmem:[#allocation2 + $0xf8] sm:$0xff]
        %v616 = vld [vmem:[#allocation2 + $0x100] sm:$0xff]
        %v617 = vld [vmem:[#allocation2 + $0x108] sm:$0xff]
        %v618 = vld [vmem:[#allocation2 + $0x110] sm:$0xff]
        %v619 = vld [vmem:[#allocation2 + $0x118] sm:$0xff]
        %v620 = vld [vmem:[#allocation2 + $0x120] sm:$0xff]
        %v621 = vld [vmem:[#allocation2 + $0x128] sm:$0xff]
        %v622 = vld [vmem:[#allocation2 + $0x130] sm:$0xff]
        %v623 = vld [vmem:[#allocation2 + $0x138] sm:$0xff]
        %v624 = vld [vmem:[#allocation2 + $0x140] sm:$0xff]
        %v625 = vld [vmem:[#allocation2 + $0x148] sm:$0xff]
        %v626 = vld [vmem:[#allocation2 + $0x150] sm:$0xff]
        %v627 = vld [vmem:[#allocation2 + $0x158] sm:$0xff]
        %v628 = vld [vmem:[#allocation2 + $0x160] sm:$0xff]
        %v629 = vld [vmem:[#allocation2 + $0x168] sm:$0xff]
        %v630 = vld [vmem:[#allocation2 + $0x170] sm:$0xff]
        %v631 = vld [vmem:[#allocation2 + $0x178] sm:$0xff]
        %v632 = vld [vmem:[#allocation2 + $0x180] sm:$0xff]
        %v633 = vld [vmem:[#allocation2 + $0x188] sm:$0xff]
        %v634 = vld [vmem:[#allocation2 + $0x190] sm:$0xff]
        %v635 = vld [vmem:[#allocation2 + $0x198] sm:$0xff]
        %v636 = vld [vmem:[#allocation2 + $0x1a0] sm:$0xff]
        %v637 = vld [vmem:[#allocation2 + $0x1a8] sm:$0xff]
        %v638 = vld [vmem:[#allocation2 + $0x1b0] sm:$0xff]
        %v639 = vld [vmem:[#allocation2 + $0x1b8] sm:$0xff]
        %v640 = vld [vmem:[#allocation2 + $0x1c0] sm:$0xff]
        %v641 = vld [vmem:[#allocation2 + $0x1c8] sm:$0xff]
        %v642 = vld [vmem:[#allocation2 + $0x1d0] sm:$0xff]
        %v643 = vld [vmem:[#allocation2 + $0x1d8] sm:$0xff]
        %v644 = vld [vmem:[#allocation2 + $0x1e0] sm:$0xff]
        %v645 = vld [vmem:[#allocation2 + $0x1e8] sm:$0xff]
        %v646 = vld [vmem:[#allocation2 + $0x1f0] sm:$0xff]
        %v647 = vld [vmem:[#allocation2 + $0x1f8] sm:$0xff]
        %v648 = vld [vmem:[#allocation2 + $0x200] sm:$0xff]
        %v649 = vld [vmem:[#allocation2 + $0x208] sm:$0xff]
        %v650 = vld [vmem:[#allocation2 + $0x210] sm:$0xff]
        %v651 = vld [vmem:[#allocation2 + $0x218] sm:$0xff]
        %v652 = vld [vmem:[#allocation2 + $0x220] sm:$0xff]
        %v653 = vld [vmem:[#allocation2 + $0x228] sm:$0xff]
        %v654 = vld [vmem:[#allocation2 + $0x230] sm:$0xff]
        %v655 = vld [vmem:[#allocation2 + $0x238] sm:$0xff]
        %v656 = vld [vmem:[#allocation2 + $0x240] sm:$0xff]
        %v657 = vld [vmem:[#allocation2 + $0x248] sm:$0xff]
        %v658 = vld [vmem:[#allocation2 + $0x250] sm:$0xff]
        %v659 = vld [vmem:[#allocation2 + $0x258] sm:$0xff]
        %v660 = vld [vmem:[#allocation2 + $0x260] sm:$0xff]
        %v661 = vld [vmem:[#allocation2 + $0x268] sm:$0xff]
        %v662 = vld [vmem:[#allocation2 + $0x270] sm:$0xff]
        %v663 = vld [vmem:[#allocation2 + $0x278] sm:$0xff]
        %v664 = vld [vmem:[#allocation2 + $0x280] sm:$0xff]
        %v665 = vld [vmem:[#allocation2 + $0x288] sm:$0xff]
        %v666 = vld [vmem:[#allocation2 + $0x290] sm:$0xff]
        %v667 = vld [vmem:[#allocation2 + $0x298] sm:$0xff]
        %v668 = vld [vmem:[#allocation2 + $0x2a0] sm:$0xff]
        %v669 = vld [vmem:[#allocation2 + $0x2a8] sm:$0xff]
        %v670 = vld [vmem:[#allocation2 + $0x2b0] sm:$0xff]
        %v671 = vld [vmem:[#allocation2 + $0x2b8] sm:$0xff]
        %v672 = vld [vmem:[#allocation2 + $0x2c0] sm:$0xff]
        %v673 = vld [vmem:[#allocation2 + $0x2c8] sm:$0xff]
        %v674 = vld [vmem:[#allocation2 + $0x2d0] sm:$0xff]
        %v675 = vld [vmem:[#allocation2 + $0x2d8] sm:$0xff]
        %v676 = vld [vmem:[#allocation2 + $0x2e0] sm:$0xff]
        %v677 = vld [vmem:[#allocation2 + $0x2e8] sm:$0xff]
        %v678 = vld [vmem:[#allocation2 + $0x2f0] sm:$0xff]
        %v679 = vld [vmem:[#allocation2 + $0x2f8] sm:$0xff]
        %v680 = vld [vmem:[#allocation2 + $0x300] sm:$0xff]
        %v681 = vld [vmem:[#allocation2 + $0x308] sm:$0xff]
        %v682 = vld [vmem:[#allocation2 + $0x310] sm:$0xff]
        %v683 = vld [vmem:[#allocation2 + $0x318] sm:$0xff]
        %v684 = vld [vmem:[#allocation2 + $0x320] sm:$0xff]
        %v685 = vld [vmem:[#allocation2 + $0x328] sm:$0xff]
        %v686 = vld [vmem:[#allocation2 + $0x330] sm:$0xff]
        %v687 = vld [vmem:[#allocation2 + $0x338] sm:$0xff]
        %v688 = vld [vmem:[#allocation2 + $0x340] sm:$0xff]
        %v689 = vld [vmem:[#allocation2 + $0x348] sm:$0xff]
        %v690 = vld [vmem:[#allocation2 + $0x350] sm:$0xff]
        %v691 = vld [vmem:[#allocation2 + $0x358] sm:$0xff]
        %v692 = vld [vmem:[#allocation2 + $0x360] sm:$0xff]
        %v693 = vld [vmem:[#allocation2 + $0x368] sm:$0xff]
        %v694 = vld [vmem:[#allocation2 + $0x370] sm:$0xff]
        %v695 = vld [vmem:[#allocation2 + $0x378] sm:$0xff]
        %v696 = vld [vmem:[#allocation2 + $0x380] sm:$0xff]
        %v697 = vld [vmem:[#allocation2 + $0x388] sm:$0xff]
        %v698 = vld [vmem:[#allocation2 + $0x390] sm:$0xff]
        %v699 = vld [vmem:[#allocation2 + $0x398] sm:$0xff]
        %v700 = vld [vmem:[#allocation2 + $0x3a0] sm:$0xff]
        %v701 = vld [vmem:[#allocation2 + $0x3a8] sm:$0xff]
        %v702 = vld [vmem:[#allocation2 + $0x3b0] sm:$0xff]
        %v703 = vld [vmem:[#allocation2 + $0x3b8] sm:$0xff]
        %v704 = vld [vmem:[#allocation2 + $0x3c0] sm:$0xff]
        %v705 = vld [vmem:[#allocation2 + $0x3c8] sm:$0xff]
        %v706 = vld [vmem:[#allocation2 + $0x3d0] sm:$0xff]
        %v707 = vld [vmem:[#allocation2 + $0x3d8] sm:$0xff]
        %v708 = vld [vmem:[#allocation2 + $0x3e0] sm:$0xff]
        %v709 = vld [vmem:[#allocation2 + $0x3e8] sm:$0xff]
        %v710 = vld [vmem:[#allocation2 + $0x3f0] sm:$0xff]
        %v711 = vld [vmem:[#allocation2 + $0x3f8] sm:$0xff]
        %v712 = vld [vmem:[#allocation2 + $0x400] sm:$0xff]
        %v713 = vld [vmem:[#allocation2 + $0x408] sm:$0xff]
        %v714 = vld [vmem:[#allocation2 + $0x410] sm:$0xff]
        %v715 = vld [vmem:[#allocation2 + $0x418] sm:$0xff]
        %v716 = vld [vmem:[#allocation2 + $0x420] sm:$0xff]
        %v717 = vld [vmem:[#allocation2 + $0x428] sm:$0xff]
        %v718 = vld [vmem:[#allocation2 + $0x430] sm:$0xff]
        %v719 = vld [vmem:[#allocation2 + $0x438] sm:$0xff]
        %v720 = vld [vmem:[#allocation2 + $0x440] sm:$0xff]
        %v721 = vld [vmem:[#allocation2 + $0x448] sm:$0xff]
        %v722 = vld [vmem:[#allocation2 + $0x450] sm:$0xff]
        %v723 = vld [vmem:[#allocation2 + $0x458] sm:$0xff]
        %v724 = vld [vmem:[#allocation2 + $0x460] sm:$0xff]
        %v725 = vld [vmem:[#allocation2 + $0x468] sm:$0xff]
        %v726 = vld [vmem:[#allocation2 + $0x470] sm:$0xff]
        %v727 = vld [vmem:[#allocation2 + $0x478] sm:$0xff]
        %v728 = vld [vmem:[#allocation2 + $0x480] sm:$0xff]
        %v729 = vld [vmem:[#allocation2 + $0x488] sm:$0xff]
        %v730 = vld [vmem:[#allocation2 + $0x490] sm:$0xff]
        %v731 = vld [vmem:[#allocation2 + $0x498] sm:$0xff]
        %v732 = vld [vmem:[#allocation2 + $0x4a0] sm:$0xff]
        %v733 = vld [vmem:[#allocation2 + $0x4a8] sm:$0xff]
        %v734 = vld [vmem:[#allocation2 + $0x4b0] sm:$0xff]
        %v735 = vld [vmem:[#allocation2 + $0x4b8] sm:$0xff]
        %v736 = vld [vmem:[#allocation2 + $0x4c0] sm:$0xff]
        %v737 = vld [vmem:[#allocation2 + $0x4c8] sm:$0xff]
        %v738 = vld [vmem:[#allocation2 + $0x4d0] sm:$0xff]
        %v739 = vld [vmem:[#allocation2 + $0x4d8] sm:$0xff]
        %v740 = vld [vmem:[#allocation2 + $0x4e0] sm:$0xff]
        %v741 = vld [vmem:[#allocation2 + $0x4e8] sm:$0xff]
        %v742 = vld [vmem:[#allocation2 + $0x4f0] sm:$0xff]
        %v743 = vld [vmem:[#allocation2 + $0x4f8] sm:$0xff]
        %v744 = vld [vmem:[#allocation2 + $0x500] sm:$0xff]
        %v745 = vld [vmem:[#allocation2 + $0x508] sm:$0xff]
        %v746 = vld [vmem:[#allocation2 + $0x510] sm:$0xff]
        %v747 = vld [vmem:[#allocation2 + $0x518] sm:$0xff]
        %v748 = vld [vmem:[#allocation2 + $0x520] sm:$0xff]
        %v749 = vld [vmem:[#allocation2 + $0x528] sm:$0xff]
        %v750 = vld [vmem:[#allocation2 + $0x530] sm:$0xff]
        %v751 = vld [vmem:[#allocation2 + $0x538] sm:$0xff]
        %v752 = vld [vmem:[#allocation2 + $0x540] sm:$0xff]
        %v753 = vld [vmem:[#allocation2 + $0x548] sm:$0xff]
        %v754 = vld [vmem:[#allocation2 + $0x550] sm:$0xff]
        %v755 = vld [vmem:[#allocation2 + $0x558] sm:$0xff]
        %v756 = vld [vmem:[#allocation2 + $0x560] sm:$0xff]
        %v757 = vld [vmem:[#allocation2 + $0x568] sm:$0xff]
        %v758 = vld [vmem:[#allocation2 + $0x570] sm:$0xff]
        %v759 = vld [vmem:[#allocation2 + $0x578] sm:$0xff]
        %v760 = vld [vmem:[#allocation2 + $0x580] sm:$0xff]
        %v761 = vld [vmem:[#allocation2 + $0x588] sm:$0xff]
        %v762 = vld [vmem:[#allocation2 + $0x590] sm:$0xff]
        %v763 = vld [vmem:[#allocation2 + $0x598] sm:$0xff]
        %v764 = vld [vmem:[#allocation2 + $0x5a0] sm:$0xff]
        %v765 = vld [vmem:[#allocation2 + $0x5a8] sm:$0xff]
        %v766 = vld [vmem:[#allocation2 + $0x5b0] sm:$0xff]
        %v767 = vld [vmem:[#allocation2 + $0x5b8] sm:$0xff]
        %v768 = vld [vmem:[#allocation2 + $0x5c0] sm:$0xff]
        %v769 = vld [vmem:[#allocation2 + $0x5c8] sm:$0xff]
        %v770 = vld [vmem:[#allocation2 + $0x5d0] sm:$0xff]
        %v771 = vld [vmem:[#allocation2 + $0x5d8] sm:$0xff]
        %v772 = vld [vmem:[#allocation2 + $0x5e0] sm:$0xff]
        %v773 = vld [vmem:[#allocation2 + $0x5e8] sm:$0xff]
        %v774 = vld [vmem:[#allocation2 + $0x5f0] sm:$0xff]
        %v775 = vld [vmem:[#allocation2 + $0x5f8] sm:$0xff]
        %v776 = vld [vmem:[#allocation2 + $0x600] sm:$0xff]
        %v777 = vld [vmem:[#allocation2 + $0x608] sm:$0xff]
        %v778 = vld [vmem:[#allocation2 + $0x610] sm:$0xff]
        %v779 = vld [vmem:[#allocation2 + $0x618] sm:$0xff]
        %v780 = vld [vmem:[#allocation2 + $0x620] sm:$0xff]
        %v781 = vld [vmem:[#allocation2 + $0x628] sm:$0xff]
        %v782 = vld [vmem:[#allocation2 + $0x630] sm:$0xff]
        %v783 = vld [vmem:[#allocation2 + $0x638] sm:$0xff]
        %v784 = vld [vmem:[#allocation2 + $0x640] sm:$0xff]
        %v785 = vld [vmem:[#allocation2 + $0x648] sm:$0xff]
        %v786 = vld [vmem:[#allocation2 + $0x650] sm:$0xff]
        %v787 = vld [vmem:[#allocation2 + $0x658] sm:$0xff]
        %v788 = vld [vmem:[#allocation2 + $0x660] sm:$0xff]
        %v789 = vld [vmem:[#allocation2 + $0x668] sm:$0xff]
        %v790 = vld [vmem:[#allocation2 + $0x670] sm:$0xff]
        %v791 = vld [vmem:[#allocation2 + $0x678] sm:$0xff]
        %v792 = vld [vmem:[#allocation2 + $0x680] sm:$0xff]
        %v793 = vld [vmem:[#allocation2 + $0x688] sm:$0xff]
        %v794 = vld [vmem:[#allocation2 + $0x690] sm:$0xff]
        %v795 = vld [vmem:[#allocation2 + $0x698] sm:$0xff]
        %v796 = vld [vmem:[#allocation2 + $0x6a0] sm:$0xff]
        %v797 = vld [vmem:[#allocation2 + $0x6a8] sm:$0xff]
        %v798 = vld [vmem:[#allocation2 + $0x6b0] sm:$0xff]
        %v799 = vld [vmem:[#allocation2 + $0x6b8] sm:$0xff]
        %v800 = vld [vmem:[#allocation2 + $0x6c0] sm:$0xff]
        %v801 = vld [vmem:[#allocation2 + $0x6c8] sm:$0xff]
        %v802 = vld [vmem:[#allocation2 + $0x6d0] sm:$0xff]
        %v803 = vld [vmem:[#allocation2 + $0x6d8] sm:$0xff]
        %v804 = vld [vmem:[#allocation2 + $0x6e0] sm:$0xff]
        %v805 = vld [vmem:[#allocation2 + $0x6e8] sm:$0xff]
        %v806 = vld [vmem:[#allocation2 + $0x6f0] sm:$0xff]
        %v807 = vld [vmem:[#allocation2 + $0x6f8] sm:$0xff]
        %v808 = vld [vmem:[#allocation2 + $0x700] sm:$0xff]
        %v809 = vld [vmem:[#allocation2 + $0x708] sm:$0xff]
        %v810 = vld [vmem:[#allocation2 + $0x710] sm:$0xff]
        %v811 = vld [vmem:[#allocation2 + $0x718] sm:$0xff]
        %v812 = vld [vmem:[#allocation2 + $0x720] sm:$0xff]
        %v813 = vld [vmem:[#allocation2 + $0x728] sm:$0xff]
        %v814 = vld [vmem:[#allocation2 + $0x730] sm:$0xff]
        %v815 = vld [vmem:[#allocation2 + $0x738] sm:$0xff]
        %v816 = vld [vmem:[#allocation2 + $0x740] sm:$0xff]
        %v817 = vld [vmem:[#allocation2 + $0x748] sm:$0xff]
        %v818 = vld [vmem:[#allocation2 + $0x750] sm:$0xff]
        %v819 = vld [vmem:[#allocation2 + $0x758] sm:$0xff]
        %v820 = vld [vmem:[#allocation2 + $0x760] sm:$0xff]
        %v821 = vld [vmem:[#allocation2 + $0x768] sm:$0xff]
        %v822 = vld [vmem:[#allocation2 + $0x770] sm:$0xff]
        %v823 = vld [vmem:[#allocation2 + $0x778] sm:$0xff]
        %v824 = vld [vmem:[#allocation2 + $0x780] sm:$0xff]
        %v825 = vld [vmem:[#allocation2 + $0x788] sm:$0xff]
        %v826 = vld [vmem:[#allocation2 + $0x790] sm:$0xff]
        %v827 = vld [vmem:[#allocation2 + $0x798] sm:$0xff]
        %v828 = vld [vmem:[#allocation2 + $0x7a0] sm:$0xff]
        %v829 = vld [vmem:[#allocation2 + $0x7a8] sm:$0xff]
        %v830 = vld [vmem:[#allocation2 + $0x7b0] sm:$0xff]
        %v831 = vld [vmem:[#allocation2 + $0x7b8] sm:$0xff]
        %v832 = vld [vmem:[#allocation2 + $0x7c0] sm:$0xff]
        %v833 = vld [vmem:[#allocation2 + $0x7c8] sm:$0xff]
        %v834 = vld [vmem:[#allocation2 + $0x7d0] sm:$0xff]
        %v835 = vld [vmem:[#allocation2 + $0x7d8] sm:$0xff]
        %v836 = vld [vmem:[#allocation2 + $0x7e0] sm:$0xff]
        %v837 = vld [vmem:[#allocation2 + $0x7e8] sm:$0xff]
        %v838 = vld [vmem:[#allocation2 + $0x7f0] sm:$0xff]
        %v839 = vld [vmem:[#allocation2 + $0x7f8] sm:$0xff]
        %840 = vmatprep.subr.mxu0 0.0
        %841 = vmatpush1.msra.mxu0 %v551
        %842 = vmatprep.subr.mxu0 0.0
        %843 = vmatpush1.msra.mxu0 %v552
        %844 = vmatprep.subr.mxu0 0.0
        %845 = vmatpush1.msra.mxu0 %v553
        %846 = vmatprep.subr.mxu0 0.0
        %847 = vmatpush1.msra.mxu0 %v554
        %848 = vmatprep.subr.mxu0 0.0
        %849 = vmatpush1.msra.mxu0 %v555
        %850 = vmatprep.subr.mxu0 0.0
        %851 = vmatpush1.msra.mxu0 %v556
        %852 = vmatprep.subr.mxu0 0.0
        %853 = vmatpush1.msra.mxu0 %v557
        %854 = vmatprep.subr.mxu0 0.0
        %855 = vmatpush1.msra.mxu0 %v558
        %856 = vmatprep.subr.mxu0 0.0
        %857 = vmatpush1.msra.mxu0 %v559
        %858 = vmatprep.subr.mxu0 0.0
        %859 = vmatpush1.msra.mxu0 %v560
        %860 = vmatprep.subr.mxu0 0.0
        %861 = vmatpush1.msra.mxu0 %v561
        %862 = vmatprep.subr.mxu0 0.0
        %863 = vmatpush1.msra.mxu0 %v562
        %864 = vmatprep.subr.mxu0 0.0
        %865 = vmatpush1.msra.mxu0 %v563
        %866 = vmatprep.subr.mxu0 0.0
        %867 = vmatpush1.msra.mxu0 %v564
        %868 = vmatprep.subr.mxu0 0.0
        %869 = vmatpush1.msra.mxu0 %v565
        %870 = vmatprep.subr.mxu0 0.0
        %871 = vmatpush1.msra.mxu0 %v566
        %872 = vmatprep.subr.mxu0 0.0
        %873 = vmatpush1.msra.mxu0 %v567
        %874 = vmatprep.subr.mxu0 0.0
        %875 = vmatpush1.msra.mxu0 %v568
        %876 = vmatprep.subr.mxu0 0.0
        %877 = vmatpush1.msra.mxu0 %v569
        %878 = vmatprep.subr.mxu0 0.0
        %879 = vmatpush1.msra.mxu0 %v570
        %880 = vmatprep.subr.mxu0 0.0
        %881 = vmatpush1.msra.mxu0 %v571
        %882 = vmatprep.subr.mxu0 0.0
        %883 = vmatpush1.msra.mxu0 %v572
        %884 = vmatprep.subr.mxu0 0.0
        %885 = vmatpush1.msra.mxu0 %v573
        %886 = vmatprep.subr.mxu0 0.0
        %887 = vmatpush1.msra.mxu0 %v574
        %888 = vmatprep.subr.mxu0 0.0
        %889 = vmatpush1.msra.mxu0 %v575
        %890 = vmatprep.subr.mxu0 0.0
        %891 = vmatpush1.msra.mxu0 %v576
        %892 = vmatprep.subr.mxu0 0.0
        %893 = vmatpush1.msra.mxu0 %v577
        %894 = vmatprep.subr.mxu0 0.0
        %895 = vmatpush1.msra.mxu0 %v578
        %896 = vmatprep.subr.mxu0 0.0
        %897 = vmatpush1.msra.mxu0 %v579
        %898 = vmatprep.subr.mxu0 0.0
        %899 = vmatpush1.msra.mxu0 %v580
        %900 = vmatprep.subr.mxu0 0.0
        %901 = vmatpush1.msra.mxu0 %v581
        %902 = vmatprep.subr.mxu0 0.0
        %903 = vmatpush1.msra.mxu0 %v582
        %904 = vmatprep.mubr.f32.mxu0 %v585
        %905 = vmatmul.mubr.f32.gmra.mrb[0].mxu0 %v584
        %v906 = vpop.f32.mrb[0].mxu0
        %v907 = vadd.f32 0.0, %v906
        %v908 = vpop.f32.mrb[0].mxu0
        %909 = vmatprep.mubr.f32.mxu0 %v587
        %910 = vmatmul.mubr.f32.gmra.mrb[0].mxu0 %v586
        %v911 = vpop.f32.mrb[0].mxu0
        %v912 = vadd.f32 0.0, %v911
        %v913 = vpop.f32.mrb[0].mxu0
        %914 = vmatprep.mubr.f32.mxu0 %v589
        %915 = vmatmul.mubr.f32.gmra.mrb[0].mxu0 %v588
        %v916 = vpop.f32.mrb[0].mxu0
        %v917 = vadd.f32 0.0, %v916
        %v918 = vpop.f32.mrb[0].mxu0
        %919 = vmatprep.mubr.f32.mxu0 %v591
        %920 = vmatmul.mubr.f32.gmra.mrb[0].mxu0 %v590
        %v921 = vpop.f32.mrb[0].mxu0
        %v922 = vadd.f32 0.0, %v921
        %v923 = vpop.f32.mrb[0].mxu0
        %924 = vmatprep.mubr.f32.mxu0 %v593
        %925 = vmatmul.mubr.f32.gmra.mrb[0].mxu0 %v592
        %v926 = vpop.f32.mrb[0].mxu0
        %v927 = vadd.f32 0.0, %v926
        %v928 = vpop.f32.mrb[0].mxu0
        %929 = vmatprep.mubr.f32.mxu0 %v595
        %930 = vmatmul.mubr.f32.gmra.mrb[0].mxu0 %v594
        %v931 = vpop.f32.mrb[0].mxu0
        %v932 = vadd.f32 0.0, %v931
        %v933 = vpop.f32.mrb[0].mxu0
        %934 = vmatprep.mubr.f32.mxu0 %v597
        %935 = vmatmul.mubr.f32.gmra.mrb[0].mxu0 %v596
        %v936 = vpop.f32.mrb[0].mxu0
        %v937 = vadd.f32 0.0, %v936
        %v938 = vpop.f32.mrb[0].mxu0
        %939 = vmatprep.mubr.f32.mxu0 %v599
        %940 = vmatmul.mubr.f32.gmra.mrb[0].mxu0 %v598
        %v941 = vpop.f32.mrb[0].mxu0
        %v942 = vadd.f32 0.0, %v941
        %v943 = vpop.f32.mrb[0].mxu0
        %944 = vmatprep.mubr.f32.mxu0 %v601
        %945 = vmatmul.mubr.f32.gmra.mrb[0].mxu0 %v600
        %v946 = vpop.f32.mrb[0].mxu0
        %v947 = vadd.f32 0.0, %v946
        %v948 = vpop.f32.mrb[0].mxu0
        %949 = vmatprep.mubr.f32.mxu0 %v603
        %950 = vmatmul.mubr.f32.gmra.mrb[0].mxu0 %v602
        %v951 = vpop.f32.mrb[0].mxu0
        %v952 = vadd.f32 0.0, %v951
        %v953 = vpop.f32.mrb[0].mxu0
        %954 = vmatprep.mubr.f32.mxu0 %v605
        %955 = vmatmul.mubr.f32.gmra.mrb[0].mxu0 %v604
        %v956 = vpop.f32.mrb[0].mxu0
        %v957 = vadd.f32 0.0, %v956
        %v958 = vpop.f32.mrb[0].mxu0
        %959 = vmatprep.mubr.f32.mxu0 %v607
        %960 = vmatmul.mubr.f32.gmra.mrb[0].mxu0 %v606
        %v961 = vpop.f32.mrb[0].mxu0
        %v962 = vadd.f32 0.0, %v961
        %v963 = vpop.f32.mrb[0].mxu0
        %964 = vmatprep.mubr.f32.mxu0 %v609
        %965 = vmatmul.mubr.f32.gmra.mrb[0].mxu0 %v608
        %v966 = vpop.f32.mrb[0].mxu0
        %v967 = vadd.f32 0.0, %v966
        %v968 = vpop.f32.mrb[0].mxu0
        %969 = vmatprep.mubr.f32.mxu0 %v611
        %970 = vmatmul.mubr.f32.gmra.mrb[0].mxu0 %v610
        %v971 = vpop.f32.mrb[0].mxu0
        %v972 = vadd.f32 0.0, %v971
        %v973 = vpop.f32.mrb[0].mxu0
        %974 = vmatprep.mubr.f32.mxu0 %v613
        %975 = vmatmul.mubr.f32.gmra.mrb[0].mxu0 %v612
        %v976 = vpop.f32.mrb[0].mxu0
        %v977 = vadd.f32 0.0, %v976
        %v978 = vpop.f32.mrb[0].mxu0
        %979 = vmatprep.mubr.f32.mxu0 %v615
        %980 = vmatmul.mubr.f32.gmra.mrb[0].mxu0 %v614
        %v981 = vpop.f32.mrb[0].mxu0
        %v982 = vadd.f32 0.0, %v981
        %v983 = vpop.f32.mrb[0].mxu0
        %984 = vmatprep.mubr.f32.mxu0 %v617
        %985 = vmatmul.mubr.f32.gmra.mrb[0].mxu0 %v616
        %v986 = vpop.f32.mrb[0].mxu0
        %v987 = vadd.f32 0.0, %v986
        %v988 = vpop.f32.mrb[0].mxu0
        %989 = vmatprep.mubr.f32.mxu0 %v619
        %990 = vmatmul.mubr.f32.gmra.mrb[0].mxu0 %v618
        %v991 = vpop.f32.mrb[0].mxu0
        %v992 = vadd.f32 0.0, %v991
        %v993 = vpop.f32.mrb[0].mxu0
        %994 = vmatprep.mubr.f32.mxu0 %v621
        %995 = vmatmul.mubr.f32.gmra.mrb[0].mxu0 %v620
        %v996 = vpop.f32.mrb[0].mxu0
        %v997 = vadd.f32 0.0, %v996
        %v998 = vpop.f32.mrb[0].mxu0
        %999 = vmatprep.mubr.f32.mxu0 %v623
        %1000 = vmatmul.mubr.f32.gmra.mrb[0].mxu0 %v622
        %v1001 = vpop.f32.mrb[0].mxu0
        %v1002 = vadd.f32 0.0, %v1001
        %v1003 = vpop.f32.mrb[0].mxu0
        %1004 = vmatprep.mubr.f32.mxu0 %v625
        %1005 = vmatmul.mubr.f32.gmra.mrb[0].mxu0 %v624
        %v1006 = vpop.f32.mrb[0].mxu0
        %v1007 = vadd.f32 0.0, %v1006
        %v1008 = vpop.f32.mrb[0].mxu0
        %1009 = vmatprep.mubr.f32.mxu0 %v627
        %1010 = vmatmul.mubr.f32.gmra.mrb[0].mxu0 %v626
        %v1011 = vpop.f32.mrb[0].mxu0
        %v1012 = vadd.f32 0.0, %v1011
        %v1013 = vpop.f32.mrb[0].mxu0
        %1014 = vmatprep.mubr.f32.mxu0 %v629
        %1015 = vmatmul.mubr.f32.gmra.mrb[0].mxu0 %v628
        %v1016 = vpop.f32.mrb[0].mxu0
        %v1017 = vadd.f32 0.0, %v1016
        %v1018 = vpop.f32.mrb[0].mxu0
        %1019 = vmatprep.mubr.f32.mxu0 %v631
        %1020 = vmatmul.mubr.f32.gmra.mrb[0].mxu0 %v630
        %v1021 = vpop.f32.mrb[0].mxu0
        %v1022 = vadd.f32 0.0, %v1021
        %v1023 = vpop.f32.mrb[0].mxu0
        %1024 = vmatprep.mubr.f32.mxu0 %v633
        %1025 = vmatmul.mubr.f32.gmra.mrb[0].mxu0 %v632
        %v1026 = vpop.f32.mrb[0].mxu0
        %v1027 = vadd.f32 0.0, %v1026
        %v1028 = vpop.f32.mrb[0].mxu0
        %1029 = vmatprep.mubr.f32.mxu0 %v635
        %1030 = vmatmul.mubr.f32.gmra.mrb[0].mxu0 %v634
        %v1031 = vpop.f32.mrb[0].mxu0
        %v1032 = vadd.f32 0.0, %v1031
        %v1033 = vpop.f32.mrb[0].mxu0
        %1034 = vmatprep.mubr.f32.mxu0 %v637
        %1035 = vmatmul.mubr.f32.gmra.mrb[0].mxu0 %v636
        %v1036 = vpop.f32.mrb[0].mxu0
        %v1037 = vadd.f32 0.0, %v1036
        %v1038 = vpop.f32.mrb[0].mxu0
        %1039 = vmatprep.mubr.f32.mxu0 %v639
        %1040 = vmatmul.mubr.f32.gmra.mrb[0].mxu0 %v638
        %v1041 = vpop.f32.mrb[0].mxu0
        %v1042 = vadd.f32 0.0, %v1041
        %v1043 = vpop.f32.mrb[0].mxu0
        %1044 = vmatprep.mubr.f32.mxu0 %v641
        %1045 = vmatmul.mubr.f32.gmra.mrb[0].mxu0 %v640
        %v1046 = vpop.f32.mrb[0].mxu0
        %v1047 = vadd.f32 0.0, %v1046
        %v1048 = vpop.f32.mrb[0].mxu0
        %1049 = vmatprep.mubr.f32.mxu0 %v643
        %1050 = vmatmul.mubr.f32.gmra.mrb[0].mxu0 %v642
        %v1051 = vpop.f32.mrb[0].mxu0
        %v1052 = vadd.f32 0.0, %v1051
        %v1053 = vpop.f32.mrb[0].mxu0
        %1054 = vmatprep.mubr.f32.mxu0 %v645
        %1055 = vmatmul.mubr.f32.gmra.mrb[0].mxu0 %v644
        %v1056 = vpop.f32.mrb[0].mxu0
        %v1057 = vadd.f32 0.0, %v1056
        %v1058 = vpop.f32.mrb[0].mxu0
        %1059 = vmatprep.mubr.f32.mxu0 %v647
        %1060 = vmatmul.mubr.f32.gmra.mrb[0].mxu0 %v646
        %v1061 = vpop.f32.mrb[0].mxu0
        %v1062 = vadd.f32 0.0, %v1061
        %v1063 = vpop.f32.mrb[0].mxu0
        %1064 = vmatprep.mubr.f32.mxu0 %v649
        %1065 = vmatmul.mubr.f32.gmra.mrb[0].mxu0 %v648
        %v1066 = vpop.f32.mrb[0].mxu0
        %v1067 = vadd.f32 0.0, %v1066
        %v1068 = vpop.f32.mrb[0].mxu0
        %1069 = vmatprep.mubr.f32.mxu0 %v651
        %1070 = vmatmul.mubr.f32.gmra.mrb[0].mxu0 %v650
        %v1071 = vpop.f32.mrb[0].mxu0
        %v1072 = vadd.f32 0.0, %v1071
        %v1073 = vpop.f32.mrb[0].mxu0
        %1074 = vmatprep.mubr.f32.mxu0 %v653
        %1075 = vmatmul.mubr.f32.gmra.mrb[0].mxu0 %v652
        %v1076 = vpop.f32.mrb[0].mxu0
        %v1077 = vadd.f32 0.0, %v1076
        %v1078 = vpop.f32.mrb[0].mxu0
        %1079 = vmatprep.mubr.f32.mxu0 %v655
        %1080 = vmatmul.mubr.f32.gmra.mrb[0].mxu0 %v654
        %v1081 = vpop.f32.mrb[0].mxu0
        %v1082 = vadd.f32 0.0, %v1081
        %v1083 = vpop.f32.mrb[0].mxu0
        %1084 = vmatprep.mubr.f32.mxu0 %v657
        %1085 = vmatmul.mubr.f32.gmra.mrb[0].mxu0 %v656
        %v1086 = vpop.f32.mrb[0].mxu0
        %v1087 = vadd.f32 0.0, %v1086
        %v1088 = vpop.f32.mrb[0].mxu0
        %1089 = vmatprep.mubr.f32.mxu0 %v659
        %1090 = vmatmul.mubr.f32.gmra.mrb[0].mxu0 %v658
        %v1091 = vpop.f32.mrb[0].mxu0
        %v1092 = vadd.f32 0.0, %v1091
        %v1093 = vpop.f32.mrb[0].mxu0
        %1094 = vmatprep.mubr.f32.mxu0 %v661
        %1095 = vmatmul.mubr.f32.gmra.mrb[0].mxu0 %v660
        %v1096 = vpop.f32.mrb[0].mxu0
        %v1097 = vadd.f32 0.0, %v1096
        %v1098 = vpop.f32.mrb[0].mxu0
        %1099 = vmatprep.mubr.f32.mxu0 %v663
        %1100 = vmatmul.mubr.f32.gmra.mrb[0].mxu0 %v662
        %v1101 = vpop.f32.mrb[0].mxu0
        %v1102 = vadd.f32 0.0, %v1101
        %v1103 = vpop.f32.mrb[0].mxu0
        %1104 = vmatprep.mubr.f32.mxu0 %v665
        %1105 = vmatmul.mubr.f32.gmra.mrb[0].mxu0 %v664
        %v1106 = vpop.f32.mrb[0].mxu0
        %v1107 = vadd.f32 0.0, %v1106
        %v1108 = vpop.f32.mrb[0].mxu0
        %1109 = vmatprep.mubr.f32.mxu0 %v667
        %1110 = vmatmul.mubr.f32.gmra.mrb[0].mxu0 %v666
        %v1111 = vpop.f32.mrb[0].mxu0
        %v1112 = vadd.f32 0.0, %v1111
        %v1113 = vpop.f32.mrb[0].mxu0
        %1114 = vmatprep.mubr.f32.mxu0 %v669
        %1115 = vmatmul.mubr.f32.gmra.mrb[0].mxu0 %v668
        %v1116 = vpop.f32.mrb[0].mxu0
        %v1117 = vadd.f32 0.0, %v1116
        %v1118 = vpop.f32.mrb[0].mxu0
        %1119 = vmatprep.mubr.f32.mxu0 %v671
        %1120 = vmatmul.mubr.f32.gmra.mrb[0].mxu0 %v670
        %v1121 = vpop.f32.mrb[0].mxu0
        %v1122 = vadd.f32 0.0, %v1121
        %v1123 = vpop.f32.mrb[0].mxu0
        %1124 = vmatprep.mubr.f32.mxu0 %v673
        %1125 = vmatmul.mubr.f32.gmra.mrb[0].mxu0 %v672
        %v1126 = vpop.f32.mrb[0].mxu0
        %v1127 = vadd.f32 0.0, %v1126
        %v1128 = vpop.f32.mrb[0].mxu0
        %1129 = vmatprep.mubr.f32.mxu0 %v675
        %1130 = vmatmul.mubr.f32.gmra.mrb[0].mxu0 %v674
        %v1131 = vpop.f32.mrb[0].mxu0
        %v1132 = vadd.f32 0.0, %v1131
        %v1133 = vpop.f32.mrb[0].mxu0
        %1134 = vmatprep.mubr.f32.mxu0 %v677
        %1135 = vmatmul.mubr.f32.gmra.mrb[0].mxu0 %v676
        %v1136 = vpop.f32.mrb[0].mxu0
        %v1137 = vadd.f32 0.0, %v1136
        %v1138 = vpop.f32.mrb[0].mxu0
        %1139 = vmatprep.mubr.f32.mxu0 %v679
        %1140 = vmatmul.mubr.f32.gmra.mrb[0].mxu0 %v678
        %v1141 = vpop.f32.mrb[0].mxu0
        %v1142 = vadd.f32 0.0, %v1141
        %v1143 = vpop.f32.mrb[0].mxu0
        %1144 = vmatprep.mubr.f32.mxu0 %v681
        %1145 = vmatmul.mubr.f32.gmra.mrb[0].mxu0 %v680
        %v1146 = vpop.f32.mrb[0].mxu0
        %v1147 = vadd.f32 0.0, %v1146
        %v1148 = vpop.f32.mrb[0].mxu0
        %1149 = vmatprep.mubr.f32.mxu0 %v683
        %1150 = vmatmul.mubr.f32.gmra.mrb[0].mxu0 %v682
        %v1151 = vpop.f32.mrb[0].mxu0
        %v1152 = vadd.f32 0.0, %v1151
        %v1153 = vpop.f32.mrb[0].mxu0
        %1154 = vmatprep.mubr.f32.mxu0 %v685
        %1155 = vmatmul.mubr.f32.gmra.mrb[0].mxu0 %v684
        %v1156 = vpop.f32.mrb[0].mxu0
        %v1157 = vadd.f32 0.0, %v1156
        %v1158 = vpop.f32.mrb[0].mxu0
        %1159 = vmatprep.mubr.f32.mxu0 %v687
        %1160 = vmatmul.mubr.f32.gmra.mrb[0].mxu0 %v686
        %v1161 = vpop.f32.mrb[0].mxu0
        %v1162 = vadd.f32 0.0, %v1161
        %v1163 = vpop.f32.mrb[0].mxu0
        %1164 = vmatprep.mubr.f32.mxu0 %v689
        %1165 = vmatmul.mubr.f32.gmra.mrb[0].mxu0 %v688
        %v1166 = vpop.f32.mrb[0].mxu0
        %v1167 = vadd.f32 0.0, %v1166
        %v1168 = vpop.f32.mrb[0].mxu0
        %1169 = vmatprep.mubr.f32.mxu0 %v691
        %1170 = vmatmul.mubr.f32.gmra.mrb[0].mxu0 %v690
        %v1171 = vpop.f32.mrb[0].mxu0
        %v1172 = vadd.f32 0.0, %v1171
        %v1173 = vpop.f32.mrb[0].mxu0
        %1174 = vmatprep.mubr.f32.mxu0 %v693
        %1175 = vmatmul.mubr.f32.gmra.mrb[0].mxu0 %v692
        %v1176 = vpop.f32.mrb[0].mxu0
        %v1177 = vadd.f32 0.0, %v1176
        %v1178 = vpop.f32.mrb[0].mxu0
        %1179 = vmatprep.mubr.f32.mxu0 %v695
        %1180 = vmatmul.mubr.f32.gmra.mrb[0].mxu0 %v694
        %v1181 = vpop.f32.mrb[0].mxu0
        %v1182 = vadd.f32 0.0, %v1181
        %v1183 = vpop.f32.mrb[0].mxu0
        %1184 = vmatprep.mubr.f32.mxu0 %v697
        %1185 = vmatmul.mubr.f32.gmra.mrb[0].mxu0 %v696
        %v1186 = vpop.f32.mrb[0].mxu0
        %v1187 = vadd.f32 0.0, %v1186
        %v1188 = vpop.f32.mrb[0].mxu0
        %1189 = vmatprep.mubr.f32.mxu0 %v699
        %1190 = vmatmul.mubr.f32.gmra.mrb[0].mxu0 %v698
        %v1191 = vpop.f32.mrb[0].mxu0
        %v1192 = vadd.f32 0.0, %v1191
        %v1193 = vpop.f32.mrb[0].mxu0
        %1194 = vmatprep.mubr.f32.mxu0 %v701
        %1195 = vmatmul.mubr.f32.gmra.mrb[0].mxu0 %v700
        %v1196 = vpop.f32.mrb[0].mxu0
        %v1197 = vadd.f32 0.0, %v1196
        %v1198 = vpop.f32.mrb[0].mxu0
        %1199 = vmatprep.mubr.f32.mxu0 %v703
        %1200 = vmatmul.mubr.f32.gmra.mrb[0].mxu0 %v702
        %v1201 = vpop.f32.mrb[0].mxu0
        %v1202 = vadd.f32 0.0, %v1201
        %v1203 = vpop.f32.mrb[0].mxu0
        %1204 = vmatprep.mubr.f32.mxu0 %v705
        %1205 = vmatmul.mubr.f32.gmra.mrb[0].mxu0 %v704
        %v1206 = vpop.f32.mrb[0].mxu0
        %v1207 = vadd.f32 0.0, %v1206
        %v1208 = vpop.f32.mrb[0].mxu0
        %1209 = vmatprep.mubr.f32.mxu0 %v707
        %1210 = vmatmul.mubr.f32.gmra.mrb[0].mxu0 %v706
        %v1211 = vpop.f32.mrb[0].mxu0
        %v1212 = vadd.f32 0.0, %v1211
        %v1213 = vpop.f32.mrb[0].mxu0
        %1214 = vmatprep.mubr.f32.mxu0 %v709
        %1215 = vmatmul.mubr.f32.gmra.mrb[0].mxu0 %v708
        %v1216 = vpop.f32.mrb[0].mxu0
        %v1217 = vadd.f32 0.0, %v1216
        %v1218 = vpop.f32.mrb[0].mxu0
        %1219 = vmatprep.mubr.f32.mxu0 %v711
        %1220 = vmatmul.mubr.f32.gmra.mrb[0].mxu0 %v710
        %v1221 = vpop.f32.mrb[0].mxu0
        %v1222 = vadd.f32 0.0, %v1221
        %v1223 = vpop.f32.mrb[0].mxu0
        %1224 = vmatprep.mubr.f32.mxu0 %v713
        %1225 = vmatmul.mubr.f32.gmra.mrb[0].mxu0 %v712
        %v1226 = vpop.f32.mrb[0].mxu0
        %v1227 = vadd.f32 0.0, %v1226
        %v1228 = vpop.f32.mrb[0].mxu0
        %1229 = vmatprep.mubr.f32.mxu0 %v715
        %1230 = vmatmul.mubr.f32.gmra.mrb[0].mxu0 %v714
        %v1231 = vpop.f32.mrb[0].mxu0
        %v1232 = vadd.f32 0.0, %v1231
        %v1233 = vpop.f32.mrb[0].mxu0
        %1234 = vmatprep.mubr.f32.mxu0 %v717
        %1235 = vmatmul.mubr.f32.gmra.mrb[0].mxu0 %v716
        %v1236 = vpop.f32.mrb[0].mxu0
        %v1237 = vadd.f32 0.0, %v1236
        %v1238 = vpop.f32.mrb[0].mxu0
        %1239 = vmatprep.mubr.f32.mxu0 %v719
        %1240 = vmatmul.mubr.f32.gmra.mrb[0].mxu0 %v718
        %v1241 = vpop.f32.mrb[0].mxu0
        %v1242 = vadd.f32 0.0, %v1241
        %v1243 = vpop.f32.mrb[0].mxu0
        %1244 = vmatprep.mubr.f32.mxu0 %v721
        %1245 = vmatmul.mubr.f32.gmra.mrb[0].mxu0 %v720
        %v1246 = vpop.f32.mrb[0].mxu0
        %v1247 = vadd.f32 0.0, %v1246
        %v1248 = vpop.f32.mrb[0].mxu0
        %1249 = vmatprep.mubr.f32.mxu0 %v723
        %1250 = vmatmul.mubr.f32.gmra.mrb[0].mxu0 %v722
        %v1251 = vpop.f32.mrb[0].mxu0
        %v1252 = vadd.f32 0.0, %v1251
        %v1253 = vpop.f32.mrb[0].mxu0
        %1254 = vmatprep.mubr.f32.mxu0 %v725
        %1255 = vmatmul.mubr.f32.gmra.mrb[0].mxu0 %v724
        %v1256 = vpop.f32.mrb[0].mxu0
        %v1257 = vadd.f32 0.0, %v1256
        %v1258 = vpop.f32.mrb[0].mxu0
        %1259 = vmatprep.mubr.f32.mxu0 %v727
        %1260 = vmatmul.mubr.f32.gmra.mrb[0].mxu0 %v726
        %v1261 = vpop.f32.mrb[0].mxu0
        %v1262 = vadd.f32 0.0, %v1261
        %v1263 = vpop.f32.mrb[0].mxu0
        %1264 = vmatprep.mubr.f32.mxu0 %v729
        %1265 = vmatmul.mubr.f32.gmra.mrb[0].mxu0 %v728
        %v1266 = vpop.f32.mrb[0].mxu0
        %v1267 = vadd.f32 0.0, %v1266
        %v1268 = vpop.f32.mrb[0].mxu0
        %1269 = vmatprep.mubr.f32.mxu0 %v731
        %1270 = vmatmul.mubr.f32.gmra.mrb[0].mxu0 %v730
        %v1271 = vpop.f32.mrb[0].mxu0
        %v1272 = vadd.f32 0.0, %v1271
        %v1273 = vpop.f32.mrb[0].mxu0
        %1274 = vmatprep.mubr.f32.mxu0 %v733
        %1275 = vmatmul.mubr.f32.gmra.mrb[0].mxu0 %v732
        %v1276 = vpop.f32.mrb[0].mxu0
        %v1277 = vadd.f32 0.0, %v1276
        %v1278 = vpop.f32.mrb[0].mxu0
        %1279 = vmatprep.mubr.f32.mxu0 %v735
        %1280 = vmatmul.mubr.f32.gmra.mrb[0].mxu0 %v734
        %v1281 = vpop.f32.mrb[0].mxu0
        %v1282 = vadd.f32 0.0, %v1281
        %v1283 = vpop.f32.mrb[0].mxu0
        %1284 = vmatprep.mubr.f32.mxu0 %v737
        %1285 = vmatmul.mubr.f32.gmra.mrb[0].mxu0 %v736
        %v1286 = vpop.f32.mrb[0].mxu0
        %v1287 = vadd.f32 0.0, %v1286
        %v1288 = vpop.f32.mrb[0].mxu0
        %1289 = vmatprep.mubr.f32.mxu0 %v739
        %1290 = vmatmul.mubr.f32.gmra.mrb[0].mxu0 %v738
        %v1291 = vpop.f32.mrb[0].mxu0
        %v1292 = vadd.f32 0.0, %v1291
        %v1293 = vpop.f32.mrb[0].mxu0
        %1294 = vmatprep.mubr.f32.mxu0 %v741
        %1295 = vmatmul.mubr.f32.gmra.mrb[0].mxu0 %v740
        %v1296 = vpop.f32.mrb[0].mxu0
        %v1297 = vadd.f32 0.0, %v1296
        %v1298 = vpop.f32.mrb[0].mxu0
        %1299 = vmatprep.mubr.f32.mxu0 %v743
        %1300 = vmatmul.mubr.f32.gmra.mrb[0].mxu0 %v742
        %v1301 = vpop.f32.mrb[0].mxu0
        %v1302 = vadd.f32 0.0, %v1301
        %v1303 = vpop.f32.mrb[0].mxu0
        %1304 = vmatprep.mubr.f32.mxu0 %v745
        %1305 = vmatmul.mubr.f32.gmra.mrb[0].mxu0 %v744
        %v1306 = vpop.f32.mrb[0].mxu0
        %v1307 = vadd.f32 0.0, %v1306
        %v1308 = vpop.f32.mrb[0].mxu0
        %1309 = vmatprep.mubr.f32.mxu0 %v747
        %1310 = vmatmul.mubr.f32.gmra.mrb[0].mxu0 %v746
        %v1311 = vpop.f32.mrb[0].mxu0
        %v1312 = vadd.f32 0.0, %v1311
        %v1313 = vpop.f32.mrb[0].mxu0
        %1314 = vmatprep.mubr.f32.mxu0 %v749
        %1315 = vmatmul.mubr.f32.gmra.mrb[0].mxu0 %v748
        %v1316 = vpop.f32.mrb[0].mxu0
        %v1317 = vadd.f32 0.0, %v1316
        %v1318 = vpop.f32.mrb[0].mxu0
        %1319 = vmatprep.mubr.f32.mxu0 %v751
        %1320 = vmatmul.mubr.f32.gmra.mrb[0].mxu0 %v750
        %v1321 = vpop.f32.mrb[0].mxu0
        %v1322 = vadd.f32 0.0, %v1321
        %v1323 = vpop.f32.mrb[0].mxu0
        %1324 = vmatprep.mubr.f32.mxu0 %v753
        %1325 = vmatmul.mubr.f32.gmra.mrb[0].mxu0 %v752
        %v1326 = vpop.f32.mrb[0].mxu0
        %v1327 = vadd.f32 0.0, %v1326
        %v1328 = vpop.f32.mrb[0].mxu0
        %1329 = vmatprep.mubr.f32.mxu0 %v755
        %1330 = vmatmul.mubr.f32.gmra.mrb[0].mxu0 %v754
        %v1331 = vpop.f32.mrb[0].mxu0
        %v1332 = vadd.f32 0.0, %v1331
        %v1333 = vpop.f32.mrb[0].mxu0
        %1334 = vmatprep.mubr.f32.mxu0 %v757
        %1335 = vmatmul.mubr.f32.gmra.mrb[0].mxu0 %v756
        %v1336 = vpop.f32.mrb[0].mxu0
        %v1337 = vadd.f32 0.0, %v1336
        %v1338 = vpop.f32.mrb[0].mxu0
        %1339 = vmatprep.mubr.f32.mxu0 %v759
        %1340 = vmatmul.mubr.f32.gmra.mrb[0].mxu0 %v758
        %v1341 = vpop.f32.mrb[0].mxu0
        %v1342 = vadd.f32 0.0, %v1341
        %v1343 = vpop.f32.mrb[0].mxu0
        %1344 = vmatprep.mubr.f32.mxu0 %v761
        %1345 = vmatmul.mubr.f32.gmra.mrb[0].mxu0 %v760
        %v1346 = vpop.f32.mrb[0].mxu0
        %v1347 = vadd.f32 0.0, %v1346
        %v1348 = vpop.f32.mrb[0].mxu0
        %1349 = vmatprep.mubr.f32.mxu0 %v763
        %1350 = vmatmul.mubr.f32.gmra.mrb[0].mxu0 %v762
        %v1351 = vpop.f32.mrb[0].mxu0
        %v1352 = vadd.f32 0.0, %v1351
        %v1353 = vpop.f32.mrb[0].mxu0
        %1354 = vmatprep.mubr.f32.mxu0 %v765
        %1355 = vmatmul.mubr.f32.gmra.mrb[0].mxu0 %v764
        %v1356 = vpop.f32.mrb[0].mxu0
        %v1357 = vadd.f32 0.0, %v1356
        %v1358 = vpop.f32.mrb[0].mxu0
        %1359 = vmatprep.mubr.f32.mxu0 %v767
        %1360 = vmatmul.mubr.f32.gmra.mrb[0].mxu0 %v766
        %v1361 = vpop.f32.mrb[0].mxu0
        %v1362 = vadd.f32 0.0, %v1361
        %v1363 = vpop.f32.mrb[0].mxu0
        %1364 = vmatprep.mubr.f32.mxu0 %v769
        %1365 = vmatmul.mubr.f32.gmra.mrb[0].mxu0 %v768
        %v1366 = vpop.f32.mrb[0].mxu0
        %v1367 = vadd.f32 0.0, %v1366
        %v1368 = vpop.f32.mrb[0].mxu0
        %1369 = vmatprep.mubr.f32.mxu0 %v771
        %1370 = vmatmul.mubr.f32.gmra.mrb[0].mxu0 %v770
        %v1371 = vpop.f32.mrb[0].mxu0
        %v1372 = vadd.f32 0.0, %v1371
        %v1373 = vpop.f32.mrb[0].mxu0
        %1374 = vmatprep.mubr.f32.mxu0 %v773
        %1375 = vmatmul.mubr.f32.gmra.mrb[0].mxu0 %v772
        %v1376 = vpop.f32.mrb[0].mxu0
        %v1377 = vadd.f32 0.0, %v1376
        %v1378 = vpop.f32.mrb[0].mxu0
        %1379 = vmatprep.mubr.f32.mxu0 %v775
        %1380 = vmatmul.mubr.f32.gmra.mrb[0].mxu0 %v774
        %v1381 = vpop.f32.mrb[0].mxu0
        %v1382 = vadd.f32 0.0, %v1381
        %v1383 = vpop.f32.mrb[0].mxu0
        %1384 = vmatprep.mubr.f32.mxu0 %v777
        %1385 = vmatmul.mubr.f32.gmra.mrb[0].mxu0 %v776
        %v1386 = vpop.f32.mrb[0].mxu0
        %v1387 = vadd.f32 0.0, %v1386
        %v1388 = vpop.f32.mrb[0].mxu0
        %1389 = vmatprep.mubr.f32.mxu0 %v779
        %1390 = vmatmul.mubr.f32.gmra.mrb[0].mxu0 %v778
        %v1391 = vpop.f32.mrb[0].mxu0
        %v1392 = vadd.f32 0.0, %v1391
        %v1393 = vpop.f32.mrb[0].mxu0
        %1394 = vmatprep.mubr.f32.mxu0 %v781
        %1395 = vmatmul.mubr.f32.gmra.mrb[0].mxu0 %v780
        %v1396 = vpop.f32.mrb[0].mxu0
        %v1397 = vadd.f32 0.0, %v1396
        %v1398 = vpop.f32.mrb[0].mxu0
        %1399 = vmatprep.mubr.f32.mxu0 %v783
        %1400 = vmatmul.mubr.f32.gmra.mrb[0].mxu0 %v782
        %v1401 = vpop.f32.mrb[0].mxu0
        %v1402 = vadd.f32 0.0, %v1401
        %v1403 = vpop.f32.mrb[0].mxu0
        %1404 = vmatprep.mubr.f32.mxu0 %v785
        %1405 = vmatmul.mubr.f32.gmra.mrb[0].mxu0 %v784
        %v1406 = vpop.f32.mrb[0].mxu0
        %v1407 = vadd.f32 0.0, %v1406
        %v1408 = vpop.f32.mrb[0].mxu0
        %1409 = vmatprep.mubr.f32.mxu0 %v787
        %1410 = vmatmul.mubr.f32.gmra.mrb[0].mxu0 %v786
        %v1411 = vpop.f32.mrb[0].mxu0
        %v1412 = vadd.f32 0.0, %v1411
        %v1413 = vpop.f32.mrb[0].mxu0
        %1414 = vmatprep.mubr.f32.mxu0 %v789
        %1415 = vmatmul.mubr.f32.gmra.mrb[0].mxu0 %v788
        %v1416 = vpop.f32.mrb[0].mxu0
        %v1417 = vadd.f32 0.0, %v1416
        %v1418 = vpop.f32.mrb[0].mxu0
        %1419 = vmatprep.mubr.f32.mxu0 %v791
        %1420 = vmatmul.mubr.f32.gmra.mrb[0].mxu0 %v790
        %v1421 = vpop.f32.mrb[0].mxu0
        %v1422 = vadd.f32 0.0, %v1421
        %v1423 = vpop.f32.mrb[0].mxu0
        %1424 = vmatprep.mubr.f32.mxu0 %v793
        %1425 = vmatmul.mubr.f32.gmra.mrb[0].mxu0 %v792
        %v1426 = vpop.f32.mrb[0].mxu0
        %v1427 = vadd.f32 0.0, %v1426
        %v1428 = vpop.f32.mrb[0].mxu0
        %1429 = vmatprep.mubr.f32.mxu0 %v795
        %1430 = vmatmul.mubr.f32.gmra.mrb[0].mxu0 %v794
        %v1431 = vpop.f32.mrb[0].mxu0
        %v1432 = vadd.f32 0.0, %v1431
        %v1433 = vpop.f32.mrb[0].mxu0
        %1434 = vmatprep.mubr.f32.mxu0 %v797
        %1435 = vmatmul.mubr.f32.gmra.mrb[0].mxu0 %v796
        %v1436 = vpop.f32.mrb[0].mxu0
        %v1437 = vadd.f32 0.0, %v1436
        %v1438 = vpop.f32.mrb[0].mxu0
        %1439 = vmatprep.mubr.f32.mxu0 %v799
        %1440 = vmatmul.mubr.f32.gmra.mrb[0].mxu0 %v798
        %v1441 = vpop.f32.mrb[0].mxu0
        %v1442 = vadd.f32 0.0, %v1441
        %v1443 = vpop.f32.mrb[0].mxu0
        %1444 = vmatprep.mubr.f32.mxu0 %v801
        %1445 = vmatmul.mubr.f32.gmra.mrb[0].mxu0 %v800
        %v1446 = vpop.f32.mrb[0].mxu0
        %v1447 = vadd.f32 0.0, %v1446
        %v1448 = vpop.f32.mrb[0].mxu0
        %1449 = vmatprep.mubr.f32.mxu0 %v803
        %1450 = vmatmul.mubr.f32.gmra.mrb[0].mxu0 %v802
        %v1451 = vpop.f32.mrb[0].mxu0
        %v1452 = vadd.f32 0.0, %v1451
        %v1453 = vpop.f32.mrb[0].mxu0
        %1454 = vmatprep.mubr.f32.mxu0 %v805
        %1455 = vmatmul.mubr.f32.gmra.mrb[0].mxu0 %v804
        %v1456 = vpop.f32.mrb[0].mxu0
        %v1457 = vadd.f32 0.0, %v1456
        %v1458 = vpop.f32.mrb[0].mxu0
        %1459 = vmatprep.mubr.f32.mxu0 %v807
        %1460 = vmatmul.mubr.f32.gmra.mrb[0].mxu0 %v806
        %v1461 = vpop.f32.mrb[0].mxu0
        %v1462 = vadd.f32 0.0, %v1461
        %v1463 = vpop.f32.mrb[0].mxu0
        %1464 = vmatprep.mubr.f32.mxu0 %v809
        %1465 = vmatmul.mubr.f32.gmra.mrb[0].mxu0 %v808
        %v1466 = vpop.f32.mrb[0].mxu0
        %v1467 = vadd.f32 0.0, %v1466
        %v1468 = vpop.f32.mrb[0].mxu0
        %1469 = vmatprep.mubr.f32.mxu0 %v811
        %1470 = vmatmul.mubr.f32.gmra.mrb[0].mxu0 %v810
        %v1471 = vpop.f32.mrb[0].mxu0
        %v1472 = vadd.f32 0.0, %v1471
        %v1473 = vpop.f32.mrb[0].mxu0
        %1474 = vmatprep.mubr.f32.mxu0 %v813
        %1475 = vmatmul.mubr.f32.gmra.mrb[0].mxu0 %v812
        %v1476 = vpop.f32.mrb[0].mxu0
        %v1477 = vadd.f32 0.0, %v1476
        %v1478 = vpop.f32.mrb[0].mxu0
        %1479 = vmatprep.mubr.f32.mxu0 %v815
        %1480 = vmatmul.mubr.f32.gmra.mrb[0].mxu0 %v814
        %v1481 = vpop.f32.mrb[0].mxu0
        %v1482 = vadd.f32 0.0, %v1481
        %v1483 = vpop.f32.mrb[0].mxu0
        %1484 = vmatprep.mubr.f32.mxu0 %v817
        %1485 = vmatmul.mubr.f32.gmra.mrb[0].mxu0 %v816
        %v1486 = vpop.f32.mrb[0].mxu0
        %v1487 = vadd.f32 0.0, %v1486
        %v1488 = vpop.f32.mrb[0].mxu0
        %1489 = vmatprep.mubr.f32.mxu0 %v819
        %1490 = vmatmul.mubr.f32.gmra.mrb[0].mxu0 %v818
        %v1491 = vpop.f32.mrb[0].mxu0
        %v1492 = vadd.f32 0.0, %v1491
        %v1493 = vpop.f32.mrb[0].mxu0
        %1494 = vmatprep.mubr.f32.mxu0 %v821
        %1495 = vmatmul.mubr.f32.gmra.mrb[0].mxu0 %v820
        %v1496 = vpop.f32.mrb[0].mxu0
        %v1497 = vadd.f32 0.0, %v1496
        %v1498 = vpop.f32.mrb[0].mxu0
        %1499 = vmatprep.mubr.f32.mxu0 %v823
        %1500 = vmatmul.mubr.f32.gmra.mrb[0].mxu0 %v822
        %v1501 = vpop.f32.mrb[0].mxu0
        %v1502 = vadd.f32 0.0, %v1501
        %v1503 = vpop.f32.mrb[0].mxu0
        %1504 = vmatprep.mubr.f32.mxu0 %v825
        %1505 = vmatmul.mubr.f32.gmra.mrb[0].mxu0 %v824
        %v1506 = vpop.f32.mrb[0].mxu0
        %v1507 = vadd.f32 0.0, %v1506
        %v1508 = vpop.f32.mrb[0].mxu0
        %1509 = vmatprep.mubr.f32.mxu0 %v827
        %1510 = vmatmul.mubr.f32.gmra.mrb[0].mxu0 %v826
        %v1511 = vpop.f32.mrb[0].mxu0
        %v1512 = vadd.f32 0.0, %v1511
        %v1513 = vpop.f32.mrb[0].mxu0
        %1514 = vmatprep.mubr.f32.mxu0 %v829
        %1515 = vmatmul.mubr.f32.gmra.mrb[0].mxu0 %v828
        %v1516 = vpop.f32.mrb[0].mxu0
        %v1517 = vadd.f32 0.0, %v1516
        %v1518 = vpop.f32.mrb[0].mxu0
        %1519 = vmatprep.mubr.f32.mxu0 %v831
        %1520 = vmatmul.mubr.f32.gmra.mrb[0].mxu0 %v830
        %v1521 = vpop.f32.mrb[0].mxu0
        %v1522 = vadd.f32 0.0, %v1521
        %v1523 = vpop.f32.mrb[0].mxu0
        %1524 = vmatprep.mubr.f32.mxu0 %v833
        %1525 = vmatmul.mubr.f32.gmra.mrb[0].mxu0 %v832
        %v1526 = vpop.f32.mrb[0].mxu0
        %v1527 = vadd.f32 0.0, %v1526
        %v1528 = vpop.f32.mrb[0].mxu0
        %1529 = vmatprep.mubr.f32.mxu0 %v835
        %1530 = vmatmul.mubr.f32.gmra.mrb[0].mxu0 %v834
        %v1531 = vpop.f32.mrb[0].mxu0
        %v1532 = vadd.f32 0.0, %v1531
        %v1533 = vpop.f32.mrb[0].mxu0
        %1534 = vmatprep.mubr.f32.mxu0 %v837
        %1535 = vmatmul.mubr.f32.gmra.mrb[0].mxu0 %v836
        %v1536 = vpop.f32.mrb[0].mxu0
        %v1537 = vadd.f32 0.0, %v1536
        %v1538 = vpop.f32.mrb[0].mxu0
        %1539 = vmatprep.mubr.f32.mxu0 %v839
        %1540 = vmatmul.mubr.f32.gmra.mrb[0].mxu0 %v838
        %v1541 = vpop.f32.mrb[0].mxu0
        %v1542 = vadd.f32 0.0, %v1541
        %v1543 = vpop.f32.mrb[0].mxu0
        %1544 = vdwg.mxu0
        %v1545 = vld [vmem:[#allocation5] sm:$0xf]
        %s1546 = scalar_lea.vmem [#allocation5], 4
        %v1547 = vld [vmem:[%s1546] sm:$0xf]
        %vm1548 = vcmask 31744
        %v1550 = vsel %vm1548, %v947, 0
        %v1553 = vsel %vm1548, %v952, 0
        %v1556 = vsel %vm1548, %v957, 0
        %v1559 = vsel %vm1548, %v962, 0
        %v1562 = vsel %vm1548, %v967, 0
        %v1565 = vsel %vm1548, %v972, 0
        %v1568 = vsel %vm1548, %v977, 0
        %v1571 = vsel %vm1548, %v982, 0
        %vm1573 = vcmask 1043456
        %v1575 = vsel %vm1573, %v1547, 0
        %1577 = vmatprep.subr.mxu0 0.0
        %1578 = vmatpush1.msra.mxu0 %v1575
        %1579 = vmatprep.subr.mxu0 0.0
        %1580 = vmatpush1.msra.mxu0 0.0
        %1581 = vmatprep.subr.mxu0 0.0
        %1582 = vmatpush1.msra.mxu0 0.0
        %1583 = vmatprep.subr.mxu0 0.0
        %1584 = vmatpush1.msra.mxu0 0.0
        %1585 = vmatprep.subr.mxu0 0.0
        %1586 = vmatpush1.msra.mxu0 0.0
        %1587 = vmatprep.subr.mxu0 0.0
        %1588 = vmatpush1.msra.mxu0 0.0
        %1589 = vmatprep.subr.mxu0 0.0
        %1590 = vmatpush1.msra.mxu0 0.0
        %1591 = vmatprep.subr.mxu0 0.0
        %1592 = vmatpush1.msra.mxu0 0.0
        %1593 = vmatprep.subr.mxu0 0.0
        %1594 = vmatpush1.msra.mxu0 0.0
        %1595 = vmatprep.subr.mxu0 0.0
        %1596 = vmatpush1.msra.mxu0 0.0
        %1597 = vmatprep.subr.mxu0 0.0
        %1598 = vmatpush1.msra.mxu0 0.0
        %1599 = vmatprep.subr.mxu0 0.0
        %1600 = vmatpush1.msra.mxu0 0.0
        %1601 = vmatprep.subr.mxu0 0.0
        %1602 = vmatpush1.msra.mxu0 0.0
        %1603 = vmatprep.subr.mxu0 0.0
        %1604 = vmatpush1.msra.mxu0 0.0
        %1605 = vmatprep.subr.mxu0 0.0
        %1606 = vmatpush1.msra.mxu0 0.0
        %1607 = vmatprep.subr.mxu0 0.0
        %1608 = vmatpush1.msra.mxu0 0.0
        %1609 = vmatprep.subr.mxu0 0.0
        %1610 = vmatpush1.msra.mxu0 0.0
        %1611 = vmatprep.subr.mxu0 0.0
        %1612 = vmatpush1.msra.mxu0 0.0
        %1613 = vmatprep.subr.mxu0 0.0
        %1614 = vmatpush1.msra.mxu0 0.0
        %1615 = vmatprep.subr.mxu0 0.0
        %1616 = vmatpush1.msra.mxu0 0.0
        %1617 = vmatprep.subr.mxu0 0.0
        %1618 = vmatpush1.msra.mxu0 0.0
        %1619 = vmatprep.subr.mxu0 0.0
        %1620 = vmatpush1.msra.mxu0 0.0
        %1621 = vmatprep.subr.mxu0 0.0
        %1622 = vmatpush1.msra.mxu0 0.0
        %1623 = vmatprep.subr.mxu0 0.0
        %1624 = vmatpush1.msra.mxu0 0.0
        %1625 = vmatprep.subr.mxu0 0.0
        %1626 = vmatpush1.msra.mxu0 0.0
        %1627 = vmatprep.subr.mxu0 0.0
        %1628 = vmatpush1.msra.mxu0 0.0
        %1629 = vmatprep.subr.mxu0 0.0
        %1630 = vmatpush1.msra.mxu0 0.0
        %1631 = vmatprep.subr.mxu0 0.0
        %1632 = vmatpush1.msra.mxu0 0.0
        %1633 = vmatprep.subr.mxu0 0.0
        %1634 = vmatpush1.msra.mxu0 0.0
        %1635 = vmatprep.subr.mxu0 0.0
        %1636 = vmatpush1.msra.mxu0 0.0
        %1637 = vmatprep.subr.mxu0 0.0
        %1638 = vmatpush1.msra.mxu0 0.0
        %1639 = vmatprep.subr.mxu0 0.0
        %1640 = vmatpush1.msra.mxu0 0.0
        %1641 = vmatprep.mubr.f32.mxu0 0.0
        %1642 = vmatmul.mubr.f32.gmra.mrb[0].mxu0 %v1550
        %v1643 = vpop.f32.mrb[0].mxu0
        %v1644 = vadd.f32 0.0, %v1643
        %v1645 = vpop.f32.mrb[0].mxu0
        %1646 = vmatprep.mubr.f32.mxu0 0.0
        %1647 = vmatmul.mubr.f32.gmra.mrb[0].mxu0 %v1553
        %v1648 = vpop.f32.mrb[0].mxu0
        %v1649 = vadd.f32 0.0, %v1648
        %v1650 = vpop.f32.mrb[0].mxu0
        %1651 = vmatprep.mubr.f32.mxu0 0.0
        %1652 = vmatmul.mubr.f32.gmra.mrb[0].mxu0 %v1556
        %v1653 = vpop.f32.mrb[0].mxu0
        %v1654 = vadd.f32 0.0, %v1653
        %v1655 = vpop.f32.mrb[0].mxu0
        %1656 = vmatprep.mubr.f32.mxu0 0.0
        %1657 = vmatmul.mubr.f32.gmra.mrb[0].mxu0 %v1559
        %v1658 = vpop.f32.mrb[0].mxu0
        %v1659 = vadd.f32 0.0, %v1658
        %v1660 = vpop.f32.mrb[0].mxu0
        %1661 = vmatprep.mubr.f32.mxu0 0.0
        %1662 = vmatmul.mubr.f32.gmra.mrb[0].mxu0 %v1562
        %v1663 = vpop.f32.mrb[0].mxu0
        %v1664 = vadd.f32 0.0, %v1663
        %v1665 = vpop.f32.mrb[0].mxu0
        %1666 = vmatprep.mubr.f32.mxu0 0.0
        %1667 = vmatmul.mubr.f32.gmra.mrb[0].mxu0 %v1565
        %v1668 = vpop.f32.mrb[0].mxu0
        %v1669 = vadd.f32 0.0, %v1668
        %v1670 = vpop.f32.mrb[0].mxu0
        %1671 = vmatprep.mubr.f32.mxu0 0.0
        %1672 = vmatmul.mubr.f32.gmra.mrb[0].mxu0 %v1568
        %v1673 = vpop.f32.mrb[0].mxu0
        %v1674 = vadd.f32 0.0, %v1673
        %v1675 = vpop.f32.mrb[0].mxu0
        %1676 = vmatprep.mubr.f32.mxu0 0.0
        %1677 = vmatmul.mubr.f32.gmra.mrb[0].mxu0 %v1571
        %v1678 = vpop.f32.mrb[0].mxu0
        %v1679 = vadd.f32 0.0, %v1678
        %v1680 = vpop.f32.mrb[0].mxu0
        %1681 = vdwg.mxu0
        %v1683 = vsel %vm1548, %v907, 0
        %v1686 = vsel %vm1548, %v912, 0
        %v1689 = vsel %vm1548, %v917, 0
        %v1692 = vsel %vm1548, %v922, 0
        %v1695 = vsel %vm1548, %v927, 0
        %v1698 = vsel %vm1548, %v932, 0
        %v1701 = vsel %vm1548, %v937, 0
        %v1704 = vsel %vm1548, %v942, 0
        %v1707 = vsel %vm1573, %v1545, 0
        %1709 = vmatprep.subr.mxu0 0.0
        %1710 = vmatpush1.msra.mxu0 %v1707
        %1711 = vmatprep.subr.mxu0 0.0
        %1712 = vmatpush1.msra.mxu0 0.0
        %1713 = vmatprep.subr.mxu0 0.0
        %1714 = vmatpush1.msra.mxu0 0.0
        %1715 = vmatprep.subr.mxu0 0.0
        %1716 = vmatpush1.msra.mxu0 0.0
        %1717 = vmatprep.subr.mxu0 0.0
        %1718 = vmatpush1.msra.mxu0 0.0
        %1719 = vmatprep.subr.mxu0 0.0
        %1720 = vmatpush1.msra.mxu0 0.0
        %1721 = vmatprep.subr.mxu0 0.0
        %1722 = vmatpush1.msra.mxu0 0.0
        %1723 = vmatprep.subr.mxu0 0.0
        %1724 = vmatpush1.msra.mxu0 0.0
        %1725 = vmatprep.subr.mxu0 0.0
        %1726 = vmatpush1.msra.mxu0 0.0
        %1727 = vmatprep.subr.mxu0 0.0
        %1728 = vmatpush1.msra.mxu0 0.0
        %1729 = vmatprep.subr.mxu0 0.0
        %1730 = vmatpush1.msra.mxu0 0.0
        %1731 = vmatprep.subr.mxu0 0.0
        %1732 = vmatpush1.msra.mxu0 0.0
        %1733 = vmatprep.subr.mxu0 0.0
        %1734 = vmatpush1.msra.mxu0 0.0
        %1735 = vmatprep.subr.mxu0 0.0
        %1736 = vmatpush1.msra.mxu0 0.0
        %1737 = vmatprep.subr.mxu0 0.0
        %1738 = vmatpush1.msra.mxu0 0.0
        %1739 = vmatprep.subr.mxu0 0.0
        %1740 = vmatpush1.msra.mxu0 0.0
        %1741 = vmatprep.subr.mxu0 0.0
        %1742 = vmatpush1.msra.mxu0 0.0
        %1743 = vmatprep.subr.mxu0 0.0
        %1744 = vmatpush1.msra.mxu0 0.0
        %1745 = vmatprep.subr.mxu0 0.0
        %1746 = vmatpush1.msra.mxu0 0.0
        %1747 = vmatprep.subr.mxu0 0.0
        %1748 = vmatpush1.msra.mxu0 0.0
        %1749 = vmatprep.subr.mxu0 0.0
        %1750 = vmatpush1.msra.mxu0 0.0
        %1751 = vmatprep.subr.mxu0 0.0
        %1752 = vmatpush1.msra.mxu0 0.0
        %1753 = vmatprep.subr.mxu0 0.0
        %1754 = vmatpush1.msra.mxu0 0.0
        %1755 = vmatprep.subr.mxu0 0.0
        %1756 = vmatpush1.msra.mxu0 0.0
        %1757 = vmatprep.subr.mxu0 0.0
        %1758 = vmatpush1.msra.mxu0 0.0
        %1759 = vmatprep.subr.mxu0 0.0
        %1760 = vmatpush1.msra.mxu0 0.0
        %1761 = vmatprep.subr.mxu0 0.0
        %1762 = vmatpush1.msra.mxu0 0.0
        %1763 = vmatprep.subr.mxu0 0.0
        %1764 = vmatpush1.msra.mxu0 0.0
        %1765 = vmatprep.subr.mxu0 0.0
        %1766 = vmatpush1.msra.mxu0 0.0
        %1767 = vmatprep.subr.mxu0 0.0
        %1768 = vmatpush1.msra.mxu0 0.0
        %1769 = vmatprep.subr.mxu0 0.0
        %1770 = vmatpush1.msra.mxu0 0.0
        %1771 = vmatprep.subr.mxu0 0.0
        %1772 = vmatpush1.msra.mxu0 0.0
        %1773 = vmatprep.mubr.f32.mxu0 0.0
        %1774 = vmatmul.mubr.f32.gmra.mrb[0].mxu0 %v1683
        %v1775 = vpop.f32.mrb[0].mxu0
        %v1776 = vadd.f32 %v1644, %v1775
        %v1777 = vpop.f32.mrb[0].mxu0
        %1778 = vmatprep.mubr.f32.mxu0 0.0
        %1779 = vmatmul.mubr.f32.gmra.mrb[0].mxu0 %v1686
        %v1780 = vpop.f32.mrb[0].mxu0
        %v1781 = vadd.f32 %v1649, %v1780
        %v1782 = vpop.f32.mrb[0].mxu0
        %1783 = vmatprep.mubr.f32.mxu0 0.0
        %1784 = vmatmul.mubr.f32.gmra.mrb[0].mxu0 %v1689
        %v1785 = vpop.f32.mrb[0].mxu0
        %v1786 = vadd.f32 %v1654, %v1785
        %v1787 = vpop.f32.mrb[0].mxu0
        %1788 = vmatprep.mubr.f32.mxu0 0.0
        %1789 = vmatmul.mubr.f32.gmra.mrb[0].mxu0 %v1692
        %v1790 = vpop.f32.mrb[0].mxu0
        %v1791 = vadd.f32 %v1659, %v1790
        %v1792 = vpop.f32.mrb[0].mxu0
        %1793 = vmatprep.mubr.f32.mxu0 0.0
        %1794 = vmatmul.mubr.f32.gmra.mrb[0].mxu0 %v1695
        %v1795 = vpop.f32.mrb[0].mxu0
        %v1796 = vadd.f32 %v1664, %v1795
        %v1797 = vpop.f32.mrb[0].mxu0
        %1798 = vmatprep.mubr.f32.mxu0 0.0
        %1799 = vmatmul.mubr.f32.gmra.mrb[0].mxu0 %v1698
        %v1800 = vpop.f32.mrb[0].mxu0
        %v1801 = vadd.f32 %v1669, %v1800
        %v1802 = vpop.f32.mrb[0].mxu0
        %1803 = vmatprep.mubr.f32.mxu0 0.0
        %1804 = vmatmul.mubr.f32.gmra.mrb[0].mxu0 %v1701
        %v1805 = vpop.f32.mrb[0].mxu0
        %v1806 = vadd.f32 %v1674, %v1805
        %v1807 = vpop.f32.mrb[0].mxu0
        %1808 = vmatprep.mubr.f32.mxu0 0.0
        %1809 = vmatmul.mubr.f32.gmra.mrb[0].mxu0 %v1704
        %v1810 = vpop.f32.mrb[0].mxu0
        %v1811 = vadd.f32 %v1679, %v1810
        %v1812 = vpop.f32.mrb[0].mxu0
        %1813 = vdwg.mxu0
        %s1814 = scalar_lea.vmem [#allocation5], 8
        %v1815 = vld [vmem:[%s1814] sm:$0xf]
        %v1817 = vsel %vm1548, %v987, 0
        %v1820 = vsel %vm1548, %v992, 0
        %v1823 = vsel %vm1548, %v997, 0
        %v1826 = vsel %vm1548, %v1002, 0
        %v1829 = vsel %vm1548, %v1007, 0
        %v1832 = vsel %vm1548, %v1012, 0
        %v1835 = vsel %vm1548, %v1017, 0
        %v1838 = vsel %vm1548, %v1022, 0
        %v1841 = vsel %vm1573, %v1815, 0
        %1843 = vmatprep.subr.mxu0 0.0
        %1844 = vmatpush1.msra.mxu0 %v1841
        %1845 = vmatprep.subr.mxu0 0.0
        %1846 = vmatpush1.msra.mxu0 0.0
        %1847 = vmatprep.subr.mxu0 0.0
        %1848 = vmatpush1.msra.mxu0 0.0
        %1849 = vmatprep.subr.mxu0 0.0
        %1850 = vmatpush1.msra.mxu0 0.0
        %1851 = vmatprep.subr.mxu0 0.0
        %1852 = vmatpush1.msra.mxu0 0.0
        %1853 = vmatprep.subr.mxu0 0.0
        %1854 = vmatpush1.msra.mxu0 0.0
        %1855 = vmatprep.subr.mxu0 0.0
        %1856 = vmatpush1.msra.mxu0 0.0
        %1857 = vmatprep.subr.mxu0 0.0
        %1858 = vmatpush1.msra.mxu0 0.0
        %1859 = vmatprep.subr.mxu0 0.0
        %1860 = vmatpush1.msra.mxu0 0.0
        %1861 = vmatprep.subr.mxu0 0.0
        %1862 = vmatpush1.msra.mxu0 0.0
        %1863 = vmatprep.subr.mxu0 0.0
        %1864 = vmatpush1.msra.mxu0 0.0
        %1865 = vmatprep.subr.mxu0 0.0
        %1866 = vmatpush1.msra.mxu0 0.0
        %1867 = vmatprep.subr.mxu0 0.0
        %1868 = vmatpush1.msra.mxu0 0.0
        %1869 = vmatprep.subr.mxu0 0.0
        %1870 = vmatpush1.msra.mxu0 0.0
        %1871 = vmatprep.subr.mxu0 0.0
        %1872 = vmatpush1.msra.mxu0 0.0
        %1873 = vmatprep.subr.mxu0 0.0
        %1874 = vmatpush1.msra.mxu0 0.0
        %1875 = vmatprep.subr.mxu0 0.0
        %1876 = vmatpush1.msra.mxu0 0.0
        %1877 = vmatprep.subr.mxu0 0.0
        %1878 = vmatpush1.msra.mxu0 0.0
        %1879 = vmatprep.subr.mxu0 0.0
        %1880 = vmatpush1.msra.mxu0 0.0
        %1881 = vmatprep.subr.mxu0 0.0
        %1882 = vmatpush1.msra.mxu0 0.0
        %1883 = vmatprep.subr.mxu0 0.0
        %1884 = vmatpush1.msra.mxu0 0.0
        %1885 = vmatprep.subr.mxu0 0.0
        %1886 = vmatpush1.msra.mxu0 0.0
        %1887 = vmatprep.subr.mxu0 0.0
        %1888 = vmatpush1.msra.mxu0 0.0
        %1889 = vmatprep.subr.mxu0 0.0
        %1890 = vmatpush1.msra.mxu0 0.0
        %1891 = vmatprep.subr.mxu0 0.0
        %1892 = vmatpush1.msra.mxu0 0.0
        %1893 = vmatprep.subr.mxu0 0.0
        %1894 = vmatpush1.msra.mxu0 0.0
        %1895 = vmatprep.subr.mxu0 0.0
        %1896 = vmatpush1.msra.mxu0 0.0
        %1897 = vmatprep.subr.mxu0 0.0
        %1898 = vmatpush1.msra.mxu0 0.0
        %1899 = vmatprep.subr.mxu0 0.0
        %1900 = vmatpush1.msra.mxu0 0.0
        %1901 = vmatprep.subr.mxu0 0.0
        %1902 = vmatpush1.msra.mxu0 0.0
        %1903 = vmatprep.subr.mxu0 0.0
        %1904 = vmatpush1.msra.mxu0 0.0
        %1905 = vmatprep.subr.mxu0 0.0
        %1906 = vmatpush1.msra.mxu0 0.0
        %1907 = vmatprep.mubr.f32.mxu0 0.0
        %1908 = vmatmul.mubr.f32.gmra.mrb[0].mxu0 %v1817
        %v1909 = vpop.f32.mrb[0].mxu0
        %v1910 = vadd.f32 0.0, %v1909
        %v1911 = vpop.f32.mrb[0].mxu0
        %1912 = vmatprep.mubr.f32.mxu0 0.0
        %1913 = vmatmul.mubr.f32.gmra.mrb[0].mxu0 %v1820
        %v1914 = vpop.f32.mrb[0].mxu0
        %v1915 = vadd.f32 0.0, %v1914
        %v1916 = vpop.f32.mrb[0].mxu0
        %1917 = vmatprep.mubr.f32.mxu0 0.0
        %1918 = vmatmul.mubr.f32.gmra.mrb[0].mxu0 %v1823
        %v1919 = vpop.f32.mrb[0].mxu0
        %v1920 = vadd.f32 0.0, %v1919
        %v1921 = vpop.f32.mrb[0].mxu0
        %1922 = vmatprep.mubr.f32.mxu0 0.0
        %1923 = vmatmul.mubr.f32.gmra.mrb[0].mxu0 %v1826
        %v1924 = vpop.f32.mrb[0].mxu0
        %v1925 = vadd.f32 0.0, %v1924
        %v1926 = vpop.f32.mrb[0].mxu0
        %1927 = vmatprep.mubr.f32.mxu0 0.0
        %1928 = vmatmul.mubr.f32.gmra.mrb[0].mxu0 %v1829
        %v1929 = vpop.f32.mrb[0].mxu0
        %v1930 = vadd.f32 0.0, %v1929
        %v1931 = vpop.f32.mrb[0].mxu0
        %1932 = vmatprep.mubr.f32.mxu0 0.0
        %1933 = vmatmul.mubr.f32.gmra.mrb[0].mxu0 %v1832
        %v1934 = vpop.f32.mrb[0].mxu0
        %v1935 = vadd.f32 0.0, %v1934
        %v1936 = vpop.f32.mrb[0].mxu0
        %1937 = vmatprep.mubr.f32.mxu0 0.0
        %1938 = vmatmul.mubr.f32.gmra.mrb[0].mxu0 %v1835
        %v1939 = vpop.f32.mrb[0].mxu0
        %v1940 = vadd.f32 0.0, %v1939
        %v1941 = vpop.f32.mrb[0].mxu0
        %1942 = vmatprep.mubr.f32.mxu0 0.0
        %1943 = vmatmul.mubr.f32.gmra.mrb[0].mxu0 %v1838
        %v1944 = vpop.f32.mrb[0].mxu0
        %v1945 = vadd.f32 0.0, %v1944
        %v1946 = vpop.f32.mrb[0].mxu0
        %1947 = vdwg.mxu0
        %v1948 = vadd.f32 %v1776, %v1910
        %v1949 = vadd.f32 %v1781, %v1915
        %v1950 = vadd.f32 %v1786, %v1920
        %v1951 = vadd.f32 %v1791, %v1925
        %v1952 = vadd.f32 %v1796, %v1930
        %v1953 = vadd.f32 %v1801, %v1935
        %v1954 = vadd.f32 %v1806, %v1940
        %v1955 = vadd.f32 %v1811, %v1945
        %s1956 = scalar_lea.vmem [#allocation5], 12
        %v1957 = vld [vmem:[%s1956] sm:$0xf]
        %v1959 = vsel %vm1548, %v1027, 0
        %v1962 = vsel %vm1548, %v1032, 0
        %v1965 = vsel %vm1548, %v1037, 0
        %v1968 = vsel %vm1548, %v1042, 0
        %v1971 = vsel %vm1548, %v1047, 0
        %v1974 = vsel %vm1548, %v1052, 0
        %v1977 = vsel %vm1548, %v1057, 0
        %v1980 = vsel %vm1548, %v1062, 0
        %v1983 = vsel %vm1573, %v1957, 0
        %1985 = vmatprep.subr.mxu0 0.0
        %1986 = vmatpush1.msra.mxu0 %v1983
        %1987 = vmatprep.subr.mxu0 0.0
        %1988 = vmatpush1.msra.mxu0 0.0
        %1989 = vmatprep.subr.mxu0 0.0
        %1990 = vmatpush1.msra.mxu0 0.0
        %1991 = vmatprep.subr.mxu0 0.0
        %1992 = vmatpush1.msra.mxu0 0.0
        %1993 = vmatprep.subr.mxu0 0.0
        %1994 = vmatpush1.msra.mxu0 0.0
        %1995 = vmatprep.subr.mxu0 0.0
        %1996 = vmatpush1.msra.mxu0 0.0
        %1997 = vmatprep.subr.mxu0 0.0
        %1998 = vmatpush1.msra.mxu0 0.0
        %1999 = vmatprep.subr.mxu0 0.0
        %2000 = vmatpush1.msra.mxu0 0.0
        %2001 = vmatprep.subr.mxu0 0.0
        %2002 = vmatpush1.msra.mxu0 0.0
        %2003 = vmatprep.subr.mxu0 0.0
        %2004 = vmatpush1.msra.mxu0 0.0
        %2005 = vmatprep.subr.mxu0 0.0
        %2006 = vmatpush1.msra.mxu0 0.0
        %2007 = vmatprep.subr.mxu0 0.0
        %2008 = vmatpush1.msra.mxu0 0.0
        %2009 = vmatprep.subr.mxu0 0.0
        %2010 = vmatpush1.msra.mxu0 0.0
        %2011 = vmatprep.subr.mxu0 0.0
        %2012 = vmatpush1.msra.mxu0 0.0
        %2013 = vmatprep.subr.mxu0 0.0
        %2014 = vmatpush1.msra.mxu0 0.0
        %2015 = vmatprep.subr.mxu0 0.0
        %2016 = vmatpush1.msra.mxu0 0.0
        %2017 = vmatprep.subr.mxu0 0.0
        %2018 = vmatpush1.msra.mxu0 0.0
        %2019 = vmatprep.subr.mxu0 0.0
        %2020 = vmatpush1.msra.mxu0 0.0
        %2021 = vmatprep.subr.mxu0 0.0
        %2022 = vmatpush1.msra.mxu0 0.0
        %2023 = vmatprep.subr.mxu0 0.0
        %2024 = vmatpush1.msra.mxu0 0.0
        %2025 = vmatprep.subr.mxu0 0.0
        %2026 = vmatpush1.msra.mxu0 0.0
        %2027 = vmatprep.subr.mxu0 0.0
        %2028 = vmatpush1.msra.mxu0 0.0
        %2029 = vmatprep.subr.mxu0 0.0
        %2030 = vmatpush1.msra.mxu0 0.0
        %2031 = vmatprep.subr.mxu0 0.0
        %2032 = vmatpush1.msra.mxu0 0.0
        %2033 = vmatprep.subr.mxu0 0.0
        %2034 = vmatpush1.msra.mxu0 0.0
        %2035 = vmatprep.subr.mxu0 0.0
        %2036 = vmatpush1.msra.mxu0 0.0
        %2037 = vmatprep.subr.mxu0 0.0
        %2038 = vmatpush1.msra.mxu0 0.0
        %2039 = vmatprep.subr.mxu0 0.0
        %2040 = vmatpush1.msra.mxu0 0.0
        %2041 = vmatprep.subr.mxu0 0.0
        %2042 = vmatpush1.msra.mxu0 0.0
        %2043 = vmatprep.subr.mxu0 0.0
        %2044 = vmatpush1.msra.mxu0 0.0
        %2045 = vmatprep.subr.mxu0 0.0
        %2046 = vmatpush1.msra.mxu0 0.0
        %2047 = vmatprep.subr.mxu0 0.0
        %2048 = vmatpush1.msra.mxu0 0.0
        %2049 = vmatprep.mubr.f32.mxu0 0.0
        %2050 = vmatmul.mubr.f32.gmra.mrb[0].mxu0 %v1959
        %v2051 = vpop.f32.mrb[0].mxu0
        %v2052 = vadd.f32 0.0, %v2051
        %v2053 = vpop.f32.mrb[0].mxu0
        %2054 = vmatprep.mubr.f32.mxu0 0.0
        %2055 = vmatmul.mubr.f32.gmra.mrb[0].mxu0 %v1962
        %v2056 = vpop.f32.mrb[0].mxu0
        %v2057 = vadd.f32 0.0, %v2056
        %v2058 = vpop.f32.mrb[0].mxu0
        %2059 = vmatprep.mubr.f32.mxu0 0.0
        %2060 = vmatmul.mubr.f32.gmra.mrb[0].mxu0 %v1965
        %v2061 = vpop.f32.mrb[0].mxu0
        %v2062 = vadd.f32 0.0, %v2061
        %v2063 = vpop.f32.mrb[0].mxu0
        %2064 = vmatprep.mubr.f32.mxu0 0.0
        %2065 = vmatmul.mubr.f32.gmra.mrb[0].mxu0 %v1968
        %v2066 = vpop.f32.mrb[0].mxu0
        %v2067 = vadd.f32 0.0, %v2066
        %v2068 = vpop.f32.mrb[0].mxu0
        %2069 = vmatprep.mubr.f32.mxu0 0.0
        %2070 = vmatmul.mubr.f32.gmra.mrb[0].mxu0 %v1971
        %v2071 = vpop.f32.mrb[0].mxu0
        %v2072 = vadd.f32 0.0, %v2071
        %v2073 = vpop.f32.mrb[0].mxu0
        %2074 = vmatprep.mubr.f32.mxu0 0.0
        %2075 = vmatmul.mubr.f32.gmra.mrb[0].mxu0 %v1974
        %v2076 = vpop.f32.mrb[0].mxu0
        %v2077 = vadd.f32 0.0, %v2076
        %v2078 = vpop.f32.mrb[0].mxu0
        %2079 = vmatprep.mubr.f32.mxu0 0.0
        %2080 = vmatmul.mubr.f32.gmra.mrb[0].mxu0 %v1977
        %v2081 = vpop.f32.mrb[0].mxu0
        %v2082 = vadd.f32 0.0, %v2081
        %v2083 = vpop.f32.mrb[0].mxu0
        %2084 = vmatprep.mubr.f32.mxu0 0.0
        %2085 = vmatmul.mubr.f32.gmra.mrb[0].mxu0 %v1980
        %v2086 = vpop.f32.mrb[0].mxu0
        %v2087 = vadd.f32 0.0, %v2086
        %v2088 = vpop.f32.mrb[0].mxu0
        %2089 = vdwg.mxu0
        %v2090 = vadd.f32 %v1948, %v2052
        %v2091 = vadd.f32 %v1949, %v2057
        %v2092 = vadd.f32 %v1950, %v2062
        %v2093 = vadd.f32 %v1951, %v2067
        %v2094 = vadd.f32 %v1952, %v2072
        %v2095 = vadd.f32 %v1953, %v2077
        %v2096 = vadd.f32 %v1954, %v2082
        %v2097 = vadd.f32 %v1955, %v2087
        %s2098 = scalar_lea.vmem [#allocation5], 16
        %v2099 = vld [vmem:[%s2098] sm:$0xf]
        %v2101 = vsel %vm1548, %v1067, 0
        %v2104 = vsel %vm1548, %v1072, 0
        %v2107 = vsel %vm1548, %v1077, 0
        %v2110 = vsel %vm1548, %v1082, 0
        %v2113 = vsel %vm1548, %v1087, 0
        %v2116 = vsel %vm1548, %v1092, 0
        %v2119 = vsel %vm1548, %v1097, 0
        %v2122 = vsel %vm1548, %v1102, 0
        %v2125 = vsel %vm1573, %v2099, 0
        %2127 = vmatprep.subr.mxu0 0.0
        %2128 = vmatpush1.msra.mxu0 %v2125
        %2129 = vmatprep.subr.mxu0 0.0
        %2130 = vmatpush1.msra.mxu0 0.0
        %2131 = vmatprep.subr.mxu0 0.0
        %2132 = vmatpush1.msra.mxu0 0.0
        %2133 = vmatprep.subr.mxu0 0.0
        %2134 = vmatpush1.msra.mxu0 0.0
        %2135 = vmatprep.subr.mxu0 0.0
        %2136 = vmatpush1.msra.mxu0 0.0
        %2137 = vmatprep.subr.mxu0 0.0
        %2138 = vmatpush1.msra.mxu0 0.0
        %2139 = vmatprep.subr.mxu0 0.0
        %2140 = vmatpush1.msra.mxu0 0.0
        %2141 = vmatprep.subr.mxu0 0.0
        %2142 = vmatpush1.msra.mxu0 0.0
        %2143 = vmatprep.subr.mxu0 0.0
        %2144 = vmatpush1.msra.mxu0 0.0
        %2145 = vmatprep.subr.mxu0 0.0
        %2146 = vmatpush1.msra.mxu0 0.0
        %2147 = vmatprep.subr.mxu0 0.0
        %2148 = vmatpush1.msra.mxu0 0.0
        %2149 = vmatprep.subr.mxu0 0.0
        %2150 = vmatpush1.msra.mxu0 0.0
        %2151 = vmatprep.subr.mxu0 0.0
        %2152 = vmatpush1.msra.mxu0 0.0
        %2153 = vmatprep.subr.mxu0 0.0
        %2154 = vmatpush1.msra.mxu0 0.0
        %2155 = vmatprep.subr.mxu0 0.0
        %2156 = vmatpush1.msra.mxu0 0.0
        %2157 = vmatprep.subr.mxu0 0.0
        %2158 = vmatpush1.msra.mxu0 0.0
        %2159 = vmatprep.subr.mxu0 0.0
        %2160 = vmatpush1.msra.mxu0 0.0
        %2161 = vmatprep.subr.mxu0 0.0
        %2162 = vmatpush1.msra.mxu0 0.0
        %2163 = vmatprep.subr.mxu0 0.0
        %2164 = vmatpush1.msra.mxu0 0.0
        %2165 = vmatprep.subr.mxu0 0.0
        %2166 = vmatpush1.msra.mxu0 0.0
        %2167 = vmatprep.subr.mxu0 0.0
        %2168 = vmatpush1.msra.mxu0 0.0
        %2169 = vmatprep.subr.mxu0 0.0
        %2170 = vmatpush1.msra.mxu0 0.0
        %2171 = vmatprep.subr.mxu0 0.0
        %2172 = vmatpush1.msra.mxu0 0.0
        %2173 = vmatprep.subr.mxu0 0.0
        %2174 = vmatpush1.msra.mxu0 0.0
        %2175 = vmatprep.subr.mxu0 0.0
        %2176 = vmatpush1.msra.mxu0 0.0
        %2177 = vmatprep.subr.mxu0 0.0
        %2178 = vmatpush1.msra.mxu0 0.0
        %2179 = vmatprep.subr.mxu0 0.0
        %2180 = vmatpush1.msra.mxu0 0.0
        %2181 = vmatprep.subr.mxu0 0.0
        %2182 = vmatpush1.msra.mxu0 0.0
        %2183 = vmatprep.subr.mxu0 0.0
        %2184 = vmatpush1.msra.mxu0 0.0
        %2185 = vmatprep.subr.mxu0 0.0
        %2186 = vmatpush1.msra.mxu0 0.0
        %2187 = vmatprep.subr.mxu0 0.0
        %2188 = vmatpush1.msra.mxu0 0.0
        %2189 = vmatprep.subr.mxu0 0.0
        %2190 = vmatpush1.msra.mxu0 0.0
        %2191 = vmatprep.mubr.f32.mxu0 0.0
        %2192 = vmatmul.mubr.f32.gmra.mrb[0].mxu0 %v2101
        %v2193 = vpop.f32.mrb[0].mxu0
        %v2194 = vadd.f32 0.0, %v2193
        %v2195 = vpop.f32.mrb[0].mxu0
        %2196 = vmatprep.mubr.f32.mxu0 0.0
        %2197 = vmatmul.mubr.f32.gmra.mrb[0].mxu0 %v2104
        %v2198 = vpop.f32.mrb[0].mxu0
        %v2199 = vadd.f32 0.0, %v2198
        %v2200 = vpop.f32.mrb[0].mxu0
        %2201 = vmatprep.mubr.f32.mxu0 0.0
        %2202 = vmatmul.mubr.f32.gmra.mrb[0].mxu0 %v2107
        %v2203 = vpop.f32.mrb[0].mxu0
        %v2204 = vadd.f32 0.0, %v2203
        %v2205 = vpop.f32.mrb[0].mxu0
        %2206 = vmatprep.mubr.f32.mxu0 0.0
        %2207 = vmatmul.mubr.f32.gmra.mrb[0].mxu0 %v2110
        %v2208 = vpop.f32.mrb[0].mxu0
        %v2209 = vadd.f32 0.0, %v2208
        %v2210 = vpop.f32.mrb[0].mxu0
        %2211 = vmatprep.mubr.f32.mxu0 0.0
        %2212 = vmatmul.mubr.f32.gmra.mrb[0].mxu0 %v2113
        %v2213 = vpop.f32.mrb[0].mxu0
        %v2214 = vadd.f32 0.0, %v2213
        %v2215 = vpop.f32.mrb[0].mxu0
        %2216 = vmatprep.mubr.f32.mxu0 0.0
        %2217 = vmatmul.mubr.f32.gmra.mrb[0].mxu0 %v2116
        %v2218 = vpop.f32.mrb[0].mxu0
        %v2219 = vadd.f32 0.0, %v2218
        %v2220 = vpop.f32.mrb[0].mxu0
        %2221 = vmatprep.mubr.f32.mxu0 0.0
        %2222 = vmatmul.mubr.f32.gmra.mrb[0].mxu0 %v2119
        %v2223 = vpop.f32.mrb[0].mxu0
        %v2224 = vadd.f32 0.0, %v2223
        %v2225 = vpop.f32.mrb[0].mxu0
        %2226 = vmatprep.mubr.f32.mxu0 0.0
        %2227 = vmatmul.mubr.f32.gmra.mrb[0].mxu0 %v2122
        %v2228 = vpop.f32.mrb[0].mxu0
        %v2229 = vadd.f32 0.0, %v2228
        %v2230 = vpop.f32.mrb[0].mxu0
        %2231 = vdwg.mxu0
        %v2232 = vadd.f32 %v2090, %v2194
        %v2233 = vadd.f32 %v2091, %v2199
        %v2234 = vadd.f32 %v2092, %v2204
        %v2235 = vadd.f32 %v2093, %v2209
        %v2236 = vadd.f32 %v2094, %v2214
        %v2237 = vadd.f32 %v2095, %v2219
        %v2238 = vadd.f32 %v2096, %v2224
        %v2239 = vadd.f32 %v2097, %v2229
        %s2240 = scalar_lea.vmem [#allocation5], 20
        %v2241 = vld [vmem:[%s2240] sm:$0xf]
        %v2243 = vsel %vm1548, %v1107, 0
        %v2246 = vsel %vm1548, %v1112, 0
        %v2249 = vsel %vm1548, %v1117, 0
        %v2252 = vsel %vm1548, %v1122, 0
        %v2255 = vsel %vm1548, %v1127, 0
        %v2258 = vsel %vm1548, %v1132, 0
        %v2261 = vsel %vm1548, %v1137, 0
        %v2264 = vsel %vm1548, %v1142, 0
        %v2267 = vsel %vm1573, %v2241, 0
        %2269 = vmatprep.subr.mxu0 0.0
        %2270 = vmatpush1.msra.mxu0 %v2267
        %2271 = vmatprep.subr.mxu0 0.0
        %2272 = vmatpush1.msra.mxu0 0.0
        %2273 = vmatprep.subr.mxu0 0.0
        %2274 = vmatpush1.msra.mxu0 0.0
        %2275 = vmatprep.subr.mxu0 0.0
        %2276 = vmatpush1.msra.mxu0 0.0
        %2277 = vmatprep.subr.mxu0 0.0
        %2278 = vmatpush1.msra.mxu0 0.0
        %2279 = vmatprep.subr.mxu0 0.0
        %2280 = vmatpush1.msra.mxu0 0.0
        %2281 = vmatprep.subr.mxu0 0.0
        %2282 = vmatpush1.msra.mxu0 0.0
        %2283 = vmatprep.subr.mxu0 0.0
        %2284 = vmatpush1.msra.mxu0 0.0
        %2285 = vmatprep.subr.mxu0 0.0
        %2286 = vmatpush1.msra.mxu0 0.0
        %2287 = vmatprep.subr.mxu0 0.0
        %2288 = vmatpush1.msra.mxu0 0.0
        %2289 = vmatprep.subr.mxu0 0.0
        %2290 = vmatpush1.msra.mxu0 0.0
        %2291 = vmatprep.subr.mxu0 0.0
        %2292 = vmatpush1.msra.mxu0 0.0
        %2293 = vmatprep.subr.mxu0 0.0
        %2294 = vmatpush1.msra.mxu0 0.0
        %2295 = vmatprep.subr.mxu0 0.0
        %2296 = vmatpush1.msra.mxu0 0.0
        %2297 = vmatprep.subr.mxu0 0.0
        %2298 = vmatpush1.msra.mxu0 0.0
        %2299 = vmatprep.subr.mxu0 0.0
        %2300 = vmatpush1.msra.mxu0 0.0
        %2301 = vmatprep.subr.mxu0 0.0
        %2302 = vmatpush1.msra.mxu0 0.0
        %2303 = vmatprep.subr.mxu0 0.0
        %2304 = vmatpush1.msra.mxu0 0.0
        %2305 = vmatprep.subr.mxu0 0.0
        %2306 = vmatpush1.msra.mxu0 0.0
        %2307 = vmatprep.subr.mxu0 0.0
        %2308 = vmatpush1.msra.mxu0 0.0
        %2309 = vmatprep.subr.mxu0 0.0
        %2310 = vmatpush1.msra.mxu0 0.0
        %2311 = vmatprep.subr.mxu0 0.0
        %2312 = vmatpush1.msra.mxu0 0.0
        %2313 = vmatprep.subr.mxu0 0.0
        %2314 = vmatpush1.msra.mxu0 0.0
        %2315 = vmatprep.subr.mxu0 0.0
        %2316 = vmatpush1.msra.mxu0 0.0
        %2317 = vmatprep.subr.mxu0 0.0
        %2318 = vmatpush1.msra.mxu0 0.0
        %2319 = vmatprep.subr.mxu0 0.0
        %2320 = vmatpush1.msra.mxu0 0.0
        %2321 = vmatprep.subr.mxu0 0.0
        %2322 = vmatpush1.msra.mxu0 0.0
        %2323 = vmatprep.subr.mxu0 0.0
        %2324 = vmatpush1.msra.mxu0 0.0
        %2325 = vmatprep.subr.mxu0 0.0
        %2326 = vmatpush1.msra.mxu0 0.0
        %2327 = vmatprep.subr.mxu0 0.0
        %2328 = vmatpush1.msra.mxu0 0.0
        %2329 = vmatprep.subr.mxu0 0.0
        %2330 = vmatpush1.msra.mxu0 0.0
        %2331 = vmatprep.subr.mxu0 0.0
        %2332 = vmatpush1.msra.mxu0 0.0
        %2333 = vmatprep.mubr.f32.mxu0 0.0
        %2334 = vmatmul.mubr.f32.gmra.mrb[0].mxu0 %v2243
        %v2335 = vpop.f32.mrb[0].mxu0
        %v2336 = vadd.f32 0.0, %v2335
        %v2337 = vpop.f32.mrb[0].mxu0
        %2338 = vmatprep.mubr.f32.mxu0 0.0
        %2339 = vmatmul.mubr.f32.gmra.mrb[0].mxu0 %v2246
        %v2340 = vpop.f32.mrb[0].mxu0
        %v2341 = vadd.f32 0.0, %v2340
        %v2342 = vpop.f32.mrb[0].mxu0
        %2343 = vmatprep.mubr.f32.mxu0 0.0
        %2344 = vmatmul.mubr.f32.gmra.mrb[0].mxu0 %v2249
        %v2345 = vpop.f32.mrb[0].mxu0
        %v2346 = vadd.f32 0.0, %v2345
        %v2347 = vpop.f32.mrb[0].mxu0
        %2348 = vmatprep.mubr.f32.mxu0 0.0
        %2349 = vmatmul.mubr.f32.gmra.mrb[0].mxu0 %v2252
        %v2350 = vpop.f32.mrb[0].mxu0
        %v2351 = vadd.f32 0.0, %v2350
        %v2352 = vpop.f32.mrb[0].mxu0
        %2353 = vmatprep.mubr.f32.mxu0 0.0
        %2354 = vmatmul.mubr.f32.gmra.mrb[0].mxu0 %v2255
        %v2355 = vpop.f32.mrb[0].mxu0
        %v2356 = vadd.f32 0.0, %v2355
        %v2357 = vpop.f32.mrb[0].mxu0
        %2358 = vmatprep.mubr.f32.mxu0 0.0
        %2359 = vmatmul.mubr.f32.gmra.mrb[0].mxu0 %v2258
        %v2360 = vpop.f32.mrb[0].mxu0
        %v2361 = vadd.f32 0.0, %v2360
        %v2362 = vpop.f32.mrb[0].mxu0
        %2363 = vmatprep.mubr.f32.mxu0 0.0
        %2364 = vmatmul.mubr.f32.gmra.mrb[0].mxu0 %v2261
        %v2365 = vpop.f32.mrb[0].mxu0
        %v2366 = vadd.f32 0.0, %v2365
        %v2367 = vpop.f32.mrb[0].mxu0
        %2368 = vmatprep.mubr.f32.mxu0 0.0
        %2369 = vmatmul.mubr.f32.gmra.mrb[0].mxu0 %v2264
        %v2370 = vpop.f32.mrb[0].mxu0
        %v2371 = vadd.f32 0.0, %v2370
        %v2372 = vpop.f32.mrb[0].mxu0
        %2373 = vdwg.mxu0
        %v2374 = vadd.f32 %v2232, %v2336
        %v2375 = vadd.f32 %v2233, %v2341
        %v2376 = vadd.f32 %v2234, %v2346
        %v2377 = vadd.f32 %v2235, %v2351
        %v2378 = vadd.f32 %v2236, %v2356
        %v2379 = vadd.f32 %v2237, %v2361
        %v2380 = vadd.f32 %v2238, %v2366
        %v2381 = vadd.f32 %v2239, %v2371
        %s2382 = scalar_lea.vmem [#allocation5], 24
        %v2383 = vld [vmem:[%s2382] sm:$0xf]
        %v2385 = vsel %vm1548, %v1147, 0
        %v2388 = vsel %vm1548, %v1152, 0
        %v2391 = vsel %vm1548, %v1157, 0
        %v2394 = vsel %vm1548, %v1162, 0
        %v2397 = vsel %vm1548, %v1167, 0
        %v2400 = vsel %vm1548, %v1172, 0
        %v2403 = vsel %vm1548, %v1177, 0
        %v2406 = vsel %vm1548, %v1182, 0
        %v2409 = vsel %vm1573, %v2383, 0
        %2411 = vmatprep.subr.mxu0 0.0
        %2412 = vmatpush1.msra.mxu0 %v2409
        %2413 = vmatprep.subr.mxu0 0.0
        %2414 = vmatpush1.msra.mxu0 0.0
        %2415 = vmatprep.subr.mxu0 0.0
        %2416 = vmatpush1.msra.mxu0 0.0
        %2417 = vmatprep.subr.mxu0 0.0
        %2418 = vmatpush1.msra.mxu0 0.0
        %2419 = vmatprep.subr.mxu0 0.0
        %2420 = vmatpush1.msra.mxu0 0.0
        %2421 = vmatprep.subr.mxu0 0.0
        %2422 = vmatpush1.msra.mxu0 0.0
        %2423 = vmatprep.subr.mxu0 0.0
        %2424 = vmatpush1.msra.mxu0 0.0
        %2425 = vmatprep.subr.mxu0 0.0
        %2426 = vmatpush1.msra.mxu0 0.0
        %2427 = vmatprep.subr.mxu0 0.0
        %2428 = vmatpush1.msra.mxu0 0.0
        %2429 = vmatprep.subr.mxu0 0.0
        %2430 = vmatpush1.msra.mxu0 0.0
        %2431 = vmatprep.subr.mxu0 0.0
        %2432 = vmatpush1.msra.mxu0 0.0
        %2433 = vmatprep.subr.mxu0 0.0
        %2434 = vmatpush1.msra.mxu0 0.0
        %2435 = vmatprep.subr.mxu0 0.0
        %2436 = vmatpush1.msra.mxu0 0.0
        %2437 = vmatprep.subr.mxu0 0.0
        %2438 = vmatpush1.msra.mxu0 0.0
        %2439 = vmatprep.subr.mxu0 0.0
        %2440 = vmatpush1.msra.mxu0 0.0
        %2441 = vmatprep.subr.mxu0 0.0
        %2442 = vmatpush1.msra.mxu0 0.0
        %2443 = vmatprep.subr.mxu0 0.0
        %2444 = vmatpush1.msra.mxu0 0.0
        %2445 = vmatprep.subr.mxu0 0.0
        %2446 = vmatpush1.msra.mxu0 0.0
        %2447 = vmatprep.subr.mxu0 0.0
        %2448 = vmatpush1.msra.mxu0 0.0
        %2449 = vmatprep.subr.mxu0 0.0
        %2450 = vmatpush1.msra.mxu0 0.0
        %2451 = vmatprep.subr.mxu0 0.0
        %2452 = vmatpush1.msra.mxu0 0.0
        %2453 = vmatprep.subr.mxu0 0.0
        %2454 = vmatpush1.msra.mxu0 0.0
        %2455 = vmatprep.subr.mxu0 0.0
        %2456 = vmatpush1.msra.mxu0 0.0
        %2457 = vmatprep.subr.mxu0 0.0
        %2458 = vmatpush1.msra.mxu0 0.0
        %2459 = vmatprep.subr.mxu0 0.0
        %2460 = vmatpush1.msra.mxu0 0.0
        %2461 = vmatprep.subr.mxu0 0.0
        %2462 = vmatpush1.msra.mxu0 0.0
        %2463 = vmatprep.subr.mxu0 0.0
        %2464 = vmatpush1.msra.mxu0 0.0
        %2465 = vmatprep.subr.mxu0 0.0
        %2466 = vmatpush1.msra.mxu0 0.0
        %2467 = vmatprep.subr.mxu0 0.0
        %2468 = vmatpush1.msra.mxu0 0.0
        %2469 = vmatprep.subr.mxu0 0.0
        %2470 = vmatpush1.msra.mxu0 0.0
        %2471 = vmatprep.subr.mxu0 0.0
        %2472 = vmatpush1.msra.mxu0 0.0
        %2473 = vmatprep.subr.mxu0 0.0
        %2474 = vmatpush1.msra.mxu0 0.0
        %2475 = vmatprep.mubr.f32.mxu0 0.0
        %2476 = vmatmul.mubr.f32.gmra.mrb[0].mxu0 %v2385
        %v2477 = vpop.f32.mrb[0].mxu0
        %v2478 = vadd.f32 0.0, %v2477
        %v2479 = vpop.f32.mrb[0].mxu0
        %2480 = vmatprep.mubr.f32.mxu0 0.0
        %2481 = vmatmul.mubr.f32.gmra.mrb[0].mxu0 %v2388
        %v2482 = vpop.f32.mrb[0].mxu0
        %v2483 = vadd.f32 0.0, %v2482
        %v2484 = vpop.f32.mrb[0].mxu0
        %2485 = vmatprep.mubr.f32.mxu0 0.0
        %2486 = vmatmul.mubr.f32.gmra.mrb[0].mxu0 %v2391
        %v2487 = vpop.f32.mrb[0].mxu0
        %v2488 = vadd.f32 0.0, %v2487
        %v2489 = vpop.f32.mrb[0].mxu0
        %2490 = vmatprep.mubr.f32.mxu0 0.0
        %2491 = vmatmul.mubr.f32.gmra.mrb[0].mxu0 %v2394
        %v2492 = vpop.f32.mrb[0].mxu0
        %v2493 = vadd.f32 0.0, %v2492
        %v2494 = vpop.f32.mrb[0].mxu0
        %2495 = vmatprep.mubr.f32.mxu0 0.0
        %2496 = vmatmul.mubr.f32.gmra.mrb[0].mxu0 %v2397
        %v2497 = vpop.f32.mrb[0].mxu0
        %v2498 = vadd.f32 0.0, %v2497
        %v2499 = vpop.f32.mrb[0].mxu0
        %2500 = vmatprep.mubr.f32.mxu0 0.0
        %2501 = vmatmul.mubr.f32.gmra.mrb[0].mxu0 %v2400
        %v2502 = vpop.f32.mrb[0].mxu0
        %v2503 = vadd.f32 0.0, %v2502
        %v2504 = vpop.f32.mrb[0].mxu0
        %2505 = vmatprep.mubr.f32.mxu0 0.0
        %2506 = vmatmul.mubr.f32.gmra.mrb[0].mxu0 %v2403
        %v2507 = vpop.f32.mrb[0].mxu0
        %v2508 = vadd.f32 0.0, %v2507
        %v2509 = vpop.f32.mrb[0].mxu0
        %2510 = vmatprep.mubr.f32.mxu0 0.0
        %2511 = vmatmul.mubr.f32.gmra.mrb[0].mxu0 %v2406
        %v2512 = vpop.f32.mrb[0].mxu0
        %v2513 = vadd.f32 0.0, %v2512
        %v2514 = vpop.f32.mrb[0].mxu0
        %2515 = vdwg.mxu0
        %v2516 = vadd.f32 %v2374, %v2478
        %v2517 = vadd.f32 %v2375, %v2483
        %v2518 = vadd.f32 %v2376, %v2488
        %v2519 = vadd.f32 %v2377, %v2493
        %v2520 = vadd.f32 %v2378, %v2498
        %v2521 = vadd.f32 %v2379, %v2503
        %v2522 = vadd.f32 %v2380, %v2508
        %v2523 = vadd.f32 %v2381, %v2513
        %s2524 = scalar_lea.vmem [#allocation5], 28
        %v2525 = vld [vmem:[%s2524] sm:$0xf]
        %v2527 = vsel %vm1548, %v1187, 0
        %v2530 = vsel %vm1548, %v1192, 0
        %v2533 = vsel %vm1548, %v1197, 0
        %v2536 = vsel %vm1548, %v1202, 0
        %v2539 = vsel %vm1548, %v1207, 0
        %v2542 = vsel %vm1548, %v1212, 0
        %v2545 = vsel %vm1548, %v1217, 0
        %v2548 = vsel %vm1548, %v1222, 0
        %v2551 = vsel %vm1573, %v2525, 0
        %2553 = vmatprep.subr.mxu0 0.0
        %2554 = vmatpush1.msra.mxu0 %v2551
        %2555 = vmatprep.subr.mxu0 0.0
        %2556 = vmatpush1.msra.mxu0 0.0
        %2557 = vmatprep.subr.mxu0 0.0
        %2558 = vmatpush1.msra.mxu0 0.0
        %2559 = vmatprep.subr.mxu0 0.0
        %2560 = vmatpush1.msra.mxu0 0.0
        %2561 = vmatprep.subr.mxu0 0.0
        %2562 = vmatpush1.msra.mxu0 0.0
        %2563 = vmatprep.subr.mxu0 0.0
        %2564 = vmatpush1.msra.mxu0 0.0
        %2565 = vmatprep.subr.mxu0 0.0
        %2566 = vmatpush1.msra.mxu0 0.0
        %2567 = vmatprep.subr.mxu0 0.0
        %2568 = vmatpush1.msra.mxu0 0.0
        %2569 = vmatprep.subr.mxu0 0.0
        %2570 = vmatpush1.msra.mxu0 0.0
        %2571 = vmatprep.subr.mxu0 0.0
        %2572 = vmatpush1.msra.mxu0 0.0
        %2573 = vmatprep.subr.mxu0 0.0
        %2574 = vmatpush1.msra.mxu0 0.0
        %2575 = vmatprep.subr.mxu0 0.0
        %2576 = vmatpush1.msra.mxu0 0.0
        %2577 = vmatprep.subr.mxu0 0.0
        %2578 = vmatpush1.msra.mxu0 0.0
        %2579 = vmatprep.subr.mxu0 0.0
        %2580 = vmatpush1.msra.mxu0 0.0
        %2581 = vmatprep.subr.mxu0 0.0
        %2582 = vmatpush1.msra.mxu0 0.0
        %2583 = vmatprep.subr.mxu0 0.0
        %2584 = vmatpush1.msra.mxu0 0.0
        %2585 = vmatprep.subr.mxu0 0.0
        %2586 = vmatpush1.msra.mxu0 0.0
        %2587 = vmatprep.subr.mxu0 0.0
        %2588 = vmatpush1.msra.mxu0 0.0
        %2589 = vmatprep.subr.mxu0 0.0
        %2590 = vmatpush1.msra.mxu0 0.0
        %2591 = vmatprep.subr.mxu0 0.0
        %2592 = vmatpush1.msra.mxu0 0.0
        %2593 = vmatprep.subr.mxu0 0.0
        %2594 = vmatpush1.msra.mxu0 0.0
        %2595 = vmatprep.subr.mxu0 0.0
        %2596 = vmatpush1.msra.mxu0 0.0
        %2597 = vmatprep.subr.mxu0 0.0
        %2598 = vmatpush1.msra.mxu0 0.0
        %2599 = vmatprep.subr.mxu0 0.0
        %2600 = vmatpush1.msra.mxu0 0.0
        %2601 = vmatprep.subr.mxu0 0.0
        %2602 = vmatpush1.msra.mxu0 0.0
        %2603 = vmatprep.subr.mxu0 0.0
        %2604 = vmatpush1.msra.mxu0 0.0
        %2605 = vmatprep.subr.mxu0 0.0
        %2606 = vmatpush1.msra.mxu0 0.0
        %2607 = vmatprep.subr.mxu0 0.0
        %2608 = vmatpush1.msra.mxu0 0.0
        %2609 = vmatprep.subr.mxu0 0.0
        %2610 = vmatpush1.msra.mxu0 0.0
        %2611 = vmatprep.subr.mxu0 0.0
        %2612 = vmatpush1.msra.mxu0 0.0
        %2613 = vmatprep.subr.mxu0 0.0
        %2614 = vmatpush1.msra.mxu0 0.0
        %2615 = vmatprep.subr.mxu0 0.0
        %2616 = vmatpush1.msra.mxu0 0.0
        %2617 = vmatprep.mubr.f32.mxu0 0.0
        %2618 = vmatmul.mubr.f32.gmra.mrb[0].mxu0 %v2527
        %v2619 = vpop.f32.mrb[0].mxu0
        %v2620 = vadd.f32 0.0, %v2619
        %v2621 = vpop.f32.mrb[0].mxu0
        %2622 = vmatprep.mubr.f32.mxu0 0.0
        %2623 = vmatmul.mubr.f32.gmra.mrb[0].mxu0 %v2530
        %v2624 = vpop.f32.mrb[0].mxu0
        %v2625 = vadd.f32 0.0, %v2624
        %v2626 = vpop.f32.mrb[0].mxu0
        %2627 = vmatprep.mubr.f32.mxu0 0.0
        %2628 = vmatmul.mubr.f32.gmra.mrb[0].mxu0 %v2533
        %v2629 = vpop.f32.mrb[0].mxu0
        %v2630 = vadd.f32 0.0, %v2629
        %v2631 = vpop.f32.mrb[0].mxu0
        %2632 = vmatprep.mubr.f32.mxu0 0.0
        %2633 = vmatmul.mubr.f32.gmra.mrb[0].mxu0 %v2536
        %v2634 = vpop.f32.mrb[0].mxu0
        %v2635 = vadd.f32 0.0, %v2634
        %v2636 = vpop.f32.mrb[0].mxu0
        %2637 = vmatprep.mubr.f32.mxu0 0.0
        %2638 = vmatmul.mubr.f32.gmra.mrb[0].mxu0 %v2539
        %v2639 = vpop.f32.mrb[0].mxu0
        %v2640 = vadd.f32 0.0, %v2639
        %v2641 = vpop.f32.mrb[0].mxu0
        %2642 = vmatprep.mubr.f32.mxu0 0.0
        %2643 = vmatmul.mubr.f32.gmra.mrb[0].mxu0 %v2542
        %v2644 = vpop.f32.mrb[0].mxu0
        %v2645 = vadd.f32 0.0, %v2644
        %v2646 = vpop.f32.mrb[0].mxu0
        %2647 = vmatprep.mubr.f32.mxu0 0.0
        %2648 = vmatmul.mubr.f32.gmra.mrb[0].mxu0 %v2545
        %v2649 = vpop.f32.mrb[0].mxu0
        %v2650 = vadd.f32 0.0, %v2649
        %v2651 = vpop.f32.mrb[0].mxu0
        %2652 = vmatprep.mubr.f32.mxu0 0.0
        %2653 = vmatmul.mubr.f32.gmra.mrb[0].mxu0 %v2548
        %v2654 = vpop.f32.mrb[0].mxu0
        %v2655 = vadd.f32 0.0, %v2654
        %v2656 = vpop.f32.mrb[0].mxu0
        %2657 = vdwg.mxu0
        %v2658 = vadd.f32 %v2516, %v2620
        %v2659 = vadd.f32 %v2517, %v2625
        %v2660 = vadd.f32 %v2518, %v2630
        %v2661 = vadd.f32 %v2519, %v2635
        %v2662 = vadd.f32 %v2520, %v2640
        %v2663 = vadd.f32 %v2521, %v2645
        %v2664 = vadd.f32 %v2522, %v2650
        %v2665 = vadd.f32 %v2523, %v2655
        %s2666 = scalar_lea.vmem [#allocation5], 32
        %v2667 = vld [vmem:[%s2666] sm:$0xf]
        %v2669 = vsel %vm1548, %v1227, 0
        %v2672 = vsel %vm1548, %v1232, 0
        %v2675 = vsel %vm1548, %v1237, 0
        %v2678 = vsel %vm1548, %v1242, 0
        %v2681 = vsel %vm1548, %v1247, 0
        %v2684 = vsel %vm1548, %v1252, 0
        %v2687 = vsel %vm1548, %v1257, 0
        %v2690 = vsel %vm1548, %v1262, 0
        %v2693 = vsel %vm1573, %v2667, 0
        %2695 = vmatprep.subr.mxu0 0.0
        %2696 = vmatpush1.msra.mxu0 %v2693
        %2697 = vmatprep.subr.mxu0 0.0
        %2698 = vmatpush1.msra.mxu0 0.0
        %2699 = vmatprep.subr.mxu0 0.0
        %2700 = vmatpush1.msra.mxu0 0.0
        %2701 = vmatprep.subr.mxu0 0.0
        %2702 = vmatpush1.msra.mxu0 0.0
        %2703 = vmatprep.subr.mxu0 0.0
        %2704 = vmatpush1.msra.mxu0 0.0
        %2705 = vmatprep.subr.mxu0 0.0
        %2706 = vmatpush1.msra.mxu0 0.0
        %2707 = vmatprep.subr.mxu0 0.0
        %2708 = vmatpush1.msra.mxu0 0.0
        %2709 = vmatprep.subr.mxu0 0.0
        %2710 = vmatpush1.msra.mxu0 0.0
        %2711 = vmatprep.subr.mxu0 0.0
        %2712 = vmatpush1.msra.mxu0 0.0
        %2713 = vmatprep.subr.mxu0 0.0
        %2714 = vmatpush1.msra.mxu0 0.0
        %2715 = vmatprep.subr.mxu0 0.0
        %2716 = vmatpush1.msra.mxu0 0.0
        %2717 = vmatprep.subr.mxu0 0.0
        %2718 = vmatpush1.msra.mxu0 0.0
        %2719 = vmatprep.subr.mxu0 0.0
        %2720 = vmatpush1.msra.mxu0 0.0
        %2721 = vmatprep.subr.mxu0 0.0
        %2722 = vmatpush1.msra.mxu0 0.0
        %2723 = vmatprep.subr.mxu0 0.0
        %2724 = vmatpush1.msra.mxu0 0.0
        %2725 = vmatprep.subr.mxu0 0.0
        %2726 = vmatpush1.msra.mxu0 0.0
        %2727 = vmatprep.subr.mxu0 0.0
        %2728 = vmatpush1.msra.mxu0 0.0
        %2729 = vmatprep.subr.mxu0 0.0
        %2730 = vmatpush1.msra.mxu0 0.0
        %2731 = vmatprep.subr.mxu0 0.0
        %2732 = vmatpush1.msra.mxu0 0.0
        %2733 = vmatprep.subr.mxu0 0.0
        %2734 = vmatpush1.msra.mxu0 0.0
        %2735 = vmatprep.subr.mxu0 0.0
        %2736 = vmatpush1.msra.mxu0 0.0
        %2737 = vmatprep.subr.mxu0 0.0
        %2738 = vmatpush1.msra.mxu0 0.0
        %2739 = vmatprep.subr.mxu0 0.0
        %2740 = vmatpush1.msra.mxu0 0.0
        %2741 = vmatprep.subr.mxu0 0.0
        %2742 = vmatpush1.msra.mxu0 0.0
        %2743 = vmatprep.subr.mxu0 0.0
        %2744 = vmatpush1.msra.mxu0 0.0
        %2745 = vmatprep.subr.mxu0 0.0
        %2746 = vmatpush1.msra.mxu0 0.0
        %2747 = vmatprep.subr.mxu0 0.0
        %2748 = vmatpush1.msra.mxu0 0.0
        %2749 = vmatprep.subr.mxu0 0.0
        %2750 = vmatpush1.msra.mxu0 0.0
        %2751 = vmatprep.subr.mxu0 0.0
        %2752 = vmatpush1.msra.mxu0 0.0
        %2753 = vmatprep.subr.mxu0 0.0
        %2754 = vmatpush1.msra.mxu0 0.0
        %2755 = vmatprep.subr.mxu0 0.0
        %2756 = vmatpush1.msra.mxu0 0.0
        %2757 = vmatprep.subr.mxu0 0.0
        %2758 = vmatpush1.msra.mxu0 0.0
        %2759 = vmatprep.mubr.f32.mxu0 0.0
        %2760 = vmatmul.mubr.f32.gmra.mrb[0].mxu0 %v2669
        %v2761 = vpop.f32.mrb[0].mxu0
        %v2762 = vadd.f32 0.0, %v2761
        %v2763 = vpop.f32.mrb[0].mxu0
        %2764 = vmatprep.mubr.f32.mxu0 0.0
        %2765 = vmatmul.mubr.f32.gmra.mrb[0].mxu0 %v2672
        %v2766 = vpop.f32.mrb[0].mxu0
        %v2767 = vadd.f32 0.0, %v2766
        %v2768 = vpop.f32.mrb[0].mxu0
        %2769 = vmatprep.mubr.f32.mxu0 0.0
        %2770 = vmatmul.mubr.f32.gmra.mrb[0].mxu0 %v2675
        %v2771 = vpop.f32.mrb[0].mxu0
        %v2772 = vadd.f32 0.0, %v2771
        %v2773 = vpop.f32.mrb[0].mxu0
        %2774 = vmatprep.mubr.f32.mxu0 0.0
        %2775 = vmatmul.mubr.f32.gmra.mrb[0].mxu0 %v2678
        %v2776 = vpop.f32.mrb[0].mxu0
        %v2777 = vadd.f32 0.0, %v2776
        %v2778 = vpop.f32.mrb[0].mxu0
        %2779 = vmatprep.mubr.f32.mxu0 0.0
        %2780 = vmatmul.mubr.f32.gmra.mrb[0].mxu0 %v2681
        %v2781 = vpop.f32.mrb[0].mxu0
        %v2782 = vadd.f32 0.0, %v2781
        %v2783 = vpop.f32.mrb[0].mxu0
        %2784 = vmatprep.mubr.f32.mxu0 0.0
        %2785 = vmatmul.mubr.f32.gmra.mrb[0].mxu0 %v2684
        %v2786 = vpop.f32.mrb[0].mxu0
        %v2787 = vadd.f32 0.0, %v2786
        %v2788 = vpop.f32.mrb[0].mxu0
        %2789 = vmatprep.mubr.f32.mxu0 0.0
        %2790 = vmatmul.mubr.f32.gmra.mrb[0].mxu0 %v2687
        %v2791 = vpop.f32.mrb[0].mxu0
        %v2792 = vadd.f32 0.0, %v2791
        %v2793 = vpop.f32.mrb[0].mxu0
        %2794 = vmatprep.mubr.f32.mxu0 0.0
        %2795 = vmatmul.mubr.f32.gmra.mrb[0].mxu0 %v2690
        %v2796 = vpop.f32.mrb[0].mxu0
        %v2797 = vadd.f32 0.0, %v2796
        %v2798 = vpop.f32.mrb[0].mxu0
        %2799 = vdwg.mxu0
        %v2800 = vadd.f32 %v2658, %v2762
        %v2801 = vadd.f32 %v2659, %v2767
        %v2802 = vadd.f32 %v2660, %v2772
        %v2803 = vadd.f32 %v2661, %v2777
        %v2804 = vadd.f32 %v2662, %v2782
        %v2805 = vadd.f32 %v2663, %v2787
        %v2806 = vadd.f32 %v2664, %v2792
        %v2807 = vadd.f32 %v2665, %v2797
        %s2808 = scalar_lea.vmem [#allocation5], 36
        %v2809 = vld [vmem:[%s2808] sm:$0xf]
        %v2811 = vsel %vm1548, %v1267, 0
        %v2814 = vsel %vm1548, %v1272, 0
        %v2817 = vsel %vm1548, %v1277, 0
        %v2820 = vsel %vm1548, %v1282, 0
        %v2823 = vsel %vm1548, %v1287, 0
        %v2826 = vsel %vm1548, %v1292, 0
        %v2829 = vsel %vm1548, %v1297, 0
        %v2832 = vsel %vm1548, %v1302, 0
        %v2835 = vsel %vm1573, %v2809, 0
        %2837 = vmatprep.subr.mxu0 0.0
        %2838 = vmatpush1.msra.mxu0 %v2835
        %2839 = vmatprep.subr.mxu0 0.0
        %2840 = vmatpush1.msra.mxu0 0.0
        %2841 = vmatprep.subr.mxu0 0.0
        %2842 = vmatpush1.msra.mxu0 0.0
        %2843 = vmatprep.subr.mxu0 0.0
        %2844 = vmatpush1.msra.mxu0 0.0
        %2845 = vmatprep.subr.mxu0 0.0
        %2846 = vmatpush1.msra.mxu0 0.0
        %2847 = vmatprep.subr.mxu0 0.0
        %2848 = vmatpush1.msra.mxu0 0.0
        %2849 = vmatprep.subr.mxu0 0.0
        %2850 = vmatpush1.msra.mxu0 0.0
        %2851 = vmatprep.subr.mxu0 0.0
        %2852 = vmatpush1.msra.mxu0 0.0
        %2853 = vmatprep.subr.mxu0 0.0
        %2854 = vmatpush1.msra.mxu0 0.0
        %2855 = vmatprep.subr.mxu0 0.0
        %2856 = vmatpush1.msra.mxu0 0.0
        %2857 = vmatprep.subr.mxu0 0.0
        %2858 = vmatpush1.msra.mxu0 0.0
        %2859 = vmatprep.subr.mxu0 0.0
        %2860 = vmatpush1.msra.mxu0 0.0
        %2861 = vmatprep.subr.mxu0 0.0
        %2862 = vmatpush1.msra.mxu0 0.0
        %2863 = vmatprep.subr.mxu0 0.0
        %2864 = vmatpush1.msra.mxu0 0.0
        %2865 = vmatprep.subr.mxu0 0.0
        %2866 = vmatpush1.msra.mxu0 0.0
        %2867 = vmatprep.subr.mxu0 0.0
        %2868 = vmatpush1.msra.mxu0 0.0
        %2869 = vmatprep.subr.mxu0 0.0
        %2870 = vmatpush1.msra.mxu0 0.0
        %2871 = vmatprep.subr.mxu0 0.0
        %2872 = vmatpush1.msra.mxu0 0.0
        %2873 = vmatprep.subr.mxu0 0.0
        %2874 = vmatpush1.msra.mxu0 0.0
        %2875 = vmatprep.subr.mxu0 0.0
        %2876 = vmatpush1.msra.mxu0 0.0
        %2877 = vmatprep.subr.mxu0 0.0
        %2878 = vmatpush1.msra.mxu0 0.0
        %2879 = vmatprep.subr.mxu0 0.0
        %2880 = vmatpush1.msra.mxu0 0.0
        %2881 = vmatprep.subr.mxu0 0.0
        %2882 = vmatpush1.msra.mxu0 0.0
        %2883 = vmatprep.subr.mxu0 0.0
        %2884 = vmatpush1.msra.mxu0 0.0
        %2885 = vmatprep.subr.mxu0 0.0
        %2886 = vmatpush1.msra.mxu0 0.0
        %2887 = vmatprep.subr.mxu0 0.0
        %2888 = vmatpush1.msra.mxu0 0.0
        %2889 = vmatprep.subr.mxu0 0.0
        %2890 = vmatpush1.msra.mxu0 0.0
        %2891 = vmatprep.subr.mxu0 0.0
        %2892 = vmatpush1.msra.mxu0 0.0
        %2893 = vmatprep.subr.mxu0 0.0
        %2894 = vmatpush1.msra.mxu0 0.0
        %2895 = vmatprep.subr.mxu0 0.0
        %2896 = vmatpush1.msra.mxu0 0.0
        %2897 = vmatprep.subr.mxu0 0.0
        %2898 = vmatpush1.msra.mxu0 0.0
        %2899 = vmatprep.subr.mxu0 0.0
        %2900 = vmatpush1.msra.mxu0 0.0
        %2901 = vmatprep.mubr.f32.mxu0 0.0
        %2902 = vmatmul.mubr.f32.gmra.mrb[0].mxu0 %v2811
        %v2903 = vpop.f32.mrb[0].mxu0
        %v2904 = vadd.f32 0.0, %v2903
        %v2905 = vpop.f32.mrb[0].mxu0
        %2906 = vmatprep.mubr.f32.mxu0 0.0
        %2907 = vmatmul.mubr.f32.gmra.mrb[0].mxu0 %v2814
        %v2908 = vpop.f32.mrb[0].mxu0
        %v2909 = vadd.f32 0.0, %v2908
        %v2910 = vpop.f32.mrb[0].mxu0
        %2911 = vmatprep.mubr.f32.mxu0 0.0
        %2912 = vmatmul.mubr.f32.gmra.mrb[0].mxu0 %v2817
        %v2913 = vpop.f32.mrb[0].mxu0
        %v2914 = vadd.f32 0.0, %v2913
        %v2915 = vpop.f32.mrb[0].mxu0
        %2916 = vmatprep.mubr.f32.mxu0 0.0
        %2917 = vmatmul.mubr.f32.gmra.mrb[0].mxu0 %v2820
        %v2918 = vpop.f32.mrb[0].mxu0
        %v2919 = vadd.f32 0.0, %v2918
        %v2920 = vpop.f32.mrb[0].mxu0
        %2921 = vmatprep.mubr.f32.mxu0 0.0
        %2922 = vmatmul.mubr.f32.gmra.mrb[0].mxu0 %v2823
        %v2923 = vpop.f32.mrb[0].mxu0
        %v2924 = vadd.f32 0.0, %v2923
        %v2925 = vpop.f32.mrb[0].mxu0
        %2926 = vmatprep.mubr.f32.mxu0 0.0
        %2927 = vmatmul.mubr.f32.gmra.mrb[0].mxu0 %v2826
        %v2928 = vpop.f32.mrb[0].mxu0
        %v2929 = vadd.f32 0.0, %v2928
        %v2930 = vpop.f32.mrb[0].mxu0
        %2931 = vmatprep.mubr.f32.mxu0 0.0
        %2932 = vmatmul.mubr.f32.gmra.mrb[0].mxu0 %v2829
        %v2933 = vpop.f32.mrb[0].mxu0
        %v2934 = vadd.f32 0.0, %v2933
        %v2935 = vpop.f32.mrb[0].mxu0
        %2936 = vmatprep.mubr.f32.mxu0 0.0
        %2937 = vmatmul.mubr.f32.gmra.mrb[0].mxu0 %v2832
        %v2938 = vpop.f32.mrb[0].mxu0
        %v2939 = vadd.f32 0.0, %v2938
        %v2940 = vpop.f32.mrb[0].mxu0
        %2941 = vdwg.mxu0
        %v2942 = vadd.f32 %v2800, %v2904
        %v2943 = vadd.f32 %v2801, %v2909
        %v2944 = vadd.f32 %v2802, %v2914
        %v2945 = vadd.f32 %v2803, %v2919
        %v2946 = vadd.f32 %v2804, %v2924
        %v2947 = vadd.f32 %v2805, %v2929
        %v2948 = vadd.f32 %v2806, %v2934
        %v2949 = vadd.f32 %v2807, %v2939
        %s2950 = scalar_lea.vmem [#allocation5], 40
        %v2951 = vld [vmem:[%s2950] sm:$0xf]
        %v2953 = vsel %vm1548, %v1307, 0
        %v2956 = vsel %vm1548, %v1312, 0
        %v2959 = vsel %vm1548, %v1317, 0
        %v2962 = vsel %vm1548, %v1322, 0
        %v2965 = vsel %vm1548, %v1327, 0
        %v2968 = vsel %vm1548, %v1332, 0
        %v2971 = vsel %vm1548, %v1337, 0
        %v2974 = vsel %vm1548, %v1342, 0
        %v2977 = vsel %vm1573, %v2951, 0
        %2979 = vmatprep.subr.mxu0 0.0
        %2980 = vmatpush1.msra.mxu0 %v2977
        %2981 = vmatprep.subr.mxu0 0.0
        %2982 = vmatpush1.msra.mxu0 0.0
        %2983 = vmatprep.subr.mxu0 0.0
        %2984 = vmatpush1.msra.mxu0 0.0
        %2985 = vmatprep.subr.mxu0 0.0
        %2986 = vmatpush1.msra.mxu0 0.0
        %2987 = vmatprep.subr.mxu0 0.0
        %2988 = vmatpush1.msra.mxu0 0.0
        %2989 = vmatprep.subr.mxu0 0.0
        %2990 = vmatpush1.msra.mxu0 0.0
        %2991 = vmatprep.subr.mxu0 0.0
        %2992 = vmatpush1.msra.mxu0 0.0
        %2993 = vmatprep.subr.mxu0 0.0
        %2994 = vmatpush1.msra.mxu0 0.0
        %2995 = vmatprep.subr.mxu0 0.0
        %2996 = vmatpush1.msra.mxu0 0.0
        %2997 = vmatprep.subr.mxu0 0.0
        %2998 = vmatpush1.msra.mxu0 0.0
        %2999 = vmatprep.subr.mxu0 0.0
        %3000 = vmatpush1.msra.mxu0 0.0
        %3001 = vmatprep.subr.mxu0 0.0
        %3002 = vmatpush1.msra.mxu0 0.0
        %3003 = vmatprep.subr.mxu0 0.0
        %3004 = vmatpush1.msra.mxu0 0.0
        %3005 = vmatprep.subr.mxu0 0.0
        %3006 = vmatpush1.msra.mxu0 0.0
        %3007 = vmatprep.subr.mxu0 0.0
        %3008 = vmatpush1.msra.mxu0 0.0
        %3009 = vmatprep.subr.mxu0 0.0
        %3010 = vmatpush1.msra.mxu0 0.0
        %3011 = vmatprep.subr.mxu0 0.0
        %3012 = vmatpush1.msra.mxu0 0.0
        %3013 = vmatprep.subr.mxu0 0.0
        %3014 = vmatpush1.msra.mxu0 0.0
        %3015 = vmatprep.subr.mxu0 0.0
        %3016 = vmatpush1.msra.mxu0 0.0
        %3017 = vmatprep.subr.mxu0 0.0
        %3018 = vmatpush1.msra.mxu0 0.0
        %3019 = vmatprep.subr.mxu0 0.0
        %3020 = vmatpush1.msra.mxu0 0.0
        %3021 = vmatprep.subr.mxu0 0.0
        %3022 = vmatpush1.msra.mxu0 0.0
        %3023 = vmatprep.subr.mxu0 0.0
        %3024 = vmatpush1.msra.mxu0 0.0
        %3025 = vmatprep.subr.mxu0 0.0
        %3026 = vmatpush1.msra.mxu0 0.0
        %3027 = vmatprep.subr.mxu0 0.0
        %3028 = vmatpush1.msra.mxu0 0.0
        %3029 = vmatprep.subr.mxu0 0.0
        %3030 = vmatpush1.msra.mxu0 0.0
        %3031 = vmatprep.subr.mxu0 0.0
        %3032 = vmatpush1.msra.mxu0 0.0
        %3033 = vmatprep.subr.mxu0 0.0
        %3034 = vmatpush1.msra.mxu0 0.0
        %3035 = vmatprep.subr.mxu0 0.0
        %3036 = vmatpush1.msra.mxu0 0.0
        %3037 = vmatprep.subr.mxu0 0.0
        %3038 = vmatpush1.msra.mxu0 0.0
        %3039 = vmatprep.subr.mxu0 0.0
        %3040 = vmatpush1.msra.mxu0 0.0
        %3041 = vmatprep.subr.mxu0 0.0
        %3042 = vmatpush1.msra.mxu0 0.0
        %3043 = vmatprep.mubr.f32.mxu0 0.0
        %3044 = vmatmul.mubr.f32.gmra.mrb[0].mxu0 %v2953
        %v3045 = vpop.f32.mrb[0].mxu0
        %v3046 = vadd.f32 0.0, %v3045
        %v3047 = vpop.f32.mrb[0].mxu0
        %3048 = vmatprep.mubr.f32.mxu0 0.0
        %3049 = vmatmul.mubr.f32.gmra.mrb[0].mxu0 %v2956
        %v3050 = vpop.f32.mrb[0].mxu0
        %v3051 = vadd.f32 0.0, %v3050
        %v3052 = vpop.f32.mrb[0].mxu0
        %3053 = vmatprep.mubr.f32.mxu0 0.0
        %3054 = vmatmul.mubr.f32.gmra.mrb[0].mxu0 %v2959
        %v3055 = vpop.f32.mrb[0].mxu0
        %v3056 = vadd.f32 0.0, %v3055
        %v3057 = vpop.f32.mrb[0].mxu0
        %3058 = vmatprep.mubr.f32.mxu0 0.0
        %3059 = vmatmul.mubr.f32.gmra.mrb[0].mxu0 %v2962
        %v3060 = vpop.f32.mrb[0].mxu0
        %v3061 = vadd.f32 0.0, %v3060
        %v3062 = vpop.f32.mrb[0].mxu0
        %3063 = vmatprep.mubr.f32.mxu0 0.0
        %3064 = vmatmul.mubr.f32.gmra.mrb[0].mxu0 %v2965
        %v3065 = vpop.f32.mrb[0].mxu0
        %v3066 = vadd.f32 0.0, %v3065
        %v3067 = vpop.f32.mrb[0].mxu0
        %3068 = vmatprep.mubr.f32.mxu0 0.0
        %3069 = vmatmul.mubr.f32.gmra.mrb[0].mxu0 %v2968
        %v3070 = vpop.f32.mrb[0].mxu0
        %v3071 = vadd.f32 0.0, %v3070
        %v3072 = vpop.f32.mrb[0].mxu0
        %3073 = vmatprep.mubr.f32.mxu0 0.0
        %3074 = vmatmul.mubr.f32.gmra.mrb[0].mxu0 %v2971
        %v3075 = vpop.f32.mrb[0].mxu0
        %v3076 = vadd.f32 0.0, %v3075
        %v3077 = vpop.f32.mrb[0].mxu0
        %3078 = vmatprep.mubr.f32.mxu0 0.0
        %3079 = vmatmul.mubr.f32.gmra.mrb[0].mxu0 %v2974
        %v3080 = vpop.f32.mrb[0].mxu0
        %v3081 = vadd.f32 0.0, %v3080
        %v3082 = vpop.f32.mrb[0].mxu0
        %3083 = vdwg.mxu0
        %v3084 = vadd.f32 %v2942, %v3046
        %v3085 = vadd.f32 %v2943, %v3051
        %v3086 = vadd.f32 %v2944, %v3056
        %v3087 = vadd.f32 %v2945, %v3061
        %v3088 = vadd.f32 %v2946, %v3066
        %v3089 = vadd.f32 %v2947, %v3071
        %v3090 = vadd.f32 %v2948, %v3076
        %v3091 = vadd.f32 %v2949, %v3081
        %s3092 = scalar_lea.vmem [#allocation5], 44
        %v3093 = vld [vmem:[%s3092] sm:$0xf]
        %v3095 = vsel %vm1548, %v1347, 0
        %v3098 = vsel %vm1548, %v1352, 0
        %v3101 = vsel %vm1548, %v1357, 0
        %v3104 = vsel %vm1548, %v1362, 0
        %v3107 = vsel %vm1548, %v1367, 0
        %v3110 = vsel %vm1548, %v1372, 0
        %v3113 = vsel %vm1548, %v1377, 0
        %v3116 = vsel %vm1548, %v1382, 0
        %v3119 = vsel %vm1573, %v3093, 0
        %3121 = vmatprep.subr.mxu0 0.0
        %3122 = vmatpush1.msra.mxu0 %v3119
        %3123 = vmatprep.subr.mxu0 0.0
        %3124 = vmatpush1.msra.mxu0 0.0
        %3125 = vmatprep.subr.mxu0 0.0
        %3126 = vmatpush1.msra.mxu0 0.0
        %3127 = vmatprep.subr.mxu0 0.0
        %3128 = vmatpush1.msra.mxu0 0.0
        %3129 = vmatprep.subr.mxu0 0.0
        %3130 = vmatpush1.msra.mxu0 0.0
        %3131 = vmatprep.subr.mxu0 0.0
        %3132 = vmatpush1.msra.mxu0 0.0
        %3133 = vmatprep.subr.mxu0 0.0
        %3134 = vmatpush1.msra.mxu0 0.0
        %3135 = vmatprep.subr.mxu0 0.0
        %3136 = vmatpush1.msra.mxu0 0.0
        %3137 = vmatprep.subr.mxu0 0.0
        %3138 = vmatpush1.msra.mxu0 0.0
        %3139 = vmatprep.subr.mxu0 0.0
        %3140 = vmatpush1.msra.mxu0 0.0
        %3141 = vmatprep.subr.mxu0 0.0
        %3142 = vmatpush1.msra.mxu0 0.0
        %3143 = vmatprep.subr.mxu0 0.0
        %3144 = vmatpush1.msra.mxu0 0.0
        %3145 = vmatprep.subr.mxu0 0.0
        %3146 = vmatpush1.msra.mxu0 0.0
        %3147 = vmatprep.subr.mxu0 0.0
        %3148 = vmatpush1.msra.mxu0 0.0
        %3149 = vmatprep.subr.mxu0 0.0
        %3150 = vmatpush1.msra.mxu0 0.0
        %3151 = vmatprep.subr.mxu0 0.0
        %3152 = vmatpush1.msra.mxu0 0.0
        %3153 = vmatprep.subr.mxu0 0.0
        %3154 = vmatpush1.msra.mxu0 0.0
        %3155 = vmatprep.subr.mxu0 0.0
        %3156 = vmatpush1.msra.mxu0 0.0
        %3157 = vmatprep.subr.mxu0 0.0
        %3158 = vmatpush1.msra.mxu0 0.0
        %3159 = vmatprep.subr.mxu0 0.0
        %3160 = vmatpush1.msra.mxu0 0.0
        %3161 = vmatprep.subr.mxu0 0.0
        %3162 = vmatpush1.msra.mxu0 0.0
        %3163 = vmatprep.subr.mxu0 0.0
        %3164 = vmatpush1.msra.mxu0 0.0
        %3165 = vmatprep.subr.mxu0 0.0
        %3166 = vmatpush1.msra.mxu0 0.0
        %3167 = vmatprep.subr.mxu0 0.0
        %3168 = vmatpush1.msra.mxu0 0.0
        %3169 = vmatprep.subr.mxu0 0.0
        %3170 = vmatpush1.msra.mxu0 0.0
        %3171 = vmatprep.subr.mxu0 0.0
        %3172 = vmatpush1.msra.mxu0 0.0
        %3173 = vmatprep.subr.mxu0 0.0
        %3174 = vmatpush1.msra.mxu0 0.0
        %3175 = vmatprep.subr.mxu0 0.0
        %3176 = vmatpush1.msra.mxu0 0.0
        %3177 = vmatprep.subr.mxu0 0.0
        %3178 = vmatpush1.msra.mxu0 0.0
        %3179 = vmatprep.subr.mxu0 0.0
        %3180 = vmatpush1.msra.mxu0 0.0
        %3181 = vmatprep.subr.mxu0 0.0
        %3182 = vmatpush1.msra.mxu0 0.0
        %3183 = vmatprep.subr.mxu0 0.0
        %3184 = vmatpush1.msra.mxu0 0.0
        %3185 = vmatprep.mubr.f32.mxu0 0.0
        %3186 = vmatmul.mubr.f32.gmra.mrb[0].mxu0 %v3095
        %v3187 = vpop.f32.mrb[0].mxu0
        %v3188 = vadd.f32 0.0, %v3187
        %v3189 = vpop.f32.mrb[0].mxu0
        %3190 = vmatprep.mubr.f32.mxu0 0.0
        %3191 = vmatmul.mubr.f32.gmra.mrb[0].mxu0 %v3098
        %v3192 = vpop.f32.mrb[0].mxu0
        %v3193 = vadd.f32 0.0, %v3192
        %v3194 = vpop.f32.mrb[0].mxu0
        %3195 = vmatprep.mubr.f32.mxu0 0.0
        %3196 = vmatmul.mubr.f32.gmra.mrb[0].mxu0 %v3101
        %v3197 = vpop.f32.mrb[0].mxu0
        %v3198 = vadd.f32 0.0, %v3197
        %v3199 = vpop.f32.mrb[0].mxu0
        %3200 = vmatprep.mubr.f32.mxu0 0.0
        %3201 = vmatmul.mubr.f32.gmra.mrb[0].mxu0 %v3104
        %v3202 = vpop.f32.mrb[0].mxu0
        %v3203 = vadd.f32 0.0, %v3202
        %v3204 = vpop.f32.mrb[0].mxu0
        %3205 = vmatprep.mubr.f32.mxu0 0.0
        %3206 = vmatmul.mubr.f32.gmra.mrb[0].mxu0 %v3107
        %v3207 = vpop.f32.mrb[0].mxu0
        %v3208 = vadd.f32 0.0, %v3207
        %v3209 = vpop.f32.mrb[0].mxu0
        %3210 = vmatprep.mubr.f32.mxu0 0.0
        %3211 = vmatmul.mubr.f32.gmra.mrb[0].mxu0 %v3110
        %v3212 = vpop.f32.mrb[0].mxu0
        %v3213 = vadd.f32 0.0, %v3212
        %v3214 = vpop.f32.mrb[0].mxu0
        %3215 = vmatprep.mubr.f32.mxu0 0.0
        %3216 = vmatmul.mubr.f32.gmra.mrb[0].mxu0 %v3113
        %v3217 = vpop.f32.mrb[0].mxu0
        %v3218 = vadd.f32 0.0, %v3217
        %v3219 = vpop.f32.mrb[0].mxu0
        %3220 = vmatprep.mubr.f32.mxu0 0.0
        %3221 = vmatmul.mubr.f32.gmra.mrb[0].mxu0 %v3116
        %v3222 = vpop.f32.mrb[0].mxu0
        %v3223 = vadd.f32 0.0, %v3222
        %v3224 = vpop.f32.mrb[0].mxu0
        %3225 = vdwg.mxu0
        %v3226 = vadd.f32 %v3084, %v3188
        %v3227 = vadd.f32 %v3085, %v3193
        %v3228 = vadd.f32 %v3086, %v3198
        %v3229 = vadd.f32 %v3087, %v3203
        %v3230 = vadd.f32 %v3088, %v3208
        %v3231 = vadd.f32 %v3089, %v3213
        %v3232 = vadd.f32 %v3090, %v3218
        %v3233 = vadd.f32 %v3091, %v3223
        %s3234 = scalar_lea.vmem [#allocation5], 48
        %v3235 = vld [vmem:[%s3234] sm:$0xf]
        %v3237 = vsel %vm1548, %v1387, 0
        %v3240 = vsel %vm1548, %v1392, 0
        %v3243 = vsel %vm1548, %v1397, 0
        %v3246 = vsel %vm1548, %v1402, 0
        %v3249 = vsel %vm1548, %v1407, 0
        %v3252 = vsel %vm1548, %v1412, 0
        %v3255 = vsel %vm1548, %v1417, 0
        %v3258 = vsel %vm1548, %v1422, 0
        %v3261 = vsel %vm1573, %v3235, 0
        %3263 = vmatprep.subr.mxu0 0.0
        %3264 = vmatpush1.msra.mxu0 %v3261
        %3265 = vmatprep.subr.mxu0 0.0
        %3266 = vmatpush1.msra.mxu0 0.0
        %3267 = vmatprep.subr.mxu0 0.0
        %3268 = vmatpush1.msra.mxu0 0.0
        %3269 = vmatprep.subr.mxu0 0.0
        %3270 = vmatpush1.msra.mxu0 0.0
        %3271 = vmatprep.subr.mxu0 0.0
        %3272 = vmatpush1.msra.mxu0 0.0
        %3273 = vmatprep.subr.mxu0 0.0
        %3274 = vmatpush1.msra.mxu0 0.0
        %3275 = vmatprep.subr.mxu0 0.0
        %3276 = vmatpush1.msra.mxu0 0.0
        %3277 = vmatprep.subr.mxu0 0.0
        %3278 = vmatpush1.msra.mxu0 0.0
        %3279 = vmatprep.subr.mxu0 0.0
        %3280 = vmatpush1.msra.mxu0 0.0
        %3281 = vmatprep.subr.mxu0 0.0
        %3282 = vmatpush1.msra.mxu0 0.0
        %3283 = vmatprep.subr.mxu0 0.0
        %3284 = vmatpush1.msra.mxu0 0.0
        %3285 = vmatprep.subr.mxu0 0.0
        %3286 = vmatpush1.msra.mxu0 0.0
        %3287 = vmatprep.subr.mxu0 0.0
        %3288 = vmatpush1.msra.mxu0 0.0
        %3289 = vmatprep.subr.mxu0 0.0
        %3290 = vmatpush1.msra.mxu0 0.0
        %3291 = vmatprep.subr.mxu0 0.0
        %3292 = vmatpush1.msra.mxu0 0.0
        %3293 = vmatprep.subr.mxu0 0.0
        %3294 = vmatpush1.msra.mxu0 0.0
        %3295 = vmatprep.subr.mxu0 0.0
        %3296 = vmatpush1.msra.mxu0 0.0
        %3297 = vmatprep.subr.mxu0 0.0
        %3298 = vmatpush1.msra.mxu0 0.0
        %3299 = vmatprep.subr.mxu0 0.0
        %3300 = vmatpush1.msra.mxu0 0.0
        %3301 = vmatprep.subr.mxu0 0.0
        %3302 = vmatpush1.msra.mxu0 0.0
        %3303 = vmatprep.subr.mxu0 0.0
        %3304 = vmatpush1.msra.mxu0 0.0
        %3305 = vmatprep.subr.mxu0 0.0
        %3306 = vmatpush1.msra.mxu0 0.0
        %3307 = vmatprep.subr.mxu0 0.0
        %3308 = vmatpush1.msra.mxu0 0.0
        %3309 = vmatprep.subr.mxu0 0.0
        %3310 = vmatpush1.msra.mxu0 0.0
        %3311 = vmatprep.subr.mxu0 0.0
        %3312 = vmatpush1.msra.mxu0 0.0
        %3313 = vmatprep.subr.mxu0 0.0
        %3314 = vmatpush1.msra.mxu0 0.0
        %3315 = vmatprep.subr.mxu0 0.0
        %3316 = vmatpush1.msra.mxu0 0.0
        %3317 = vmatprep.subr.mxu0 0.0
        %3318 = vmatpush1.msra.mxu0 0.0
        %3319 = vmatprep.subr.mxu0 0.0
        %3320 = vmatpush1.msra.mxu0 0.0
        %3321 = vmatprep.subr.mxu0 0.0
        %3322 = vmatpush1.msra.mxu0 0.0
        %3323 = vmatprep.subr.mxu0 0.0
        %3324 = vmatpush1.msra.mxu0 0.0
        %3325 = vmatprep.subr.mxu0 0.0
        %3326 = vmatpush1.msra.mxu0 0.0
        %3327 = vmatprep.mubr.f32.mxu0 0.0
        %3328 = vmatmul.mubr.f32.gmra.mrb[0].mxu0 %v3237
        %v3329 = vpop.f32.mrb[0].mxu0
        %v3330 = vadd.f32 0.0, %v3329
        %v3331 = vpop.f32.mrb[0].mxu0
        %3332 = vmatprep.mubr.f32.mxu0 0.0
        %3333 = vmatmul.mubr.f32.gmra.mrb[0].mxu0 %v3240
        %v3334 = vpop.f32.mrb[0].mxu0
        %v3335 = vadd.f32 0.0, %v3334
        %v3336 = vpop.f32.mrb[0].mxu0
        %3337 = vmatprep.mubr.f32.mxu0 0.0
        %3338 = vmatmul.mubr.f32.gmra.mrb[0].mxu0 %v3243
        %v3339 = vpop.f32.mrb[0].mxu0
        %v3340 = vadd.f32 0.0, %v3339
        %v3341 = vpop.f32.mrb[0].mxu0
        %3342 = vmatprep.mubr.f32.mxu0 0.0
        %3343 = vmatmul.mubr.f32.gmra.mrb[0].mxu0 %v3246
        %v3344 = vpop.f32.mrb[0].mxu0
        %v3345 = vadd.f32 0.0, %v3344
        %v3346 = vpop.f32.mrb[0].mxu0
        %3347 = vmatprep.mubr.f32.mxu0 0.0
        %3348 = vmatmul.mubr.f32.gmra.mrb[0].mxu0 %v3249
        %v3349 = vpop.f32.mrb[0].mxu0
        %v3350 = vadd.f32 0.0, %v3349
        %v3351 = vpop.f32.mrb[0].mxu0
        %3352 = vmatprep.mubr.f32.mxu0 0.0
        %3353 = vmatmul.mubr.f32.gmra.mrb[0].mxu0 %v3252
        %v3354 = vpop.f32.mrb[0].mxu0
        %v3355 = vadd.f32 0.0, %v3354
        %v3356 = vpop.f32.mrb[0].mxu0
        %3357 = vmatprep.mubr.f32.mxu0 0.0
        %3358 = vmatmul.mubr.f32.gmra.mrb[0].mxu0 %v3255
        %v3359 = vpop.f32.mrb[0].mxu0
        %v3360 = vadd.f32 0.0, %v3359
        %v3361 = vpop.f32.mrb[0].mxu0
        %3362 = vmatprep.mubr.f32.mxu0 0.0
        %3363 = vmatmul.mubr.f32.gmra.mrb[0].mxu0 %v3258
        %v3364 = vpop.f32.mrb[0].mxu0
        %v3365 = vadd.f32 0.0, %v3364
        %v3366 = vpop.f32.mrb[0].mxu0
        %3367 = vdwg.mxu0
        %v3368 = vadd.f32 %v3226, %v3330
        %v3369 = vadd.f32 %v3227, %v3335
        %v3370 = vadd.f32 %v3228, %v3340
        %v3371 = vadd.f32 %v3229, %v3345
        %v3372 = vadd.f32 %v3230, %v3350
        %v3373 = vadd.f32 %v3231, %v3355
        %v3374 = vadd.f32 %v3232, %v3360
        %v3375 = vadd.f32 %v3233, %v3365
        %s3376 = scalar_lea.vmem [#allocation5], 52
        %v3377 = vld [vmem:[%s3376] sm:$0xf]
        %v3379 = vsel %vm1548, %v1427, 0
        %v3382 = vsel %vm1548, %v1432, 0
        %v3385 = vsel %vm1548, %v1437, 0
        %v3388 = vsel %vm1548, %v1442, 0
        %v3391 = vsel %vm1548, %v1447, 0
        %v3394 = vsel %vm1548, %v1452, 0
        %v3397 = vsel %vm1548, %v1457, 0
        %v3400 = vsel %vm1548, %v1462, 0
        %v3403 = vsel %vm1573, %v3377, 0
        %3405 = vmatprep.subr.mxu0 0.0
        %3406 = vmatpush1.msra.mxu0 %v3403
        %3407 = vmatprep.subr.mxu0 0.0
        %3408 = vmatpush1.msra.mxu0 0.0
        %3409 = vmatprep.subr.mxu0 0.0
        %3410 = vmatpush1.msra.mxu0 0.0
        %3411 = vmatprep.subr.mxu0 0.0
        %3412 = vmatpush1.msra.mxu0 0.0
        %3413 = vmatprep.subr.mxu0 0.0
        %3414 = vmatpush1.msra.mxu0 0.0
        %3415 = vmatprep.subr.mxu0 0.0
        %3416 = vmatpush1.msra.mxu0 0.0
        %3417 = vmatprep.subr.mxu0 0.0
        %3418 = vmatpush1.msra.mxu0 0.0
        %3419 = vmatprep.subr.mxu0 0.0
        %3420 = vmatpush1.msra.mxu0 0.0
        %3421 = vmatprep.subr.mxu0 0.0
        %3422 = vmatpush1.msra.mxu0 0.0
        %3423 = vmatprep.subr.mxu0 0.0
        %3424 = vmatpush1.msra.mxu0 0.0
        %3425 = vmatprep.subr.mxu0 0.0
        %3426 = vmatpush1.msra.mxu0 0.0
        %3427 = vmatprep.subr.mxu0 0.0
        %3428 = vmatpush1.msra.mxu0 0.0
        %3429 = vmatprep.subr.mxu0 0.0
        %3430 = vmatpush1.msra.mxu0 0.0
        %3431 = vmatprep.subr.mxu0 0.0
        %3432 = vmatpush1.msra.mxu0 0.0
        %3433 = vmatprep.subr.mxu0 0.0
        %3434 = vmatpush1.msra.mxu0 0.0
        %3435 = vmatprep.subr.mxu0 0.0
        %3436 = vmatpush1.msra.mxu0 0.0
        %3437 = vmatprep.subr.mxu0 0.0
        %3438 = vmatpush1.msra.mxu0 0.0
        %3439 = vmatprep.subr.mxu0 0.0
        %3440 = vmatpush1.msra.mxu0 0.0
        %3441 = vmatprep.subr.mxu0 0.0
        %3442 = vmatpush1.msra.mxu0 0.0
        %3443 = vmatprep.subr.mxu0 0.0
        %3444 = vmatpush1.msra.mxu0 0.0
        %3445 = vmatprep.subr.mxu0 0.0
        %3446 = vmatpush1.msra.mxu0 0.0
        %3447 = vmatprep.subr.mxu0 0.0
        %3448 = vmatpush1.msra.mxu0 0.0
        %3449 = vmatprep.subr.mxu0 0.0
        %3450 = vmatpush1.msra.mxu0 0.0
        %3451 = vmatprep.subr.mxu0 0.0
        %3452 = vmatpush1.msra.mxu0 0.0
        %3453 = vmatprep.subr.mxu0 0.0
        %3454 = vmatpush1.msra.mxu0 0.0
        %3455 = vmatprep.subr.mxu0 0.0
        %3456 = vmatpush1.msra.mxu0 0.0
        %3457 = vmatprep.subr.mxu0 0.0
        %3458 = vmatpush1.msra.mxu0 0.0
        %3459 = vmatprep.subr.mxu0 0.0
        %3460 = vmatpush1.msra.mxu0 0.0
        %3461 = vmatprep.subr.mxu0 0.0
        %3462 = vmatpush1.msra.mxu0 0.0
        %3463 = vmatprep.subr.mxu0 0.0
        %3464 = vmatpush1.msra.mxu0 0.0
        %3465 = vmatprep.subr.mxu0 0.0
        %3466 = vmatpush1.msra.mxu0 0.0
        %3467 = vmatprep.subr.mxu0 0.0
        %3468 = vmatpush1.msra.mxu0 0.0
        %3469 = vmatprep.mubr.f32.mxu0 0.0
        %3470 = vmatmul.mubr.f32.gmra.mrb[0].mxu0 %v3379
        %v3471 = vpop.f32.mrb[0].mxu0
        %v3472 = vadd.f32 0.0, %v3471
        %v3473 = vpop.f32.mrb[0].mxu0
        %3474 = vmatprep.mubr.f32.mxu0 0.0
        %3475 = vmatmul.mubr.f32.gmra.mrb[0].mxu0 %v3382
        %v3476 = vpop.f32.mrb[0].mxu0
        %v3477 = vadd.f32 0.0, %v3476
        %v3478 = vpop.f32.mrb[0].mxu0
        %3479 = vmatprep.mubr.f32.mxu0 0.0
        %3480 = vmatmul.mubr.f32.gmra.mrb[0].mxu0 %v3385
        %v3481 = vpop.f32.mrb[0].mxu0
        %v3482 = vadd.f32 0.0, %v3481
        %v3483 = vpop.f32.mrb[0].mxu0
        %3484 = vmatprep.mubr.f32.mxu0 0.0
        %3485 = vmatmul.mubr.f32.gmra.mrb[0].mxu0 %v3388
        %v3486 = vpop.f32.mrb[0].mxu0
        %v3487 = vadd.f32 0.0, %v3486
        %v3488 = vpop.f32.mrb[0].mxu0
        %3489 = vmatprep.mubr.f32.mxu0 0.0
        %3490 = vmatmul.mubr.f32.gmra.mrb[0].mxu0 %v3391
        %v3491 = vpop.f32.mrb[0].mxu0
        %v3492 = vadd.f32 0.0, %v3491
        %v3493 = vpop.f32.mrb[0].mxu0
        %3494 = vmatprep.mubr.f32.mxu0 0.0
        %3495 = vmatmul.mubr.f32.gmra.mrb[0].mxu0 %v3394
        %v3496 = vpop.f32.mrb[0].mxu0
        %v3497 = vadd.f32 0.0, %v3496
        %v3498 = vpop.f32.mrb[0].mxu0
        %3499 = vmatprep.mubr.f32.mxu0 0.0
        %3500 = vmatmul.mubr.f32.gmra.mrb[0].mxu0 %v3397
        %v3501 = vpop.f32.mrb[0].mxu0
        %v3502 = vadd.f32 0.0, %v3501
        %v3503 = vpop.f32.mrb[0].mxu0
        %3504 = vmatprep.mubr.f32.mxu0 0.0
        %3505 = vmatmul.mubr.f32.gmra.mrb[0].mxu0 %v3400
        %v3506 = vpop.f32.mrb[0].mxu0
        %v3507 = vadd.f32 0.0, %v3506
        %v3508 = vpop.f32.mrb[0].mxu0
        %3509 = vdwg.mxu0
        %v3510 = vadd.f32 %v3368, %v3472
        %v3511 = vadd.f32 %v3369, %v3477
        %v3512 = vadd.f32 %v3370, %v3482
        %v3513 = vadd.f32 %v3371, %v3487
        %v3514 = vadd.f32 %v3372, %v3492
        %v3515 = vadd.f32 %v3373, %v3497
        %v3516 = vadd.f32 %v3374, %v3502
        %v3517 = vadd.f32 %v3375, %v3507
        %s3518 = scalar_lea.vmem [#allocation5], 56
        %v3519 = vld [vmem:[%s3518] sm:$0xf]
        %v3521 = vsel %vm1548, %v1467, 0
        %v3524 = vsel %vm1548, %v1472, 0
        %v3527 = vsel %vm1548, %v1477, 0
        %v3530 = vsel %vm1548, %v1482, 0
        %v3533 = vsel %vm1548, %v1487, 0
        %v3536 = vsel %vm1548, %v1492, 0
        %v3539 = vsel %vm1548, %v1497, 0
        %v3542 = vsel %vm1548, %v1502, 0
        %v3545 = vsel %vm1573, %v3519, 0
        %3547 = vmatprep.subr.mxu0 0.0
        %3548 = vmatpush1.msra.mxu0 %v3545
        %3549 = vmatprep.subr.mxu0 0.0
        %3550 = vmatpush1.msra.mxu0 0.0
        %3551 = vmatprep.subr.mxu0 0.0
        %3552 = vmatpush1.msra.mxu0 0.0
        %3553 = vmatprep.subr.mxu0 0.0
        %3554 = vmatpush1.msra.mxu0 0.0
        %3555 = vmatprep.subr.mxu0 0.0
        %3556 = vmatpush1.msra.mxu0 0.0
        %3557 = vmatprep.subr.mxu0 0.0
        %3558 = vmatpush1.msra.mxu0 0.0
        %3559 = vmatprep.subr.mxu0 0.0
        %3560 = vmatpush1.msra.mxu0 0.0
        %3561 = vmatprep.subr.mxu0 0.0
        %3562 = vmatpush1.msra.mxu0 0.0
        %3563 = vmatprep.subr.mxu0 0.0
        %3564 = vmatpush1.msra.mxu0 0.0
        %3565 = vmatprep.subr.mxu0 0.0
        %3566 = vmatpush1.msra.mxu0 0.0
        %3567 = vmatprep.subr.mxu0 0.0
        %3568 = vmatpush1.msra.mxu0 0.0
        %3569 = vmatprep.subr.mxu0 0.0
        %3570 = vmatpush1.msra.mxu0 0.0
        %3571 = vmatprep.subr.mxu0 0.0
        %3572 = vmatpush1.msra.mxu0 0.0
        %3573 = vmatprep.subr.mxu0 0.0
        %3574 = vmatpush1.msra.mxu0 0.0
        %3575 = vmatprep.subr.mxu0 0.0
        %3576 = vmatpush1.msra.mxu0 0.0
        %3577 = vmatprep.subr.mxu0 0.0
        %3578 = vmatpush1.msra.mxu0 0.0
        %3579 = vmatprep.subr.mxu0 0.0
        %3580 = vmatpush1.msra.mxu0 0.0
        %3581 = vmatprep.subr.mxu0 0.0
        %3582 = vmatpush1.msra.mxu0 0.0
        %3583 = vmatprep.subr.mxu0 0.0
        %3584 = vmatpush1.msra.mxu0 0.0
        %3585 = vmatprep.subr.mxu0 0.0
        %3586 = vmatpush1.msra.mxu0 0.0
        %3587 = vmatprep.subr.mxu0 0.0
        %3588 = vmatpush1.msra.mxu0 0.0
        %3589 = vmatprep.subr.mxu0 0.0
        %3590 = vmatpush1.msra.mxu0 0.0
        %3591 = vmatprep.subr.mxu0 0.0
        %3592 = vmatpush1.msra.mxu0 0.0
        %3593 = vmatprep.subr.mxu0 0.0
        %3594 = vmatpush1.msra.mxu0 0.0
        %3595 = vmatprep.subr.mxu0 0.0
        %3596 = vmatpush1.msra.mxu0 0.0
        %3597 = vmatprep.subr.mxu0 0.0
        %3598 = vmatpush1.msra.mxu0 0.0
        %3599 = vmatprep.subr.mxu0 0.0
        %3600 = vmatpush1.msra.mxu0 0.0
        %3601 = vmatprep.subr.mxu0 0.0
        %3602 = vmatpush1.msra.mxu0 0.0
        %3603 = vmatprep.subr.mxu0 0.0
        %3604 = vmatpush1.msra.mxu0 0.0
        %3605 = vmatprep.subr.mxu0 0.0
        %3606 = vmatpush1.msra.mxu0 0.0
        %3607 = vmatprep.subr.mxu0 0.0
        %3608 = vmatpush1.msra.mxu0 0.0
        %3609 = vmatprep.subr.mxu0 0.0
        %3610 = vmatpush1.msra.mxu0 0.0
        %3611 = vmatprep.mubr.f32.mxu0 0.0
        %3612 = vmatmul.mubr.f32.gmra.mrb[0].mxu0 %v3521
        %v3613 = vpop.f32.mrb[0].mxu0
        %v3614 = vadd.f32 0.0, %v3613
        %v3615 = vpop.f32.mrb[0].mxu0
        %3616 = vmatprep.mubr.f32.mxu0 0.0
        %3617 = vmatmul.mubr.f32.gmra.mrb[0].mxu0 %v3524
        %v3618 = vpop.f32.mrb[0].mxu0
        %v3619 = vadd.f32 0.0, %v3618
        %v3620 = vpop.f32.mrb[0].mxu0
        %3621 = vmatprep.mubr.f32.mxu0 0.0
        %3622 = vmatmul.mubr.f32.gmra.mrb[0].mxu0 %v3527
        %v3623 = vpop.f32.mrb[0].mxu0
        %v3624 = vadd.f32 0.0, %v3623
        %v3625 = vpop.f32.mrb[0].mxu0
        %3626 = vmatprep.mubr.f32.mxu0 0.0
        %3627 = vmatmul.mubr.f32.gmra.mrb[0].mxu0 %v3530
        %v3628 = vpop.f32.mrb[0].mxu0
        %v3629 = vadd.f32 0.0, %v3628
        %v3630 = vpop.f32.mrb[0].mxu0
        %3631 = vmatprep.mubr.f32.mxu0 0.0
        %3632 = vmatmul.mubr.f32.gmra.mrb[0].mxu0 %v3533
        %v3633 = vpop.f32.mrb[0].mxu0
        %v3634 = vadd.f32 0.0, %v3633
        %v3635 = vpop.f32.mrb[0].mxu0
        %3636 = vmatprep.mubr.f32.mxu0 0.0
        %3637 = vmatmul.mubr.f32.gmra.mrb[0].mxu0 %v3536
        %v3638 = vpop.f32.mrb[0].mxu0
        %v3639 = vadd.f32 0.0, %v3638
        %v3640 = vpop.f32.mrb[0].mxu0
        %3641 = vmatprep.mubr.f32.mxu0 0.0
        %3642 = vmatmul.mubr.f32.gmra.mrb[0].mxu0 %v3539
        %v3643 = vpop.f32.mrb[0].mxu0
        %v3644 = vadd.f32 0.0, %v3643
        %v3645 = vpop.f32.mrb[0].mxu0
        %3646 = vmatprep.mubr.f32.mxu0 0.0
        %3647 = vmatmul.mubr.f32.gmra.mrb[0].mxu0 %v3542
        %v3648 = vpop.f32.mrb[0].mxu0
        %v3649 = vadd.f32 0.0, %v3648
        %v3650 = vpop.f32.mrb[0].mxu0
        %3651 = vdwg.mxu0
        %v3652 = vadd.f32 %v3510, %v3614
        %v3653 = vadd.f32 %v3511, %v3619
        %v3654 = vadd.f32 %v3512, %v3624
        %v3655 = vadd.f32 %v3513, %v3629
        %v3656 = vadd.f32 %v3514, %v3634
        %v3657 = vadd.f32 %v3515, %v3639
        %v3658 = vadd.f32 %v3516, %v3644
        %v3659 = vadd.f32 %v3517, %v3649
        %s3660 = scalar_lea.vmem [#allocation5], 60
        %v3661 = vld [vmem:[%s3660] sm:$0xf]
        %v3663 = vsel %vm1548, %v1507, 0
        %v3666 = vsel %vm1548, %v1512, 0
        %v3669 = vsel %vm1548, %v1517, 0
        %v3672 = vsel %vm1548, %v1522, 0
        %v3675 = vsel %vm1548, %v1527, 0
        %v3678 = vsel %vm1548, %v1532, 0
        %v3681 = vsel %vm1548, %v1537, 0
        %v3684 = vsel %vm1548, %v1542, 0
        %v3687 = vsel %vm1573, %v3661, 0
        %3689 = vmatprep.subr.mxu0 0.0
        %3690 = vmatpush1.msra.mxu0 %v3687
        %3691 = vmatprep.subr.mxu0 0.0
        %3692 = vmatpush1.msra.mxu0 0.0
        %3693 = vmatprep.subr.mxu0 0.0
        %3694 = vmatpush1.msra.mxu0 0.0
        %3695 = vmatprep.subr.mxu0 0.0
        %3696 = vmatpush1.msra.mxu0 0.0
        %3697 = vmatprep.subr.mxu0 0.0
        %3698 = vmatpush1.msra.mxu0 0.0
        %3699 = vmatprep.subr.mxu0 0.0
        %3700 = vmatpush1.msra.mxu0 0.0
        %3701 = vmatprep.subr.mxu0 0.0
        %3702 = vmatpush1.msra.mxu0 0.0
        %3703 = vmatprep.subr.mxu0 0.0
        %3704 = vmatpush1.msra.mxu0 0.0
        %3705 = vmatprep.subr.mxu0 0.0
        %3706 = vmatpush1.msra.mxu0 0.0
        %3707 = vmatprep.subr.mxu0 0.0
        %3708 = vmatpush1.msra.mxu0 0.0
        %3709 = vmatprep.subr.mxu0 0.0
        %3710 = vmatpush1.msra.mxu0 0.0
        %3711 = vmatprep.subr.mxu0 0.0
        %3712 = vmatpush1.msra.mxu0 0.0
        %3713 = vmatprep.subr.mxu0 0.0
        %3714 = vmatpush1.msra.mxu0 0.0
        %3715 = vmatprep.subr.mxu0 0.0
        %3716 = vmatpush1.msra.mxu0 0.0
        %3717 = vmatprep.subr.mxu0 0.0
        %3718 = vmatpush1.msra.mxu0 0.0
        %3719 = vmatprep.subr.mxu0 0.0
        %3720 = vmatpush1.msra.mxu0 0.0
        %3721 = vmatprep.subr.mxu0 0.0
        %3722 = vmatpush1.msra.mxu0 0.0
        %3723 = vmatprep.subr.mxu0 0.0
        %3724 = vmatpush1.msra.mxu0 0.0
        %3725 = vmatprep.subr.mxu0 0.0
        %3726 = vmatpush1.msra.mxu0 0.0
        %3727 = vmatprep.subr.mxu0 0.0
        %3728 = vmatpush1.msra.mxu0 0.0
        %3729 = vmatprep.subr.mxu0 0.0
        %3730 = vmatpush1.msra.mxu0 0.0
        %3731 = vmatprep.subr.mxu0 0.0
        %3732 = vmatpush1.msra.mxu0 0.0
        %3733 = vmatprep.subr.mxu0 0.0
        %3734 = vmatpush1.msra.mxu0 0.0
        %3735 = vmatprep.subr.mxu0 0.0
        %3736 = vmatpush1.msra.mxu0 0.0
        %3737 = vmatprep.subr.mxu0 0.0
        %3738 = vmatpush1.msra.mxu0 0.0
        %3739 = vmatprep.subr.mxu0 0.0
        %3740 = vmatpush1.msra.mxu0 0.0
        %3741 = vmatprep.subr.mxu0 0.0
        %3742 = vmatpush1.msra.mxu0 0.0
        %3743 = vmatprep.subr.mxu0 0.0
        %3744 = vmatpush1.msra.mxu0 0.0
        %3745 = vmatprep.subr.mxu0 0.0
        %3746 = vmatpush1.msra.mxu0 0.0
        %3747 = vmatprep.subr.mxu0 0.0
        %3748 = vmatpush1.msra.mxu0 0.0
        %3749 = vmatprep.subr.mxu0 0.0
        %3750 = vmatpush1.msra.mxu0 0.0
        %3751 = vmatprep.subr.mxu0 0.0
        %3752 = vmatpush1.msra.mxu0 0.0
        %3753 = vmatprep.mubr.f32.mxu0 0.0
        %3754 = vmatmul.mubr.f32.gmra.mrb[0].mxu0 %v3663
        %v3755 = vpop.f32.mrb[0].mxu0
        %v3756 = vadd.f32 0.0, %v3755
        %v3757 = vpop.f32.mrb[0].mxu0
        %3758 = vmatprep.mubr.f32.mxu0 0.0
        %3759 = vmatmul.mubr.f32.gmra.mrb[0].mxu0 %v3666
        %v3760 = vpop.f32.mrb[0].mxu0
        %v3761 = vadd.f32 0.0, %v3760
        %v3762 = vpop.f32.mrb[0].mxu0
        %3763 = vmatprep.mubr.f32.mxu0 0.0
        %3764 = vmatmul.mubr.f32.gmra.mrb[0].mxu0 %v3669
        %v3765 = vpop.f32.mrb[0].mxu0
        %v3766 = vadd.f32 0.0, %v3765
        %v3767 = vpop.f32.mrb[0].mxu0
        %3768 = vmatprep.mubr.f32.mxu0 0.0
        %3769 = vmatmul.mubr.f32.gmra.mrb[0].mxu0 %v3672
        %v3770 = vpop.f32.mrb[0].mxu0
        %v3771 = vadd.f32 0.0, %v3770
        %v3772 = vpop.f32.mrb[0].mxu0
        %3773 = vmatprep.mubr.f32.mxu0 0.0
        %3774 = vmatmul.mubr.f32.gmra.mrb[0].mxu0 %v3675
        %v3775 = vpop.f32.mrb[0].mxu0
        %v3776 = vadd.f32 0.0, %v3775
        %v3777 = vpop.f32.mrb[0].mxu0
        %3778 = vmatprep.mubr.f32.mxu0 0.0
        %3779 = vmatmul.mubr.f32.gmra.mrb[0].mxu0 %v3678
        %v3780 = vpop.f32.mrb[0].mxu0
        %v3781 = vadd.f32 0.0, %v3780
        %v3782 = vpop.f32.mrb[0].mxu0
        %3783 = vmatprep.mubr.f32.mxu0 0.0
        %3784 = vmatmul.mubr.f32.gmra.mrb[0].mxu0 %v3681
        %v3785 = vpop.f32.mrb[0].mxu0
        %v3786 = vadd.f32 0.0, %v3785
        %v3787 = vpop.f32.mrb[0].mxu0
        %3788 = vmatprep.mubr.f32.mxu0 0.0
        %3789 = vmatmul.mubr.f32.gmra.mrb[0].mxu0 %v3684
        %v3790 = vpop.f32.mrb[0].mxu0
        %v3791 = vadd.f32 0.0, %v3790
        %v3792 = vpop.f32.mrb[0].mxu0
        %3793 = vdwg.mxu0
        %v3794 = vadd.f32 %v3652, %v3756
        %v3795 = vadd.f32 %v3653, %v3761
        %v3796 = vadd.f32 %v3654, %v3766
        %v3797 = vadd.f32 %v3655, %v3771
        %v3798 = vadd.f32 %v3656, %v3776
        %v3799 = vadd.f32 %v3657, %v3781
        %v3800 = vadd.f32 %v3658, %v3786
        %v3801 = vadd.f32 %v3659, %v3791
        %v3803 = vlaneseq
        %v3804 = vshrl.u32 %v3803, 7
        %v3805 = vsub.s32 0, %v3804
        %v3806 = vrot.slane %v583, %v3805
        %v3808 = vadd.f32 %v3794, %v3806
        %v3809 = vadd.f32 %v3795, %v3806
        %v3810 = vadd.f32 %v3796, %v3806
        %v3811 = vadd.f32 %v3797, %v3806
        %v3812 = vadd.f32 %v3798, %v3806
        %v3813 = vadd.f32 %v3799, %v3806
        %v3814 = vadd.f32 %v3800, %v3806
        %v3815 = vadd.f32 %v3801, %v3806
        %v3816 = vmax.f32 %v3808, 0.0
        %v3817 = vmax.f32 %v3809, 0.0
        %v3818 = vmax.f32 %v3810, 0.0
        %v3819 = vmax.f32 %v3811, 0.0
        %v3820 = vmax.f32 %v3812, 0.0
        %v3821 = vmax.f32 %v3813, 0.0
        %v3822 = vmax.f32 %v3814, 0.0
        %v3823 = vmax.f32 %v3815, 0.0
        %vm3824 = vcmask 130048
        %3825 = vst.msk [vmem:[%s524] sm:$0xff] %vm3824, %v3816
        %3826 = vst.msk [vmem:[%s524 + $0x8] sm:$0xff] %vm3824, %v3817
        %3827 = vst.msk [vmem:[%s524 + $0x10] sm:$0xff] %vm3824, %v3818
        %3828 = vst.msk [vmem:[%s524 + $0x18] sm:$0xff] %vm3824, %v3819
        %3829 = vst.msk [vmem:[%s524 + $0x20] sm:$0xff] %vm3824, %v3820
        %3830 = vst.msk [vmem:[%s524 + $0x28] sm:$0xff] %vm3824, %v3821
        %3831 = vst.msk [vmem:[%s524 + $0x30] sm:$0xff] %vm3824, %v3822
        %3832 = vst.msk [vmem:[%s524 + $0x38] sm:$0xff] %vm3824, %v3823
        %v3833 = vld [vmem:[%s7] sm:$0x1]
        %v3834 = vld [vmem:[%s2] sm:$0xff]
        %v3835 = vld [vmem:[%s2 + $0x8] sm:$0xff]
        %v3836 = vld [vmem:[%s2 + $0x10] sm:$0xff]
        %v3837 = vld [vmem:[%s2 + $0x18] sm:$0xff]
        %v3838 = vld [vmem:[%s2 + $0x20] sm:$0xff]
        %v3839 = vld [vmem:[%s2 + $0x28] sm:$0xff]
        %v3840 = vld [vmem:[%s2 + $0x30] sm:$0xff]
        %v3841 = vld [vmem:[%s2 + $0x38] sm:$0xff]
        %v3842 = vld [vmem:[%s2 + $0x40] sm:$0xff]
        %v3843 = vld [vmem:[%s2 + $0x48] sm:$0xff]
        %v3844 = vld [vmem:[%s2 + $0x50] sm:$0xff]
        %v3845 = vld [vmem:[%s2 + $0x58] sm:$0xff]
        %v3846 = vld [vmem:[%s2 + $0x60] sm:$0xff]
        %v3847 = vld [vmem:[%s2 + $0x68] sm:$0xff]
        %v3848 = vld [vmem:[%s2 + $0x70] sm:$0xff]
        %v3849 = vld [vmem:[%s2 + $0x78] sm:$0xff]
        %v3850 = vld [vmem:[%s2 + $0x80] sm:$0xff]
        %v3851 = vld [vmem:[%s2 + $0x88] sm:$0xff]
        %v3852 = vld [vmem:[%s2 + $0x90] sm:$0xff]
        %v3853 = vld [vmem:[%s2 + $0x98] sm:$0xff]
        %v3854 = vld [vmem:[%s2 + $0xa0] sm:$0xff]
        %v3855 = vld [vmem:[%s2 + $0xa8] sm:$0xff]
        %v3856 = vld [vmem:[%s2 + $0xb0] sm:$0xff]
        %v3857 = vld [vmem:[%s2 + $0xb8] sm:$0xff]
        %v3858 = vld [vmem:[%s2 + $0xc0] sm:$0xff]
        %v3859 = vld [vmem:[%s2 + $0xc8] sm:$0xff]
        %v3860 = vld [vmem:[%s2 + $0xd0] sm:$0xff]
        %v3861 = vld [vmem:[%s2 + $0xd8] sm:$0xff]
        %v3862 = vld [vmem:[%s2 + $0xe0] sm:$0xff]
        %v3863 = vld [vmem:[%s2 + $0xe8] sm:$0xff]
        %v3864 = vld [vmem:[%s2 + $0xf0] sm:$0xff]
        %v3865 = vld [vmem:[%s2 + $0xf8] sm:$0xff]
        %vm3866 = vcmask 523264
        %v3868 = vsel %vm3866, %v3834, 0
        %v3871 = vsel %vm3866, %v3835, 0
        %v3874 = vsel %vm3866, %v3836, 0
        %v3877 = vsel %vm3866, %v3837, 0
        %v3880 = vsel %vm3866, %v3838, 0
        %v3883 = vsel %vm3866, %v3839, 0
        %v3886 = vsel %vm3866, %v3840, 0
        %v3889 = vsel %vm3866, %v3841, 0
        %v3892 = vsel %vm3866, %v3842, 0
        %v3895 = vsel %vm3866, %v3843, 0
        %v3898 = vsel %vm3866, %v3844, 0
        %v3901 = vsel %vm3866, %v3845, 0
        %v3904 = vsel %vm3866, %v3846, 0
        %v3907 = vsel %vm3866, %v3847, 0
        %v3910 = vsel %vm3866, %v3848, 0
        %v3913 = vsel %vm3866, %v3849, 0
        %v3916 = vsel %vm3866, %v3850, 0
        %v3919 = vsel %vm3866, %v3851, 0
        %v3922 = vsel %vm3866, %v3852, 0
        %v3925 = vsel %vm3866, %v3853, 0
        %v3928 = vsel %vm3866, %v3854, 0
        %v3931 = vsel %vm3866, %v3855, 0
        %v3934 = vsel %vm3866, %v3856, 0
        %v3937 = vsel %vm3866, %v3857, 0
        %v3940 = vsel %vm3866, %v3858, 0
        %v3943 = vsel %vm3866, %v3859, 0
        %v3946 = vsel %vm3866, %v3860, 0
        %v3949 = vsel %vm3866, %v3861, 0
        %v3952 = vsel %vm3866, %v3862, 0
        %v3955 = vsel %vm3866, %v3863, 0
        %v3958 = vsel %vm3866, %v3864, 0
        %v3961 = vsel %vm3866, %v3865, 0
        %3963 = vmatprep.subr.mxu0 0.0
        %3964 = vmatpush1.msra.mxu0 %v3816
        %3965 = vmatprep.subr.mxu0 0.0
        %3966 = vmatpush1.msra.mxu0 %v3817
        %3967 = vmatprep.subr.mxu0 0.0
        %3968 = vmatpush1.msra.mxu0 %v3818
        %3969 = vmatprep.subr.mxu0 0.0
        %3970 = vmatpush1.msra.mxu0 %v3819
        %3971 = vmatprep.subr.mxu0 0.0
        %3972 = vmatpush1.msra.mxu0 %v3820
        %3973 = vmatprep.subr.mxu0 0.0
        %3974 = vmatpush1.msra.mxu0 %v3821
        %3975 = vmatprep.subr.mxu0 0.0
        %3976 = vmatpush1.msra.mxu0 %v3822
        %3977 = vmatprep.subr.mxu0 0.0
        %3978 = vmatpush1.msra.mxu0 %v3823
        %3979 = vmatprep.subr.mxu0 0.0
        %3980 = vmatpush1.msra.mxu0 0.0
        %3981 = vmatprep.subr.mxu0 0.0
        %3982 = vmatpush1.msra.mxu0 0.0
        %3983 = vmatprep.subr.mxu0 0.0
        %3984 = vmatpush1.msra.mxu0 0.0
        %3985 = vmatprep.subr.mxu0 0.0
        %3986 = vmatpush1.msra.mxu0 0.0
        %3987 = vmatprep.subr.mxu0 0.0
        %3988 = vmatpush1.msra.mxu0 0.0
        %3989 = vmatprep.subr.mxu0 0.0
        %3990 = vmatpush1.msra.mxu0 0.0
        %3991 = vmatprep.subr.mxu0 0.0
        %3992 = vmatpush1.msra.mxu0 0.0
        %3993 = vmatprep.subr.mxu0 0.0
        %3994 = vmatpush1.msra.mxu0 0.0
        %3995 = vmatprep.subr.mxu0 0.0
        %3996 = vmatpush1.msra.mxu0 0.0
        %3997 = vmatprep.subr.mxu0 0.0
        %3998 = vmatpush1.msra.mxu0 0.0
        %3999 = vmatprep.subr.mxu0 0.0
        %4000 = vmatpush1.msra.mxu0 0.0
        %4001 = vmatprep.subr.mxu0 0.0
        %4002 = vmatpush1.msra.mxu0 0.0
        %4003 = vmatprep.subr.mxu0 0.0
        %4004 = vmatpush1.msra.mxu0 0.0
        %4005 = vmatprep.subr.mxu0 0.0
        %4006 = vmatpush1.msra.mxu0 0.0
        %4007 = vmatprep.subr.mxu0 0.0
        %4008 = vmatpush1.msra.mxu0 0.0
        %4009 = vmatprep.subr.mxu0 0.0
        %4010 = vmatpush1.msra.mxu0 0.0
        %4011 = vmatprep.subr.mxu0 0.0
        %4012 = vmatpush1.msra.mxu0 0.0
        %4013 = vmatprep.subr.mxu0 0.0
        %4014 = vmatpush1.msra.mxu0 0.0
        %4015 = vmatprep.subr.mxu0 0.0
        %4016 = vmatpush1.msra.mxu0 0.0
        %4017 = vmatprep.subr.mxu0 0.0
        %4018 = vmatpush1.msra.mxu0 0.0
        %4019 = vmatprep.subr.mxu0 0.0
        %4020 = vmatpush1.msra.mxu0 0.0
        %4021 = vmatprep.subr.mxu0 0.0
        %4022 = vmatpush1.msra.mxu0 0.0
        %4023 = vmatprep.subr.mxu0 0.0
        %4024 = vmatpush1.msra.mxu0 0.0
        %4025 = vmatprep.subr.mxu0 0.0
        %4026 = vmatpush1.msra.mxu0 0.0
        %4027 = vmatprep.mubr.f32.mxu0 0.0
        %4028 = vmatmul.mubr.f32.gmra.mrb[0].mxu0 %v3868
        %v4029 = vpop.f32.mrb[0].mxu0
        %v4030 = vadd.f32 0.0, %v4029
        %v4031 = vpop.f32.mrb[0].mxu0
        %4032 = vmatprep.mubr.f32.mxu0 0.0
        %4033 = vmatmul.mubr.f32.gmra.mrb[0].mxu0 %v3871
        %v4034 = vpop.f32.mrb[0].mxu0
        %v4035 = vadd.f32 0.0, %v4034
        %v4036 = vpop.f32.mrb[0].mxu0
        %4037 = vmatprep.mubr.f32.mxu0 0.0
        %4038 = vmatmul.mubr.f32.gmra.mrb[0].mxu0 %v3874
        %v4039 = vpop.f32.mrb[0].mxu0
        %v4040 = vadd.f32 0.0, %v4039
        %v4041 = vpop.f32.mrb[0].mxu0
        %4042 = vmatprep.mubr.f32.mxu0 0.0
        %4043 = vmatmul.mubr.f32.gmra.mrb[0].mxu0 %v3877
        %v4044 = vpop.f32.mrb[0].mxu0
        %v4045 = vadd.f32 0.0, %v4044
        %v4046 = vpop.f32.mrb[0].mxu0
        %4047 = vmatprep.mubr.f32.mxu0 0.0
        %4048 = vmatmul.mubr.f32.gmra.mrb[0].mxu0 %v3880
        %v4049 = vpop.f32.mrb[0].mxu0
        %v4050 = vadd.f32 0.0, %v4049
        %v4051 = vpop.f32.mrb[0].mxu0
        %4052 = vmatprep.mubr.f32.mxu0 0.0
        %4053 = vmatmul.mubr.f32.gmra.mrb[0].mxu0 %v3883
        %v4054 = vpop.f32.mrb[0].mxu0
        %v4055 = vadd.f32 0.0, %v4054
        %v4056 = vpop.f32.mrb[0].mxu0
        %4057 = vmatprep.mubr.f32.mxu0 0.0
        %4058 = vmatmul.mubr.f32.gmra.mrb[0].mxu0 %v3886
        %v4059 = vpop.f32.mrb[0].mxu0
        %v4060 = vadd.f32 0.0, %v4059
        %v4061 = vpop.f32.mrb[0].mxu0
        %4062 = vmatprep.mubr.f32.mxu0 0.0
        %4063 = vmatmul.mubr.f32.gmra.mrb[0].mxu0 %v3889
        %v4064 = vpop.f32.mrb[0].mxu0
        %v4065 = vadd.f32 0.0, %v4064
        %v4066 = vpop.f32.mrb[0].mxu0
        %4067 = vmatprep.mubr.f32.mxu0 0.0
        %4068 = vmatmul.mubr.f32.gmra.mrb[0].mxu0 %v3892
        %v4069 = vpop.f32.mrb[0].mxu0
        %v4070 = vadd.f32 0.0, %v4069
        %v4071 = vpop.f32.mrb[0].mxu0
        %4072 = vmatprep.mubr.f32.mxu0 0.0
        %4073 = vmatmul.mubr.f32.gmra.mrb[0].mxu0 %v3895
        %v4074 = vpop.f32.mrb[0].mxu0
        %v4075 = vadd.f32 0.0, %v4074
        %v4076 = vpop.f32.mrb[0].mxu0
        %4077 = vmatprep.mubr.f32.mxu0 0.0
        %4078 = vmatmul.mubr.f32.gmra.mrb[0].mxu0 %v3898
        %v4079 = vpop.f32.mrb[0].mxu0
        %v4080 = vadd.f32 0.0, %v4079
        %v4081 = vpop.f32.mrb[0].mxu0
        %4082 = vmatprep.mubr.f32.mxu0 0.0
        %4083 = vmatmul.mubr.f32.gmra.mrb[0].mxu0 %v3901
        %v4084 = vpop.f32.mrb[0].mxu0
        %v4085 = vadd.f32 0.0, %v4084
        %v4086 = vpop.f32.mrb[0].mxu0
        %4087 = vmatprep.mubr.f32.mxu0 0.0
        %4088 = vmatmul.mubr.f32.gmra.mrb[0].mxu0 %v3904
        %v4089 = vpop.f32.mrb[0].mxu0
        %v4090 = vadd.f32 0.0, %v4089
        %v4091 = vpop.f32.mrb[0].mxu0
        %4092 = vmatprep.mubr.f32.mxu0 0.0
        %4093 = vmatmul.mubr.f32.gmra.mrb[0].mxu0 %v3907
        %v4094 = vpop.f32.mrb[0].mxu0
        %v4095 = vadd.f32 0.0, %v4094
        %v4096 = vpop.f32.mrb[0].mxu0
        %4097 = vmatprep.mubr.f32.mxu0 0.0
        %4098 = vmatmul.mubr.f32.gmra.mrb[0].mxu0 %v3910
        %v4099 = vpop.f32.mrb[0].mxu0
        %v4100 = vadd.f32 0.0, %v4099
        %v4101 = vpop.f32.mrb[0].mxu0
        %4102 = vmatprep.mubr.f32.mxu0 0.0
        %4103 = vmatmul.mubr.f32.gmra.mrb[0].mxu0 %v3913
        %v4104 = vpop.f32.mrb[0].mxu0
        %v4105 = vadd.f32 0.0, %v4104
        %v4106 = vpop.f32.mrb[0].mxu0
        %4107 = vmatprep.mubr.f32.mxu0 0.0
        %4108 = vmatmul.mubr.f32.gmra.mrb[0].mxu0 %v3916
        %v4109 = vpop.f32.mrb[0].mxu0
        %v4110 = vadd.f32 0.0, %v4109
        %v4111 = vpop.f32.mrb[0].mxu0
        %4112 = vmatprep.mubr.f32.mxu0 0.0
        %4113 = vmatmul.mubr.f32.gmra.mrb[0].mxu0 %v3919
        %v4114 = vpop.f32.mrb[0].mxu0
        %v4115 = vadd.f32 0.0, %v4114
        %v4116 = vpop.f32.mrb[0].mxu0
        %4117 = vmatprep.mubr.f32.mxu0 0.0
        %4118 = vmatmul.mubr.f32.gmra.mrb[0].mxu0 %v3922
        %v4119 = vpop.f32.mrb[0].mxu0
        %v4120 = vadd.f32 0.0, %v4119
        %v4121 = vpop.f32.mrb[0].mxu0
        %4122 = vmatprep.mubr.f32.mxu0 0.0
        %4123 = vmatmul.mubr.f32.gmra.mrb[0].mxu0 %v3925
        %v4124 = vpop.f32.mrb[0].mxu0
        %v4125 = vadd.f32 0.0, %v4124
        %v4126 = vpop.f32.mrb[0].mxu0
        %4127 = vmatprep.mubr.f32.mxu0 0.0
        %4128 = vmatmul.mubr.f32.gmra.mrb[0].mxu0 %v3928
        %v4129 = vpop.f32.mrb[0].mxu0
        %v4130 = vadd.f32 0.0, %v4129
        %v4131 = vpop.f32.mrb[0].mxu0
        %4132 = vmatprep.mubr.f32.mxu0 0.0
        %4133 = vmatmul.mubr.f32.gmra.mrb[0].mxu0 %v3931
        %v4134 = vpop.f32.mrb[0].mxu0
        %v4135 = vadd.f32 0.0, %v4134
        %v4136 = vpop.f32.mrb[0].mxu0
        %4137 = vmatprep.mubr.f32.mxu0 0.0
        %4138 = vmatmul.mubr.f32.gmra.mrb[0].mxu0 %v3934
        %v4139 = vpop.f32.mrb[0].mxu0
        %v4140 = vadd.f32 0.0, %v4139
        %v4141 = vpop.f32.mrb[0].mxu0
        %4142 = vmatprep.mubr.f32.mxu0 0.0
        %4143 = vmatmul.mubr.f32.gmra.mrb[0].mxu0 %v3937
        %v4144 = vpop.f32.mrb[0].mxu0
        %v4145 = vadd.f32 0.0, %v4144
        %v4146 = vpop.f32.mrb[0].mxu0
        %4147 = vmatprep.mubr.f32.mxu0 0.0
        %4148 = vmatmul.mubr.f32.gmra.mrb[0].mxu0 %v3940
        %v4149 = vpop.f32.mrb[0].mxu0
        %v4150 = vadd.f32 0.0, %v4149
        %v4151 = vpop.f32.mrb[0].mxu0
        %4152 = vmatprep.mubr.f32.mxu0 0.0
        %4153 = vmatmul.mubr.f32.gmra.mrb[0].mxu0 %v3943
        %v4154 = vpop.f32.mrb[0].mxu0
        %v4155 = vadd.f32 0.0, %v4154
        %v4156 = vpop.f32.mrb[0].mxu0
        %4157 = vmatprep.mubr.f32.mxu0 0.0
        %4158 = vmatmul.mubr.f32.gmra.mrb[0].mxu0 %v3946
        %v4159 = vpop.f32.mrb[0].mxu0
        %v4160 = vadd.f32 0.0, %v4159
        %v4161 = vpop.f32.mrb[0].mxu0
        %4162 = vmatprep.mubr.f32.mxu0 0.0
        %4163 = vmatmul.mubr.f32.gmra.mrb[0].mxu0 %v3949
        %v4164 = vpop.f32.mrb[0].mxu0
        %v4165 = vadd.f32 0.0, %v4164
        %v4166 = vpop.f32.mrb[0].mxu0
        %4167 = vmatprep.mubr.f32.mxu0 0.0
        %4168 = vmatmul.mubr.f32.gmra.mrb[0].mxu0 %v3952
        %v4169 = vpop.f32.mrb[0].mxu0
        %v4170 = vadd.f32 0.0, %v4169
        %v4171 = vpop.f32.mrb[0].mxu0
        %4172 = vmatprep.mubr.f32.mxu0 0.0
        %4173 = vmatmul.mubr.f32.gmra.mrb[0].mxu0 %v3955
        %v4174 = vpop.f32.mrb[0].mxu0
        %v4175 = vadd.f32 0.0, %v4174
        %v4176 = vpop.f32.mrb[0].mxu0
        %4177 = vmatprep.mubr.f32.mxu0 0.0
        %4178 = vmatmul.mubr.f32.gmra.mrb[0].mxu0 %v3958
        %v4179 = vpop.f32.mrb[0].mxu0
        %v4180 = vadd.f32 0.0, %v4179
        %v4181 = vpop.f32.mrb[0].mxu0
        %4182 = vmatprep.mubr.f32.mxu0 0.0
        %4183 = vmatmul.mubr.f32.gmra.mrb[0].mxu0 %v3961
        %v4184 = vpop.f32.mrb[0].mxu0
        %v4185 = vadd.f32 0.0, %v4184
        %v4186 = vpop.f32.mrb[0].mxu0
        %4187 = vdwg.mxu0
        %v4188 = vld [vmem:[%s6] sm:$0xff]
        %v4189 = vld [vmem:[%s6 + $0x8] sm:$0xff]
        %s4190 = scalar_lea.vmem %s6, 16
        %v4191 = vld [vmem:[%s4190] sm:$0xff]
        %v4192 = vld [vmem:[%s4190 + $0x8] sm:$0xff]
        %v4194 = vsel %vm3824, %v4040, 0
        %v4197 = vsel %vm3824, %v4045, 0
        %4199 = vmatprep.subr.mxu0 0.0
        %4200 = vmatpush1.msra.mxu0 %v4191
        %4201 = vmatprep.subr.mxu0 0.0
        %4202 = vmatpush1.msra.mxu0 %v4192
        %4203 = vmatprep.subr.mxu0 0.0
        %4204 = vmatpush1.msra.mxu0 0.0
        %4205 = vmatprep.subr.mxu0 0.0
        %4206 = vmatpush1.msra.mxu0 0.0
        %4207 = vmatprep.subr.mxu0 0.0
        %4208 = vmatpush1.msra.mxu0 0.0
        %4209 = vmatprep.subr.mxu0 0.0
        %4210 = vmatpush1.msra.mxu0 0.0
        %4211 = vmatprep.subr.mxu0 0.0
        %4212 = vmatpush1.msra.mxu0 0.0
        %4213 = vmatprep.subr.mxu0 0.0
        %4214 = vmatpush1.msra.mxu0 0.0
        %4215 = vmatprep.subr.mxu0 0.0
        %4216 = vmatpush1.msra.mxu0 0.0
        %4217 = vmatprep.subr.mxu0 0.0
        %4218 = vmatpush1.msra.mxu0 0.0
        %4219 = vmatprep.subr.mxu0 0.0
        %4220 = vmatpush1.msra.mxu0 0.0
        %4221 = vmatprep.subr.mxu0 0.0
        %4222 = vmatpush1.msra.mxu0 0.0
        %4223 = vmatprep.subr.mxu0 0.0
        %4224 = vmatpush1.msra.mxu0 0.0
        %4225 = vmatprep.subr.mxu0 0.0
        %4226 = vmatpush1.msra.mxu0 0.0
        %4227 = vmatprep.subr.mxu0 0.0
        %4228 = vmatpush1.msra.mxu0 0.0
        %4229 = vmatprep.subr.mxu0 0.0
        %4230 = vmatpush1.msra.mxu0 0.0
        %4231 = vmatprep.subr.mxu0 0.0
        %4232 = vmatpush1.msra.mxu0 0.0
        %4233 = vmatprep.subr.mxu0 0.0
        %4234 = vmatpush1.msra.mxu0 0.0
        %4235 = vmatprep.subr.mxu0 0.0
        %4236 = vmatpush1.msra.mxu0 0.0
        %4237 = vmatprep.subr.mxu0 0.0
        %4238 = vmatpush1.msra.mxu0 0.0
        %4239 = vmatprep.subr.mxu0 0.0
        %4240 = vmatpush1.msra.mxu0 0.0
        %4241 = vmatprep.subr.mxu0 0.0
        %4242 = vmatpush1.msra.mxu0 0.0
        %4243 = vmatprep.subr.mxu0 0.0
        %4244 = vmatpush1.msra.mxu0 0.0
        %4245 = vmatprep.subr.mxu0 0.0
        %4246 = vmatpush1.msra.mxu0 0.0
        %4247 = vmatprep.subr.mxu0 0.0
        %4248 = vmatpush1.msra.mxu0 0.0
        %4249 = vmatprep.subr.mxu0 0.0
        %4250 = vmatpush1.msra.mxu0 0.0
        %4251 = vmatprep.subr.mxu0 0.0
        %4252 = vmatpush1.msra.mxu0 0.0
        %4253 = vmatprep.subr.mxu0 0.0
        %4254 = vmatpush1.msra.mxu0 0.0
        %4255 = vmatprep.subr.mxu0 0.0
        %4256 = vmatpush1.msra.mxu0 0.0
        %4257 = vmatprep.subr.mxu0 0.0
        %4258 = vmatpush1.msra.mxu0 0.0
        %4259 = vmatprep.subr.mxu0 0.0
        %4260 = vmatpush1.msra.mxu0 0.0
        %4261 = vmatprep.subr.mxu0 0.0
        %4262 = vmatpush1.msra.mxu0 0.0
        %4263 = vmatprep.mubr.f32.mxu0 0.0
        %4264 = vmatmul.mubr.f32.gmra.mrb[0].mxu0 %v4194
        %v4265 = vpop.f32.mrb[0].mxu0
        %v4266 = vadd.f32 0.0, %v4265
        %v4267 = vpop.f32.mrb[0].mxu0
        %4268 = vmatprep.mubr.f32.mxu0 0.0
        %4269 = vmatmul.mubr.f32.gmra.mrb[0].mxu0 %v4197
        %v4270 = vpop.f32.mrb[0].mxu0
        %v4271 = vadd.f32 0.0, %v4270
        %v4272 = vpop.f32.mrb[0].mxu0
        %4273 = vdwg.mxu0
        %v4275 = vsel %vm3824, %v4030, 0
        %v4278 = vsel %vm3824, %v4035, 0
        %4280 = vmatprep.subr.mxu0 0.0
        %4281 = vmatpush1.msra.mxu0 %v4188
        %4282 = vmatprep.subr.mxu0 0.0
        %4283 = vmatpush1.msra.mxu0 %v4189
        %4284 = vmatprep.subr.mxu0 0.0
        %4285 = vmatpush1.msra.mxu0 0.0
        %4286 = vmatprep.subr.mxu0 0.0
        %4287 = vmatpush1.msra.mxu0 0.0
        %4288 = vmatprep.subr.mxu0 0.0
        %4289 = vmatpush1.msra.mxu0 0.0
        %4290 = vmatprep.subr.mxu0 0.0
        %4291 = vmatpush1.msra.mxu0 0.0
        %4292 = vmatprep.subr.mxu0 0.0
        %4293 = vmatpush1.msra.mxu0 0.0
        %4294 = vmatprep.subr.mxu0 0.0
        %4295 = vmatpush1.msra.mxu0 0.0
        %4296 = vmatprep.subr.mxu0 0.0
        %4297 = vmatpush1.msra.mxu0 0.0
        %4298 = vmatprep.subr.mxu0 0.0
        %4299 = vmatpush1.msra.mxu0 0.0
        %4300 = vmatprep.subr.mxu0 0.0
        %4301 = vmatpush1.msra.mxu0 0.0
        %4302 = vmatprep.subr.mxu0 0.0
        %4303 = vmatpush1.msra.mxu0 0.0
        %4304 = vmatprep.subr.mxu0 0.0
        %4305 = vmatpush1.msra.mxu0 0.0
        %4306 = vmatprep.subr.mxu0 0.0
        %4307 = vmatpush1.msra.mxu0 0.0
        %4308 = vmatprep.subr.mxu0 0.0
        %4309 = vmatpush1.msra.mxu0 0.0
        %4310 = vmatprep.subr.mxu0 0.0
        %4311 = vmatpush1.msra.mxu0 0.0
        %4312 = vmatprep.subr.mxu0 0.0
        %4313 = vmatpush1.msra.mxu0 0.0
        %4314 = vmatprep.subr.mxu0 0.0
        %4315 = vmatpush1.msra.mxu0 0.0
        %4316 = vmatprep.subr.mxu0 0.0
        %4317 = vmatpush1.msra.mxu0 0.0
        %4318 = vmatprep.subr.mxu0 0.0
        %4319 = vmatpush1.msra.mxu0 0.0
        %4320 = vmatprep.subr.mxu0 0.0
        %4321 = vmatpush1.msra.mxu0 0.0
        %4322 = vmatprep.subr.mxu0 0.0
        %4323 = vmatpush1.msra.mxu0 0.0
        %4324 = vmatprep.subr.mxu0 0.0
        %4325 = vmatpush1.msra.mxu0 0.0
        %4326 = vmatprep.subr.mxu0 0.0
        %4327 = vmatpush1.msra.mxu0 0.0
        %4328 = vmatprep.subr.mxu0 0.0
        %4329 = vmatpush1.msra.mxu0 0.0
        %4330 = vmatprep.subr.mxu0 0.0
        %4331 = vmatpush1.msra.mxu0 0.0
        %4332 = vmatprep.subr.mxu0 0.0
        %4333 = vmatpush1.msra.mxu0 0.0
        %4334 = vmatprep.subr.mxu0 0.0
        %4335 = vmatpush1.msra.mxu0 0.0
        %4336 = vmatprep.subr.mxu0 0.0
        %4337 = vmatpush1.msra.mxu0 0.0
        %4338 = vmatprep.subr.mxu0 0.0
        %4339 = vmatpush1.msra.mxu0 0.0
        %4340 = vmatprep.subr.mxu0 0.0
        %4341 = vmatpush1.msra.mxu0 0.0
        %4342 = vmatprep.subr.mxu0 0.0
        %4343 = vmatpush1.msra.mxu0 0.0
        %4344 = vmatprep.mubr.f32.mxu0 0.0
        %4345 = vmatmul.mubr.f32.gmra.mrb[0].mxu0 %v4275
        %v4346 = vpop.f32.mrb[0].mxu0
        %v4347 = vadd.f32 %v4266, %v4346
        %v4348 = vpop.f32.mrb[0].mxu0
        %4349 = vmatprep.mubr.f32.mxu0 0.0
        %4350 = vmatmul.mubr.f32.gmra.mrb[0].mxu0 %v4278
        %v4351 = vpop.f32.mrb[0].mxu0
        %v4352 = vadd.f32 %v4271, %v4351
        %v4353 = vpop.f32.mrb[0].mxu0
        %4354 = vdwg.mxu0
        %s4355 = scalar_lea.vmem %s6, 32
        %v4356 = vld [vmem:[%s4355] sm:$0xff]
        %v4357 = vld [vmem:[%s4355 + $0x8] sm:$0xff]
        %v4359 = vsel %vm3824, %v4050, 0
        %v4362 = vsel %vm3824, %v4055, 0
        %4364 = vmatprep.subr.mxu0 0.0
        %4365 = vmatpush1.msra.mxu0 %v4356
        %4366 = vmatprep.subr.mxu0 0.0
        %4367 = vmatpush1.msra.mxu0 %v4357
        %4368 = vmatprep.subr.mxu0 0.0
        %4369 = vmatpush1.msra.mxu0 0.0
        %4370 = vmatprep.subr.mxu0 0.0
        %4371 = vmatpush1.msra.mxu0 0.0
        %4372 = vmatprep.subr.mxu0 0.0
        %4373 = vmatpush1.msra.mxu0 0.0
        %4374 = vmatprep.subr.mxu0 0.0
        %4375 = vmatpush1.msra.mxu0 0.0
        %4376 = vmatprep.subr.mxu0 0.0
        %4377 = vmatpush1.msra.mxu0 0.0
        %4378 = vmatprep.subr.mxu0 0.0
        %4379 = vmatpush1.msra.mxu0 0.0
        %4380 = vmatprep.subr.mxu0 0.0
        %4381 = vmatpush1.msra.mxu0 0.0
        %4382 = vmatprep.subr.mxu0 0.0
        %4383 = vmatpush1.msra.mxu0 0.0
        %4384 = vmatprep.subr.mxu0 0.0
        %4385 = vmatpush1.msra.mxu0 0.0
        %4386 = vmatprep.subr.mxu0 0.0
        %4387 = vmatpush1.msra.mxu0 0.0
        %4388 = vmatprep.subr.mxu0 0.0
        %4389 = vmatpush1.msra.mxu0 0.0
        %4390 = vmatprep.subr.mxu0 0.0
        %4391 = vmatpush1.msra.mxu0 0.0
        %4392 = vmatprep.subr.mxu0 0.0
        %4393 = vmatpush1.msra.mxu0 0.0
        %4394 = vmatprep.subr.mxu0 0.0
        %4395 = vmatpush1.msra.mxu0 0.0
        %4396 = vmatprep.subr.mxu0 0.0
        %4397 = vmatpush1.msra.mxu0 0.0
        %4398 = vmatprep.subr.mxu0 0.0
        %4399 = vmatpush1.msra.mxu0 0.0
        %4400 = vmatprep.subr.mxu0 0.0
        %4401 = vmatpush1.msra.mxu0 0.0
        %4402 = vmatprep.subr.mxu0 0.0
        %4403 = vmatpush1.msra.mxu0 0.0
        %4404 = vmatprep.subr.mxu0 0.0
        %4405 = vmatpush1.msra.mxu0 0.0
        %4406 = vmatprep.subr.mxu0 0.0
        %4407 = vmatpush1.msra.mxu0 0.0
        %4408 = vmatprep.subr.mxu0 0.0
        %4409 = vmatpush1.msra.mxu0 0.0
        %4410 = vmatprep.subr.mxu0 0.0
        %4411 = vmatpush1.msra.mxu0 0.0
        %4412 = vmatprep.subr.mxu0 0.0
        %4413 = vmatpush1.msra.mxu0 0.0
        %4414 = vmatprep.subr.mxu0 0.0
        %4415 = vmatpush1.msra.mxu0 0.0
        %4416 = vmatprep.subr.mxu0 0.0
        %4417 = vmatpush1.msra.mxu0 0.0
        %4418 = vmatprep.subr.mxu0 0.0
        %4419 = vmatpush1.msra.mxu0 0.0
        %4420 = vmatprep.subr.mxu0 0.0
        %4421 = vmatpush1.msra.mxu0 0.0
        %4422 = vmatprep.subr.mxu0 0.0
        %4423 = vmatpush1.msra.mxu0 0.0
        %4424 = vmatprep.subr.mxu0 0.0
        %4425 = vmatpush1.msra.mxu0 0.0
        %4426 = vmatprep.subr.mxu0 0.0
        %4427 = vmatpush1.msra.mxu0 0.0
        %4428 = vmatprep.mubr.f32.mxu0 0.0
        %4429 = vmatmul.mubr.f32.gmra.mrb[0].mxu0 %v4359
        %v4430 = vpop.f32.mrb[0].mxu0
        %v4431 = vadd.f32 0.0, %v4430
        %v4432 = vpop.f32.mrb[0].mxu0
        %4433 = vmatprep.mubr.f32.mxu0 0.0
        %4434 = vmatmul.mubr.f32.gmra.mrb[0].mxu0 %v4362
        %v4435 = vpop.f32.mrb[0].mxu0
        %v4436 = vadd.f32 0.0, %v4435
        %v4437 = vpop.f32.mrb[0].mxu0
        %4438 = vdwg.mxu0
        %v4439 = vadd.f32 %v4347, %v4431
        %v4440 = vadd.f32 %v4352, %v4436
        %s4441 = scalar_lea.vmem %s6, 48
        %v4442 = vld [vmem:[%s4441] sm:$0xff]
        %v4443 = vld [vmem:[%s4441 + $0x8] sm:$0xff]
        %v4445 = vsel %vm3824, %v4060, 0
        %v4448 = vsel %vm3824, %v4065, 0
        %4450 = vmatprep.subr.mxu0 0.0
        %4451 = vmatpush1.msra.mxu0 %v4442
        %4452 = vmatprep.subr.mxu0 0.0
        %4453 = vmatpush1.msra.mxu0 %v4443
        %4454 = vmatprep.subr.mxu0 0.0
        %4455 = vmatpush1.msra.mxu0 0.0
        %4456 = vmatprep.subr.mxu0 0.0
        %4457 = vmatpush1.msra.mxu0 0.0
        %4458 = vmatprep.subr.mxu0 0.0
        %4459 = vmatpush1.msra.mxu0 0.0
        %4460 = vmatprep.subr.mxu0 0.0
        %4461 = vmatpush1.msra.mxu0 0.0
        %4462 = vmatprep.subr.mxu0 0.0
        %4463 = vmatpush1.msra.mxu0 0.0
        %4464 = vmatprep.subr.mxu0 0.0
        %4465 = vmatpush1.msra.mxu0 0.0
        %4466 = vmatprep.subr.mxu0 0.0
        %4467 = vmatpush1.msra.mxu0 0.0
        %4468 = vmatprep.subr.mxu0 0.0
        %4469 = vmatpush1.msra.mxu0 0.0
        %4470 = vmatprep.subr.mxu0 0.0
        %4471 = vmatpush1.msra.mxu0 0.0
        %4472 = vmatprep.subr.mxu0 0.0
        %4473 = vmatpush1.msra.mxu0 0.0
        %4474 = vmatprep.subr.mxu0 0.0
        %4475 = vmatpush1.msra.mxu0 0.0
        %4476 = vmatprep.subr.mxu0 0.0
        %4477 = vmatpush1.msra.mxu0 0.0
        %4478 = vmatprep.subr.mxu0 0.0
        %4479 = vmatpush1.msra.mxu0 0.0
        %4480 = vmatprep.subr.mxu0 0.0
        %4481 = vmatpush1.msra.mxu0 0.0
        %4482 = vmatprep.subr.mxu0 0.0
        %4483 = vmatpush1.msra.mxu0 0.0
        %4484 = vmatprep.subr.mxu0 0.0
        %4485 = vmatpush1.msra.mxu0 0.0
        %4486 = vmatprep.subr.mxu0 0.0
        %4487 = vmatpush1.msra.mxu0 0.0
        %4488 = vmatprep.subr.mxu0 0.0
        %4489 = vmatpush1.msra.mxu0 0.0
        %4490 = vmatprep.subr.mxu0 0.0
        %4491 = vmatpush1.msra.mxu0 0.0
        %4492 = vmatprep.subr.mxu0 0.0
        %4493 = vmatpush1.msra.mxu0 0.0
        %4494 = vmatprep.subr.mxu0 0.0
        %4495 = vmatpush1.msra.mxu0 0.0
        %4496 = vmatprep.subr.mxu0 0.0
        %4497 = vmatpush1.msra.mxu0 0.0
        %4498 = vmatprep.subr.mxu0 0.0
        %4499 = vmatpush1.msra.mxu0 0.0
        %4500 = vmatprep.subr.mxu0 0.0
        %4501 = vmatpush1.msra.mxu0 0.0
        %4502 = vmatprep.subr.mxu0 0.0
        %4503 = vmatpush1.msra.mxu0 0.0
        %4504 = vmatprep.subr.mxu0 0.0
        %4505 = vmatpush1.msra.mxu0 0.0
        %4506 = vmatprep.subr.mxu0 0.0
        %4507 = vmatpush1.msra.mxu0 0.0
        %4508 = vmatprep.subr.mxu0 0.0
        %4509 = vmatpush1.msra.mxu0 0.0
        %4510 = vmatprep.subr.mxu0 0.0
        %4511 = vmatpush1.msra.mxu0 0.0
        %4512 = vmatprep.subr.mxu0 0.0
        %4513 = vmatpush1.msra.mxu0 0.0
        %4514 = vmatprep.mubr.f32.mxu0 0.0
        %4515 = vmatmul.mubr.f32.gmra.mrb[0].mxu0 %v4445
        %v4516 = vpop.f32.mrb[0].mxu0
        %v4517 = vadd.f32 0.0, %v4516
        %v4518 = vpop.f32.mrb[0].mxu0
        %4519 = vmatprep.mubr.f32.mxu0 0.0
        %4520 = vmatmul.mubr.f32.gmra.mrb[0].mxu0 %v4448
        %v4521 = vpop.f32.mrb[0].mxu0
        %v4522 = vadd.f32 0.0, %v4521
        %v4523 = vpop.f32.mrb[0].mxu0
        %4524 = vdwg.mxu0
        %v4525 = vadd.f32 %v4439, %v4517
        %v4526 = vadd.f32 %v4440, %v4522
        %s4527 = scalar_lea.vmem %s6, 64
        %v4528 = vld [vmem:[%s4527] sm:$0xff]
        %v4529 = vld [vmem:[%s4527 + $0x8] sm:$0xff]
        %v4531 = vsel %vm3824, %v4070, 0
        %v4534 = vsel %vm3824, %v4075, 0
        %4536 = vmatprep.subr.mxu0 0.0
        %4537 = vmatpush1.msra.mxu0 %v4528
        %4538 = vmatprep.subr.mxu0 0.0
        %4539 = vmatpush1.msra.mxu0 %v4529
        %4540 = vmatprep.subr.mxu0 0.0
        %4541 = vmatpush1.msra.mxu0 0.0
        %4542 = vmatprep.subr.mxu0 0.0
        %4543 = vmatpush1.msra.mxu0 0.0
        %4544 = vmatprep.subr.mxu0 0.0
        %4545 = vmatpush1.msra.mxu0 0.0
        %4546 = vmatprep.subr.mxu0 0.0
        %4547 = vmatpush1.msra.mxu0 0.0
        %4548 = vmatprep.subr.mxu0 0.0
        %4549 = vmatpush1.msra.mxu0 0.0
        %4550 = vmatprep.subr.mxu0 0.0
        %4551 = vmatpush1.msra.mxu0 0.0
        %4552 = vmatprep.subr.mxu0 0.0
        %4553 = vmatpush1.msra.mxu0 0.0
        %4554 = vmatprep.subr.mxu0 0.0
        %4555 = vmatpush1.msra.mxu0 0.0
        %4556 = vmatprep.subr.mxu0 0.0
        %4557 = vmatpush1.msra.mxu0 0.0
        %4558 = vmatprep.subr.mxu0 0.0
        %4559 = vmatpush1.msra.mxu0 0.0
        %4560 = vmatprep.subr.mxu0 0.0
        %4561 = vmatpush1.msra.mxu0 0.0
        %4562 = vmatprep.subr.mxu0 0.0
        %4563 = vmatpush1.msra.mxu0 0.0
        %4564 = vmatprep.subr.mxu0 0.0
        %4565 = vmatpush1.msra.mxu0 0.0
        %4566 = vmatprep.subr.mxu0 0.0
        %4567 = vmatpush1.msra.mxu0 0.0
        %4568 = vmatprep.subr.mxu0 0.0
        %4569 = vmatpush1.msra.mxu0 0.0
        %4570 = vmatprep.subr.mxu0 0.0
        %4571 = vmatpush1.msra.mxu0 0.0
        %4572 = vmatprep.subr.mxu0 0.0
        %4573 = vmatpush1.msra.mxu0 0.0
        %4574 = vmatprep.subr.mxu0 0.0
        %4575 = vmatpush1.msra.mxu0 0.0
        %4576 = vmatprep.subr.mxu0 0.0
        %4577 = vmatpush1.msra.mxu0 0.0
        %4578 = vmatprep.subr.mxu0 0.0
        %4579 = vmatpush1.msra.mxu0 0.0
        %4580 = vmatprep.subr.mxu0 0.0
        %4581 = vmatpush1.msra.mxu0 0.0
        %4582 = vmatprep.subr.mxu0 0.0
        %4583 = vmatpush1.msra.mxu0 0.0
        %4584 = vmatprep.subr.mxu0 0.0
        %4585 = vmatpush1.msra.mxu0 0.0
        %4586 = vmatprep.subr.mxu0 0.0
        %4587 = vmatpush1.msra.mxu0 0.0
        %4588 = vmatprep.subr.mxu0 0.0
        %4589 = vmatpush1.msra.mxu0 0.0
        %4590 = vmatprep.subr.mxu0 0.0
        %4591 = vmatpush1.msra.mxu0 0.0
        %4592 = vmatprep.subr.mxu0 0.0
        %4593 = vmatpush1.msra.mxu0 0.0
        %4594 = vmatprep.subr.mxu0 0.0
        %4595 = vmatpush1.msra.mxu0 0.0
        %4596 = vmatprep.subr.mxu0 0.0
        %4597 = vmatpush1.msra.mxu0 0.0
        %4598 = vmatprep.subr.mxu0 0.0
        %4599 = vmatpush1.msra.mxu0 0.0
        %4600 = vmatprep.mubr.f32.mxu0 0.0
        %4601 = vmatmul.mubr.f32.gmra.mrb[0].mxu0 %v4531
        %v4602 = vpop.f32.mrb[0].mxu0
        %v4603 = vadd.f32 0.0, %v4602
        %v4604 = vpop.f32.mrb[0].mxu0
        %4605 = vmatprep.mubr.f32.mxu0 0.0
        %4606 = vmatmul.mubr.f32.gmra.mrb[0].mxu0 %v4534
        %v4607 = vpop.f32.mrb[0].mxu0
        %v4608 = vadd.f32 0.0, %v4607
        %v4609 = vpop.f32.mrb[0].mxu0
        %4610 = vdwg.mxu0
        %v4611 = vadd.f32 %v4525, %v4603
        %v4612 = vadd.f32 %v4526, %v4608
        %s4613 = scalar_lea.vmem %s6, 80
        %v4614 = vld [vmem:[%s4613] sm:$0xff]
        %v4615 = vld [vmem:[%s4613 + $0x8] sm:$0xff]
        %v4617 = vsel %vm3824, %v4080, 0
        %v4620 = vsel %vm3824, %v4085, 0
        %4622 = vmatprep.subr.mxu0 0.0
        %4623 = vmatpush1.msra.mxu0 %v4614
        %4624 = vmatprep.subr.mxu0 0.0
        %4625 = vmatpush1.msra.mxu0 %v4615
        %4626 = vmatprep.subr.mxu0 0.0
        %4627 = vmatpush1.msra.mxu0 0.0
        %4628 = vmatprep.subr.mxu0 0.0
        %4629 = vmatpush1.msra.mxu0 0.0
        %4630 = vmatprep.subr.mxu0 0.0
        %4631 = vmatpush1.msra.mxu0 0.0
        %4632 = vmatprep.subr.mxu0 0.0
        %4633 = vmatpush1.msra.mxu0 0.0
        %4634 = vmatprep.subr.mxu0 0.0
        %4635 = vmatpush1.msra.mxu0 0.0
        %4636 = vmatprep.subr.mxu0 0.0
        %4637 = vmatpush1.msra.mxu0 0.0
        %4638 = vmatprep.subr.mxu0 0.0
        %4639 = vmatpush1.msra.mxu0 0.0
        %4640 = vmatprep.subr.mxu0 0.0
        %4641 = vmatpush1.msra.mxu0 0.0
        %4642 = vmatprep.subr.mxu0 0.0
        %4643 = vmatpush1.msra.mxu0 0.0
        %4644 = vmatprep.subr.mxu0 0.0
        %4645 = vmatpush1.msra.mxu0 0.0
        %4646 = vmatprep.subr.mxu0 0.0
        %4647 = vmatpush1.msra.mxu0 0.0
        %4648 = vmatprep.subr.mxu0 0.0
        %4649 = vmatpush1.msra.mxu0 0.0
        %4650 = vmatprep.subr.mxu0 0.0
        %4651 = vmatpush1.msra.mxu0 0.0
        %4652 = vmatprep.subr.mxu0 0.0
        %4653 = vmatpush1.msra.mxu0 0.0
        %4654 = vmatprep.subr.mxu0 0.0
        %4655 = vmatpush1.msra.mxu0 0.0
        %4656 = vmatprep.subr.mxu0 0.0
        %4657 = vmatpush1.msra.mxu0 0.0
        %4658 = vmatprep.subr.mxu0 0.0
        %4659 = vmatpush1.msra.mxu0 0.0
        %4660 = vmatprep.subr.mxu0 0.0
        %4661 = vmatpush1.msra.mxu0 0.0
        %4662 = vmatprep.subr.mxu0 0.0
        %4663 = vmatpush1.msra.mxu0 0.0
        %4664 = vmatprep.subr.mxu0 0.0
        %4665 = vmatpush1.msra.mxu0 0.0
        %4666 = vmatprep.subr.mxu0 0.0
        %4667 = vmatpush1.msra.mxu0 0.0
        %4668 = vmatprep.subr.mxu0 0.0
        %4669 = vmatpush1.msra.mxu0 0.0
        %4670 = vmatprep.subr.mxu0 0.0
        %4671 = vmatpush1.msra.mxu0 0.0
        %4672 = vmatprep.subr.mxu0 0.0
        %4673 = vmatpush1.msra.mxu0 0.0
        %4674 = vmatprep.subr.mxu0 0.0
        %4675 = vmatpush1.msra.mxu0 0.0
        %4676 = vmatprep.subr.mxu0 0.0
        %4677 = vmatpush1.msra.mxu0 0.0
        %4678 = vmatprep.subr.mxu0 0.0
        %4679 = vmatpush1.msra.mxu0 0.0
        %4680 = vmatprep.subr.mxu0 0.0
        %4681 = vmatpush1.msra.mxu0 0.0
        %4682 = vmatprep.subr.mxu0 0.0
        %4683 = vmatpush1.msra.mxu0 0.0
        %4684 = vmatprep.subr.mxu0 0.0
        %4685 = vmatpush1.msra.mxu0 0.0
        %4686 = vmatprep.mubr.f32.mxu0 0.0
        %4687 = vmatmul.mubr.f32.gmra.mrb[0].mxu0 %v4617
        %v4688 = vpop.f32.mrb[0].mxu0
        %v4689 = vadd.f32 0.0, %v4688
        %v4690 = vpop.f32.mrb[0].mxu0
        %4691 = vmatprep.mubr.f32.mxu0 0.0
        %4692 = vmatmul.mubr.f32.gmra.mrb[0].mxu0 %v4620
        %v4693 = vpop.f32.mrb[0].mxu0
        %v4694 = vadd.f32 0.0, %v4693
        %v4695 = vpop.f32.mrb[0].mxu0
        %4696 = vdwg.mxu0
        %v4697 = vadd.f32 %v4611, %v4689
        %v4698 = vadd.f32 %v4612, %v4694
        %s4699 = scalar_lea.vmem %s6, 96
        %v4700 = vld [vmem:[%s4699] sm:$0xff]
        %v4701 = vld [vmem:[%s4699 + $0x8] sm:$0xff]
        %v4703 = vsel %vm3824, %v4090, 0
        %v4706 = vsel %vm3824, %v4095, 0
        %4708 = vmatprep.subr.mxu0 0.0
        %4709 = vmatpush1.msra.mxu0 %v4700
        %4710 = vmatprep.subr.mxu0 0.0
        %4711 = vmatpush1.msra.mxu0 %v4701
        %4712 = vmatprep.subr.mxu0 0.0
        %4713 = vmatpush1.msra.mxu0 0.0
        %4714 = vmatprep.subr.mxu0 0.0
        %4715 = vmatpush1.msra.mxu0 0.0
        %4716 = vmatprep.subr.mxu0 0.0
        %4717 = vmatpush1.msra.mxu0 0.0
        %4718 = vmatprep.subr.mxu0 0.0
        %4719 = vmatpush1.msra.mxu0 0.0
        %4720 = vmatprep.subr.mxu0 0.0
        %4721 = vmatpush1.msra.mxu0 0.0
        %4722 = vmatprep.subr.mxu0 0.0
        %4723 = vmatpush1.msra.mxu0 0.0
        %4724 = vmatprep.subr.mxu0 0.0
        %4725 = vmatpush1.msra.mxu0 0.0
        %4726 = vmatprep.subr.mxu0 0.0
        %4727 = vmatpush1.msra.mxu0 0.0
        %4728 = vmatprep.subr.mxu0 0.0
        %4729 = vmatpush1.msra.mxu0 0.0
        %4730 = vmatprep.subr.mxu0 0.0
        %4731 = vmatpush1.msra.mxu0 0.0
        %4732 = vmatprep.subr.mxu0 0.0
        %4733 = vmatpush1.msra.mxu0 0.0
        %4734 = vmatprep.subr.mxu0 0.0
        %4735 = vmatpush1.msra.mxu0 0.0
        %4736 = vmatprep.subr.mxu0 0.0
        %4737 = vmatpush1.msra.mxu0 0.0
        %4738 = vmatprep.subr.mxu0 0.0
        %4739 = vmatpush1.msra.mxu0 0.0
        %4740 = vmatprep.subr.mxu0 0.0
        %4741 = vmatpush1.msra.mxu0 0.0
        %4742 = vmatprep.subr.mxu0 0.0
        %4743 = vmatpush1.msra.mxu0 0.0
        %4744 = vmatprep.subr.mxu0 0.0
        %4745 = vmatpush1.msra.mxu0 0.0
        %4746 = vmatprep.subr.mxu0 0.0
        %4747 = vmatpush1.msra.mxu0 0.0
        %4748 = vmatprep.subr.mxu0 0.0
        %4749 = vmatpush1.msra.mxu0 0.0
        %4750 = vmatprep.subr.mxu0 0.0
        %4751 = vmatpush1.msra.mxu0 0.0
        %4752 = vmatprep.subr.mxu0 0.0
        %4753 = vmatpush1.msra.mxu0 0.0
        %4754 = vmatprep.subr.mxu0 0.0
        %4755 = vmatpush1.msra.mxu0 0.0
        %4756 = vmatprep.subr.mxu0 0.0
        %4757 = vmatpush1.msra.mxu0 0.0
        %4758 = vmatprep.subr.mxu0 0.0
        %4759 = vmatpush1.msra.mxu0 0.0
        %4760 = vmatprep.subr.mxu0 0.0
        %4761 = vmatpush1.msra.mxu0 0.0
        %4762 = vmatprep.subr.mxu0 0.0
        %4763 = vmatpush1.msra.mxu0 0.0
        %4764 = vmatprep.subr.mxu0 0.0
        %4765 = vmatpush1.msra.mxu0 0.0
        %4766 = vmatprep.subr.mxu0 0.0
        %4767 = vmatpush1.msra.mxu0 0.0
        %4768 = vmatprep.subr.mxu0 0.0
        %4769 = vmatpush1.msra.mxu0 0.0
        %4770 = vmatprep.subr.mxu0 0.0
        %4771 = vmatpush1.msra.mxu0 0.0
        %4772 = vmatprep.mubr.f32.mxu0 0.0
        %4773 = vmatmul.mubr.f32.gmra.mrb[0].mxu0 %v4703
        %v4774 = vpop.f32.mrb[0].mxu0
        %v4775 = vadd.f32 0.0, %v4774
        %v4776 = vpop.f32.mrb[0].mxu0
        %4777 = vmatprep.mubr.f32.mxu0 0.0
        %4778 = vmatmul.mubr.f32.gmra.mrb[0].mxu0 %v4706
        %v4779 = vpop.f32.mrb[0].mxu0
        %v4780 = vadd.f32 0.0, %v4779
        %v4781 = vpop.f32.mrb[0].mxu0
        %4782 = vdwg.mxu0
        %v4783 = vadd.f32 %v4697, %v4775
        %v4784 = vadd.f32 %v4698, %v4780
        %s4785 = scalar_lea.vmem %s6, 112
        %v4786 = vld [vmem:[%s4785] sm:$0xff]
        %v4787 = vld [vmem:[%s4785 + $0x8] sm:$0xff]
        %v4789 = vsel %vm3824, %v4100, 0
        %v4792 = vsel %vm3824, %v4105, 0
        %4794 = vmatprep.subr.mxu0 0.0
        %4795 = vmatpush1.msra.mxu0 %v4786
        %4796 = vmatprep.subr.mxu0 0.0
        %4797 = vmatpush1.msra.mxu0 %v4787
        %4798 = vmatprep.subr.mxu0 0.0
        %4799 = vmatpush1.msra.mxu0 0.0
        %4800 = vmatprep.subr.mxu0 0.0
        %4801 = vmatpush1.msra.mxu0 0.0
        %4802 = vmatprep.subr.mxu0 0.0
        %4803 = vmatpush1.msra.mxu0 0.0
        %4804 = vmatprep.subr.mxu0 0.0
        %4805 = vmatpush1.msra.mxu0 0.0
        %4806 = vmatprep.subr.mxu0 0.0
        %4807 = vmatpush1.msra.mxu0 0.0
        %4808 = vmatprep.subr.mxu0 0.0
        %4809 = vmatpush1.msra.mxu0 0.0
        %4810 = vmatprep.subr.mxu0 0.0
        %4811 = vmatpush1.msra.mxu0 0.0
        %4812 = vmatprep.subr.mxu0 0.0
        %4813 = vmatpush1.msra.mxu0 0.0
        %4814 = vmatprep.subr.mxu0 0.0
        %4815 = vmatpush1.msra.mxu0 0.0
        %4816 = vmatprep.subr.mxu0 0.0
        %4817 = vmatpush1.msra.mxu0 0.0
        %4818 = vmatprep.subr.mxu0 0.0
        %4819 = vmatpush1.msra.mxu0 0.0
        %4820 = vmatprep.subr.mxu0 0.0
        %4821 = vmatpush1.msra.mxu0 0.0
        %4822 = vmatprep.subr.mxu0 0.0
        %4823 = vmatpush1.msra.mxu0 0.0
        %4824 = vmatprep.subr.mxu0 0.0
        %4825 = vmatpush1.msra.mxu0 0.0
        %4826 = vmatprep.subr.mxu0 0.0
        %4827 = vmatpush1.msra.mxu0 0.0
        %4828 = vmatprep.subr.mxu0 0.0
        %4829 = vmatpush1.msra.mxu0 0.0
        %4830 = vmatprep.subr.mxu0 0.0
        %4831 = vmatpush1.msra.mxu0 0.0
        %4832 = vmatprep.subr.mxu0 0.0
        %4833 = vmatpush1.msra.mxu0 0.0
        %4834 = vmatprep.subr.mxu0 0.0
        %4835 = vmatpush1.msra.mxu0 0.0
        %4836 = vmatprep.subr.mxu0 0.0
        %4837 = vmatpush1.msra.mxu0 0.0
        %4838 = vmatprep.subr.mxu0 0.0
        %4839 = vmatpush1.msra.mxu0 0.0
        %4840 = vmatprep.subr.mxu0 0.0
        %4841 = vmatpush1.msra.mxu0 0.0
        %4842 = vmatprep.subr.mxu0 0.0
        %4843 = vmatpush1.msra.mxu0 0.0
        %4844 = vmatprep.subr.mxu0 0.0
        %4845 = vmatpush1.msra.mxu0 0.0
        %4846 = vmatprep.subr.mxu0 0.0
        %4847 = vmatpush1.msra.mxu0 0.0
        %4848 = vmatprep.subr.mxu0 0.0
        %4849 = vmatpush1.msra.mxu0 0.0
        %4850 = vmatprep.subr.mxu0 0.0
        %4851 = vmatpush1.msra.mxu0 0.0
        %4852 = vmatprep.subr.mxu0 0.0
        %4853 = vmatpush1.msra.mxu0 0.0
        %4854 = vmatprep.subr.mxu0 0.0
        %4855 = vmatpush1.msra.mxu0 0.0
        %4856 = vmatprep.subr.mxu0 0.0
        %4857 = vmatpush1.msra.mxu0 0.0
        %4858 = vmatprep.mubr.f32.mxu0 0.0
        %4859 = vmatmul.mubr.f32.gmra.mrb[0].mxu0 %v4789
        %v4860 = vpop.f32.mrb[0].mxu0
        %v4861 = vadd.f32 0.0, %v4860
        %v4862 = vpop.f32.mrb[0].mxu0
        %4863 = vmatprep.mubr.f32.mxu0 0.0
        %4864 = vmatmul.mubr.f32.gmra.mrb[0].mxu0 %v4792
        %v4865 = vpop.f32.mrb[0].mxu0
        %v4866 = vadd.f32 0.0, %v4865
        %v4867 = vpop.f32.mrb[0].mxu0
        %4868 = vdwg.mxu0
        %v4869 = vadd.f32 %v4783, %v4861
        %v4870 = vadd.f32 %v4784, %v4866
        %s4871 = scalar_lea.vmem %s6, 128
        %v4872 = vld [vmem:[%s4871] sm:$0xff]
        %v4873 = vld [vmem:[%s4871 + $0x8] sm:$0xff]
        %v4875 = vsel %vm3824, %v4110, 0
        %v4878 = vsel %vm3824, %v4115, 0
        %4880 = vmatprep.subr.mxu0 0.0
        %4881 = vmatpush1.msra.mxu0 %v4872
        %4882 = vmatprep.subr.mxu0 0.0
        %4883 = vmatpush1.msra.mxu0 %v4873
        %4884 = vmatprep.subr.mxu0 0.0
        %4885 = vmatpush1.msra.mxu0 0.0
        %4886 = vmatprep.subr.mxu0 0.0
        %4887 = vmatpush1.msra.mxu0 0.0
        %4888 = vmatprep.subr.mxu0 0.0
        %4889 = vmatpush1.msra.mxu0 0.0
        %4890 = vmatprep.subr.mxu0 0.0
        %4891 = vmatpush1.msra.mxu0 0.0
        %4892 = vmatprep.subr.mxu0 0.0
        %4893 = vmatpush1.msra.mxu0 0.0
        %4894 = vmatprep.subr.mxu0 0.0
        %4895 = vmatpush1.msra.mxu0 0.0
        %4896 = vmatprep.subr.mxu0 0.0
        %4897 = vmatpush1.msra.mxu0 0.0
        %4898 = vmatprep.subr.mxu0 0.0
        %4899 = vmatpush1.msra.mxu0 0.0
        %4900 = vmatprep.subr.mxu0 0.0
        %4901 = vmatpush1.msra.mxu0 0.0
        %4902 = vmatprep.subr.mxu0 0.0
        %4903 = vmatpush1.msra.mxu0 0.0
        %4904 = vmatprep.subr.mxu0 0.0
        %4905 = vmatpush1.msra.mxu0 0.0
        %4906 = vmatprep.subr.mxu0 0.0
        %4907 = vmatpush1.msra.mxu0 0.0
        %4908 = vmatprep.subr.mxu0 0.0
        %4909 = vmatpush1.msra.mxu0 0.0
        %4910 = vmatprep.subr.mxu0 0.0
        %4911 = vmatpush1.msra.mxu0 0.0
        %4912 = vmatprep.subr.mxu0 0.0
        %4913 = vmatpush1.msra.mxu0 0.0
        %4914 = vmatprep.subr.mxu0 0.0
        %4915 = vmatpush1.msra.mxu0 0.0
        %4916 = vmatprep.subr.mxu0 0.0
        %4917 = vmatpush1.msra.mxu0 0.0
        %4918 = vmatprep.subr.mxu0 0.0
        %4919 = vmatpush1.msra.mxu0 0.0
        %4920 = vmatprep.subr.mxu0 0.0
        %4921 = vmatpush1.msra.mxu0 0.0
        %4922 = vmatprep.subr.mxu0 0.0
        %4923 = vmatpush1.msra.mxu0 0.0
        %4924 = vmatprep.subr.mxu0 0.0
        %4925 = vmatpush1.msra.mxu0 0.0
        %4926 = vmatprep.subr.mxu0 0.0
        %4927 = vmatpush1.msra.mxu0 0.0
        %4928 = vmatprep.subr.mxu0 0.0
        %4929 = vmatpush1.msra.mxu0 0.0
        %4930 = vmatprep.subr.mxu0 0.0
        %4931 = vmatpush1.msra.mxu0 0.0
        %4932 = vmatprep.subr.mxu0 0.0
        %4933 = vmatpush1.msra.mxu0 0.0
        %4934 = vmatprep.subr.mxu0 0.0
        %4935 = vmatpush1.msra.mxu0 0.0
        %4936 = vmatprep.subr.mxu0 0.0
        %4937 = vmatpush1.msra.mxu0 0.0
        %4938 = vmatprep.subr.mxu0 0.0
        %4939 = vmatpush1.msra.mxu0 0.0
        %4940 = vmatprep.subr.mxu0 0.0
        %4941 = vmatpush1.msra.mxu0 0.0
        %4942 = vmatprep.subr.mxu0 0.0
        %4943 = vmatpush1.msra.mxu0 0.0
        %4944 = vmatprep.mubr.f32.mxu0 0.0
        %4945 = vmatmul.mubr.f32.gmra.mrb[0].mxu0 %v4875
        %v4946 = vpop.f32.mrb[0].mxu0
        %v4947 = vadd.f32 0.0, %v4946
        %v4948 = vpop.f32.mrb[0].mxu0
        %4949 = vmatprep.mubr.f32.mxu0 0.0
        %4950 = vmatmul.mubr.f32.gmra.mrb[0].mxu0 %v4878
        %v4951 = vpop.f32.mrb[0].mxu0
        %v4952 = vadd.f32 0.0, %v4951
        %v4953 = vpop.f32.mrb[0].mxu0
        %4954 = vdwg.mxu0
        %v4955 = vadd.f32 %v4869, %v4947
        %v4956 = vadd.f32 %v4870, %v4952
        %s4957 = scalar_lea.vmem %s6, 144
        %v4958 = vld [vmem:[%s4957] sm:$0xff]
        %v4959 = vld [vmem:[%s4957 + $0x8] sm:$0xff]
        %v4961 = vsel %vm3824, %v4120, 0
        %v4964 = vsel %vm3824, %v4125, 0
        %4966 = vmatprep.subr.mxu0 0.0
        %4967 = vmatpush1.msra.mxu0 %v4958
        %4968 = vmatprep.subr.mxu0 0.0
        %4969 = vmatpush1.msra.mxu0 %v4959
        %4970 = vmatprep.subr.mxu0 0.0
        %4971 = vmatpush1.msra.mxu0 0.0
        %4972 = vmatprep.subr.mxu0 0.0
        %4973 = vmatpush1.msra.mxu0 0.0
        %4974 = vmatprep.subr.mxu0 0.0
        %4975 = vmatpush1.msra.mxu0 0.0
        %4976 = vmatprep.subr.mxu0 0.0
        %4977 = vmatpush1.msra.mxu0 0.0
        %4978 = vmatprep.subr.mxu0 0.0
        %4979 = vmatpush1.msra.mxu0 0.0
        %4980 = vmatprep.subr.mxu0 0.0
        %4981 = vmatpush1.msra.mxu0 0.0
        %4982 = vmatprep.subr.mxu0 0.0
        %4983 = vmatpush1.msra.mxu0 0.0
        %4984 = vmatprep.subr.mxu0 0.0
        %4985 = vmatpush1.msra.mxu0 0.0
        %4986 = vmatprep.subr.mxu0 0.0
        %4987 = vmatpush1.msra.mxu0 0.0
        %4988 = vmatprep.subr.mxu0 0.0
        %4989 = vmatpush1.msra.mxu0 0.0
        %4990 = vmatprep.subr.mxu0 0.0
        %4991 = vmatpush1.msra.mxu0 0.0
        %4992 = vmatprep.subr.mxu0 0.0
        %4993 = vmatpush1.msra.mxu0 0.0
        %4994 = vmatprep.subr.mxu0 0.0
        %4995 = vmatpush1.msra.mxu0 0.0
        %4996 = vmatprep.subr.mxu0 0.0
        %4997 = vmatpush1.msra.mxu0 0.0
        %4998 = vmatprep.subr.mxu0 0.0
        %4999 = vmatpush1.msra.mxu0 0.0
        %5000 = vmatprep.subr.mxu0 0.0
        %5001 = vmatpush1.msra.mxu0 0.0
        %5002 = vmatprep.subr.mxu0 0.0
        %5003 = vmatpush1.msra.mxu0 0.0
        %5004 = vmatprep.subr.mxu0 0.0
        %5005 = vmatpush1.msra.mxu0 0.0
        %5006 = vmatprep.subr.mxu0 0.0
        %5007 = vmatpush1.msra.mxu0 0.0
        %5008 = vmatprep.subr.mxu0 0.0
        %5009 = vmatpush1.msra.mxu0 0.0
        %5010 = vmatprep.subr.mxu0 0.0
        %5011 = vmatpush1.msra.mxu0 0.0
        %5012 = vmatprep.subr.mxu0 0.0
        %5013 = vmatpush1.msra.mxu0 0.0
        %5014 = vmatprep.subr.mxu0 0.0
        %5015 = vmatpush1.msra.mxu0 0.0
        %5016 = vmatprep.subr.mxu0 0.0
        %5017 = vmatpush1.msra.mxu0 0.0
        %5018 = vmatprep.subr.mxu0 0.0
        %5019 = vmatpush1.msra.mxu0 0.0
        %5020 = vmatprep.subr.mxu0 0.0
        %5021 = vmatpush1.msra.mxu0 0.0
        %5022 = vmatprep.subr.mxu0 0.0
        %5023 = vmatpush1.msra.mxu0 0.0
        %5024 = vmatprep.subr.mxu0 0.0
        %5025 = vmatpush1.msra.mxu0 0.0
        %5026 = vmatprep.subr.mxu0 0.0
        %5027 = vmatpush1.msra.mxu0 0.0
        %5028 = vmatprep.subr.mxu0 0.0
        %5029 = vmatpush1.msra.mxu0 0.0
        %5030 = vmatprep.mubr.f32.mxu0 0.0
        %5031 = vmatmul.mubr.f32.gmra.mrb[0].mxu0 %v4961
        %v5032 = vpop.f32.mrb[0].mxu0
        %v5033 = vadd.f32 0.0, %v5032
        %v5034 = vpop.f32.mrb[0].mxu0
        %5035 = vmatprep.mubr.f32.mxu0 0.0
        %5036 = vmatmul.mubr.f32.gmra.mrb[0].mxu0 %v4964
        %v5037 = vpop.f32.mrb[0].mxu0
        %v5038 = vadd.f32 0.0, %v5037
        %v5039 = vpop.f32.mrb[0].mxu0
        %5040 = vdwg.mxu0
        %v5041 = vadd.f32 %v4955, %v5033
        %v5042 = vadd.f32 %v4956, %v5038
        %s5043 = scalar_lea.vmem %s6, 160
        %v5044 = vld [vmem:[%s5043] sm:$0xff]
        %v5045 = vld [vmem:[%s5043 + $0x8] sm:$0xff]
        %v5047 = vsel %vm3824, %v4130, 0
        %v5050 = vsel %vm3824, %v4135, 0
        %5052 = vmatprep.subr.mxu0 0.0
        %5053 = vmatpush1.msra.mxu0 %v5044
        %5054 = vmatprep.subr.mxu0 0.0
        %5055 = vmatpush1.msra.mxu0 %v5045
        %5056 = vmatprep.subr.mxu0 0.0
        %5057 = vmatpush1.msra.mxu0 0.0
        %5058 = vmatprep.subr.mxu0 0.0
        %5059 = vmatpush1.msra.mxu0 0.0
        %5060 = vmatprep.subr.mxu0 0.0
        %5061 = vmatpush1.msra.mxu0 0.0
        %5062 = vmatprep.subr.mxu0 0.0
        %5063 = vmatpush1.msra.mxu0 0.0
        %5064 = vmatprep.subr.mxu0 0.0
        %5065 = vmatpush1.msra.mxu0 0.0
        %5066 = vmatprep.subr.mxu0 0.0
        %5067 = vmatpush1.msra.mxu0 0.0
        %5068 = vmatprep.subr.mxu0 0.0
        %5069 = vmatpush1.msra.mxu0 0.0
        %5070 = vmatprep.subr.mxu0 0.0
        %5071 = vmatpush1.msra.mxu0 0.0
        %5072 = vmatprep.subr.mxu0 0.0
        %5073 = vmatpush1.msra.mxu0 0.0
        %5074 = vmatprep.subr.mxu0 0.0
        %5075 = vmatpush1.msra.mxu0 0.0
        %5076 = vmatprep.subr.mxu0 0.0
        %5077 = vmatpush1.msra.mxu0 0.0
        %5078 = vmatprep.subr.mxu0 0.0
        %5079 = vmatpush1.msra.mxu0 0.0
        %5080 = vmatprep.subr.mxu0 0.0
        %5081 = vmatpush1.msra.mxu0 0.0
        %5082 = vmatprep.subr.mxu0 0.0
        %5083 = vmatpush1.msra.mxu0 0.0
        %5084 = vmatprep.subr.mxu0 0.0
        %5085 = vmatpush1.msra.mxu0 0.0
        %5086 = vmatprep.subr.mxu0 0.0
        %5087 = vmatpush1.msra.mxu0 0.0
        %5088 = vmatprep.subr.mxu0 0.0
        %5089 = vmatpush1.msra.mxu0 0.0
        %5090 = vmatprep.subr.mxu0 0.0
        %5091 = vmatpush1.msra.mxu0 0.0
        %5092 = vmatprep.subr.mxu0 0.0
        %5093 = vmatpush1.msra.mxu0 0.0
        %5094 = vmatprep.subr.mxu0 0.0
        %5095 = vmatpush1.msra.mxu0 0.0
        %5096 = vmatprep.subr.mxu0 0.0
        %5097 = vmatpush1.msra.mxu0 0.0
        %5098 = vmatprep.subr.mxu0 0.0
        %5099 = vmatpush1.msra.mxu0 0.0
        %5100 = vmatprep.subr.mxu0 0.0
        %5101 = vmatpush1.msra.mxu0 0.0
        %5102 = vmatprep.subr.mxu0 0.0
        %5103 = vmatpush1.msra.mxu0 0.0
        %5104 = vmatprep.subr.mxu0 0.0
        %5105 = vmatpush1.msra.mxu0 0.0
        %5106 = vmatprep.subr.mxu0 0.0
        %5107 = vmatpush1.msra.mxu0 0.0
        %5108 = vmatprep.subr.mxu0 0.0
        %5109 = vmatpush1.msra.mxu0 0.0
        %5110 = vmatprep.subr.mxu0 0.0
        %5111 = vmatpush1.msra.mxu0 0.0
        %5112 = vmatprep.subr.mxu0 0.0
        %5113 = vmatpush1.msra.mxu0 0.0
        %5114 = vmatprep.subr.mxu0 0.0
        %5115 = vmatpush1.msra.mxu0 0.0
        %5116 = vmatprep.mubr.f32.mxu0 0.0
        %5117 = vmatmul.mubr.f32.gmra.mrb[0].mxu0 %v5047
        %v5118 = vpop.f32.mrb[0].mxu0
        %v5119 = vadd.f32 0.0, %v5118
        %v5120 = vpop.f32.mrb[0].mxu0
        %5121 = vmatprep.mubr.f32.mxu0 0.0
        %5122 = vmatmul.mubr.f32.gmra.mrb[0].mxu0 %v5050
        %v5123 = vpop.f32.mrb[0].mxu0
        %v5124 = vadd.f32 0.0, %v5123
        %v5125 = vpop.f32.mrb[0].mxu0
        %5126 = vdwg.mxu0
        %v5127 = vadd.f32 %v5041, %v5119
        %v5128 = vadd.f32 %v5042, %v5124
        %s5129 = scalar_lea.vmem %s6, 176
        %v5130 = vld [vmem:[%s5129] sm:$0xff]
        %v5131 = vld [vmem:[%s5129 + $0x8] sm:$0xff]
        %v5133 = vsel %vm3824, %v4140, 0
        %v5136 = vsel %vm3824, %v4145, 0
        %5138 = vmatprep.subr.mxu0 0.0
        %5139 = vmatpush1.msra.mxu0 %v5130
        %5140 = vmatprep.subr.mxu0 0.0
        %5141 = vmatpush1.msra.mxu0 %v5131
        %5142 = vmatprep.subr.mxu0 0.0
        %5143 = vmatpush1.msra.mxu0 0.0
        %5144 = vmatprep.subr.mxu0 0.0
        %5145 = vmatpush1.msra.mxu0 0.0
        %5146 = vmatprep.subr.mxu0 0.0
        %5147 = vmatpush1.msra.mxu0 0.0
        %5148 = vmatprep.subr.mxu0 0.0
        %5149 = vmatpush1.msra.mxu0 0.0
        %5150 = vmatprep.subr.mxu0 0.0
        %5151 = vmatpush1.msra.mxu0 0.0
        %5152 = vmatprep.subr.mxu0 0.0
        %5153 = vmatpush1.msra.mxu0 0.0
        %5154 = vmatprep.subr.mxu0 0.0
        %5155 = vmatpush1.msra.mxu0 0.0
        %5156 = vmatprep.subr.mxu0 0.0
        %5157 = vmatpush1.msra.mxu0 0.0
        %5158 = vmatprep.subr.mxu0 0.0
        %5159 = vmatpush1.msra.mxu0 0.0
        %5160 = vmatprep.subr.mxu0 0.0
        %5161 = vmatpush1.msra.mxu0 0.0
        %5162 = vmatprep.subr.mxu0 0.0
        %5163 = vmatpush1.msra.mxu0 0.0
        %5164 = vmatprep.subr.mxu0 0.0
        %5165 = vmatpush1.msra.mxu0 0.0
        %5166 = vmatprep.subr.mxu0 0.0
        %5167 = vmatpush1.msra.mxu0 0.0
        %5168 = vmatprep.subr.mxu0 0.0
        %5169 = vmatpush1.msra.mxu0 0.0
        %5170 = vmatprep.subr.mxu0 0.0
        %5171 = vmatpush1.msra.mxu0 0.0
        %5172 = vmatprep.subr.mxu0 0.0
        %5173 = vmatpush1.msra.mxu0 0.0
        %5174 = vmatprep.subr.mxu0 0.0
        %5175 = vmatpush1.msra.mxu0 0.0
        %5176 = vmatprep.subr.mxu0 0.0
        %5177 = vmatpush1.msra.mxu0 0.0
        %5178 = vmatprep.subr.mxu0 0.0
        %5179 = vmatpush1.msra.mxu0 0.0
        %5180 = vmatprep.subr.mxu0 0.0
        %5181 = vmatpush1.msra.mxu0 0.0
        %5182 = vmatprep.subr.mxu0 0.0
        %5183 = vmatpush1.msra.mxu0 0.0
        %5184 = vmatprep.subr.mxu0 0.0
        %5185 = vmatpush1.msra.mxu0 0.0
        %5186 = vmatprep.subr.mxu0 0.0
        %5187 = vmatpush1.msra.mxu0 0.0
        %5188 = vmatprep.subr.mxu0 0.0
        %5189 = vmatpush1.msra.mxu0 0.0
        %5190 = vmatprep.subr.mxu0 0.0
        %5191 = vmatpush1.msra.mxu0 0.0
        %5192 = vmatprep.subr.mxu0 0.0
        %5193 = vmatpush1.msra.mxu0 0.0
        %5194 = vmatprep.subr.mxu0 0.0
        %5195 = vmatpush1.msra.mxu0 0.0
        %5196 = vmatprep.subr.mxu0 0.0
        %5197 = vmatpush1.msra.mxu0 0.0
        %5198 = vmatprep.subr.mxu0 0.0
        %5199 = vmatpush1.msra.mxu0 0.0
        %5200 = vmatprep.subr.mxu0 0.0
        %5201 = vmatpush1.msra.mxu0 0.0
        %5202 = vmatprep.mubr.f32.mxu0 0.0
        %5203 = vmatmul.mubr.f32.gmra.mrb[0].mxu0 %v5133
        %v5204 = vpop.f32.mrb[0].mxu0
        %v5205 = vadd.f32 0.0, %v5204
        %v5206 = vpop.f32.mrb[0].mxu0
        %5207 = vmatprep.mubr.f32.mxu0 0.0
        %5208 = vmatmul.mubr.f32.gmra.mrb[0].mxu0 %v5136
        %v5209 = vpop.f32.mrb[0].mxu0
        %v5210 = vadd.f32 0.0, %v5209
        %v5211 = vpop.f32.mrb[0].mxu0
        %5212 = vdwg.mxu0
        %v5213 = vadd.f32 %v5127, %v5205
        %v5214 = vadd.f32 %v5128, %v5210
        %s5215 = scalar_lea.vmem %s6, 192
        %v5216 = vld [vmem:[%s5215] sm:$0xff]
        %v5217 = vld [vmem:[%s5215 + $0x8] sm:$0xff]
        %v5219 = vsel %vm3824, %v4150, 0
        %v5222 = vsel %vm3824, %v4155, 0
        %5224 = vmatprep.subr.mxu0 0.0
        %5225 = vmatpush1.msra.mxu0 %v5216
        %5226 = vmatprep.subr.mxu0 0.0
        %5227 = vmatpush1.msra.mxu0 %v5217
        %5228 = vmatprep.subr.mxu0 0.0
        %5229 = vmatpush1.msra.mxu0 0.0
        %5230 = vmatprep.subr.mxu0 0.0
        %5231 = vmatpush1.msra.mxu0 0.0
        %5232 = vmatprep.subr.mxu0 0.0
        %5233 = vmatpush1.msra.mxu0 0.0
        %5234 = vmatprep.subr.mxu0 0.0
        %5235 = vmatpush1.msra.mxu0 0.0
        %5236 = vmatprep.subr.mxu0 0.0
        %5237 = vmatpush1.msra.mxu0 0.0
        %5238 = vmatprep.subr.mxu0 0.0
        %5239 = vmatpush1.msra.mxu0 0.0
        %5240 = vmatprep.subr.mxu0 0.0
        %5241 = vmatpush1.msra.mxu0 0.0
        %5242 = vmatprep.subr.mxu0 0.0
        %5243 = vmatpush1.msra.mxu0 0.0
        %5244 = vmatprep.subr.mxu0 0.0
        %5245 = vmatpush1.msra.mxu0 0.0
        %5246 = vmatprep.subr.mxu0 0.0
        %5247 = vmatpush1.msra.mxu0 0.0
        %5248 = vmatprep.subr.mxu0 0.0
        %5249 = vmatpush1.msra.mxu0 0.0
        %5250 = vmatprep.subr.mxu0 0.0
        %5251 = vmatpush1.msra.mxu0 0.0
        %5252 = vmatprep.subr.mxu0 0.0
        %5253 = vmatpush1.msra.mxu0 0.0
        %5254 = vmatprep.subr.mxu0 0.0
        %5255 = vmatpush1.msra.mxu0 0.0
        %5256 = vmatprep.subr.mxu0 0.0
        %5257 = vmatpush1.msra.mxu0 0.0
        %5258 = vmatprep.subr.mxu0 0.0
        %5259 = vmatpush1.msra.mxu0 0.0
        %5260 = vmatprep.subr.mxu0 0.0
        %5261 = vmatpush1.msra.mxu0 0.0
        %5262 = vmatprep.subr.mxu0 0.0
        %5263 = vmatpush1.msra.mxu0 0.0
        %5264 = vmatprep.subr.mxu0 0.0
        %5265 = vmatpush1.msra.mxu0 0.0
        %5266 = vmatprep.subr.mxu0 0.0
        %5267 = vmatpush1.msra.mxu0 0.0
        %5268 = vmatprep.subr.mxu0 0.0
        %5269 = vmatpush1.msra.mxu0 0.0
        %5270 = vmatprep.subr.mxu0 0.0
        %5271 = vmatpush1.msra.mxu0 0.0
        %5272 = vmatprep.subr.mxu0 0.0
        %5273 = vmatpush1.msra.mxu0 0.0
        %5274 = vmatprep.subr.mxu0 0.0
        %5275 = vmatpush1.msra.mxu0 0.0
        %5276 = vmatprep.subr.mxu0 0.0
        %5277 = vmatpush1.msra.mxu0 0.0
        %5278 = vmatprep.subr.mxu0 0.0
        %5279 = vmatpush1.msra.mxu0 0.0
        %5280 = vmatprep.subr.mxu0 0.0
        %5281 = vmatpush1.msra.mxu0 0.0
        %5282 = vmatprep.subr.mxu0 0.0
        %5283 = vmatpush1.msra.mxu0 0.0
        %5284 = vmatprep.subr.mxu0 0.0
        %5285 = vmatpush1.msra.mxu0 0.0
        %5286 = vmatprep.subr.mxu0 0.0
        %5287 = vmatpush1.msra.mxu0 0.0
        %5288 = vmatprep.mubr.f32.mxu0 0.0
        %5289 = vmatmul.mubr.f32.gmra.mrb[0].mxu0 %v5219
        %v5290 = vpop.f32.mrb[0].mxu0
        %v5291 = vadd.f32 0.0, %v5290
        %v5292 = vpop.f32.mrb[0].mxu0
        %5293 = vmatprep.mubr.f32.mxu0 0.0
        %5294 = vmatmul.mubr.f32.gmra.mrb[0].mxu0 %v5222
        %v5295 = vpop.f32.mrb[0].mxu0
        %v5296 = vadd.f32 0.0, %v5295
        %v5297 = vpop.f32.mrb[0].mxu0
        %5298 = vdwg.mxu0
        %v5299 = vadd.f32 %v5213, %v5291
        %v5300 = vadd.f32 %v5214, %v5296
        %s5301 = scalar_lea.vmem %s6, 208
        %v5302 = vld [vmem:[%s5301] sm:$0xff]
        %v5303 = vld [vmem:[%s5301 + $0x8] sm:$0xff]
        %v5305 = vsel %vm3824, %v4160, 0
        %v5308 = vsel %vm3824, %v4165, 0
        %5310 = vmatprep.subr.mxu0 0.0
        %5311 = vmatpush1.msra.mxu0 %v5302
        %5312 = vmatprep.subr.mxu0 0.0
        %5313 = vmatpush1.msra.mxu0 %v5303
        %5314 = vmatprep.subr.mxu0 0.0
        %5315 = vmatpush1.msra.mxu0 0.0
        %5316 = vmatprep.subr.mxu0 0.0
        %5317 = vmatpush1.msra.mxu0 0.0
        %5318 = vmatprep.subr.mxu0 0.0
        %5319 = vmatpush1.msra.mxu0 0.0
        %5320 = vmatprep.subr.mxu0 0.0
        %5321 = vmatpush1.msra.mxu0 0.0
        %5322 = vmatprep.subr.mxu0 0.0
        %5323 = vmatpush1.msra.mxu0 0.0
        %5324 = vmatprep.subr.mxu0 0.0
        %5325 = vmatpush1.msra.mxu0 0.0
        %5326 = vmatprep.subr.mxu0 0.0
        %5327 = vmatpush1.msra.mxu0 0.0
        %5328 = vmatprep.subr.mxu0 0.0
        %5329 = vmatpush1.msra.mxu0 0.0
        %5330 = vmatprep.subr.mxu0 0.0
        %5331 = vmatpush1.msra.mxu0 0.0
        %5332 = vmatprep.subr.mxu0 0.0
        %5333 = vmatpush1.msra.mxu0 0.0
        %5334 = vmatprep.subr.mxu0 0.0
        %5335 = vmatpush1.msra.mxu0 0.0
        %5336 = vmatprep.subr.mxu0 0.0
        %5337 = vmatpush1.msra.mxu0 0.0
        %5338 = vmatprep.subr.mxu0 0.0
        %5339 = vmatpush1.msra.mxu0 0.0
        %5340 = vmatprep.subr.mxu0 0.0
        %5341 = vmatpush1.msra.mxu0 0.0
        %5342 = vmatprep.subr.mxu0 0.0
        %5343 = vmatpush1.msra.mxu0 0.0
        %5344 = vmatprep.subr.mxu0 0.0
        %5345 = vmatpush1.msra.mxu0 0.0
        %5346 = vmatprep.subr.mxu0 0.0
        %5347 = vmatpush1.msra.mxu0 0.0
        %5348 = vmatprep.subr.mxu0 0.0
        %5349 = vmatpush1.msra.mxu0 0.0
        %5350 = vmatprep.subr.mxu0 0.0
        %5351 = vmatpush1.msra.mxu0 0.0
        %5352 = vmatprep.subr.mxu0 0.0
        %5353 = vmatpush1.msra.mxu0 0.0
        %5354 = vmatprep.subr.mxu0 0.0
        %5355 = vmatpush1.msra.mxu0 0.0
        %5356 = vmatprep.subr.mxu0 0.0
        %5357 = vmatpush1.msra.mxu0 0.0
        %5358 = vmatprep.subr.mxu0 0.0
        %5359 = vmatpush1.msra.mxu0 0.0
        %5360 = vmatprep.subr.mxu0 0.0
        %5361 = vmatpush1.msra.mxu0 0.0
        %5362 = vmatprep.subr.mxu0 0.0
        %5363 = vmatpush1.msra.mxu0 0.0
        %5364 = vmatprep.subr.mxu0 0.0
        %5365 = vmatpush1.msra.mxu0 0.0
        %5366 = vmatprep.subr.mxu0 0.0
        %5367 = vmatpush1.msra.mxu0 0.0
        %5368 = vmatprep.subr.mxu0 0.0
        %5369 = vmatpush1.msra.mxu0 0.0
        %5370 = vmatprep.subr.mxu0 0.0
        %5371 = vmatpush1.msra.mxu0 0.0
        %5372 = vmatprep.subr.mxu0 0.0
        %5373 = vmatpush1.msra.mxu0 0.0
        %5374 = vmatprep.mubr.f32.mxu0 0.0
        %5375 = vmatmul.mubr.f32.gmra.mrb[0].mxu0 %v5305
        %v5376 = vpop.f32.mrb[0].mxu0
        %v5377 = vadd.f32 0.0, %v5376
        %v5378 = vpop.f32.mrb[0].mxu0
        %5379 = vmatprep.mubr.f32.mxu0 0.0
        %5380 = vmatmul.mubr.f32.gmra.mrb[0].mxu0 %v5308
        %v5381 = vpop.f32.mrb[0].mxu0
        %v5382 = vadd.f32 0.0, %v5381
        %v5383 = vpop.f32.mrb[0].mxu0
        %5384 = vdwg.mxu0
        %v5385 = vadd.f32 %v5299, %v5377
        %v5386 = vadd.f32 %v5300, %v5382
        %s5387 = scalar_lea.vmem %s6, 224
        %v5388 = vld [vmem:[%s5387] sm:$0xff]
        %v5389 = vld [vmem:[%s5387 + $0x8] sm:$0xff]
        %v5391 = vsel %vm3824, %v4170, 0
        %v5394 = vsel %vm3824, %v4175, 0
        %5396 = vmatprep.subr.mxu0 0.0
        %5397 = vmatpush1.msra.mxu0 %v5388
        %5398 = vmatprep.subr.mxu0 0.0
        %5399 = vmatpush1.msra.mxu0 %v5389
        %5400 = vmatprep.subr.mxu0 0.0
        %5401 = vmatpush1.msra.mxu0 0.0
        %5402 = vmatprep.subr.mxu0 0.0
        %5403 = vmatpush1.msra.mxu0 0.0
        %5404 = vmatprep.subr.mxu0 0.0
        %5405 = vmatpush1.msra.mxu0 0.0
        %5406 = vmatprep.subr.mxu0 0.0
        %5407 = vmatpush1.msra.mxu0 0.0
        %5408 = vmatprep.subr.mxu0 0.0
        %5409 = vmatpush1.msra.mxu0 0.0
        %5410 = vmatprep.subr.mxu0 0.0
        %5411 = vmatpush1.msra.mxu0 0.0
        %5412 = vmatprep.subr.mxu0 0.0
        %5413 = vmatpush1.msra.mxu0 0.0
        %5414 = vmatprep.subr.mxu0 0.0
        %5415 = vmatpush1.msra.mxu0 0.0
        %5416 = vmatprep.subr.mxu0 0.0
        %5417 = vmatpush1.msra.mxu0 0.0
        %5418 = vmatprep.subr.mxu0 0.0
        %5419 = vmatpush1.msra.mxu0 0.0
        %5420 = vmatprep.subr.mxu0 0.0
        %5421 = vmatpush1.msra.mxu0 0.0
        %5422 = vmatprep.subr.mxu0 0.0
        %5423 = vmatpush1.msra.mxu0 0.0
        %5424 = vmatprep.subr.mxu0 0.0
        %5425 = vmatpush1.msra.mxu0 0.0
        %5426 = vmatprep.subr.mxu0 0.0
        %5427 = vmatpush1.msra.mxu0 0.0
        %5428 = vmatprep.subr.mxu0 0.0
        %5429 = vmatpush1.msra.mxu0 0.0
        %5430 = vmatprep.subr.mxu0 0.0
        %5431 = vmatpush1.msra.mxu0 0.0
        %5432 = vmatprep.subr.mxu0 0.0
        %5433 = vmatpush1.msra.mxu0 0.0
        %5434 = vmatprep.subr.mxu0 0.0
        %5435 = vmatpush1.msra.mxu0 0.0
        %5436 = vmatprep.subr.mxu0 0.0
        %5437 = vmatpush1.msra.mxu0 0.0
        %5438 = vmatprep.subr.mxu0 0.0
        %5439 = vmatpush1.msra.mxu0 0.0
        %5440 = vmatprep.subr.mxu0 0.0
        %5441 = vmatpush1.msra.mxu0 0.0
        %5442 = vmatprep.subr.mxu0 0.0
        %5443 = vmatpush1.msra.mxu0 0.0
        %5444 = vmatprep.subr.mxu0 0.0
        %5445 = vmatpush1.msra.mxu0 0.0
        %5446 = vmatprep.subr.mxu0 0.0
        %5447 = vmatpush1.msra.mxu0 0.0
        %5448 = vmatprep.subr.mxu0 0.0
        %5449 = vmatpush1.msra.mxu0 0.0
        %5450 = vmatprep.subr.mxu0 0.0
        %5451 = vmatpush1.msra.mxu0 0.0
        %5452 = vmatprep.subr.mxu0 0.0
        %5453 = vmatpush1.msra.mxu0 0.0
        %5454 = vmatprep.subr.mxu0 0.0
        %5455 = vmatpush1.msra.mxu0 0.0
        %5456 = vmatprep.subr.mxu0 0.0
        %5457 = vmatpush1.msra.mxu0 0.0
        %5458 = vmatprep.subr.mxu0 0.0
        %5459 = vmatpush1.msra.mxu0 0.0
        %5460 = vmatprep.mubr.f32.mxu0 0.0
        %5461 = vmatmul.mubr.f32.gmra.mrb[0].mxu0 %v5391
        %v5462 = vpop.f32.mrb[0].mxu0
        %v5463 = vadd.f32 0.0, %v5462
        %v5464 = vpop.f32.mrb[0].mxu0
        %5465 = vmatprep.mubr.f32.mxu0 0.0
        %5466 = vmatmul.mubr.f32.gmra.mrb[0].mxu0 %v5394
        %v5467 = vpop.f32.mrb[0].mxu0
        %v5468 = vadd.f32 0.0, %v5467
        %v5469 = vpop.f32.mrb[0].mxu0
        %5470 = vdwg.mxu0
        %v5471 = vadd.f32 %v5385, %v5463
        %v5472 = vadd.f32 %v5386, %v5468
        %s5473 = scalar_lea.vmem %s6, 240
        %v5474 = vld [vmem:[%s5473] sm:$0xff]
        %v5475 = vld [vmem:[%s5473 + $0x8] sm:$0xff]
        %v5477 = vsel %vm3824, %v4180, 0
        %v5480 = vsel %vm3824, %v4185, 0
        %5482 = vmatprep.subr.mxu0 0.0
        %5483 = vmatpush1.msra.mxu0 %v5474
        %5484 = vmatprep.subr.mxu0 0.0
        %5485 = vmatpush1.msra.mxu0 %v5475
        %5486 = vmatprep.subr.mxu0 0.0
        %5487 = vmatpush1.msra.mxu0 0.0
        %5488 = vmatprep.subr.mxu0 0.0
        %5489 = vmatpush1.msra.mxu0 0.0
        %5490 = vmatprep.subr.mxu0 0.0
        %5491 = vmatpush1.msra.mxu0 0.0
        %5492 = vmatprep.subr.mxu0 0.0
        %5493 = vmatpush1.msra.mxu0 0.0
        %5494 = vmatprep.subr.mxu0 0.0
        %5495 = vmatpush1.msra.mxu0 0.0
        %5496 = vmatprep.subr.mxu0 0.0
        %5497 = vmatpush1.msra.mxu0 0.0
        %5498 = vmatprep.subr.mxu0 0.0
        %5499 = vmatpush1.msra.mxu0 0.0
        %5500 = vmatprep.subr.mxu0 0.0
        %5501 = vmatpush1.msra.mxu0 0.0
        %5502 = vmatprep.subr.mxu0 0.0
        %5503 = vmatpush1.msra.mxu0 0.0
        %5504 = vmatprep.subr.mxu0 0.0
        %5505 = vmatpush1.msra.mxu0 0.0
        %5506 = vmatprep.subr.mxu0 0.0
        %5507 = vmatpush1.msra.mxu0 0.0
        %5508 = vmatprep.subr.mxu0 0.0
        %5509 = vmatpush1.msra.mxu0 0.0
        %5510 = vmatprep.subr.mxu0 0.0
        %5511 = vmatpush1.msra.mxu0 0.0
        %5512 = vmatprep.subr.mxu0 0.0
        %5513 = vmatpush1.msra.mxu0 0.0
        %5514 = vmatprep.subr.mxu0 0.0
        %5515 = vmatpush1.msra.mxu0 0.0
        %5516 = vmatprep.subr.mxu0 0.0
        %5517 = vmatpush1.msra.mxu0 0.0
        %5518 = vmatprep.subr.mxu0 0.0
        %5519 = vmatpush1.msra.mxu0 0.0
        %5520 = vmatprep.subr.mxu0 0.0
        %5521 = vmatpush1.msra.mxu0 0.0
        %5522 = vmatprep.subr.mxu0 0.0
        %5523 = vmatpush1.msra.mxu0 0.0
        %5524 = vmatprep.subr.mxu0 0.0
        %5525 = vmatpush1.msra.mxu0 0.0
        %5526 = vmatprep.subr.mxu0 0.0
        %5527 = vmatpush1.msra.mxu0 0.0
        %5528 = vmatprep.subr.mxu0 0.0
        %5529 = vmatpush1.msra.mxu0 0.0
        %5530 = vmatprep.subr.mxu0 0.0
        %5531 = vmatpush1.msra.mxu0 0.0
        %5532 = vmatprep.subr.mxu0 0.0
        %5533 = vmatpush1.msra.mxu0 0.0
        %5534 = vmatprep.subr.mxu0 0.0
        %5535 = vmatpush1.msra.mxu0 0.0
        %5536 = vmatprep.subr.mxu0 0.0
        %5537 = vmatpush1.msra.mxu0 0.0
        %5538 = vmatprep.subr.mxu0 0.0
        %5539 = vmatpush1.msra.mxu0 0.0
        %5540 = vmatprep.subr.mxu0 0.0
        %5541 = vmatpush1.msra.mxu0 0.0
        %5542 = vmatprep.subr.mxu0 0.0
        %5543 = vmatpush1.msra.mxu0 0.0
        %5544 = vmatprep.subr.mxu0 0.0
        %5545 = vmatpush1.msra.mxu0 0.0
        %5546 = vmatprep.mubr.f32.mxu0 0.0
        %5547 = vmatmul.mubr.f32.gmra.mrb[0].mxu0 %v5477
        %v5548 = vpop.f32.mrb[0].mxu0
        %v5549 = vadd.f32 0.0, %v5548
        %v5550 = vpop.f32.mrb[0].mxu0
        %5551 = vmatprep.mubr.f32.mxu0 0.0
        %5552 = vmatmul.mubr.f32.gmra.mrb[0].mxu0 %v5480
        %v5553 = vpop.f32.mrb[0].mxu0
        %v5554 = vadd.f32 0.0, %v5553
        %v5555 = vpop.f32.mrb[0].mxu0
        %5556 = vdwg.mxu0
        %v5557 = vadd.f32 %v5471, %v5549
        %v5558 = vadd.f32 %v5472, %v5554
        %v5560 = vlaneseq
        %v5561 = vshrl.u32 %v5560, 7
        %v5562 = vsub.s32 0, %v5561
        %v5563 = vrot.slane %v3833, %v5562
        %v5565 = vadd.f32 %v5557, %v5563
        %v5566 = vadd.f32 %v5558, %v5563
        %v5567 = vmax.f32 %v5565, 0.0
        %v5568 = vmax.f32 %v5566, 0.0
        %vm5569 = vcmask 261120
        %5570 = vst.msk [vmem:[%s531] sm:$0xff] %vm5569, %v5567
        %5571 = vst.msk [vmem:[%s531 + $0x8] sm:$0xff] %vm5569, %v5568
        %v5572 = vld [vmem:[%s9] sm:$0x1]
        %v5573 = vld [vmem:[%s3] sm:$0xff]
        %v5574 = vld [vmem:[%s3 + $0x8] sm:$0xff]
        %v5575 = vld [vmem:[%s3 + $0x10] sm:$0xff]
        %v5576 = vld [vmem:[%s3 + $0x18] sm:$0xff]
        %v5577 = vld [vmem:[%s3 + $0x20] sm:$0xff]
        %v5578 = vld [vmem:[%s3 + $0x28] sm:$0xff]
        %v5579 = vld [vmem:[%s3 + $0x30] sm:$0xff]
        %v5580 = vld [vmem:[%s3 + $0x38] sm:$0xff]
        %v5581 = vld [vmem:[%s3 + $0x40] sm:$0xff]
        %v5582 = vld [vmem:[%s3 + $0x48] sm:$0xff]
        %v5583 = vld [vmem:[%s3 + $0x50] sm:$0xff]
        %v5584 = vld [vmem:[%s3 + $0x58] sm:$0xff]
        %v5585 = vld [vmem:[%s3 + $0x60] sm:$0xff]
        %v5586 = vld [vmem:[%s3 + $0x68] sm:$0xff]
        %v5587 = vld [vmem:[%s3 + $0x70] sm:$0xff]
        %v5588 = vld [vmem:[%s3 + $0x78] sm:$0xff]
        %v5589 = vld [vmem:[%s3 + $0x80] sm:$0xff]
        %v5590 = vld [vmem:[%s3 + $0x88] sm:$0xff]
        %v5592 = vsel %vm3824, %v5573, 0
        %v5595 = vsel %vm3824, %v5574, 0
        %v5598 = vsel %vm3824, %v5575, 0
        %v5601 = vsel %vm3824, %v5576, 0
        %v5604 = vsel %vm3824, %v5577, 0
        %v5607 = vsel %vm3824, %v5578, 0
        %v5610 = vsel %vm3824, %v5579, 0
        %v5613 = vsel %vm3824, %v5580, 0
        %v5616 = vsel %vm3824, %v5581, 0
        %v5619 = vsel %vm3824, %v5582, 0
        %v5622 = vsel %vm3824, %v5583, 0
        %v5625 = vsel %vm3824, %v5584, 0
        %v5628 = vsel %vm3824, %v5585, 0
        %v5631 = vsel %vm3824, %v5586, 0
        %v5634 = vsel %vm3824, %v5587, 0
        %v5637 = vsel %vm3824, %v5588, 0
        %v5640 = vsel %vm3824, %v5589, 0
        %v5643 = vsel %vm3824, %v5590, 0
        %5645 = vmatprep.subr.mxu0 0.0
        %5646 = vmatpush1.msra.mxu0 %v5567
        %5647 = vmatprep.subr.mxu0 0.0
        %5648 = vmatpush1.msra.mxu0 %v5568
        %5649 = vmatprep.subr.mxu0 0.0
        %5650 = vmatpush1.msra.mxu0 0.0
        %5651 = vmatprep.subr.mxu0 0.0
        %5652 = vmatpush1.msra.mxu0 0.0
        %5653 = vmatprep.subr.mxu0 0.0
        %5654 = vmatpush1.msra.mxu0 0.0
        %5655 = vmatprep.subr.mxu0 0.0
        %5656 = vmatpush1.msra.mxu0 0.0
        %5657 = vmatprep.subr.mxu0 0.0
        %5658 = vmatpush1.msra.mxu0 0.0
        %5659 = vmatprep.subr.mxu0 0.0
        %5660 = vmatpush1.msra.mxu0 0.0
        %5661 = vmatprep.subr.mxu0 0.0
        %5662 = vmatpush1.msra.mxu0 0.0
        %5663 = vmatprep.subr.mxu0 0.0
        %5664 = vmatpush1.msra.mxu0 0.0
        %5665 = vmatprep.subr.mxu0 0.0
        %5666 = vmatpush1.msra.mxu0 0.0
        %5667 = vmatprep.subr.mxu0 0.0
        %5668 = vmatpush1.msra.mxu0 0.0
        %5669 = vmatprep.subr.mxu0 0.0
        %5670 = vmatpush1.msra.mxu0 0.0
        %5671 = vmatprep.subr.mxu0 0.0
        %5672 = vmatpush1.msra.mxu0 0.0
        %5673 = vmatprep.subr.mxu0 0.0
        %5674 = vmatpush1.msra.mxu0 0.0
        %5675 = vmatprep.subr.mxu0 0.0
        %5676 = vmatpush1.msra.mxu0 0.0
        %5677 = vmatprep.subr.mxu0 0.0
        %5678 = vmatpush1.msra.mxu0 0.0
        %5679 = vmatprep.subr.mxu0 0.0
        %5680 = vmatpush1.msra.mxu0 0.0
        %5681 = vmatprep.subr.mxu0 0.0
        %5682 = vmatpush1.msra.mxu0 0.0
        %5683 = vmatprep.subr.mxu0 0.0
        %5684 = vmatpush1.msra.mxu0 0.0
        %5685 = vmatprep.subr.mxu0 0.0
        %5686 = vmatpush1.msra.mxu0 0.0
        %5687 = vmatprep.subr.mxu0 0.0
        %5688 = vmatpush1.msra.mxu0 0.0
        %5689 = vmatprep.subr.mxu0 0.0
        %5690 = vmatpush1.msra.mxu0 0.0
        %5691 = vmatprep.subr.mxu0 0.0
        %5692 = vmatpush1.msra.mxu0 0.0
        %5693 = vmatprep.subr.mxu0 0.0
        %5694 = vmatpush1.msra.mxu0 0.0
        %5695 = vmatprep.subr.mxu0 0.0
        %5696 = vmatpush1.msra.mxu0 0.0
        %5697 = vmatprep.subr.mxu0 0.0
        %5698 = vmatpush1.msra.mxu0 0.0
        %5699 = vmatprep.subr.mxu0 0.0
        %5700 = vmatpush1.msra.mxu0 0.0
        %5701 = vmatprep.subr.mxu0 0.0
        %5702 = vmatpush1.msra.mxu0 0.0
        %5703 = vmatprep.subr.mxu0 0.0
        %5704 = vmatpush1.msra.mxu0 0.0
        %5705 = vmatprep.subr.mxu0 0.0
        %5706 = vmatpush1.msra.mxu0 0.0
        %5707 = vmatprep.subr.mxu0 0.0
        %5708 = vmatpush1.msra.mxu0 0.0
        %5709 = vmatprep.mubr.f32.mxu0 0.0
        %5710 = vmatmul.mubr.f32.gmra.mrb[0].mxu0 %v5592
        %v5711 = vpop.f32.mrb[0].mxu0
        %v5712 = vadd.f32 0.0, %v5711
        %v5713 = vpop.f32.mrb[0].mxu0
        %5714 = vmatprep.mubr.f32.mxu0 0.0
        %5715 = vmatmul.mubr.f32.gmra.mrb[0].mxu0 %v5595
        %v5716 = vpop.f32.mrb[0].mxu0
        %v5717 = vadd.f32 0.0, %v5716
        %v5718 = vpop.f32.mrb[0].mxu0
        %5719 = vmatprep.mubr.f32.mxu0 0.0
        %5720 = vmatmul.mubr.f32.gmra.mrb[0].mxu0 %v5598
        %v5721 = vpop.f32.mrb[0].mxu0
        %v5722 = vadd.f32 0.0, %v5721
        %v5723 = vpop.f32.mrb[0].mxu0
        %5724 = vmatprep.mubr.f32.mxu0 0.0
        %5725 = vmatmul.mubr.f32.gmra.mrb[0].mxu0 %v5601
        %v5726 = vpop.f32.mrb[0].mxu0
        %v5727 = vadd.f32 0.0, %v5726
        %v5728 = vpop.f32.mrb[0].mxu0
        %5729 = vmatprep.mubr.f32.mxu0 0.0
        %5730 = vmatmul.mubr.f32.gmra.mrb[0].mxu0 %v5604
        %v5731 = vpop.f32.mrb[0].mxu0
        %v5732 = vadd.f32 0.0, %v5731
        %v5733 = vpop.f32.mrb[0].mxu0
        %5734 = vmatprep.mubr.f32.mxu0 0.0
        %5735 = vmatmul.mubr.f32.gmra.mrb[0].mxu0 %v5607
        %v5736 = vpop.f32.mrb[0].mxu0
        %v5737 = vadd.f32 0.0, %v5736
        %v5738 = vpop.f32.mrb[0].mxu0
        %5739 = vmatprep.mubr.f32.mxu0 0.0
        %5740 = vmatmul.mubr.f32.gmra.mrb[0].mxu0 %v5610
        %v5741 = vpop.f32.mrb[0].mxu0
        %v5742 = vadd.f32 0.0, %v5741
        %v5743 = vpop.f32.mrb[0].mxu0
        %5744 = vmatprep.mubr.f32.mxu0 0.0
        %5745 = vmatmul.mubr.f32.gmra.mrb[0].mxu0 %v5613
        %v5746 = vpop.f32.mrb[0].mxu0
        %v5747 = vadd.f32 0.0, %v5746
        %v5748 = vpop.f32.mrb[0].mxu0
        %5749 = vmatprep.mubr.f32.mxu0 0.0
        %5750 = vmatmul.mubr.f32.gmra.mrb[0].mxu0 %v5616
        %v5751 = vpop.f32.mrb[0].mxu0
        %v5752 = vadd.f32 0.0, %v5751
        %v5753 = vpop.f32.mrb[0].mxu0
        %5754 = vmatprep.mubr.f32.mxu0 0.0
        %5755 = vmatmul.mubr.f32.gmra.mrb[0].mxu0 %v5619
        %v5756 = vpop.f32.mrb[0].mxu0
        %v5757 = vadd.f32 0.0, %v5756
        %v5758 = vpop.f32.mrb[0].mxu0
        %5759 = vmatprep.mubr.f32.mxu0 0.0
        %5760 = vmatmul.mubr.f32.gmra.mrb[0].mxu0 %v5622
        %v5761 = vpop.f32.mrb[0].mxu0
        %v5762 = vadd.f32 0.0, %v5761
        %v5763 = vpop.f32.mrb[0].mxu0
        %5764 = vmatprep.mubr.f32.mxu0 0.0
        %5765 = vmatmul.mubr.f32.gmra.mrb[0].mxu0 %v5625
        %v5766 = vpop.f32.mrb[0].mxu0
        %v5767 = vadd.f32 0.0, %v5766
        %v5768 = vpop.f32.mrb[0].mxu0
        %5769 = vmatprep.mubr.f32.mxu0 0.0
        %5770 = vmatmul.mubr.f32.gmra.mrb[0].mxu0 %v5628
        %v5771 = vpop.f32.mrb[0].mxu0
        %v5772 = vadd.f32 0.0, %v5771
        %v5773 = vpop.f32.mrb[0].mxu0
        %5774 = vmatprep.mubr.f32.mxu0 0.0
        %5775 = vmatmul.mubr.f32.gmra.mrb[0].mxu0 %v5631
        %v5776 = vpop.f32.mrb[0].mxu0
        %v5777 = vadd.f32 0.0, %v5776
        %v5778 = vpop.f32.mrb[0].mxu0
        %5779 = vmatprep.mubr.f32.mxu0 0.0
        %5780 = vmatmul.mubr.f32.gmra.mrb[0].mxu0 %v5634
        %v5781 = vpop.f32.mrb[0].mxu0
        %v5782 = vadd.f32 0.0, %v5781
        %v5783 = vpop.f32.mrb[0].mxu0
        %5784 = vmatprep.mubr.f32.mxu0 0.0
        %5785 = vmatmul.mubr.f32.gmra.mrb[0].mxu0 %v5637
        %v5786 = vpop.f32.mrb[0].mxu0
        %v5787 = vadd.f32 0.0, %v5786
        %v5788 = vpop.f32.mrb[0].mxu0
        %5789 = vmatprep.mubr.f32.mxu0 0.0
        %5790 = vmatmul.mubr.f32.gmra.mrb[0].mxu0 %v5640
        %v5791 = vpop.f32.mrb[0].mxu0
        %v5792 = vadd.f32 0.0, %v5791
        %v5793 = vpop.f32.mrb[0].mxu0
        %5794 = vmatprep.mubr.f32.mxu0 0.0
        %5795 = vmatmul.mubr.f32.gmra.mrb[0].mxu0 %v5643
        %v5796 = vpop.f32.mrb[0].mxu0
        %v5797 = vadd.f32 0.0, %v5796
        %v5798 = vpop.f32.mrb[0].mxu0
        %5799 = vdwg.mxu0
        %v5800 = vld [vmem:[%s8] sm:$0xff]
        %v5801 = vld [vmem:[%s8 + $0x8] sm:$0xff]
        %v5802 = vld [vmem:[%s8 + $0x10] sm:$0xff]
        %v5803 = vld [vmem:[%s8 + $0x18] sm:$0xff]
        %s5804 = scalar_lea.vmem %s8, 32
        %v5805 = vld [vmem:[%s5804] sm:$0xff]
        %v5806 = vld [vmem:[%s5804 + $0x8] sm:$0xff]
        %v5807 = vld [vmem:[%s5804 + $0x10] sm:$0xff]
        %v5808 = vld [vmem:[%s5804 + $0x18] sm:$0xff]
        %v5810 = vsel %vm5569, %v5722, 0
        %v5813 = vsel %vm5569, %v5727, 0
        %5815 = vmatprep.subr.mxu0 0.0
        %5816 = vmatpush1.msra.mxu0 %v5805
        %5817 = vmatprep.subr.mxu0 0.0
        %5818 = vmatpush1.msra.mxu0 %v5806
        %5819 = vmatprep.subr.mxu0 0.0
        %5820 = vmatpush1.msra.mxu0 %v5807
        %5821 = vmatprep.subr.mxu0 0.0
        %5822 = vmatpush1.msra.mxu0 %v5808
        %5823 = vmatprep.subr.mxu0 0.0
        %5824 = vmatpush1.msra.mxu0 0.0
        %5825 = vmatprep.subr.mxu0 0.0
        %5826 = vmatpush1.msra.mxu0 0.0
        %5827 = vmatprep.subr.mxu0 0.0
        %5828 = vmatpush1.msra.mxu0 0.0
        %5829 = vmatprep.subr.mxu0 0.0
        %5830 = vmatpush1.msra.mxu0 0.0
        %5831 = vmatprep.subr.mxu0 0.0
        %5832 = vmatpush1.msra.mxu0 0.0
        %5833 = vmatprep.subr.mxu0 0.0
        %5834 = vmatpush1.msra.mxu0 0.0
        %5835 = vmatprep.subr.mxu0 0.0
        %5836 = vmatpush1.msra.mxu0 0.0
        %5837 = vmatprep.subr.mxu0 0.0
        %5838 = vmatpush1.msra.mxu0 0.0
        %5839 = vmatprep.subr.mxu0 0.0
        %5840 = vmatpush1.msra.mxu0 0.0
        %5841 = vmatprep.subr.mxu0 0.0
        %5842 = vmatpush1.msra.mxu0 0.0
        %5843 = vmatprep.subr.mxu0 0.0
        %5844 = vmatpush1.msra.mxu0 0.0
        %5845 = vmatprep.subr.mxu0 0.0
        %5846 = vmatpush1.msra.mxu0 0.0
        %5847 = vmatprep.subr.mxu0 0.0
        %5848 = vmatpush1.msra.mxu0 0.0
        %5849 = vmatprep.subr.mxu0 0.0
        %5850 = vmatpush1.msra.mxu0 0.0
        %5851 = vmatprep.subr.mxu0 0.0
        %5852 = vmatpush1.msra.mxu0 0.0
        %5853 = vmatprep.subr.mxu0 0.0
        %5854 = vmatpush1.msra.mxu0 0.0
        %5855 = vmatprep.subr.mxu0 0.0
        %5856 = vmatpush1.msra.mxu0 0.0
        %5857 = vmatprep.subr.mxu0 0.0
        %5858 = vmatpush1.msra.mxu0 0.0
        %5859 = vmatprep.subr.mxu0 0.0
        %5860 = vmatpush1.msra.mxu0 0.0
        %5861 = vmatprep.subr.mxu0 0.0
        %5862 = vmatpush1.msra.mxu0 0.0
        %5863 = vmatprep.subr.mxu0 0.0
        %5864 = vmatpush1.msra.mxu0 0.0
        %5865 = vmatprep.subr.mxu0 0.0
        %5866 = vmatpush1.msra.mxu0 0.0
        %5867 = vmatprep.subr.mxu0 0.0
        %5868 = vmatpush1.msra.mxu0 0.0
        %5869 = vmatprep.subr.mxu0 0.0
        %5870 = vmatpush1.msra.mxu0 0.0
        %5871 = vmatprep.subr.mxu0 0.0
        %5872 = vmatpush1.msra.mxu0 0.0
        %5873 = vmatprep.subr.mxu0 0.0
        %5874 = vmatpush1.msra.mxu0 0.0
        %5875 = vmatprep.subr.mxu0 0.0
        %5876 = vmatpush1.msra.mxu0 0.0
        %5877 = vmatprep.subr.mxu0 0.0
        %5878 = vmatpush1.msra.mxu0 0.0
        %5879 = vmatprep.mubr.f32.mxu0 0.0
        %5880 = vmatmul.mubr.f32.gmra.mrb[0].mxu0 %v5810
        %v5881 = vpop.f32.mrb[0].mxu0
        %v5882 = vadd.f32 0.0, %v5881
        %v5883 = vpop.f32.mrb[0].mxu0
        %5884 = vmatprep.mubr.f32.mxu0 0.0
        %5885 = vmatmul.mubr.f32.gmra.mrb[0].mxu0 %v5813
        %v5886 = vpop.f32.mrb[0].mxu0
        %v5887 = vadd.f32 0.0, %v5886
        %v5888 = vpop.f32.mrb[0].mxu0
        %5889 = vdwg.mxu0
        %v5891 = vsel %vm5569, %v5712, 0
        %v5894 = vsel %vm5569, %v5717, 0
        %5896 = vmatprep.subr.mxu0 0.0
        %5897 = vmatpush1.msra.mxu0 %v5800
        %5898 = vmatprep.subr.mxu0 0.0
        %5899 = vmatpush1.msra.mxu0 %v5801
        %5900 = vmatprep.subr.mxu0 0.0
        %5901 = vmatpush1.msra.mxu0 %v5802
        %5902 = vmatprep.subr.mxu0 0.0
        %5903 = vmatpush1.msra.mxu0 %v5803
        %5904 = vmatprep.subr.mxu0 0.0
        %5905 = vmatpush1.msra.mxu0 0.0
        %5906 = vmatprep.subr.mxu0 0.0
        %5907 = vmatpush1.msra.mxu0 0.0
        %5908 = vmatprep.subr.mxu0 0.0
        %5909 = vmatpush1.msra.mxu0 0.0
        %5910 = vmatprep.subr.mxu0 0.0
        %5911 = vmatpush1.msra.mxu0 0.0
        %5912 = vmatprep.subr.mxu0 0.0
        %5913 = vmatpush1.msra.mxu0 0.0
        %5914 = vmatprep.subr.mxu0 0.0
        %5915 = vmatpush1.msra.mxu0 0.0
        %5916 = vmatprep.subr.mxu0 0.0
        %5917 = vmatpush1.msra.mxu0 0.0
        %5918 = vmatprep.subr.mxu0 0.0
        %5919 = vmatpush1.msra.mxu0 0.0
        %5920 = vmatprep.subr.mxu0 0.0
        %5921 = vmatpush1.msra.mxu0 0.0
        %5922 = vmatprep.subr.mxu0 0.0
        %5923 = vmatpush1.msra.mxu0 0.0
        %5924 = vmatprep.subr.mxu0 0.0
        %5925 = vmatpush1.msra.mxu0 0.0
        %5926 = vmatprep.subr.mxu0 0.0
        %5927 = vmatpush1.msra.mxu0 0.0
        %5928 = vmatprep.subr.mxu0 0.0
        %5929 = vmatpush1.msra.mxu0 0.0
        %5930 = vmatprep.subr.mxu0 0.0
        %5931 = vmatpush1.msra.mxu0 0.0
        %5932 = vmatprep.subr.mxu0 0.0
        %5933 = vmatpush1.msra.mxu0 0.0
        %5934 = vmatprep.subr.mxu0 0.0
        %5935 = vmatpush1.msra.mxu0 0.0
        %5936 = vmatprep.subr.mxu0 0.0
        %5937 = vmatpush1.msra.mxu0 0.0
        %5938 = vmatprep.subr.mxu0 0.0
        %5939 = vmatpush1.msra.mxu0 0.0
        %5940 = vmatprep.subr.mxu0 0.0
        %5941 = vmatpush1.msra.mxu0 0.0
        %5942 = vmatprep.subr.mxu0 0.0
        %5943 = vmatpush1.msra.mxu0 0.0
        %5944 = vmatprep.subr.mxu0 0.0
        %5945 = vmatpush1.msra.mxu0 0.0
        %5946 = vmatprep.subr.mxu0 0.0
        %5947 = vmatpush1.msra.mxu0 0.0
        %5948 = vmatprep.subr.mxu0 0.0
        %5949 = vmatpush1.msra.mxu0 0.0
        %5950 = vmatprep.subr.mxu0 0.0
        %5951 = vmatpush1.msra.mxu0 0.0
        %5952 = vmatprep.subr.mxu0 0.0
        %5953 = vmatpush1.msra.mxu0 0.0
        %5954 = vmatprep.subr.mxu0 0.0
        %5955 = vmatpush1.msra.mxu0 0.0
        %5956 = vmatprep.subr.mxu0 0.0
        %5957 = vmatpush1.msra.mxu0 0.0
        %5958 = vmatprep.subr.mxu0 0.0
        %5959 = vmatpush1.msra.mxu0 0.0
        %5960 = vmatprep.mubr.f32.mxu0 0.0
        %5961 = vmatmul.mubr.f32.gmra.mrb[0].mxu0 %v5891
        %v5962 = vpop.f32.mrb[0].mxu0
        %v5963 = vadd.f32 %v5882, %v5962
        %v5964 = vpop.f32.mrb[0].mxu0
        %5965 = vmatprep.mubr.f32.mxu0 0.0
        %5966 = vmatmul.mubr.f32.gmra.mrb[0].mxu0 %v5894
        %v5967 = vpop.f32.mrb[0].mxu0
        %v5968 = vadd.f32 %v5887, %v5967
        %v5969 = vpop.f32.mrb[0].mxu0
        %5970 = vdwg.mxu0
        %s5971 = scalar_lea.vmem %s8, 64
        %v5972 = vld [vmem:[%s5971] sm:$0xff]
        %v5973 = vld [vmem:[%s5971 + $0x8] sm:$0xff]
        %v5974 = vld [vmem:[%s5971 + $0x10] sm:$0xff]
        %v5975 = vld [vmem:[%s5971 + $0x18] sm:$0xff]
        %v5977 = vsel %vm5569, %v5732, 0
        %v5980 = vsel %vm5569, %v5737, 0
        %5982 = vmatprep.subr.mxu0 0.0
        %5983 = vmatpush1.msra.mxu0 %v5972
        %5984 = vmatprep.subr.mxu0 0.0
        %5985 = vmatpush1.msra.mxu0 %v5973
        %5986 = vmatprep.subr.mxu0 0.0
        %5987 = vmatpush1.msra.mxu0 %v5974
        %5988 = vmatprep.subr.mxu0 0.0
        %5989 = vmatpush1.msra.mxu0 %v5975
        %5990 = vmatprep.subr.mxu0 0.0
        %5991 = vmatpush1.msra.mxu0 0.0
        %5992 = vmatprep.subr.mxu0 0.0
        %5993 = vmatpush1.msra.mxu0 0.0
        %5994 = vmatprep.subr.mxu0 0.0
        %5995 = vmatpush1.msra.mxu0 0.0
        %5996 = vmatprep.subr.mxu0 0.0
        %5997 = vmatpush1.msra.mxu0 0.0
        %5998 = vmatprep.subr.mxu0 0.0
        %5999 = vmatpush1.msra.mxu0 0.0
        %6000 = vmatprep.subr.mxu0 0.0
        %6001 = vmatpush1.msra.mxu0 0.0
        %6002 = vmatprep.subr.mxu0 0.0
        %6003 = vmatpush1.msra.mxu0 0.0
        %6004 = vmatprep.subr.mxu0 0.0
        %6005 = vmatpush1.msra.mxu0 0.0
        %6006 = vmatprep.subr.mxu0 0.0
        %6007 = vmatpush1.msra.mxu0 0.0
        %6008 = vmatprep.subr.mxu0 0.0
        %6009 = vmatpush1.msra.mxu0 0.0
        %6010 = vmatprep.subr.mxu0 0.0
        %6011 = vmatpush1.msra.mxu0 0.0
        %6012 = vmatprep.subr.mxu0 0.0
        %6013 = vmatpush1.msra.mxu0 0.0
        %6014 = vmatprep.subr.mxu0 0.0
        %6015 = vmatpush1.msra.mxu0 0.0
        %6016 = vmatprep.subr.mxu0 0.0
        %6017 = vmatpush1.msra.mxu0 0.0
        %6018 = vmatprep.subr.mxu0 0.0
        %6019 = vmatpush1.msra.mxu0 0.0
        %6020 = vmatprep.subr.mxu0 0.0
        %6021 = vmatpush1.msra.mxu0 0.0
        %6022 = vmatprep.subr.mxu0 0.0
        %6023 = vmatpush1.msra.mxu0 0.0
        %6024 = vmatprep.subr.mxu0 0.0
        %6025 = vmatpush1.msra.mxu0 0.0
        %6026 = vmatprep.subr.mxu0 0.0
        %6027 = vmatpush1.msra.mxu0 0.0
        %6028 = vmatprep.subr.mxu0 0.0
        %6029 = vmatpush1.msra.mxu0 0.0
        %6030 = vmatprep.subr.mxu0 0.0
        %6031 = vmatpush1.msra.mxu0 0.0
        %6032 = vmatprep.subr.mxu0 0.0
        %6033 = vmatpush1.msra.mxu0 0.0
        %6034 = vmatprep.subr.mxu0 0.0
        %6035 = vmatpush1.msra.mxu0 0.0
        %6036 = vmatprep.subr.mxu0 0.0
        %6037 = vmatpush1.msra.mxu0 0.0
        %6038 = vmatprep.subr.mxu0 0.0
        %6039 = vmatpush1.msra.mxu0 0.0
        %6040 = vmatprep.subr.mxu0 0.0
        %6041 = vmatpush1.msra.mxu0 0.0
        %6042 = vmatprep.subr.mxu0 0.0
        %6043 = vmatpush1.msra.mxu0 0.0
        %6044 = vmatprep.subr.mxu0 0.0
        %6045 = vmatpush1.msra.mxu0 0.0
        %6046 = vmatprep.mubr.f32.mxu0 0.0
        %6047 = vmatmul.mubr.f32.gmra.mrb[0].mxu0 %v5977
        %v6048 = vpop.f32.mrb[0].mxu0
        %v6049 = vadd.f32 0.0, %v6048
        %v6050 = vpop.f32.mrb[0].mxu0
        %6051 = vmatprep.mubr.f32.mxu0 0.0
        %6052 = vmatmul.mubr.f32.gmra.mrb[0].mxu0 %v5980
        %v6053 = vpop.f32.mrb[0].mxu0
        %v6054 = vadd.f32 0.0, %v6053
        %v6055 = vpop.f32.mrb[0].mxu0
        %6056 = vdwg.mxu0
        %v6057 = vadd.f32 %v5963, %v6049
        %v6058 = vadd.f32 %v5968, %v6054
        %s6059 = scalar_lea.vmem %s8, 96
        %v6060 = vld [vmem:[%s6059] sm:$0xff]
        %v6061 = vld [vmem:[%s6059 + $0x8] sm:$0xff]
        %v6062 = vld [vmem:[%s6059 + $0x10] sm:$0xff]
        %v6063 = vld [vmem:[%s6059 + $0x18] sm:$0xff]
        %v6065 = vsel %vm5569, %v5742, 0
        %v6068 = vsel %vm5569, %v5747, 0
        %6070 = vmatprep.subr.mxu0 0.0
        %6071 = vmatpush1.msra.mxu0 %v6060
        %6072 = vmatprep.subr.mxu0 0.0
        %6073 = vmatpush1.msra.mxu0 %v6061
        %6074 = vmatprep.subr.mxu0 0.0
        %6075 = vmatpush1.msra.mxu0 %v6062
        %6076 = vmatprep.subr.mxu0 0.0
        %6077 = vmatpush1.msra.mxu0 %v6063
        %6078 = vmatprep.subr.mxu0 0.0
        %6079 = vmatpush1.msra.mxu0 0.0
        %6080 = vmatprep.subr.mxu0 0.0
        %6081 = vmatpush1.msra.mxu0 0.0
        %6082 = vmatprep.subr.mxu0 0.0
        %6083 = vmatpush1.msra.mxu0 0.0
        %6084 = vmatprep.subr.mxu0 0.0
        %6085 = vmatpush1.msra.mxu0 0.0
        %6086 = vmatprep.subr.mxu0 0.0
        %6087 = vmatpush1.msra.mxu0 0.0
        %6088 = vmatprep.subr.mxu0 0.0
        %6089 = vmatpush1.msra.mxu0 0.0
        %6090 = vmatprep.subr.mxu0 0.0
        %6091 = vmatpush1.msra.mxu0 0.0
        %6092 = vmatprep.subr.mxu0 0.0
        %6093 = vmatpush1.msra.mxu0 0.0
        %6094 = vmatprep.subr.mxu0 0.0
        %6095 = vmatpush1.msra.mxu0 0.0
        %6096 = vmatprep.subr.mxu0 0.0
        %6097 = vmatpush1.msra.mxu0 0.0
        %6098 = vmatprep.subr.mxu0 0.0
        %6099 = vmatpush1.msra.mxu0 0.0
        %6100 = vmatprep.subr.mxu0 0.0
        %6101 = vmatpush1.msra.mxu0 0.0
        %6102 = vmatprep.subr.mxu0 0.0
        %6103 = vmatpush1.msra.mxu0 0.0
        %6104 = vmatprep.subr.mxu0 0.0
        %6105 = vmatpush1.msra.mxu0 0.0
        %6106 = vmatprep.subr.mxu0 0.0
        %6107 = vmatpush1.msra.mxu0 0.0
        %6108 = vmatprep.subr.mxu0 0.0
        %6109 = vmatpush1.msra.mxu0 0.0
        %6110 = vmatprep.subr.mxu0 0.0
        %6111 = vmatpush1.msra.mxu0 0.0
        %6112 = vmatprep.subr.mxu0 0.0
        %6113 = vmatpush1.msra.mxu0 0.0
        %6114 = vmatprep.subr.mxu0 0.0
        %6115 = vmatpush1.msra.mxu0 0.0
        %6116 = vmatprep.subr.mxu0 0.0
        %6117 = vmatpush1.msra.mxu0 0.0
        %6118 = vmatprep.subr.mxu0 0.0
        %6119 = vmatpush1.msra.mxu0 0.0
        %6120 = vmatprep.subr.mxu0 0.0
        %6121 = vmatpush1.msra.mxu0 0.0
        %6122 = vmatprep.subr.mxu0 0.0
        %6123 = vmatpush1.msra.mxu0 0.0
        %6124 = vmatprep.subr.mxu0 0.0
        %6125 = vmatpush1.msra.mxu0 0.0
        %6126 = vmatprep.subr.mxu0 0.0
        %6127 = vmatpush1.msra.mxu0 0.0
        %6128 = vmatprep.subr.mxu0 0.0
        %6129 = vmatpush1.msra.mxu0 0.0
        %6130 = vmatprep.subr.mxu0 0.0
        %6131 = vmatpush1.msra.mxu0 0.0
        %6132 = vmatprep.subr.mxu0 0.0
        %6133 = vmatpush1.msra.mxu0 0.0
        %6134 = vmatprep.mubr.f32.mxu0 0.0
        %6135 = vmatmul.mubr.f32.gmra.mrb[0].mxu0 %v6065
        %v6136 = vpop.f32.mrb[0].mxu0
        %v6137 = vadd.f32 0.0, %v6136
        %v6138 = vpop.f32.mrb[0].mxu0
        %6139 = vmatprep.mubr.f32.mxu0 0.0
        %6140 = vmatmul.mubr.f32.gmra.mrb[0].mxu0 %v6068
        %v6141 = vpop.f32.mrb[0].mxu0
        %v6142 = vadd.f32 0.0, %v6141
        %v6143 = vpop.f32.mrb[0].mxu0
        %6144 = vdwg.mxu0
        %v6145 = vadd.f32 %v6057, %v6137
        %v6146 = vadd.f32 %v6058, %v6142
        %s6147 = scalar_lea.vmem %s8, 128
        %v6148 = vld [vmem:[%s6147] sm:$0xff]
        %v6149 = vld [vmem:[%s6147 + $0x8] sm:$0xff]
        %v6150 = vld [vmem:[%s6147 + $0x10] sm:$0xff]
        %v6151 = vld [vmem:[%s6147 + $0x18] sm:$0xff]
        %v6153 = vsel %vm5569, %v5752, 0
        %v6156 = vsel %vm5569, %v5757, 0
        %6158 = vmatprep.subr.mxu0 0.0
        %6159 = vmatpush1.msra.mxu0 %v6148
        %6160 = vmatprep.subr.mxu0 0.0
        %6161 = vmatpush1.msra.mxu0 %v6149
        %6162 = vmatprep.subr.mxu0 0.0
        %6163 = vmatpush1.msra.mxu0 %v6150
        %6164 = vmatprep.subr.mxu0 0.0
        %6165 = vmatpush1.msra.mxu0 %v6151
        %6166 = vmatprep.subr.mxu0 0.0
        %6167 = vmatpush1.msra.mxu0 0.0
        %6168 = vmatprep.subr.mxu0 0.0
        %6169 = vmatpush1.msra.mxu0 0.0
        %6170 = vmatprep.subr.mxu0 0.0
        %6171 = vmatpush1.msra.mxu0 0.0
        %6172 = vmatprep.subr.mxu0 0.0
        %6173 = vmatpush1.msra.mxu0 0.0
        %6174 = vmatprep.subr.mxu0 0.0
        %6175 = vmatpush1.msra.mxu0 0.0
        %6176 = vmatprep.subr.mxu0 0.0
        %6177 = vmatpush1.msra.mxu0 0.0
        %6178 = vmatprep.subr.mxu0 0.0
        %6179 = vmatpush1.msra.mxu0 0.0
        %6180 = vmatprep.subr.mxu0 0.0
        %6181 = vmatpush1.msra.mxu0 0.0
        %6182 = vmatprep.subr.mxu0 0.0
        %6183 = vmatpush1.msra.mxu0 0.0
        %6184 = vmatprep.subr.mxu0 0.0
        %6185 = vmatpush1.msra.mxu0 0.0
        %6186 = vmatprep.subr.mxu0 0.0
        %6187 = vmatpush1.msra.mxu0 0.0
        %6188 = vmatprep.subr.mxu0 0.0
        %6189 = vmatpush1.msra.mxu0 0.0
        %6190 = vmatprep.subr.mxu0 0.0
        %6191 = vmatpush1.msra.mxu0 0.0
        %6192 = vmatprep.subr.mxu0 0.0
        %6193 = vmatpush1.msra.mxu0 0.0
        %6194 = vmatprep.subr.mxu0 0.0
        %6195 = vmatpush1.msra.mxu0 0.0
        %6196 = vmatprep.subr.mxu0 0.0
        %6197 = vmatpush1.msra.mxu0 0.0
        %6198 = vmatprep.subr.mxu0 0.0
        %6199 = vmatpush1.msra.mxu0 0.0
        %6200 = vmatprep.subr.mxu0 0.0
        %6201 = vmatpush1.msra.mxu0 0.0
        %6202 = vmatprep.subr.mxu0 0.0
        %6203 = vmatpush1.msra.mxu0 0.0
        %6204 = vmatprep.subr.mxu0 0.0
        %6205 = vmatpush1.msra.mxu0 0.0
        %6206 = vmatprep.subr.mxu0 0.0
        %6207 = vmatpush1.msra.mxu0 0.0
        %6208 = vmatprep.subr.mxu0 0.0
        %6209 = vmatpush1.msra.mxu0 0.0
        %6210 = vmatprep.subr.mxu0 0.0
        %6211 = vmatpush1.msra.mxu0 0.0
        %6212 = vmatprep.subr.mxu0 0.0
        %6213 = vmatpush1.msra.mxu0 0.0
        %6214 = vmatprep.subr.mxu0 0.0
        %6215 = vmatpush1.msra.mxu0 0.0
        %6216 = vmatprep.subr.mxu0 0.0
        %6217 = vmatpush1.msra.mxu0 0.0
        %6218 = vmatprep.subr.mxu0 0.0
        %6219 = vmatpush1.msra.mxu0 0.0
        %6220 = vmatprep.subr.mxu0 0.0
        %6221 = vmatpush1.msra.mxu0 0.0
        %6222 = vmatprep.mubr.f32.mxu0 0.0
        %6223 = vmatmul.mubr.f32.gmra.mrb[0].mxu0 %v6153
        %v6224 = vpop.f32.mrb[0].mxu0
        %v6225 = vadd.f32 0.0, %v6224
        %v6226 = vpop.f32.mrb[0].mxu0
        %6227 = vmatprep.mubr.f32.mxu0 0.0
        %6228 = vmatmul.mubr.f32.gmra.mrb[0].mxu0 %v6156
        %v6229 = vpop.f32.mrb[0].mxu0
        %v6230 = vadd.f32 0.0, %v6229
        %v6231 = vpop.f32.mrb[0].mxu0
        %6232 = vdwg.mxu0
        %v6233 = vadd.f32 %v6145, %v6225
        %v6234 = vadd.f32 %v6146, %v6230
        %s6235 = scalar_lea.vmem %s8, 160
        %v6236 = vld [vmem:[%s6235] sm:$0xff]
        %v6237 = vld [vmem:[%s6235 + $0x8] sm:$0xff]
        %v6238 = vld [vmem:[%s6235 + $0x10] sm:$0xff]
        %v6239 = vld [vmem:[%s6235 + $0x18] sm:$0xff]
        %v6241 = vsel %vm5569, %v5762, 0
        %v6244 = vsel %vm5569, %v5767, 0
        %6246 = vmatprep.subr.mxu0 0.0
        %6247 = vmatpush1.msra.mxu0 %v6236
        %6248 = vmatprep.subr.mxu0 0.0
        %6249 = vmatpush1.msra.mxu0 %v6237
        %6250 = vmatprep.subr.mxu0 0.0
        %6251 = vmatpush1.msra.mxu0 %v6238
        %6252 = vmatprep.subr.mxu0 0.0
        %6253 = vmatpush1.msra.mxu0 %v6239
        %6254 = vmatprep.subr.mxu0 0.0
        %6255 = vmatpush1.msra.mxu0 0.0
        %6256 = vmatprep.subr.mxu0 0.0
        %6257 = vmatpush1.msra.mxu0 0.0
        %6258 = vmatprep.subr.mxu0 0.0
        %6259 = vmatpush1.msra.mxu0 0.0
        %6260 = vmatprep.subr.mxu0 0.0
        %6261 = vmatpush1.msra.mxu0 0.0
        %6262 = vmatprep.subr.mxu0 0.0
        %6263 = vmatpush1.msra.mxu0 0.0
        %6264 = vmatprep.subr.mxu0 0.0
        %6265 = vmatpush1.msra.mxu0 0.0
        %6266 = vmatprep.subr.mxu0 0.0
        %6267 = vmatpush1.msra.mxu0 0.0
        %6268 = vmatprep.subr.mxu0 0.0
        %6269 = vmatpush1.msra.mxu0 0.0
        %6270 = vmatprep.subr.mxu0 0.0
        %6271 = vmatpush1.msra.mxu0 0.0
        %6272 = vmatprep.subr.mxu0 0.0
        %6273 = vmatpush1.msra.mxu0 0.0
        %6274 = vmatprep.subr.mxu0 0.0
        %6275 = vmatpush1.msra.mxu0 0.0
        %6276 = vmatprep.subr.mxu0 0.0
        %6277 = vmatpush1.msra.mxu0 0.0
        %6278 = vmatprep.subr.mxu0 0.0
        %6279 = vmatpush1.msra.mxu0 0.0
        %6280 = vmatprep.subr.mxu0 0.0
        %6281 = vmatpush1.msra.mxu0 0.0
        %6282 = vmatprep.subr.mxu0 0.0
        %6283 = vmatpush1.msra.mxu0 0.0
        %6284 = vmatprep.subr.mxu0 0.0
        %6285 = vmatpush1.msra.mxu0 0.0
        %6286 = vmatprep.subr.mxu0 0.0
        %6287 = vmatpush1.msra.mxu0 0.0
        %6288 = vmatprep.subr.mxu0 0.0
        %6289 = vmatpush1.msra.mxu0 0.0
        %6290 = vmatprep.subr.mxu0 0.0
        %6291 = vmatpush1.msra.mxu0 0.0
        %6292 = vmatprep.subr.mxu0 0.0
        %6293 = vmatpush1.msra.mxu0 0.0
        %6294 = vmatprep.subr.mxu0 0.0
        %6295 = vmatpush1.msra.mxu0 0.0
        %6296 = vmatprep.subr.mxu0 0.0
        %6297 = vmatpush1.msra.mxu0 0.0
        %6298 = vmatprep.subr.mxu0 0.0
        %6299 = vmatpush1.msra.mxu0 0.0
        %6300 = vmatprep.subr.mxu0 0.0
        %6301 = vmatpush1.msra.mxu0 0.0
        %6302 = vmatprep.subr.mxu0 0.0
        %6303 = vmatpush1.msra.mxu0 0.0
        %6304 = vmatprep.subr.mxu0 0.0
        %6305 = vmatpush1.msra.mxu0 0.0
        %6306 = vmatprep.subr.mxu0 0.0
        %6307 = vmatpush1.msra.mxu0 0.0
        %6308 = vmatprep.subr.mxu0 0.0
        %6309 = vmatpush1.msra.mxu0 0.0
        %6310 = vmatprep.mubr.f32.mxu0 0.0
        %6311 = vmatmul.mubr.f32.gmra.mrb[0].mxu0 %v6241
        %v6312 = vpop.f32.mrb[0].mxu0
        %v6313 = vadd.f32 0.0, %v6312
        %v6314 = vpop.f32.mrb[0].mxu0
        %6315 = vmatprep.mubr.f32.mxu0 0.0
        %6316 = vmatmul.mubr.f32.gmra.mrb[0].mxu0 %v6244
        %v6317 = vpop.f32.mrb[0].mxu0
        %v6318 = vadd.f32 0.0, %v6317
        %v6319 = vpop.f32.mrb[0].mxu0
        %6320 = vdwg.mxu0
        %v6321 = vadd.f32 %v6233, %v6313
        %v6322 = vadd.f32 %v6234, %v6318
        %s6323 = scalar_lea.vmem %s8, 192
        %v6324 = vld [vmem:[%s6323] sm:$0xff]
        %v6325 = vld [vmem:[%s6323 + $0x8] sm:$0xff]
        %v6326 = vld [vmem:[%s6323 + $0x10] sm:$0xff]
        %v6327 = vld [vmem:[%s6323 + $0x18] sm:$0xff]
        %v6329 = vsel %vm5569, %v5772, 0
        %v6332 = vsel %vm5569, %v5777, 0
        %6334 = vmatprep.subr.mxu0 0.0
        %6335 = vmatpush1.msra.mxu0 %v6324
        %6336 = vmatprep.subr.mxu0 0.0
        %6337 = vmatpush1.msra.mxu0 %v6325
        %6338 = vmatprep.subr.mxu0 0.0
        %6339 = vmatpush1.msra.mxu0 %v6326
        %6340 = vmatprep.subr.mxu0 0.0
        %6341 = vmatpush1.msra.mxu0 %v6327
        %6342 = vmatprep.subr.mxu0 0.0
        %6343 = vmatpush1.msra.mxu0 0.0
        %6344 = vmatprep.subr.mxu0 0.0
        %6345 = vmatpush1.msra.mxu0 0.0
        %6346 = vmatprep.subr.mxu0 0.0
        %6347 = vmatpush1.msra.mxu0 0.0
        %6348 = vmatprep.subr.mxu0 0.0
        %6349 = vmatpush1.msra.mxu0 0.0
        %6350 = vmatprep.subr.mxu0 0.0
        %6351 = vmatpush1.msra.mxu0 0.0
        %6352 = vmatprep.subr.mxu0 0.0
        %6353 = vmatpush1.msra.mxu0 0.0
        %6354 = vmatprep.subr.mxu0 0.0
        %6355 = vmatpush1.msra.mxu0 0.0
        %6356 = vmatprep.subr.mxu0 0.0
        %6357 = vmatpush1.msra.mxu0 0.0
        %6358 = vmatprep.subr.mxu0 0.0
        %6359 = vmatpush1.msra.mxu0 0.0
        %6360 = vmatprep.subr.mxu0 0.0
        %6361 = vmatpush1.msra.mxu0 0.0
        %6362 = vmatprep.subr.mxu0 0.0
        %6363 = vmatpush1.msra.mxu0 0.0
        %6364 = vmatprep.subr.mxu0 0.0
        %6365 = vmatpush1.msra.mxu0 0.0
        %6366 = vmatprep.subr.mxu0 0.0
        %6367 = vmatpush1.msra.mxu0 0.0
        %6368 = vmatprep.subr.mxu0 0.0
        %6369 = vmatpush1.msra.mxu0 0.0
        %6370 = vmatprep.subr.mxu0 0.0
        %6371 = vmatpush1.msra.mxu0 0.0
        %6372 = vmatprep.subr.mxu0 0.0
        %6373 = vmatpush1.msra.mxu0 0.0
        %6374 = vmatprep.subr.mxu0 0.0
        %6375 = vmatpush1.msra.mxu0 0.0
        %6376 = vmatprep.subr.mxu0 0.0
        %6377 = vmatpush1.msra.mxu0 0.0
        %6378 = vmatprep.subr.mxu0 0.0
        %6379 = vmatpush1.msra.mxu0 0.0
        %6380 = vmatprep.subr.mxu0 0.0
        %6381 = vmatpush1.msra.mxu0 0.0
        %6382 = vmatprep.subr.mxu0 0.0
        %6383 = vmatpush1.msra.mxu0 0.0
        %6384 = vmatprep.subr.mxu0 0.0
        %6385 = vmatpush1.msra.mxu0 0.0
        %6386 = vmatprep.subr.mxu0 0.0
        %6387 = vmatpush1.msra.mxu0 0.0
        %6388 = vmatprep.subr.mxu0 0.0
        %6389 = vmatpush1.msra.mxu0 0.0
        %6390 = vmatprep.subr.mxu0 0.0
        %6391 = vmatpush1.msra.mxu0 0.0
        %6392 = vmatprep.subr.mxu0 0.0
        %6393 = vmatpush1.msra.mxu0 0.0
        %6394 = vmatprep.subr.mxu0 0.0
        %6395 = vmatpush1.msra.mxu0 0.0
        %6396 = vmatprep.subr.mxu0 0.0
        %6397 = vmatpush1.msra.mxu0 0.0
        %6398 = vmatprep.mubr.f32.mxu0 0.0
        %6399 = vmatmul.mubr.f32.gmra.mrb[0].mxu0 %v6329
        %v6400 = vpop.f32.mrb[0].mxu0
        %v6401 = vadd.f32 0.0, %v6400
        %v6402 = vpop.f32.mrb[0].mxu0
        %6403 = vmatprep.mubr.f32.mxu0 0.0
        %6404 = vmatmul.mubr.f32.gmra.mrb[0].mxu0 %v6332
        %v6405 = vpop.f32.mrb[0].mxu0
        %v6406 = vadd.f32 0.0, %v6405
        %v6407 = vpop.f32.mrb[0].mxu0
        %6408 = vdwg.mxu0
        %v6409 = vadd.f32 %v6321, %v6401
        %v6410 = vadd.f32 %v6322, %v6406
        %s6411 = scalar_lea.vmem %s8, 224
        %v6412 = vld [vmem:[%s6411] sm:$0xff]
        %v6413 = vld [vmem:[%s6411 + $0x8] sm:$0xff]
        %v6414 = vld [vmem:[%s6411 + $0x10] sm:$0xff]
        %v6415 = vld [vmem:[%s6411 + $0x18] sm:$0xff]
        %v6417 = vsel %vm5569, %v5782, 0
        %v6420 = vsel %vm5569, %v5787, 0
        %6422 = vmatprep.subr.mxu0 0.0
        %6423 = vmatpush1.msra.mxu0 %v6412
        %6424 = vmatprep.subr.mxu0 0.0
        %6425 = vmatpush1.msra.mxu0 %v6413
        %6426 = vmatprep.subr.mxu0 0.0
        %6427 = vmatpush1.msra.mxu0 %v6414
        %6428 = vmatprep.subr.mxu0 0.0
        %6429 = vmatpush1.msra.mxu0 %v6415
        %6430 = vmatprep.subr.mxu0 0.0
        %6431 = vmatpush1.msra.mxu0 0.0
        %6432 = vmatprep.subr.mxu0 0.0
        %6433 = vmatpush1.msra.mxu0 0.0
        %6434 = vmatprep.subr.mxu0 0.0
        %6435 = vmatpush1.msra.mxu0 0.0
        %6436 = vmatprep.subr.mxu0 0.0
        %6437 = vmatpush1.msra.mxu0 0.0
        %6438 = vmatprep.subr.mxu0 0.0
        %6439 = vmatpush1.msra.mxu0 0.0
        %6440 = vmatprep.subr.mxu0 0.0
        %6441 = vmatpush1.msra.mxu0 0.0
        %6442 = vmatprep.subr.mxu0 0.0
        %6443 = vmatpush1.msra.mxu0 0.0
        %6444 = vmatprep.subr.mxu0 0.0
        %6445 = vmatpush1.msra.mxu0 0.0
        %6446 = vmatprep.subr.mxu0 0.0
        %6447 = vmatpush1.msra.mxu0 0.0
        %6448 = vmatprep.subr.mxu0 0.0
        %6449 = vmatpush1.msra.mxu0 0.0
        %6450 = vmatprep.subr.mxu0 0.0
        %6451 = vmatpush1.msra.mxu0 0.0
        %6452 = vmatprep.subr.mxu0 0.0
        %6453 = vmatpush1.msra.mxu0 0.0
        %6454 = vmatprep.subr.mxu0 0.0
        %6455 = vmatpush1.msra.mxu0 0.0
        %6456 = vmatprep.subr.mxu0 0.0
        %6457 = vmatpush1.msra.mxu0 0.0
        %6458 = vmatprep.subr.mxu0 0.0
        %6459 = vmatpush1.msra.mxu0 0.0
        %6460 = vmatprep.subr.mxu0 0.0
        %6461 = vmatpush1.msra.mxu0 0.0
        %6462 = vmatprep.subr.mxu0 0.0
        %6463 = vmatpush1.msra.mxu0 0.0
        %6464 = vmatprep.subr.mxu0 0.0
        %6465 = vmatpush1.msra.mxu0 0.0
        %6466 = vmatprep.subr.mxu0 0.0
        %6467 = vmatpush1.msra.mxu0 0.0
        %6468 = vmatprep.subr.mxu0 0.0
        %6469 = vmatpush1.msra.mxu0 0.0
        %6470 = vmatprep.subr.mxu0 0.0
        %6471 = vmatpush1.msra.mxu0 0.0
        %6472 = vmatprep.subr.mxu0 0.0
        %6473 = vmatpush1.msra.mxu0 0.0
        %6474 = vmatprep.subr.mxu0 0.0
        %6475 = vmatpush1.msra.mxu0 0.0
        %6476 = vmatprep.subr.mxu0 0.0
        %6477 = vmatpush1.msra.mxu0 0.0
        %6478 = vmatprep.subr.mxu0 0.0
        %6479 = vmatpush1.msra.mxu0 0.0
        %6480 = vmatprep.subr.mxu0 0.0
        %6481 = vmatpush1.msra.mxu0 0.0
        %6482 = vmatprep.subr.mxu0 0.0
        %6483 = vmatpush1.msra.mxu0 0.0
        %6484 = vmatprep.subr.mxu0 0.0
        %6485 = vmatpush1.msra.mxu0 0.0
        %6486 = vmatprep.mubr.f32.mxu0 0.0
        %6487 = vmatmul.mubr.f32.gmra.mrb[0].mxu0 %v6417
        %v6488 = vpop.f32.mrb[0].mxu0
        %v6489 = vadd.f32 0.0, %v6488
        %v6490 = vpop.f32.mrb[0].mxu0
        %6491 = vmatprep.mubr.f32.mxu0 0.0
        %6492 = vmatmul.mubr.f32.gmra.mrb[0].mxu0 %v6420
        %v6493 = vpop.f32.mrb[0].mxu0
        %v6494 = vadd.f32 0.0, %v6493
        %v6495 = vpop.f32.mrb[0].mxu0
        %6496 = vdwg.mxu0
        %v6497 = vadd.f32 %v6409, %v6489
        %v6498 = vadd.f32 %v6410, %v6494
        %s6499 = scalar_lea.vmem %s8, 256
        %v6500 = vld [vmem:[%s6499] sm:$0xff]
        %v6501 = vld [vmem:[%s6499 + $0x8] sm:$0xff]
        %v6502 = vld [vmem:[%s6499 + $0x10] sm:$0xff]
        %v6503 = vld [vmem:[%s6499 + $0x18] sm:$0xff]
        %v6505 = vsel %vm5569, %v5792, 0
        %v6508 = vsel %vm5569, %v5797, 0
        %6510 = vmatprep.subr.mxu0 0.0
        %6511 = vmatpush1.msra.mxu0 %v6500
        %6512 = vmatprep.subr.mxu0 0.0
        %6513 = vmatpush1.msra.mxu0 %v6501
        %6514 = vmatprep.subr.mxu0 0.0
        %6515 = vmatpush1.msra.mxu0 %v6502
        %6516 = vmatprep.subr.mxu0 0.0
        %6517 = vmatpush1.msra.mxu0 %v6503
        %6518 = vmatprep.subr.mxu0 0.0
        %6519 = vmatpush1.msra.mxu0 0.0
        %6520 = vmatprep.subr.mxu0 0.0
        %6521 = vmatpush1.msra.mxu0 0.0
        %6522 = vmatprep.subr.mxu0 0.0
        %6523 = vmatpush1.msra.mxu0 0.0
        %6524 = vmatprep.subr.mxu0 0.0
        %6525 = vmatpush1.msra.mxu0 0.0
        %6526 = vmatprep.subr.mxu0 0.0
        %6527 = vmatpush1.msra.mxu0 0.0
        %6528 = vmatprep.subr.mxu0 0.0
        %6529 = vmatpush1.msra.mxu0 0.0
        %6530 = vmatprep.subr.mxu0 0.0
        %6531 = vmatpush1.msra.mxu0 0.0
        %6532 = vmatprep.subr.mxu0 0.0
        %6533 = vmatpush1.msra.mxu0 0.0
        %6534 = vmatprep.subr.mxu0 0.0
        %6535 = vmatpush1.msra.mxu0 0.0
        %6536 = vmatprep.subr.mxu0 0.0
        %6537 = vmatpush1.msra.mxu0 0.0
        %6538 = vmatprep.subr.mxu0 0.0
        %6539 = vmatpush1.msra.mxu0 0.0
        %6540 = vmatprep.subr.mxu0 0.0
        %6541 = vmatpush1.msra.mxu0 0.0
        %6542 = vmatprep.subr.mxu0 0.0
        %6543 = vmatpush1.msra.mxu0 0.0
        %6544 = vmatprep.subr.mxu0 0.0
        %6545 = vmatpush1.msra.mxu0 0.0
        %6546 = vmatprep.subr.mxu0 0.0
        %6547 = vmatpush1.msra.mxu0 0.0
        %6548 = vmatprep.subr.mxu0 0.0
        %6549 = vmatpush1.msra.mxu0 0.0
        %6550 = vmatprep.subr.mxu0 0.0
        %6551 = vmatpush1.msra.mxu0 0.0
        %6552 = vmatprep.subr.mxu0 0.0
        %6553 = vmatpush1.msra.mxu0 0.0
        %6554 = vmatprep.subr.mxu0 0.0
        %6555 = vmatpush1.msra.mxu0 0.0
        %6556 = vmatprep.subr.mxu0 0.0
        %6557 = vmatpush1.msra.mxu0 0.0
        %6558 = vmatprep.subr.mxu0 0.0
        %6559 = vmatpush1.msra.mxu0 0.0
        %6560 = vmatprep.subr.mxu0 0.0
        %6561 = vmatpush1.msra.mxu0 0.0
        %6562 = vmatprep.subr.mxu0 0.0
        %6563 = vmatpush1.msra.mxu0 0.0
        %6564 = vmatprep.subr.mxu0 0.0
        %6565 = vmatpush1.msra.mxu0 0.0
        %6566 = vmatprep.subr.mxu0 0.0
        %6567 = vmatpush1.msra.mxu0 0.0
        %6568 = vmatprep.subr.mxu0 0.0
        %6569 = vmatpush1.msra.mxu0 0.0
        %6570 = vmatprep.subr.mxu0 0.0
        %6571 = vmatpush1.msra.mxu0 0.0
        %6572 = vmatprep.subr.mxu0 0.0
        %6573 = vmatpush1.msra.mxu0 0.0
        %6574 = vmatprep.mubr.f32.mxu0 0.0
        %6575 = vmatmul.mubr.f32.gmra.mrb[0].mxu0 %v6505
        %v6576 = vpop.f32.mrb[0].mxu0
        %v6577 = vadd.f32 0.0, %v6576
        %v6578 = vpop.f32.mrb[0].mxu0
        %6579 = vmatprep.mubr.f32.mxu0 0.0
        %6580 = vmatmul.mubr.f32.gmra.mrb[0].mxu0 %v6508
        %v6581 = vpop.f32.mrb[0].mxu0
        %v6582 = vadd.f32 0.0, %v6581
        %v6583 = vpop.f32.mrb[0].mxu0
        %6584 = vdwg.mxu0
        %v6585 = vadd.f32 %v6497, %v6577
        %v6586 = vadd.f32 %v6498, %v6582
        %v6588 = vlaneseq
        %v6589 = vshrl.u32 %v6588, 7
        %v6590 = vsub.s32 0, %v6589
        %v6591 = vrot.slane %v5572, %v6590
        %v6593 = vadd.f32 %v6585, %v6591
        %v6594 = vadd.f32 %v6586, %v6591
        %v6595 = vmax.f32 %v6593, 0.0
        %v6596 = vmax.f32 %v6594, 0.0
        %6597 = vst.msk [vmem:[%s538] sm:$0xff] %vm5569, %v6595
        %6598 = vst.msk [vmem:[%s538 + $0x8] sm:$0xff] %vm5569, %v6596
        %v6599 = vmax.f32 %v6595, 0.0
        %v6600 = vmax.f32 %v6596, 0.0
        %v6601 = vld [vmem:[%s3] sm:$0xff]
        %v6602 = vld [vmem:[%s3 + $0x8] sm:$0xff]
        %v6603 = vld [vmem:[%s3 + $0x10] sm:$0xff]
        %v6604 = vld [vmem:[%s3 + $0x18] sm:$0xff]
        %v6605 = vld [vmem:[%s3 + $0x20] sm:$0xff]
        %v6606 = vld [vmem:[%s3 + $0x28] sm:$0xff]
        %v6607 = vld [vmem:[%s3 + $0x30] sm:$0xff]
        %v6608 = vld [vmem:[%s3 + $0x38] sm:$0xff]
        %v6609 = vld [vmem:[%s3 + $0x40] sm:$0xff]
        %v6610 = vld [vmem:[%s3 + $0x48] sm:$0xff]
        %v6611 = vld [vmem:[%s3 + $0x50] sm:$0xff]
        %v6612 = vld [vmem:[%s3 + $0x58] sm:$0xff]
        %v6613 = vld [vmem:[%s3 + $0x60] sm:$0xff]
        %v6614 = vld [vmem:[%s3 + $0x68] sm:$0xff]
        %v6615 = vld [vmem:[%s3 + $0x70] sm:$0xff]
        %v6616 = vld [vmem:[%s3 + $0x78] sm:$0xff]
        %v6617 = vld [vmem:[%s3 + $0x80] sm:$0xff]
        %v6618 = vld [vmem:[%s3 + $0x88] sm:$0xff]
        %v6620 = vsel %vm3824, %v6601, 0
        %v6623 = vsel %vm3824, %v6602, 0
        %v6626 = vsel %vm3824, %v6603, 0
        %v6629 = vsel %vm3824, %v6604, 0
        %v6632 = vsel %vm3824, %v6605, 0
        %v6635 = vsel %vm3824, %v6606, 0
        %v6638 = vsel %vm3824, %v6607, 0
        %v6641 = vsel %vm3824, %v6608, 0
        %v6644 = vsel %vm3824, %v6609, 0
        %v6647 = vsel %vm3824, %v6610, 0
        %v6650 = vsel %vm3824, %v6611, 0
        %v6653 = vsel %vm3824, %v6612, 0
        %v6656 = vsel %vm3824, %v6613, 0
        %v6659 = vsel %vm3824, %v6614, 0
        %v6662 = vsel %vm3824, %v6615, 0
        %v6665 = vsel %vm3824, %v6616, 0
        %v6668 = vsel %vm3824, %v6617, 0
        %v6671 = vsel %vm3824, %v6618, 0
        %6673 = vmatprep.subr.mxu0 0.0
        %6674 = vmatpush1.msra.mxu0 %v6599
        %6675 = vmatprep.subr.mxu0 0.0
        %6676 = vmatpush1.msra.mxu0 %v6600
        %6677 = vmatprep.subr.mxu0 0.0
        %6678 = vmatpush1.msra.mxu0 0.0
        %6679 = vmatprep.subr.mxu0 0.0
        %6680 = vmatpush1.msra.mxu0 0.0
        %6681 = vmatprep.subr.mxu0 0.0
        %6682 = vmatpush1.msra.mxu0 0.0
        %6683 = vmatprep.subr.mxu0 0.0
        %6684 = vmatpush1.msra.mxu0 0.0
        %6685 = vmatprep.subr.mxu0 0.0
        %6686 = vmatpush1.msra.mxu0 0.0
        %6687 = vmatprep.subr.mxu0 0.0
        %6688 = vmatpush1.msra.mxu0 0.0
        %6689 = vmatprep.subr.mxu0 0.0
        %6690 = vmatpush1.msra.mxu0 0.0
        %6691 = vmatprep.subr.mxu0 0.0
        %6692 = vmatpush1.msra.mxu0 0.0
        %6693 = vmatprep.subr.mxu0 0.0
        %6694 = vmatpush1.msra.mxu0 0.0
        %6695 = vmatprep.subr.mxu0 0.0
        %6696 = vmatpush1.msra.mxu0 0.0
        %6697 = vmatprep.subr.mxu0 0.0
        %6698 = vmatpush1.msra.mxu0 0.0
        %6699 = vmatprep.subr.mxu0 0.0
        %6700 = vmatpush1.msra.mxu0 0.0
        %6701 = vmatprep.subr.mxu0 0.0
        %6702 = vmatpush1.msra.mxu0 0.0
        %6703 = vmatprep.subr.mxu0 0.0
        %6704 = vmatpush1.msra.mxu0 0.0
        %6705 = vmatprep.subr.mxu0 0.0
        %6706 = vmatpush1.msra.mxu0 0.0
        %6707 = vmatprep.subr.mxu0 0.0
        %6708 = vmatpush1.msra.mxu0 0.0
        %6709 = vmatprep.subr.mxu0 0.0
        %6710 = vmatpush1.msra.mxu0 0.0
        %6711 = vmatprep.subr.mxu0 0.0
        %6712 = vmatpush1.msra.mxu0 0.0
        %6713 = vmatprep.subr.mxu0 0.0
        %6714 = vmatpush1.msra.mxu0 0.0
        %6715 = vmatprep.subr.mxu0 0.0
        %6716 = vmatpush1.msra.mxu0 0.0
        %6717 = vmatprep.subr.mxu0 0.0
        %6718 = vmatpush1.msra.mxu0 0.0
        %6719 = vmatprep.subr.mxu0 0.0
        %6720 = vmatpush1.msra.mxu0 0.0
        %6721 = vmatprep.subr.mxu0 0.0
        %6722 = vmatpush1.msra.mxu0 0.0
        %6723 = vmatprep.subr.mxu0 0.0
        %6724 = vmatpush1.msra.mxu0 0.0
        %6725 = vmatprep.subr.mxu0 0.0
        %6726 = vmatpush1.msra.mxu0 0.0
        %6727 = vmatprep.subr.mxu0 0.0
        %6728 = vmatpush1.msra.mxu0 0.0
        %6729 = vmatprep.subr.mxu0 0.0
        %6730 = vmatpush1.msra.mxu0 0.0
        %6731 = vmatprep.subr.mxu0 0.0
        %6732 = vmatpush1.msra.mxu0 0.0
        %6733 = vmatprep.subr.mxu0 0.0
        %6734 = vmatpush1.msra.mxu0 0.0
        %6735 = vmatprep.subr.mxu0 0.0
        %6736 = vmatpush1.msra.mxu0 0.0
        %6737 = vmatprep.mubr.f32.mxu0 0.0
        %6738 = vmatmul.mubr.f32.gmra.mrb[0].mxu0 %v6620
        %v6739 = vpop.f32.mrb[0].mxu0
        %v6740 = vadd.f32 0.0, %v6739
        %v6741 = vpop.f32.mrb[0].mxu0
        %6742 = vmatprep.mubr.f32.mxu0 0.0
        %6743 = vmatmul.mubr.f32.gmra.mrb[0].mxu0 %v6623
        %v6744 = vpop.f32.mrb[0].mxu0
        %v6745 = vadd.f32 0.0, %v6744
        %v6746 = vpop.f32.mrb[0].mxu0
        %6747 = vmatprep.mubr.f32.mxu0 0.0
        %6748 = vmatmul.mubr.f32.gmra.mrb[0].mxu0 %v6626
        %v6749 = vpop.f32.mrb[0].mxu0
        %v6750 = vadd.f32 0.0, %v6749
        %v6751 = vpop.f32.mrb[0].mxu0
        %6752 = vmatprep.mubr.f32.mxu0 0.0
        %6753 = vmatmul.mubr.f32.gmra.mrb[0].mxu0 %v6629
        %v6754 = vpop.f32.mrb[0].mxu0
        %v6755 = vadd.f32 0.0, %v6754
        %v6756 = vpop.f32.mrb[0].mxu0
        %6757 = vmatprep.mubr.f32.mxu0 0.0
        %6758 = vmatmul.mubr.f32.gmra.mrb[0].mxu0 %v6632
        %v6759 = vpop.f32.mrb[0].mxu0
        %v6760 = vadd.f32 0.0, %v6759
        %v6761 = vpop.f32.mrb[0].mxu0
        %6762 = vmatprep.mubr.f32.mxu0 0.0
        %6763 = vmatmul.mubr.f32.gmra.mrb[0].mxu0 %v6635
        %v6764 = vpop.f32.mrb[0].mxu0
        %v6765 = vadd.f32 0.0, %v6764
        %v6766 = vpop.f32.mrb[0].mxu0
        %6767 = vmatprep.mubr.f32.mxu0 0.0
        %6768 = vmatmul.mubr.f32.gmra.mrb[0].mxu0 %v6638
        %v6769 = vpop.f32.mrb[0].mxu0
        %v6770 = vadd.f32 0.0, %v6769
        %v6771 = vpop.f32.mrb[0].mxu0
        %6772 = vmatprep.mubr.f32.mxu0 0.0
        %6773 = vmatmul.mubr.f32.gmra.mrb[0].mxu0 %v6641
        %v6774 = vpop.f32.mrb[0].mxu0
        %v6775 = vadd.f32 0.0, %v6774
        %v6776 = vpop.f32.mrb[0].mxu0
        %6777 = vmatprep.mubr.f32.mxu0 0.0
        %6778 = vmatmul.mubr.f32.gmra.mrb[0].mxu0 %v6644
        %v6779 = vpop.f32.mrb[0].mxu0
        %v6780 = vadd.f32 0.0, %v6779
        %v6781 = vpop.f32.mrb[0].mxu0
        %6782 = vmatprep.mubr.f32.mxu0 0.0
        %6783 = vmatmul.mubr.f32.gmra.mrb[0].mxu0 %v6647
        %v6784 = vpop.f32.mrb[0].mxu0
        %v6785 = vadd.f32 0.0, %v6784
        %v6786 = vpop.f32.mrb[0].mxu0
        %6787 = vmatprep.mubr.f32.mxu0 0.0
        %6788 = vmatmul.mubr.f32.gmra.mrb[0].mxu0 %v6650
        %v6789 = vpop.f32.mrb[0].mxu0
        %v6790 = vadd.f32 0.0, %v6789
        %v6791 = vpop.f32.mrb[0].mxu0
        %6792 = vmatprep.mubr.f32.mxu0 0.0
        %6793 = vmatmul.mubr.f32.gmra.mrb[0].mxu0 %v6653
        %v6794 = vpop.f32.mrb[0].mxu0
        %v6795 = vadd.f32 0.0, %v6794
        %v6796 = vpop.f32.mrb[0].mxu0
        %6797 = vmatprep.mubr.f32.mxu0 0.0
        %6798 = vmatmul.mubr.f32.gmra.mrb[0].mxu0 %v6656
        %v6799 = vpop.f32.mrb[0].mxu0
        %v6800 = vadd.f32 0.0, %v6799
        %v6801 = vpop.f32.mrb[0].mxu0
        %6802 = vmatprep.mubr.f32.mxu0 0.0
        %6803 = vmatmul.mubr.f32.gmra.mrb[0].mxu0 %v6659
        %v6804 = vpop.f32.mrb[0].mxu0
        %v6805 = vadd.f32 0.0, %v6804
        %v6806 = vpop.f32.mrb[0].mxu0
        %6807 = vmatprep.mubr.f32.mxu0 0.0
        %6808 = vmatmul.mubr.f32.gmra.mrb[0].mxu0 %v6662
        %v6809 = vpop.f32.mrb[0].mxu0
        %v6810 = vadd.f32 0.0, %v6809
        %v6811 = vpop.f32.mrb[0].mxu0
        %6812 = vmatprep.mubr.f32.mxu0 0.0
        %6813 = vmatmul.mubr.f32.gmra.mrb[0].mxu0 %v6665
        %v6814 = vpop.f32.mrb[0].mxu0
        %v6815 = vadd.f32 0.0, %v6814
        %v6816 = vpop.f32.mrb[0].mxu0
        %6817 = vmatprep.mubr.f32.mxu0 0.0
        %6818 = vmatmul.mubr.f32.gmra.mrb[0].mxu0 %v6668
        %v6819 = vpop.f32.mrb[0].mxu0
        %v6820 = vadd.f32 0.0, %v6819
        %v6821 = vpop.f32.mrb[0].mxu0
        %6822 = vmatprep.mubr.f32.mxu0 0.0
        %6823 = vmatmul.mubr.f32.gmra.mrb[0].mxu0 %v6671
        %v6824 = vpop.f32.mrb[0].mxu0
        %v6825 = vadd.f32 0.0, %v6824
        %v6826 = vpop.f32.mrb[0].mxu0
        %6827 = vdwg.mxu0
        %v6828 = vld [vmem:[%s10] sm:$0xff]
        %v6829 = vld [vmem:[%s10 + $0x8] sm:$0xff]
        %v6830 = vld [vmem:[%s10 + $0x10] sm:$0xff]
        %v6831 = vld [vmem:[%s10 + $0x18] sm:$0xff]
        %s6832 = scalar_lea.vmem %s10, 32
        %v6833 = vld [vmem:[%s6832] sm:$0xff]
        %v6834 = vld [vmem:[%s6832 + $0x8] sm:$0xff]
        %v6835 = vld [vmem:[%s6832 + $0x10] sm:$0xff]
        %v6836 = vld [vmem:[%s6832 + $0x18] sm:$0xff]
        %v6838 = vsel %vm5569, %v6750, 0
        %v6841 = vsel %vm5569, %v6755, 0
        %6843 = vmatprep.subr.mxu0 0.0
        %6844 = vmatpush1.msra.mxu0 %v6833
        %6845 = vmatprep.subr.mxu0 0.0
        %6846 = vmatpush1.msra.mxu0 %v6834
        %6847 = vmatprep.subr.mxu0 0.0
        %6848 = vmatpush1.msra.mxu0 %v6835
        %6849 = vmatprep.subr.mxu0 0.0
        %6850 = vmatpush1.msra.mxu0 %v6836
        %6851 = vmatprep.subr.mxu0 0.0
        %6852 = vmatpush1.msra.mxu0 0.0
        %6853 = vmatprep.subr.mxu0 0.0
        %6854 = vmatpush1.msra.mxu0 0.0
        %6855 = vmatprep.subr.mxu0 0.0
        %6856 = vmatpush1.msra.mxu0 0.0
        %6857 = vmatprep.subr.mxu0 0.0
        %6858 = vmatpush1.msra.mxu0 0.0
        %6859 = vmatprep.subr.mxu0 0.0
        %6860 = vmatpush1.msra.mxu0 0.0
        %6861 = vmatprep.subr.mxu0 0.0
        %6862 = vmatpush1.msra.mxu0 0.0
        %6863 = vmatprep.subr.mxu0 0.0
        %6864 = vmatpush1.msra.mxu0 0.0
        %6865 = vmatprep.subr.mxu0 0.0
        %6866 = vmatpush1.msra.mxu0 0.0
        %6867 = vmatprep.subr.mxu0 0.0
        %6868 = vmatpush1.msra.mxu0 0.0
        %6869 = vmatprep.subr.mxu0 0.0
        %6870 = vmatpush1.msra.mxu0 0.0
        %6871 = vmatprep.subr.mxu0 0.0
        %6872 = vmatpush1.msra.mxu0 0.0
        %6873 = vmatprep.subr.mxu0 0.0
        %6874 = vmatpush1.msra.mxu0 0.0
        %6875 = vmatprep.subr.mxu0 0.0
        %6876 = vmatpush1.msra.mxu0 0.0
        %6877 = vmatprep.subr.mxu0 0.0
        %6878 = vmatpush1.msra.mxu0 0.0
        %6879 = vmatprep.subr.mxu0 0.0
        %6880 = vmatpush1.msra.mxu0 0.0
        %6881 = vmatprep.subr.mxu0 0.0
        %6882 = vmatpush1.msra.mxu0 0.0
        %6883 = vmatprep.subr.mxu0 0.0
        %6884 = vmatpush1.msra.mxu0 0.0
        %6885 = vmatprep.subr.mxu0 0.0
        %6886 = vmatpush1.msra.mxu0 0.0
        %6887 = vmatprep.subr.mxu0 0.0
        %6888 = vmatpush1.msra.mxu0 0.0
        %6889 = vmatprep.subr.mxu0 0.0
        %6890 = vmatpush1.msra.mxu0 0.0
        %6891 = vmatprep.subr.mxu0 0.0
        %6892 = vmatpush1.msra.mxu0 0.0
        %6893 = vmatprep.subr.mxu0 0.0
        %6894 = vmatpush1.msra.mxu0 0.0
        %6895 = vmatprep.subr.mxu0 0.0
        %6896 = vmatpush1.msra.mxu0 0.0
        %6897 = vmatprep.subr.mxu0 0.0
        %6898 = vmatpush1.msra.mxu0 0.0
        %6899 = vmatprep.subr.mxu0 0.0
        %6900 = vmatpush1.msra.mxu0 0.0
        %6901 = vmatprep.subr.mxu0 0.0
        %6902 = vmatpush1.msra.mxu0 0.0
        %6903 = vmatprep.subr.mxu0 0.0
        %6904 = vmatpush1.msra.mxu0 0.0
        %6905 = vmatprep.subr.mxu0 0.0
        %6906 = vmatpush1.msra.mxu0 0.0
        %6907 = vmatprep.mubr.f32.mxu0 0.0
        %6908 = vmatmul.mubr.f32.gmra.mrb[0].mxu0 %v6838
        %v6909 = vpop.f32.mrb[0].mxu0
        %v6910 = vadd.f32 0.0, %v6909
        %v6911 = vpop.f32.mrb[0].mxu0
        %6912 = vmatprep.mubr.f32.mxu0 0.0
        %6913 = vmatmul.mubr.f32.gmra.mrb[0].mxu0 %v6841
        %v6914 = vpop.f32.mrb[0].mxu0
        %v6915 = vadd.f32 0.0, %v6914
        %v6916 = vpop.f32.mrb[0].mxu0
        %6917 = vdwg.mxu0
        %v6919 = vsel %vm5569, %v6740, 0
        %v6922 = vsel %vm5569, %v6745, 0
        %6924 = vmatprep.subr.mxu0 0.0
        %6925 = vmatpush1.msra.mxu0 %v6828
        %6926 = vmatprep.subr.mxu0 0.0
        %6927 = vmatpush1.msra.mxu0 %v6829
        %6928 = vmatprep.subr.mxu0 0.0
        %6929 = vmatpush1.msra.mxu0 %v6830
        %6930 = vmatprep.subr.mxu0 0.0
        %6931 = vmatpush1.msra.mxu0 %v6831
        %6932 = vmatprep.subr.mxu0 0.0
        %6933 = vmatpush1.msra.mxu0 0.0
        %6934 = vmatprep.subr.mxu0 0.0
        %6935 = vmatpush1.msra.mxu0 0.0
        %6936 = vmatprep.subr.mxu0 0.0
        %6937 = vmatpush1.msra.mxu0 0.0
        %6938 = vmatprep.subr.mxu0 0.0
        %6939 = vmatpush1.msra.mxu0 0.0
        %6940 = vmatprep.subr.mxu0 0.0
        %6941 = vmatpush1.msra.mxu0 0.0
        %6942 = vmatprep.subr.mxu0 0.0
        %6943 = vmatpush1.msra.mxu0 0.0
        %6944 = vmatprep.subr.mxu0 0.0
        %6945 = vmatpush1.msra.mxu0 0.0
        %6946 = vmatprep.subr.mxu0 0.0
        %6947 = vmatpush1.msra.mxu0 0.0
        %6948 = vmatprep.subr.mxu0 0.0
        %6949 = vmatpush1.msra.mxu0 0.0
        %6950 = vmatprep.subr.mxu0 0.0
        %6951 = vmatpush1.msra.mxu0 0.0
        %6952 = vmatprep.subr.mxu0 0.0
        %6953 = vmatpush1.msra.mxu0 0.0
        %6954 = vmatprep.subr.mxu0 0.0
        %6955 = vmatpush1.msra.mxu0 0.0
        %6956 = vmatprep.subr.mxu0 0.0
        %6957 = vmatpush1.msra.mxu0 0.0
        %6958 = vmatprep.subr.mxu0 0.0
        %6959 = vmatpush1.msra.mxu0 0.0
        %6960 = vmatprep.subr.mxu0 0.0
        %6961 = vmatpush1.msra.mxu0 0.0
        %6962 = vmatprep.subr.mxu0 0.0
        %6963 = vmatpush1.msra.mxu0 0.0
        %6964 = vmatprep.subr.mxu0 0.0
        %6965 = vmatpush1.msra.mxu0 0.0
        %6966 = vmatprep.subr.mxu0 0.0
        %6967 = vmatpush1.msra.mxu0 0.0
        %6968 = vmatprep.subr.mxu0 0.0
        %6969 = vmatpush1.msra.mxu0 0.0
        %6970 = vmatprep.subr.mxu0 0.0
        %6971 = vmatpush1.msra.mxu0 0.0
        %6972 = vmatprep.subr.mxu0 0.0
        %6973 = vmatpush1.msra.mxu0 0.0
        %6974 = vmatprep.subr.mxu0 0.0
        %6975 = vmatpush1.msra.mxu0 0.0
        %6976 = vmatprep.subr.mxu0 0.0
        %6977 = vmatpush1.msra.mxu0 0.0
        %6978 = vmatprep.subr.mxu0 0.0
        %6979 = vmatpush1.msra.mxu0 0.0
        %6980 = vmatprep.subr.mxu0 0.0
        %6981 = vmatpush1.msra.mxu0 0.0
        %6982 = vmatprep.subr.mxu0 0.0
        %6983 = vmatpush1.msra.mxu0 0.0
        %6984 = vmatprep.subr.mxu0 0.0
        %6985 = vmatpush1.msra.mxu0 0.0
        %6986 = vmatprep.subr.mxu0 0.0
        %6987 = vmatpush1.msra.mxu0 0.0
        %6988 = vmatprep.mubr.f32.mxu0 0.0
        %6989 = vmatmul.mubr.f32.gmra.mrb[0].mxu0 %v6919
        %v6990 = vpop.f32.mrb[0].mxu0
        %v6991 = vadd.f32 %v6910, %v6990
        %v6992 = vpop.f32.mrb[0].mxu0
        %6993 = vmatprep.mubr.f32.mxu0 0.0
        %6994 = vmatmul.mubr.f32.gmra.mrb[0].mxu0 %v6922
        %v6995 = vpop.f32.mrb[0].mxu0
        %v6996 = vadd.f32 %v6915, %v6995
        %v6997 = vpop.f32.mrb[0].mxu0
        %6998 = vdwg.mxu0
        %s6999 = scalar_lea.vmem %s10, 64
        %v7000 = vld [vmem:[%s6999] sm:$0xff]
        %v7001 = vld [vmem:[%s6999 + $0x8] sm:$0xff]
        %v7002 = vld [vmem:[%s6999 + $0x10] sm:$0xff]
        %v7003 = vld [vmem:[%s6999 + $0x18] sm:$0xff]
        %v7005 = vsel %vm5569, %v6760, 0
        %v7008 = vsel %vm5569, %v6765, 0
        %7010 = vmatprep.subr.mxu0 0.0
        %7011 = vmatpush1.msra.mxu0 %v7000
        %7012 = vmatprep.subr.mxu0 0.0
        %7013 = vmatpush1.msra.mxu0 %v7001
        %7014 = vmatprep.subr.mxu0 0.0
        %7015 = vmatpush1.msra.mxu0 %v7002
        %7016 = vmatprep.subr.mxu0 0.0
        %7017 = vmatpush1.msra.mxu0 %v7003
        %7018 = vmatprep.subr.mxu0 0.0
        %7019 = vmatpush1.msra.mxu0 0.0
        %7020 = vmatprep.subr.mxu0 0.0
        %7021 = vmatpush1.msra.mxu0 0.0
        %7022 = vmatprep.subr.mxu0 0.0
        %7023 = vmatpush1.msra.mxu0 0.0
        %7024 = vmatprep.subr.mxu0 0.0
        %7025 = vmatpush1.msra.mxu0 0.0
        %7026 = vmatprep.subr.mxu0 0.0
        %7027 = vmatpush1.msra.mxu0 0.0
        %7028 = vmatprep.subr.mxu0 0.0
        %7029 = vmatpush1.msra.mxu0 0.0
        %7030 = vmatprep.subr.mxu0 0.0
        %7031 = vmatpush1.msra.mxu0 0.0
        %7032 = vmatprep.subr.mxu0 0.0
        %7033 = vmatpush1.msra.mxu0 0.0
        %7034 = vmatprep.subr.mxu0 0.0
        %7035 = vmatpush1.msra.mxu0 0.0
        %7036 = vmatprep.subr.mxu0 0.0
        %7037 = vmatpush1.msra.mxu0 0.0
        %7038 = vmatprep.subr.mxu0 0.0
        %7039 = vmatpush1.msra.mxu0 0.0
        %7040 = vmatprep.subr.mxu0 0.0
        %7041 = vmatpush1.msra.mxu0 0.0
        %7042 = vmatprep.subr.mxu0 0.0
        %7043 = vmatpush1.msra.mxu0 0.0
        %7044 = vmatprep.subr.mxu0 0.0
        %7045 = vmatpush1.msra.mxu0 0.0
        %7046 = vmatprep.subr.mxu0 0.0
        %7047 = vmatpush1.msra.mxu0 0.0
        %7048 = vmatprep.subr.mxu0 0.0
        %7049 = vmatpush1.msra.mxu0 0.0
        %7050 = vmatprep.subr.mxu0 0.0
        %7051 = vmatpush1.msra.mxu0 0.0
        %7052 = vmatprep.subr.mxu0 0.0
        %7053 = vmatpush1.msra.mxu0 0.0
        %7054 = vmatprep.subr.mxu0 0.0
        %7055 = vmatpush1.msra.mxu0 0.0
        %7056 = vmatprep.subr.mxu0 0.0
        %7057 = vmatpush1.msra.mxu0 0.0
        %7058 = vmatprep.subr.mxu0 0.0
        %7059 = vmatpush1.msra.mxu0 0.0
        %7060 = vmatprep.subr.mxu0 0.0
        %7061 = vmatpush1.msra.mxu0 0.0
        %7062 = vmatprep.subr.mxu0 0.0
        %7063 = vmatpush1.msra.mxu0 0.0
        %7064 = vmatprep.subr.mxu0 0.0
        %7065 = vmatpush1.msra.mxu0 0.0
        %7066 = vmatprep.subr.mxu0 0.0
        %7067 = vmatpush1.msra.mxu0 0.0
        %7068 = vmatprep.subr.mxu0 0.0
        %7069 = vmatpush1.msra.mxu0 0.0
        %7070 = vmatprep.subr.mxu0 0.0
        %7071 = vmatpush1.msra.mxu0 0.0
        %7072 = vmatprep.subr.mxu0 0.0
        %7073 = vmatpush1.msra.mxu0 0.0
        %7074 = vmatprep.mubr.f32.mxu0 0.0
        %7075 = vmatmul.mubr.f32.gmra.mrb[0].mxu0 %v7005
        %v7076 = vpop.f32.mrb[0].mxu0
        %v7077 = vadd.f32 0.0, %v7076
        %v7078 = vpop.f32.mrb[0].mxu0
        %7079 = vmatprep.mubr.f32.mxu0 0.0
        %7080 = vmatmul.mubr.f32.gmra.mrb[0].mxu0 %v7008
        %v7081 = vpop.f32.mrb[0].mxu0
        %v7082 = vadd.f32 0.0, %v7081
        %v7083 = vpop.f32.mrb[0].mxu0
        %7084 = vdwg.mxu0
        %v7085 = vadd.f32 %v6991, %v7077
        %v7086 = vadd.f32 %v6996, %v7082
        %s7087 = scalar_lea.vmem %s10, 96
        %v7088 = vld [vmem:[%s7087] sm:$0xff]
        %v7089 = vld [vmem:[%s7087 + $0x8] sm:$0xff]
        %v7090 = vld [vmem:[%s7087 + $0x10] sm:$0xff]
        %v7091 = vld [vmem:[%s7087 + $0x18] sm:$0xff]
        %v7093 = vsel %vm5569, %v6770, 0
        %v7096 = vsel %vm5569, %v6775, 0
        %7098 = vmatprep.subr.mxu0 0.0
        %7099 = vmatpush1.msra.mxu0 %v7088
        %7100 = vmatprep.subr.mxu0 0.0
        %7101 = vmatpush1.msra.mxu0 %v7089
        %7102 = vmatprep.subr.mxu0 0.0
        %7103 = vmatpush1.msra.mxu0 %v7090
        %7104 = vmatprep.subr.mxu0 0.0
        %7105 = vmatpush1.msra.mxu0 %v7091
        %7106 = vmatprep.subr.mxu0 0.0
        %7107 = vmatpush1.msra.mxu0 0.0
        %7108 = vmatprep.subr.mxu0 0.0
        %7109 = vmatpush1.msra.mxu0 0.0
        %7110 = vmatprep.subr.mxu0 0.0
        %7111 = vmatpush1.msra.mxu0 0.0
        %7112 = vmatprep.subr.mxu0 0.0
        %7113 = vmatpush1.msra.mxu0 0.0
        %7114 = vmatprep.subr.mxu0 0.0
        %7115 = vmatpush1.msra.mxu0 0.0
        %7116 = vmatprep.subr.mxu0 0.0
        %7117 = vmatpush1.msra.mxu0 0.0
        %7118 = vmatprep.subr.mxu0 0.0
        %7119 = vmatpush1.msra.mxu0 0.0
        %7120 = vmatprep.subr.mxu0 0.0
        %7121 = vmatpush1.msra.mxu0 0.0
        %7122 = vmatprep.subr.mxu0 0.0
        %7123 = vmatpush1.msra.mxu0 0.0
        %7124 = vmatprep.subr.mxu0 0.0
        %7125 = vmatpush1.msra.mxu0 0.0
        %7126 = vmatprep.subr.mxu0 0.0
        %7127 = vmatpush1.msra.mxu0 0.0
        %7128 = vmatprep.subr.mxu0 0.0
        %7129 = vmatpush1.msra.mxu0 0.0
        %7130 = vmatprep.subr.mxu0 0.0
        %7131 = vmatpush1.msra.mxu0 0.0
        %7132 = vmatprep.subr.mxu0 0.0
        %7133 = vmatpush1.msra.mxu0 0.0
        %7134 = vmatprep.subr.mxu0 0.0
        %7135 = vmatpush1.msra.mxu0 0.0
        %7136 = vmatprep.subr.mxu0 0.0
        %7137 = vmatpush1.msra.mxu0 0.0
        %7138 = vmatprep.subr.mxu0 0.0
        %7139 = vmatpush1.msra.mxu0 0.0
        %7140 = vmatprep.subr.mxu0 0.0
        %7141 = vmatpush1.msra.mxu0 0.0
        %7142 = vmatprep.subr.mxu0 0.0
        %7143 = vmatpush1.msra.mxu0 0.0
        %7144 = vmatprep.subr.mxu0 0.0
        %7145 = vmatpush1.msra.mxu0 0.0
        %7146 = vmatprep.subr.mxu0 0.0
        %7147 = vmatpush1.msra.mxu0 0.0
        %7148 = vmatprep.subr.mxu0 0.0
        %7149 = vmatpush1.msra.mxu0 0.0
        %7150 = vmatprep.subr.mxu0 0.0
        %7151 = vmatpush1.msra.mxu0 0.0
        %7152 = vmatprep.subr.mxu0 0.0
        %7153 = vmatpush1.msra.mxu0 0.0
        %7154 = vmatprep.subr.mxu0 0.0
        %7155 = vmatpush1.msra.mxu0 0.0
        %7156 = vmatprep.subr.mxu0 0.0
        %7157 = vmatpush1.msra.mxu0 0.0
        %7158 = vmatprep.subr.mxu0 0.0
        %7159 = vmatpush1.msra.mxu0 0.0
        %7160 = vmatprep.subr.mxu0 0.0
        %7161 = vmatpush1.msra.mxu0 0.0
        %7162 = vmatprep.mubr.f32.mxu0 0.0
        %7163 = vmatmul.mubr.f32.gmra.mrb[0].mxu0 %v7093
        %v7164 = vpop.f32.mrb[0].mxu0
        %v7165 = vadd.f32 0.0, %v7164
        %v7166 = vpop.f32.mrb[0].mxu0
        %7167 = vmatprep.mubr.f32.mxu0 0.0
        %7168 = vmatmul.mubr.f32.gmra.mrb[0].mxu0 %v7096
        %v7169 = vpop.f32.mrb[0].mxu0
        %v7170 = vadd.f32 0.0, %v7169
        %v7171 = vpop.f32.mrb[0].mxu0
        %7172 = vdwg.mxu0
        %v7173 = vadd.f32 %v7085, %v7165
        %v7174 = vadd.f32 %v7086, %v7170
        %s7175 = scalar_lea.vmem %s10, 128
        %v7176 = vld [vmem:[%s7175] sm:$0xff]
        %v7177 = vld [vmem:[%s7175 + $0x8] sm:$0xff]
        %v7178 = vld [vmem:[%s7175 + $0x10] sm:$0xff]
        %v7179 = vld [vmem:[%s7175 + $0x18] sm:$0xff]
        %v7181 = vsel %vm5569, %v6780, 0
        %v7184 = vsel %vm5569, %v6785, 0
        %7186 = vmatprep.subr.mxu0 0.0
        %7187 = vmatpush1.msra.mxu0 %v7176
        %7188 = vmatprep.subr.mxu0 0.0
        %7189 = vmatpush1.msra.mxu0 %v7177
        %7190 = vmatprep.subr.mxu0 0.0
        %7191 = vmatpush1.msra.mxu0 %v7178
        %7192 = vmatprep.subr.mxu0 0.0
        %7193 = vmatpush1.msra.mxu0 %v7179
        %7194 = vmatprep.subr.mxu0 0.0
        %7195 = vmatpush1.msra.mxu0 0.0
        %7196 = vmatprep.subr.mxu0 0.0
        %7197 = vmatpush1.msra.mxu0 0.0
        %7198 = vmatprep.subr.mxu0 0.0
        %7199 = vmatpush1.msra.mxu0 0.0
        %7200 = vmatprep.subr.mxu0 0.0
        %7201 = vmatpush1.msra.mxu0 0.0
        %7202 = vmatprep.subr.mxu0 0.0
        %7203 = vmatpush1.msra.mxu0 0.0
        %7204 = vmatprep.subr.mxu0 0.0
        %7205 = vmatpush1.msra.mxu0 0.0
        %7206 = vmatprep.subr.mxu0 0.0
        %7207 = vmatpush1.msra.mxu0 0.0
        %7208 = vmatprep.subr.mxu0 0.0
        %7209 = vmatpush1.msra.mxu0 0.0
        %7210 = vmatprep.subr.mxu0 0.0
        %7211 = vmatpush1.msra.mxu0 0.0
        %7212 = vmatprep.subr.mxu0 0.0
        %7213 = vmatpush1.msra.mxu0 0.0
        %7214 = vmatprep.subr.mxu0 0.0
        %7215 = vmatpush1.msra.mxu0 0.0
        %7216 = vmatprep.subr.mxu0 0.0
        %7217 = vmatpush1.msra.mxu0 0.0
        %7218 = vmatprep.subr.mxu0 0.0
        %7219 = vmatpush1.msra.mxu0 0.0
        %7220 = vmatprep.subr.mxu0 0.0
        %7221 = vmatpush1.msra.mxu0 0.0
        %7222 = vmatprep.subr.mxu0 0.0
        %7223 = vmatpush1.msra.mxu0 0.0
        %7224 = vmatprep.subr.mxu0 0.0
        %7225 = vmatpush1.msra.mxu0 0.0
        %7226 = vmatprep.subr.mxu0 0.0
        %7227 = vmatpush1.msra.mxu0 0.0
        %7228 = vmatprep.subr.mxu0 0.0
        %7229 = vmatpush1.msra.mxu0 0.0
        %7230 = vmatprep.subr.mxu0 0.0
        %7231 = vmatpush1.msra.mxu0 0.0
        %7232 = vmatprep.subr.mxu0 0.0
        %7233 = vmatpush1.msra.mxu0 0.0
        %7234 = vmatprep.subr.mxu0 0.0
        %7235 = vmatpush1.msra.mxu0 0.0
        %7236 = vmatprep.subr.mxu0 0.0
        %7237 = vmatpush1.msra.mxu0 0.0
        %7238 = vmatprep.subr.mxu0 0.0
        %7239 = vmatpush1.msra.mxu0 0.0
        %7240 = vmatprep.subr.mxu0 0.0
        %7241 = vmatpush1.msra.mxu0 0.0
        %7242 = vmatprep.subr.mxu0 0.0
        %7243 = vmatpush1.msra.mxu0 0.0
        %7244 = vmatprep.subr.mxu0 0.0
        %7245 = vmatpush1.msra.mxu0 0.0
        %7246 = vmatprep.subr.mxu0 0.0
        %7247 = vmatpush1.msra.mxu0 0.0
        %7248 = vmatprep.subr.mxu0 0.0
        %7249 = vmatpush1.msra.mxu0 0.0
        %7250 = vmatprep.mubr.f32.mxu0 0.0
        %7251 = vmatmul.mubr.f32.gmra.mrb[0].mxu0 %v7181
        %v7252 = vpop.f32.mrb[0].mxu0
        %v7253 = vadd.f32 0.0, %v7252
        %v7254 = vpop.f32.mrb[0].mxu0
        %7255 = vmatprep.mubr.f32.mxu0 0.0
        %7256 = vmatmul.mubr.f32.gmra.mrb[0].mxu0 %v7184
        %v7257 = vpop.f32.mrb[0].mxu0
        %v7258 = vadd.f32 0.0, %v7257
        %v7259 = vpop.f32.mrb[0].mxu0
        %7260 = vdwg.mxu0
        %v7261 = vadd.f32 %v7173, %v7253
        %v7262 = vadd.f32 %v7174, %v7258
        %s7263 = scalar_lea.vmem %s10, 160
        %v7264 = vld [vmem:[%s7263] sm:$0xff]
        %v7265 = vld [vmem:[%s7263 + $0x8] sm:$0xff]
        %v7266 = vld [vmem:[%s7263 + $0x10] sm:$0xff]
        %v7267 = vld [vmem:[%s7263 + $0x18] sm:$0xff]
        %v7269 = vsel %vm5569, %v6790, 0
        %v7272 = vsel %vm5569, %v6795, 0
        %7274 = vmatprep.subr.mxu0 0.0
        %7275 = vmatpush1.msra.mxu0 %v7264
        %7276 = vmatprep.subr.mxu0 0.0
        %7277 = vmatpush1.msra.mxu0 %v7265
        %7278 = vmatprep.subr.mxu0 0.0
        %7279 = vmatpush1.msra.mxu0 %v7266
        %7280 = vmatprep.subr.mxu0 0.0
        %7281 = vmatpush1.msra.mxu0 %v7267
        %7282 = vmatprep.subr.mxu0 0.0
        %7283 = vmatpush1.msra.mxu0 0.0
        %7284 = vmatprep.subr.mxu0 0.0
        %7285 = vmatpush1.msra.mxu0 0.0
        %7286 = vmatprep.subr.mxu0 0.0
        %7287 = vmatpush1.msra.mxu0 0.0
        %7288 = vmatprep.subr.mxu0 0.0
        %7289 = vmatpush1.msra.mxu0 0.0
        %7290 = vmatprep.subr.mxu0 0.0
        %7291 = vmatpush1.msra.mxu0 0.0
        %7292 = vmatprep.subr.mxu0 0.0
        %7293 = vmatpush1.msra.mxu0 0.0
        %7294 = vmatprep.subr.mxu0 0.0
        %7295 = vmatpush1.msra.mxu0 0.0
        %7296 = vmatprep.subr.mxu0 0.0
        %7297 = vmatpush1.msra.mxu0 0.0
        %7298 = vmatprep.subr.mxu0 0.0
        %7299 = vmatpush1.msra.mxu0 0.0
        %7300 = vmatprep.subr.mxu0 0.0
        %7301 = vmatpush1.msra.mxu0 0.0
        %7302 = vmatprep.subr.mxu0 0.0
        %7303 = vmatpush1.msra.mxu0 0.0
        %7304 = vmatprep.subr.mxu0 0.0
        %7305 = vmatpush1.msra.mxu0 0.0
        %7306 = vmatprep.subr.mxu0 0.0
        %7307 = vmatpush1.msra.mxu0 0.0
        %7308 = vmatprep.subr.mxu0 0.0
        %7309 = vmatpush1.msra.mxu0 0.0
        %7310 = vmatprep.subr.mxu0 0.0
        %7311 = vmatpush1.msra.mxu0 0.0
        %7312 = vmatprep.subr.mxu0 0.0
        %7313 = vmatpush1.msra.mxu0 0.0
        %7314 = vmatprep.subr.mxu0 0.0
        %7315 = vmatpush1.msra.mxu0 0.0
        %7316 = vmatprep.subr.mxu0 0.0
        %7317 = vmatpush1.msra.mxu0 0.0
        %7318 = vmatprep.subr.mxu0 0.0
        %7319 = vmatpush1.msra.mxu0 0.0
        %7320 = vmatprep.subr.mxu0 0.0
        %7321 = vmatpush1.msra.mxu0 0.0
        %7322 = vmatprep.subr.mxu0 0.0
        %7323 = vmatpush1.msra.mxu0 0.0
        %7324 = vmatprep.subr.mxu0 0.0
        %7325 = vmatpush1.msra.mxu0 0.0
        %7326 = vmatprep.subr.mxu0 0.0
        %7327 = vmatpush1.msra.mxu0 0.0
        %7328 = vmatprep.subr.mxu0 0.0
        %7329 = vmatpush1.msra.mxu0 0.0
        %7330 = vmatprep.subr.mxu0 0.0
        %7331 = vmatpush1.msra.mxu0 0.0
        %7332 = vmatprep.subr.mxu0 0.0
        %7333 = vmatpush1.msra.mxu0 0.0
        %7334 = vmatprep.subr.mxu0 0.0
        %7335 = vmatpush1.msra.mxu0 0.0
        %7336 = vmatprep.subr.mxu0 0.0
        %7337 = vmatpush1.msra.mxu0 0.0
        %7338 = vmatprep.mubr.f32.mxu0 0.0
        %7339 = vmatmul.mubr.f32.gmra.mrb[0].mxu0 %v7269
        %v7340 = vpop.f32.mrb[0].mxu0
        %v7341 = vadd.f32 0.0, %v7340
        %v7342 = vpop.f32.mrb[0].mxu0
        %7343 = vmatprep.mubr.f32.mxu0 0.0
        %7344 = vmatmul.mubr.f32.gmra.mrb[0].mxu0 %v7272
        %v7345 = vpop.f32.mrb[0].mxu0
        %v7346 = vadd.f32 0.0, %v7345
        %v7347 = vpop.f32.mrb[0].mxu0
        %7348 = vdwg.mxu0
        %v7349 = vadd.f32 %v7261, %v7341
        %v7350 = vadd.f32 %v7262, %v7346
        %s7351 = scalar_lea.vmem %s10, 192
        %v7352 = vld [vmem:[%s7351] sm:$0xff]
        %v7353 = vld [vmem:[%s7351 + $0x8] sm:$0xff]
        %v7354 = vld [vmem:[%s7351 + $0x10] sm:$0xff]
        %v7355 = vld [vmem:[%s7351 + $0x18] sm:$0xff]
        %v7357 = vsel %vm5569, %v6800, 0
        %v7360 = vsel %vm5569, %v6805, 0
        %7362 = vmatprep.subr.mxu0 0.0
        %7363 = vmatpush1.msra.mxu0 %v7352
        %7364 = vmatprep.subr.mxu0 0.0
        %7365 = vmatpush1.msra.mxu0 %v7353
        %7366 = vmatprep.subr.mxu0 0.0
        %7367 = vmatpush1.msra.mxu0 %v7354
        %7368 = vmatprep.subr.mxu0 0.0
        %7369 = vmatpush1.msra.mxu0 %v7355
        %7370 = vmatprep.subr.mxu0 0.0
        %7371 = vmatpush1.msra.mxu0 0.0
        %7372 = vmatprep.subr.mxu0 0.0
        %7373 = vmatpush1.msra.mxu0 0.0
        %7374 = vmatprep.subr.mxu0 0.0
        %7375 = vmatpush1.msra.mxu0 0.0
        %7376 = vmatprep.subr.mxu0 0.0
        %7377 = vmatpush1.msra.mxu0 0.0
        %7378 = vmatprep.subr.mxu0 0.0
        %7379 = vmatpush1.msra.mxu0 0.0
        %7380 = vmatprep.subr.mxu0 0.0
        %7381 = vmatpush1.msra.mxu0 0.0
        %7382 = vmatprep.subr.mxu0 0.0
        %7383 = vmatpush1.msra.mxu0 0.0
        %7384 = vmatprep.subr.mxu0 0.0
        %7385 = vmatpush1.msra.mxu0 0.0
        %7386 = vmatprep.subr.mxu0 0.0
        %7387 = vmatpush1.msra.mxu0 0.0
        %7388 = vmatprep.subr.mxu0 0.0
        %7389 = vmatpush1.msra.mxu0 0.0
        %7390 = vmatprep.subr.mxu0 0.0
        %7391 = vmatpush1.msra.mxu0 0.0
        %7392 = vmatprep.subr.mxu0 0.0
        %7393 = vmatpush1.msra.mxu0 0.0
        %7394 = vmatprep.subr.mxu0 0.0
        %7395 = vmatpush1.msra.mxu0 0.0
        %7396 = vmatprep.subr.mxu0 0.0
        %7397 = vmatpush1.msra.mxu0 0.0
        %7398 = vmatprep.subr.mxu0 0.0
        %7399 = vmatpush1.msra.mxu0 0.0
        %7400 = vmatprep.subr.mxu0 0.0
        %7401 = vmatpush1.msra.mxu0 0.0
        %7402 = vmatprep.subr.mxu0 0.0
        %7403 = vmatpush1.msra.mxu0 0.0
        %7404 = vmatprep.subr.mxu0 0.0
        %7405 = vmatpush1.msra.mxu0 0.0
        %7406 = vmatprep.subr.mxu0 0.0
        %7407 = vmatpush1.msra.mxu0 0.0
        %7408 = vmatprep.subr.mxu0 0.0
        %7409 = vmatpush1.msra.mxu0 0.0
        %7410 = vmatprep.subr.mxu0 0.0
        %7411 = vmatpush1.msra.mxu0 0.0
        %7412 = vmatprep.subr.mxu0 0.0
        %7413 = vmatpush1.msra.mxu0 0.0
        %7414 = vmatprep.subr.mxu0 0.0
        %7415 = vmatpush1.msra.mxu0 0.0
        %7416 = vmatprep.subr.mxu0 0.0
        %7417 = vmatpush1.msra.mxu0 0.0
        %7418 = vmatprep.subr.mxu0 0.0
        %7419 = vmatpush1.msra.mxu0 0.0
        %7420 = vmatprep.subr.mxu0 0.0
        %7421 = vmatpush1.msra.mxu0 0.0
        %7422 = vmatprep.subr.mxu0 0.0
        %7423 = vmatpush1.msra.mxu0 0.0
        %7424 = vmatprep.subr.mxu0 0.0
        %7425 = vmatpush1.msra.mxu0 0.0
        %7426 = vmatprep.mubr.f32.mxu0 0.0
        %7427 = vmatmul.mubr.f32.gmra.mrb[0].mxu0 %v7357
        %v7428 = vpop.f32.mrb[0].mxu0
        %v7429 = vadd.f32 0.0, %v7428
        %v7430 = vpop.f32.mrb[0].mxu0
        %7431 = vmatprep.mubr.f32.mxu0 0.0
        %7432 = vmatmul.mubr.f32.gmra.mrb[0].mxu0 %v7360
        %v7433 = vpop.f32.mrb[0].mxu0
        %v7434 = vadd.f32 0.0, %v7433
        %v7435 = vpop.f32.mrb[0].mxu0
        %7436 = vdwg.mxu0
        %v7437 = vadd.f32 %v7349, %v7429
        %v7438 = vadd.f32 %v7350, %v7434
        %s7439 = scalar_lea.vmem %s10, 224
        %v7440 = vld [vmem:[%s7439] sm:$0xff]
        %v7441 = vld [vmem:[%s7439 + $0x8] sm:$0xff]
        %v7442 = vld [vmem:[%s7439 + $0x10] sm:$0xff]
        %v7443 = vld [vmem:[%s7439 + $0x18] sm:$0xff]
        %v7445 = vsel %vm5569, %v6810, 0
        %v7448 = vsel %vm5569, %v6815, 0
        %7450 = vmatprep.subr.mxu0 0.0
        %7451 = vmatpush1.msra.mxu0 %v7440
        %7452 = vmatprep.subr.mxu0 0.0
        %7453 = vmatpush1.msra.mxu0 %v7441
        %7454 = vmatprep.subr.mxu0 0.0
        %7455 = vmatpush1.msra.mxu0 %v7442
        %7456 = vmatprep.subr.mxu0 0.0
        %7457 = vmatpush1.msra.mxu0 %v7443
        %7458 = vmatprep.subr.mxu0 0.0
        %7459 = vmatpush1.msra.mxu0 0.0
        %7460 = vmatprep.subr.mxu0 0.0
        %7461 = vmatpush1.msra.mxu0 0.0
        %7462 = vmatprep.subr.mxu0 0.0
        %7463 = vmatpush1.msra.mxu0 0.0
        %7464 = vmatprep.subr.mxu0 0.0
        %7465 = vmatpush1.msra.mxu0 0.0
        %7466 = vmatprep.subr.mxu0 0.0
        %7467 = vmatpush1.msra.mxu0 0.0
        %7468 = vmatprep.subr.mxu0 0.0
        %7469 = vmatpush1.msra.mxu0 0.0
        %7470 = vmatprep.subr.mxu0 0.0
        %7471 = vmatpush1.msra.mxu0 0.0
        %7472 = vmatprep.subr.mxu0 0.0
        %7473 = vmatpush1.msra.mxu0 0.0
        %7474 = vmatprep.subr.mxu0 0.0
        %7475 = vmatpush1.msra.mxu0 0.0
        %7476 = vmatprep.subr.mxu0 0.0
        %7477 = vmatpush1.msra.mxu0 0.0
        %7478 = vmatprep.subr.mxu0 0.0
        %7479 = vmatpush1.msra.mxu0 0.0
        %7480 = vmatprep.subr.mxu0 0.0
        %7481 = vmatpush1.msra.mxu0 0.0
        %7482 = vmatprep.subr.mxu0 0.0
        %7483 = vmatpush1.msra.mxu0 0.0
        %7484 = vmatprep.subr.mxu0 0.0
        %7485 = vmatpush1.msra.mxu0 0.0
        %7486 = vmatprep.subr.mxu0 0.0
        %7487 = vmatpush1.msra.mxu0 0.0
        %7488 = vmatprep.subr.mxu0 0.0
        %7489 = vmatpush1.msra.mxu0 0.0
        %7490 = vmatprep.subr.mxu0 0.0
        %7491 = vmatpush1.msra.mxu0 0.0
        %7492 = vmatprep.subr.mxu0 0.0
        %7493 = vmatpush1.msra.mxu0 0.0
        %7494 = vmatprep.subr.mxu0 0.0
        %7495 = vmatpush1.msra.mxu0 0.0
        %7496 = vmatprep.subr.mxu0 0.0
        %7497 = vmatpush1.msra.mxu0 0.0
        %7498 = vmatprep.subr.mxu0 0.0
        %7499 = vmatpush1.msra.mxu0 0.0
        %7500 = vmatprep.subr.mxu0 0.0
        %7501 = vmatpush1.msra.mxu0 0.0
        %7502 = vmatprep.subr.mxu0 0.0
        %7503 = vmatpush1.msra.mxu0 0.0
        %7504 = vmatprep.subr.mxu0 0.0
        %7505 = vmatpush1.msra.mxu0 0.0
        %7506 = vmatprep.subr.mxu0 0.0
        %7507 = vmatpush1.msra.mxu0 0.0
        %7508 = vmatprep.subr.mxu0 0.0
        %7509 = vmatpush1.msra.mxu0 0.0
        %7510 = vmatprep.subr.mxu0 0.0
        %7511 = vmatpush1.msra.mxu0 0.0
        %7512 = vmatprep.subr.mxu0 0.0
        %7513 = vmatpush1.msra.mxu0 0.0
        %7514 = vmatprep.mubr.f32.mxu0 0.0
        %7515 = vmatmul.mubr.f32.gmra.mrb[0].mxu0 %v7445
        %v7516 = vpop.f32.mrb[0].mxu0
        %v7517 = vadd.f32 0.0, %v7516
        %v7518 = vpop.f32.mrb[0].mxu0
        %7519 = vmatprep.mubr.f32.mxu0 0.0
        %7520 = vmatmul.mubr.f32.gmra.mrb[0].mxu0 %v7448
        %v7521 = vpop.f32.mrb[0].mxu0
        %v7522 = vadd.f32 0.0, %v7521
        %v7523 = vpop.f32.mrb[0].mxu0
        %7524 = vdwg.mxu0
        %v7525 = vadd.f32 %v7437, %v7517
        %v7526 = vadd.f32 %v7438, %v7522
        %s7527 = scalar_lea.vmem %s10, 256
        %v7528 = vld [vmem:[%s7527] sm:$0xff]
        %v7529 = vld [vmem:[%s7527 + $0x8] sm:$0xff]
        %v7530 = vld [vmem:[%s7527 + $0x10] sm:$0xff]
        %v7531 = vld [vmem:[%s7527 + $0x18] sm:$0xff]
        %v7533 = vsel %vm5569, %v6820, 0
        %v7536 = vsel %vm5569, %v6825, 0
        %7538 = vmatprep.subr.mxu0 0.0
        %7539 = vmatpush1.msra.mxu0 %v7528
        %7540 = vmatprep.subr.mxu0 0.0
        %7541 = vmatpush1.msra.mxu0 %v7529
        %7542 = vmatprep.subr.mxu0 0.0
        %7543 = vmatpush1.msra.mxu0 %v7530
        %7544 = vmatprep.subr.mxu0 0.0
        %7545 = vmatpush1.msra.mxu0 %v7531
        %7546 = vmatprep.subr.mxu0 0.0
        %7547 = vmatpush1.msra.mxu0 0.0
        %7548 = vmatprep.subr.mxu0 0.0
        %7549 = vmatpush1.msra.mxu0 0.0
        %7550 = vmatprep.subr.mxu0 0.0
        %7551 = vmatpush1.msra.mxu0 0.0
        %7552 = vmatprep.subr.mxu0 0.0
        %7553 = vmatpush1.msra.mxu0 0.0
        %7554 = vmatprep.subr.mxu0 0.0
        %7555 = vmatpush1.msra.mxu0 0.0
        %7556 = vmatprep.subr.mxu0 0.0
        %7557 = vmatpush1.msra.mxu0 0.0
        %7558 = vmatprep.subr.mxu0 0.0
        %7559 = vmatpush1.msra.mxu0 0.0
        %7560 = vmatprep.subr.mxu0 0.0
        %7561 = vmatpush1.msra.mxu0 0.0
        %7562 = vmatprep.subr.mxu0 0.0
        %7563 = vmatpush1.msra.mxu0 0.0
        %7564 = vmatprep.subr.mxu0 0.0
        %7565 = vmatpush1.msra.mxu0 0.0
        %7566 = vmatprep.subr.mxu0 0.0
        %7567 = vmatpush1.msra.mxu0 0.0
        %7568 = vmatprep.subr.mxu0 0.0
        %7569 = vmatpush1.msra.mxu0 0.0
        %7570 = vmatprep.subr.mxu0 0.0
        %7571 = vmatpush1.msra.mxu0 0.0
        %7572 = vmatprep.subr.mxu0 0.0
        %7573 = vmatpush1.msra.mxu0 0.0
        %7574 = vmatprep.subr.mxu0 0.0
        %7575 = vmatpush1.msra.mxu0 0.0
        %7576 = vmatprep.subr.mxu0 0.0
        %7577 = vmatpush1.msra.mxu0 0.0
        %7578 = vmatprep.subr.mxu0 0.0
        %7579 = vmatpush1.msra.mxu0 0.0
        %7580 = vmatprep.subr.mxu0 0.0
        %7581 = vmatpush1.msra.mxu0 0.0
        %7582 = vmatprep.subr.mxu0 0.0
        %7583 = vmatpush1.msra.mxu0 0.0
        %7584 = vmatprep.subr.mxu0 0.0
        %7585 = vmatpush1.msra.mxu0 0.0
        %7586 = vmatprep.subr.mxu0 0.0
        %7587 = vmatpush1.msra.mxu0 0.0
        %7588 = vmatprep.subr.mxu0 0.0
        %7589 = vmatpush1.msra.mxu0 0.0
        %7590 = vmatprep.subr.mxu0 0.0
        %7591 = vmatpush1.msra.mxu0 0.0
        %7592 = vmatprep.subr.mxu0 0.0
        %7593 = vmatpush1.msra.mxu0 0.0
        %7594 = vmatprep.subr.mxu0 0.0
        %7595 = vmatpush1.msra.mxu0 0.0
        %7596 = vmatprep.subr.mxu0 0.0
        %7597 = vmatpush1.msra.mxu0 0.0
        %7598 = vmatprep.subr.mxu0 0.0
        %7599 = vmatpush1.msra.mxu0 0.0
        %7600 = vmatprep.subr.mxu0 0.0
        %7601 = vmatpush1.msra.mxu0 0.0
        %7602 = vmatprep.mubr.f32.mxu0 0.0
        %7603 = vmatmul.mubr.f32.gmra.mrb[0].mxu0 %v7533
        %v7604 = vpop.f32.mrb[0].mxu0
        %v7605 = vadd.f32 0.0, %v7604
        %v7606 = vpop.f32.mrb[0].mxu0
        %7607 = vmatprep.mubr.f32.mxu0 0.0
        %7608 = vmatmul.mubr.f32.gmra.mrb[0].mxu0 %v7536
        %v7609 = vpop.f32.mrb[0].mxu0
        %v7610 = vadd.f32 0.0, %v7609
        %v7611 = vpop.f32.mrb[0].mxu0
        %7612 = vdwg.mxu0
        %v7613 = vadd.f32 %v7525, %v7605
        %v7614 = vadd.f32 %v7526, %v7610
        %v7615 = vmax.f32 %v7613, 0.0
        %v7616 = vmax.f32 %v7614, 0.0
        %v7617 = vld [vmem:[%s11] sm:$0xff]
        %v7618 = vld [vmem:[%s11 + $0x8] sm:$0xff]
        %v7620 = vsel %vm3824, %v7615, 0
        %v7623 = vsel %vm3824, %v7616, 0
        %7625 = vmatprep.subr.mxu0 0.0
        %7626 = vmatpush1.msra.mxu0 %v7617
        %7627 = vmatprep.subr.mxu0 0.0
        %7628 = vmatpush1.msra.mxu0 %v7618
        %7629 = vmatprep.subr.mxu0 0.0
        %7630 = vmatpush1.msra.mxu0 0.0
        %7631 = vmatprep.subr.mxu0 0.0
        %7632 = vmatpush1.msra.mxu0 0.0
        %7633 = vmatprep.subr.mxu0 0.0
        %7634 = vmatpush1.msra.mxu0 0.0
        %7635 = vmatprep.subr.mxu0 0.0
        %7636 = vmatpush1.msra.mxu0 0.0
        %7637 = vmatprep.subr.mxu0 0.0
        %7638 = vmatpush1.msra.mxu0 0.0
        %7639 = vmatprep.subr.mxu0 0.0
        %7640 = vmatpush1.msra.mxu0 0.0
        %7641 = vmatprep.subr.mxu0 0.0
        %7642 = vmatpush1.msra.mxu0 0.0
        %7643 = vmatprep.subr.mxu0 0.0
        %7644 = vmatpush1.msra.mxu0 0.0
        %7645 = vmatprep.subr.mxu0 0.0
        %7646 = vmatpush1.msra.mxu0 0.0
        %7647 = vmatprep.subr.mxu0 0.0
        %7648 = vmatpush1.msra.mxu0 0.0
        %7649 = vmatprep.subr.mxu0 0.0
        %7650 = vmatpush1.msra.mxu0 0.0
        %7651 = vmatprep.subr.mxu0 0.0
        %7652 = vmatpush1.msra.mxu0 0.0
        %7653 = vmatprep.subr.mxu0 0.0
        %7654 = vmatpush1.msra.mxu0 0.0
        %7655 = vmatprep.subr.mxu0 0.0
        %7656 = vmatpush1.msra.mxu0 0.0
        %7657 = vmatprep.subr.mxu0 0.0
        %7658 = vmatpush1.msra.mxu0 0.0
        %7659 = vmatprep.subr.mxu0 0.0
        %7660 = vmatpush1.msra.mxu0 0.0
        %7661 = vmatprep.subr.mxu0 0.0
        %7662 = vmatpush1.msra.mxu0 0.0
        %7663 = vmatprep.subr.mxu0 0.0
        %7664 = vmatpush1.msra.mxu0 0.0
        %7665 = vmatprep.subr.mxu0 0.0
        %7666 = vmatpush1.msra.mxu0 0.0
        %7667 = vmatprep.subr.mxu0 0.0
        %7668 = vmatpush1.msra.mxu0 0.0
        %7669 = vmatprep.subr.mxu0 0.0
        %7670 = vmatpush1.msra.mxu0 0.0
        %7671 = vmatprep.subr.mxu0 0.0
        %7672 = vmatpush1.msra.mxu0 0.0
        %7673 = vmatprep.subr.mxu0 0.0
        %7674 = vmatpush1.msra.mxu0 0.0
        %7675 = vmatprep.subr.mxu0 0.0
        %7676 = vmatpush1.msra.mxu0 0.0
        %7677 = vmatprep.subr.mxu0 0.0
        %7678 = vmatpush1.msra.mxu0 0.0
        %7679 = vmatprep.subr.mxu0 0.0
        %7680 = vmatpush1.msra.mxu0 0.0
        %7681 = vmatprep.subr.mxu0 0.0
        %7682 = vmatpush1.msra.mxu0 0.0
        %7683 = vmatprep.subr.mxu0 0.0
        %7684 = vmatpush1.msra.mxu0 0.0
        %7685 = vmatprep.subr.mxu0 0.0
        %7686 = vmatpush1.msra.mxu0 0.0
        %7687 = vmatprep.subr.mxu0 0.0
        %7688 = vmatpush1.msra.mxu0 0.0
        %7689 = vmatprep.mubr.f32.mxu0 0.0
        %7690 = vmatmul.mubr.f32.gmra.mrb[0].mxu0 %v7620
        %v7691 = vpop.f32.mrb[0].mxu0
        %v7692 = vadd.f32 0.0, %v7691
        %v7693 = vpop.f32.mrb[0].mxu0
        %7694 = vmatprep.mubr.f32.mxu0 0.0
        %7695 = vmatmul.mubr.f32.gmra.mrb[0].mxu0 %v7623
        %v7696 = vpop.f32.mrb[0].mxu0
        %v7697 = vadd.f32 0.0, %v7696
        %v7698 = vpop.f32.mrb[0].mxu0
        %7699 = vdwg.mxu0
        %v7700 = vadd.f32 %v6595, %v7692
        %v7701 = vadd.f32 %v6596, %v7697
        %v7702 = vmax.f32 %v7700, 0.0
        %v7703 = vmax.f32 %v7701, 0.0
        %7704 = vmatprep.subr.mxu0 0.0
        %7705 = vmatpush1.msra.mxu0 %v7702
        %7706 = vmatprep.subr.mxu0 0.0
        %7707 = vmatpush1.msra.mxu0 %v7703
        %7708 = vmatprep.subr.mxu0 0.0
        %7709 = vmatpush1.msra.mxu0 0.0
        %7710 = vmatprep.subr.mxu0 0.0
        %7711 = vmatpush1.msra.mxu0 0.0
        %7712 = vmatprep.subr.mxu0 0.0
        %7713 = vmatpush1.msra.mxu0 0.0
        %7714 = vmatprep.subr.mxu0 0.0
        %7715 = vmatpush1.msra.mxu0 0.0
        %7716 = vmatprep.subr.mxu0 0.0
        %7717 = vmatpush1.msra.mxu0 0.0
        %7718 = vmatprep.subr.mxu0 0.0
        %7719 = vmatpush1.msra.mxu0 0.0
        %7720 = vmatprep.subr.mxu0 0.0
        %7721 = vmatpush1.msra.mxu0 0.0
        %7722 = vmatprep.subr.mxu0 0.0
        %7723 = vmatpush1.msra.mxu0 0.0
        %7724 = vmatprep.subr.mxu0 0.0
        %7725 = vmatpush1.msra.mxu0 0.0
        %7726 = vmatprep.subr.mxu0 0.0
        %7727 = vmatpush1.msra.mxu0 0.0
        %7728 = vmatprep.subr.mxu0 0.0
        %7729 = vmatpush1.msra.mxu0 0.0
        %7730 = vmatprep.subr.mxu0 0.0
        %7731 = vmatpush1.msra.mxu0 0.0
        %7732 = vmatprep.subr.mxu0 0.0
        %7733 = vmatpush1.msra.mxu0 0.0
        %7734 = vmatprep.subr.mxu0 0.0
        %7735 = vmatpush1.msra.mxu0 0.0
        %7736 = vmatprep.subr.mxu0 0.0
        %7737 = vmatpush1.msra.mxu0 0.0
        %7738 = vmatprep.subr.mxu0 0.0
        %7739 = vmatpush1.msra.mxu0 0.0
        %7740 = vmatprep.subr.mxu0 0.0
        %7741 = vmatpush1.msra.mxu0 0.0
        %7742 = vmatprep.subr.mxu0 0.0
        %7743 = vmatpush1.msra.mxu0 0.0
        %7744 = vmatprep.subr.mxu0 0.0
        %7745 = vmatpush1.msra.mxu0 0.0
        %7746 = vmatprep.subr.mxu0 0.0
        %7747 = vmatpush1.msra.mxu0 0.0
        %7748 = vmatprep.subr.mxu0 0.0
        %7749 = vmatpush1.msra.mxu0 0.0
        %7750 = vmatprep.subr.mxu0 0.0
        %7751 = vmatpush1.msra.mxu0 0.0
        %7752 = vmatprep.subr.mxu0 0.0
        %7753 = vmatpush1.msra.mxu0 0.0
        %7754 = vmatprep.subr.mxu0 0.0
        %7755 = vmatpush1.msra.mxu0 0.0
        %7756 = vmatprep.subr.mxu0 0.0
        %7757 = vmatpush1.msra.mxu0 0.0
        %7758 = vmatprep.subr.mxu0 0.0
        %7759 = vmatpush1.msra.mxu0 0.0
        %7760 = vmatprep.subr.mxu0 0.0
        %7761 = vmatpush1.msra.mxu0 0.0
        %7762 = vmatprep.subr.mxu0 0.0
        %7763 = vmatpush1.msra.mxu0 0.0
        %7764 = vmatprep.subr.mxu0 0.0
        %7765 = vmatpush1.msra.mxu0 0.0
        %7766 = vmatprep.subr.mxu0 0.0
        %7767 = vmatpush1.msra.mxu0 0.0
        %7768 = vmatprep.mubr.f32.mxu0 0.0
        %7769 = vmatmul.mubr.f32.gmra.mrb[0].mxu0 %v6620
        %v7770 = vpop.f32.mrb[0].mxu0
        %v7771 = vadd.f32 0.0, %v7770
        %v7772 = vpop.f32.mrb[0].mxu0
        %7773 = vmatprep.mubr.f32.mxu0 0.0
        %7774 = vmatmul.mubr.f32.gmra.mrb[0].mxu0 %v6623
        %v7775 = vpop.f32.mrb[0].mxu0
        %v7776 = vadd.f32 0.0, %v7775
        %v7777 = vpop.f32.mrb[0].mxu0
        %7778 = vmatprep.mubr.f32.mxu0 0.0
        %7779 = vmatmul.mubr.f32.gmra.mrb[0].mxu0 %v6626
        %v7780 = vpop.f32.mrb[0].mxu0
        %v7781 = vadd.f32 0.0, %v7780
        %v7782 = vpop.f32.mrb[0].mxu0
        %7783 = vmatprep.mubr.f32.mxu0 0.0
        %7784 = vmatmul.mubr.f32.gmra.mrb[0].mxu0 %v6629
        %v7785 = vpop.f32.mrb[0].mxu0
        %v7786 = vadd.f32 0.0, %v7785
        %v7787 = vpop.f32.mrb[0].mxu0
        %7788 = vmatprep.mubr.f32.mxu0 0.0
        %7789 = vmatmul.mubr.f32.gmra.mrb[0].mxu0 %v6632
        %v7790 = vpop.f32.mrb[0].mxu0
        %v7791 = vadd.f32 0.0, %v7790
        %v7792 = vpop.f32.mrb[0].mxu0
        %7793 = vmatprep.mubr.f32.mxu0 0.0
        %7794 = vmatmul.mubr.f32.gmra.mrb[0].mxu0 %v6635
        %v7795 = vpop.f32.mrb[0].mxu0
        %v7796 = vadd.f32 0.0, %v7795
        %v7797 = vpop.f32.mrb[0].mxu0
        %7798 = vmatprep.mubr.f32.mxu0 0.0
        %7799 = vmatmul.mubr.f32.gmra.mrb[0].mxu0 %v6638
        %v7800 = vpop.f32.mrb[0].mxu0
        %v7801 = vadd.f32 0.0, %v7800
        %v7802 = vpop.f32.mrb[0].mxu0
        %7803 = vmatprep.mubr.f32.mxu0 0.0
        %7804 = vmatmul.mubr.f32.gmra.mrb[0].mxu0 %v6641
        %v7805 = vpop.f32.mrb[0].mxu0
        %v7806 = vadd.f32 0.0, %v7805
        %v7807 = vpop.f32.mrb[0].mxu0
        %7808 = vmatprep.mubr.f32.mxu0 0.0
        %7809 = vmatmul.mubr.f32.gmra.mrb[0].mxu0 %v6644
        %v7810 = vpop.f32.mrb[0].mxu0
        %v7811 = vadd.f32 0.0, %v7810
        %v7812 = vpop.f32.mrb[0].mxu0
        %7813 = vmatprep.mubr.f32.mxu0 0.0
        %7814 = vmatmul.mubr.f32.gmra.mrb[0].mxu0 %v6647
        %v7815 = vpop.f32.mrb[0].mxu0
        %v7816 = vadd.f32 0.0, %v7815
        %v7817 = vpop.f32.mrb[0].mxu0
        %7818 = vmatprep.mubr.f32.mxu0 0.0
        %7819 = vmatmul.mubr.f32.gmra.mrb[0].mxu0 %v6650
        %v7820 = vpop.f32.mrb[0].mxu0
        %v7821 = vadd.f32 0.0, %v7820
        %v7822 = vpop.f32.mrb[0].mxu0
        %7823 = vmatprep.mubr.f32.mxu0 0.0
        %7824 = vmatmul.mubr.f32.gmra.mrb[0].mxu0 %v6653
        %v7825 = vpop.f32.mrb[0].mxu0
        %v7826 = vadd.f32 0.0, %v7825
        %v7827 = vpop.f32.mrb[0].mxu0
        %7828 = vmatprep.mubr.f32.mxu0 0.0
        %7829 = vmatmul.mubr.f32.gmra.mrb[0].mxu0 %v6656
        %v7830 = vpop.f32.mrb[0].mxu0
        %v7831 = vadd.f32 0.0, %v7830
        %v7832 = vpop.f32.mrb[0].mxu0
        %7833 = vmatprep.mubr.f32.mxu0 0.0
        %7834 = vmatmul.mubr.f32.gmra.mrb[0].mxu0 %v6659
        %v7835 = vpop.f32.mrb[0].mxu0
        %v7836 = vadd.f32 0.0, %v7835
        %v7837 = vpop.f32.mrb[0].mxu0
        %7838 = vmatprep.mubr.f32.mxu0 0.0
        %7839 = vmatmul.mubr.f32.gmra.mrb[0].mxu0 %v6662
        %v7840 = vpop.f32.mrb[0].mxu0
        %v7841 = vadd.f32 0.0, %v7840
        %v7842 = vpop.f32.mrb[0].mxu0
        %7843 = vmatprep.mubr.f32.mxu0 0.0
        %7844 = vmatmul.mubr.f32.gmra.mrb[0].mxu0 %v6665
        %v7845 = vpop.f32.mrb[0].mxu0
        %v7846 = vadd.f32 0.0, %v7845
        %v7847 = vpop.f32.mrb[0].mxu0
        %7848 = vmatprep.mubr.f32.mxu0 0.0
        %7849 = vmatmul.mubr.f32.gmra.mrb[0].mxu0 %v6668
        %v7850 = vpop.f32.mrb[0].mxu0
        %v7851 = vadd.f32 0.0, %v7850
        %v7852 = vpop.f32.mrb[0].mxu0
        %7853 = vmatprep.mubr.f32.mxu0 0.0
        %7854 = vmatmul.mubr.f32.gmra.mrb[0].mxu0 %v6671
        %v7855 = vpop.f32.mrb[0].mxu0
        %v7856 = vadd.f32 0.0, %v7855
        %v7857 = vpop.f32.mrb[0].mxu0
        %7858 = vdwg.mxu0
        %v7860 = vsel %vm5569, %v7781, 0
        %v7863 = vsel %vm5569, %v7786, 0
        %7865 = vmatprep.subr.mxu0 0.0
        %7866 = vmatpush1.msra.mxu0 %v6833
        %7867 = vmatprep.subr.mxu0 0.0
        %7868 = vmatpush1.msra.mxu0 %v6834
        %7869 = vmatprep.subr.mxu0 0.0
        %7870 = vmatpush1.msra.mxu0 %v6835
        %7871 = vmatprep.subr.mxu0 0.0
        %7872 = vmatpush1.msra.mxu0 %v6836
        %7873 = vmatprep.subr.mxu0 0.0
        %7874 = vmatpush1.msra.mxu0 0.0
        %7875 = vmatprep.subr.mxu0 0.0
        %7876 = vmatpush1.msra.mxu0 0.0
        %7877 = vmatprep.subr.mxu0 0.0
        %7878 = vmatpush1.msra.mxu0 0.0
        %7879 = vmatprep.subr.mxu0 0.0
        %7880 = vmatpush1.msra.mxu0 0.0
        %7881 = vmatprep.subr.mxu0 0.0
        %7882 = vmatpush1.msra.mxu0 0.0
        %7883 = vmatprep.subr.mxu0 0.0
        %7884 = vmatpush1.msra.mxu0 0.0
        %7885 = vmatprep.subr.mxu0 0.0
        %7886 = vmatpush1.msra.mxu0 0.0
        %7887 = vmatprep.subr.mxu0 0.0
        %7888 = vmatpush1.msra.mxu0 0.0
        %7889 = vmatprep.subr.mxu0 0.0
        %7890 = vmatpush1.msra.mxu0 0.0
        %7891 = vmatprep.subr.mxu0 0.0
        %7892 = vmatpush1.msra.mxu0 0.0
        %7893 = vmatprep.subr.mxu0 0.0
        %7894 = vmatpush1.msra.mxu0 0.0
        %7895 = vmatprep.subr.mxu0 0.0
        %7896 = vmatpush1.msra.mxu0 0.0
        %7897 = vmatprep.subr.mxu0 0.0
        %7898 = vmatpush1.msra.mxu0 0.0
        %7899 = vmatprep.subr.mxu0 0.0
        %7900 = vmatpush1.msra.mxu0 0.0
        %7901 = vmatprep.subr.mxu0 0.0
        %7902 = vmatpush1.msra.mxu0 0.0
        %7903 = vmatprep.subr.mxu0 0.0
        %7904 = vmatpush1.msra.mxu0 0.0
        %7905 = vmatprep.subr.mxu0 0.0
        %7906 = vmatpush1.msra.mxu0 0.0
        %7907 = vmatprep.subr.mxu0 0.0
        %7908 = vmatpush1.msra.mxu0 0.0
        %7909 = vmatprep.subr.mxu0 0.0
        %7910 = vmatpush1.msra.mxu0 0.0
        %7911 = vmatprep.subr.mxu0 0.0
        %7912 = vmatpush1.msra.mxu0 0.0
        %7913 = vmatprep.subr.mxu0 0.0
        %7914 = vmatpush1.msra.mxu0 0.0
        %7915 = vmatprep.subr.mxu0 0.0
        %7916 = vmatpush1.msra.mxu0 0.0
        %7917 = vmatprep.subr.mxu0 0.0
        %7918 = vmatpush1.msra.mxu0 0.0
        %7919 = vmatprep.subr.mxu0 0.0
        %7920 = vmatpush1.msra.mxu0 0.0
        %7921 = vmatprep.subr.mxu0 0.0
        %7922 = vmatpush1.msra.mxu0 0.0
        %7923 = vmatprep.subr.mxu0 0.0
        %7924 = vmatpush1.msra.mxu0 0.0
        %7925 = vmatprep.subr.mxu0 0.0
        %7926 = vmatpush1.msra.mxu0 0.0
        %7927 = vmatprep.subr.mxu0 0.0
        %7928 = vmatpush1.msra.mxu0 0.0
        %7929 = vmatprep.mubr.f32.mxu0 0.0
        %7930 = vmatmul.mubr.f32.gmra.mrb[0].mxu0 %v7860
        %v7931 = vpop.f32.mrb[0].mxu0
        %v7932 = vadd.f32 0.0, %v7931
        %v7933 = vpop.f32.mrb[0].mxu0
        %7934 = vmatprep.mubr.f32.mxu0 0.0
        %7935 = vmatmul.mubr.f32.gmra.mrb[0].mxu0 %v7863
        %v7936 = vpop.f32.mrb[0].mxu0
        %v7937 = vadd.f32 0.0, %v7936
        %v7938 = vpop.f32.mrb[0].mxu0
        %7939 = vdwg.mxu0
        %v7941 = vsel %vm5569, %v7771, 0
        %v7944 = vsel %vm5569, %v7776, 0
        %7946 = vmatprep.subr.mxu0 0.0
        %7947 = vmatpush1.msra.mxu0 %v6828
        %7948 = vmatprep.subr.mxu0 0.0
        %7949 = vmatpush1.msra.mxu0 %v6829
        %7950 = vmatprep.subr.mxu0 0.0
        %7951 = vmatpush1.msra.mxu0 %v6830
        %7952 = vmatprep.subr.mxu0 0.0
        %7953 = vmatpush1.msra.mxu0 %v6831
        %7954 = vmatprep.subr.mxu0 0.0
        %7955 = vmatpush1.msra.mxu0 0.0
        %7956 = vmatprep.subr.mxu0 0.0
        %7957 = vmatpush1.msra.mxu0 0.0
        %7958 = vmatprep.subr.mxu0 0.0
        %7959 = vmatpush1.msra.mxu0 0.0
        %7960 = vmatprep.subr.mxu0 0.0
        %7961 = vmatpush1.msra.mxu0 0.0
        %7962 = vmatprep.subr.mxu0 0.0
        %7963 = vmatpush1.msra.mxu0 0.0
        %7964 = vmatprep.subr.mxu0 0.0
        %7965 = vmatpush1.msra.mxu0 0.0
        %7966 = vmatprep.subr.mxu0 0.0
        %7967 = vmatpush1.msra.mxu0 0.0
        %7968 = vmatprep.subr.mxu0 0.0
        %7969 = vmatpush1.msra.mxu0 0.0
        %7970 = vmatprep.subr.mxu0 0.0
        %7971 = vmatpush1.msra.mxu0 0.0
        %7972 = vmatprep.subr.mxu0 0.0
        %7973 = vmatpush1.msra.mxu0 0.0
        %7974 = vmatprep.subr.mxu0 0.0
        %7975 = vmatpush1.msra.mxu0 0.0
        %7976 = vmatprep.subr.mxu0 0.0
        %7977 = vmatpush1.msra.mxu0 0.0
        %7978 = vmatprep.subr.mxu0 0.0
        %7979 = vmatpush1.msra.mxu0 0.0
        %7980 = vmatprep.subr.mxu0 0.0
        %7981 = vmatpush1.msra.mxu0 0.0
        %7982 = vmatprep.subr.mxu0 0.0
        %7983 = vmatpush1.msra.mxu0 0.0
        %7984 = vmatprep.subr.mxu0 0.0
        %7985 = vmatpush1.msra.mxu0 0.0
        %7986 = vmatprep.subr.mxu0 0.0
        %7987 = vmatpush1.msra.mxu0 0.0
        %7988 = vmatprep.subr.mxu0 0.0
        %7989 = vmatpush1.msra.mxu0 0.0
        %7990 = vmatprep.subr.mxu0 0.0
        %7991 = vmatpush1.msra.mxu0 0.0
        %7992 = vmatprep.subr.mxu0 0.0
        %7993 = vmatpush1.msra.mxu0 0.0
        %7994 = vmatprep.subr.mxu0 0.0
        %7995 = vmatpush1.msra.mxu0 0.0
        %7996 = vmatprep.subr.mxu0 0.0
        %7997 = vmatpush1.msra.mxu0 0.0
        %7998 = vmatprep.subr.mxu0 0.0
        %7999 = vmatpush1.msra.mxu0 0.0
        %8000 = vmatprep.subr.mxu0 0.0
        %8001 = vmatpush1.msra.mxu0 0.0
        %8002 = vmatprep.subr.mxu0 0.0
        %8003 = vmatpush1.msra.mxu0 0.0
        %8004 = vmatprep.subr.mxu0 0.0
        %8005 = vmatpush1.msra.mxu0 0.0
        %8006 = vmatprep.subr.mxu0 0.0
        %8007 = vmatpush1.msra.mxu0 0.0
        %8008 = vmatprep.subr.mxu0 0.0
        %8009 = vmatpush1.msra.mxu0 0.0
        %8010 = vmatprep.mubr.f32.mxu0 0.0
        %8011 = vmatmul.mubr.f32.gmra.mrb[0].mxu0 %v7941
        %v8012 = vpop.f32.mrb[0].mxu0
        %v8013 = vadd.f32 %v7932, %v8012
        %v8014 = vpop.f32.mrb[0].mxu0
        %8015 = vmatprep.mubr.f32.mxu0 0.0
        %8016 = vmatmul.mubr.f32.gmra.mrb[0].mxu0 %v7944
        %v8017 = vpop.f32.mrb[0].mxu0
        %v8018 = vadd.f32 %v7937, %v8017
        %v8019 = vpop.f32.mrb[0].mxu0
        %8020 = vdwg.mxu0
        %v8022 = vsel %vm5569, %v7791, 0
        %v8025 = vsel %vm5569, %v7796, 0
        %8027 = vmatprep.subr.mxu0 0.0
        %8028 = vmatpush1.msra.mxu0 %v7000
        %8029 = vmatprep.subr.mxu0 0.0
        %8030 = vmatpush1.msra.mxu0 %v7001
        %8031 = vmatprep.subr.mxu0 0.0
        %8032 = vmatpush1.msra.mxu0 %v7002
        %8033 = vmatprep.subr.mxu0 0.0
        %8034 = vmatpush1.msra.mxu0 %v7003
        %8035 = vmatprep.subr.mxu0 0.0
        %8036 = vmatpush1.msra.mxu0 0.0
        %8037 = vmatprep.subr.mxu0 0.0
        %8038 = vmatpush1.msra.mxu0 0.0
        %8039 = vmatprep.subr.mxu0 0.0
        %8040 = vmatpush1.msra.mxu0 0.0
        %8041 = vmatprep.subr.mxu0 0.0
        %8042 = vmatpush1.msra.mxu0 0.0
        %8043 = vmatprep.subr.mxu0 0.0
        %8044 = vmatpush1.msra.mxu0 0.0
        %8045 = vmatprep.subr.mxu0 0.0
        %8046 = vmatpush1.msra.mxu0 0.0
        %8047 = vmatprep.subr.mxu0 0.0
        %8048 = vmatpush1.msra.mxu0 0.0
        %8049 = vmatprep.subr.mxu0 0.0
        %8050 = vmatpush1.msra.mxu0 0.0
        %8051 = vmatprep.subr.mxu0 0.0
        %8052 = vmatpush1.msra.mxu0 0.0
        %8053 = vmatprep.subr.mxu0 0.0
        %8054 = vmatpush1.msra.mxu0 0.0
        %8055 = vmatprep.subr.mxu0 0.0
        %8056 = vmatpush1.msra.mxu0 0.0
        %8057 = vmatprep.subr.mxu0 0.0
        %8058 = vmatpush1.msra.mxu0 0.0
        %8059 = vmatprep.subr.mxu0 0.0
        %8060 = vmatpush1.msra.mxu0 0.0
        %8061 = vmatprep.subr.mxu0 0.0
        %8062 = vmatpush1.msra.mxu0 0.0
        %8063 = vmatprep.subr.mxu0 0.0
        %8064 = vmatpush1.msra.mxu0 0.0
        %8065 = vmatprep.subr.mxu0 0.0
        %8066 = vmatpush1.msra.mxu0 0.0
        %8067 = vmatprep.subr.mxu0 0.0
        %8068 = vmatpush1.msra.mxu0 0.0
        %8069 = vmatprep.subr.mxu0 0.0
        %8070 = vmatpush1.msra.mxu0 0.0
        %8071 = vmatprep.subr.mxu0 0.0
        %8072 = vmatpush1.msra.mxu0 0.0
        %8073 = vmatprep.subr.mxu0 0.0
        %8074 = vmatpush1.msra.mxu0 0.0
        %8075 = vmatprep.subr.mxu0 0.0
        %8076 = vmatpush1.msra.mxu0 0.0
        %8077 = vmatprep.subr.mxu0 0.0
        %8078 = vmatpush1.msra.mxu0 0.0
        %8079 = vmatprep.subr.mxu0 0.0
        %8080 = vmatpush1.msra.mxu0 0.0
        %8081 = vmatprep.subr.mxu0 0.0
        %8082 = vmatpush1.msra.mxu0 0.0
        %8083 = vmatprep.subr.mxu0 0.0
        %8084 = vmatpush1.msra.mxu0 0.0
        %8085 = vmatprep.subr.mxu0 0.0
        %8086 = vmatpush1.msra.mxu0 0.0
        %8087 = vmatprep.subr.mxu0 0.0
        %8088 = vmatpush1.msra.mxu0 0.0
        %8089 = vmatprep.subr.mxu0 0.0
        %8090 = vmatpush1.msra.mxu0 0.0
        %8091 = vmatprep.mubr.f32.mxu0 0.0
        %8092 = vmatmul.mubr.f32.gmra.mrb[0].mxu0 %v8022
        %v8093 = vpop.f32.mrb[0].mxu0
        %v8094 = vadd.f32 0.0, %v8093
        %v8095 = vpop.f32.mrb[0].mxu0
        %8096 = vmatprep.mubr.f32.mxu0 0.0
        %8097 = vmatmul.mubr.f32.gmra.mrb[0].mxu0 %v8025
        %v8098 = vpop.f32.mrb[0].mxu0
        %v8099 = vadd.f32 0.0, %v8098
        %v8100 = vpop.f32.mrb[0].mxu0
        %8101 = vdwg.mxu0
        %v8102 = vadd.f32 %v8013, %v8094
        %v8103 = vadd.f32 %v8018, %v8099
        %v8105 = vsel %vm5569, %v7801, 0
        %v8108 = vsel %vm5569, %v7806, 0
        %8110 = vmatprep.subr.mxu0 0.0
        %8111 = vmatpush1.msra.mxu0 %v7088
        %8112 = vmatprep.subr.mxu0 0.0
        %8113 = vmatpush1.msra.mxu0 %v7089
        %8114 = vmatprep.subr.mxu0 0.0
        %8115 = vmatpush1.msra.mxu0 %v7090
        %8116 = vmatprep.subr.mxu0 0.0
        %8117 = vmatpush1.msra.mxu0 %v7091
        %8118 = vmatprep.subr.mxu0 0.0
        %8119 = vmatpush1.msra.mxu0 0.0
        %8120 = vmatprep.subr.mxu0 0.0
        %8121 = vmatpush1.msra.mxu0 0.0
        %8122 = vmatprep.subr.mxu0 0.0
        %8123 = vmatpush1.msra.mxu0 0.0
        %8124 = vmatprep.subr.mxu0 0.0
        %8125 = vmatpush1.msra.mxu0 0.0
        %8126 = vmatprep.subr.mxu0 0.0
        %8127 = vmatpush1.msra.mxu0 0.0
        %8128 = vmatprep.subr.mxu0 0.0
        %8129 = vmatpush1.msra.mxu0 0.0
        %8130 = vmatprep.subr.mxu0 0.0
        %8131 = vmatpush1.msra.mxu0 0.0
        %8132 = vmatprep.subr.mxu0 0.0
        %8133 = vmatpush1.msra.mxu0 0.0
        %8134 = vmatprep.subr.mxu0 0.0
        %8135 = vmatpush1.msra.mxu0 0.0
        %8136 = vmatprep.subr.mxu0 0.0
        %8137 = vmatpush1.msra.mxu0 0.0
        %8138 = vmatprep.subr.mxu0 0.0
        %8139 = vmatpush1.msra.mxu0 0.0
        %8140 = vmatprep.subr.mxu0 0.0
        %8141 = vmatpush1.msra.mxu0 0.0
        %8142 = vmatprep.subr.mxu0 0.0
        %8143 = vmatpush1.msra.mxu0 0.0
        %8144 = vmatprep.subr.mxu0 0.0
        %8145 = vmatpush1.msra.mxu0 0.0
        %8146 = vmatprep.subr.mxu0 0.0
        %8147 = vmatpush1.msra.mxu0 0.0
        %8148 = vmatprep.subr.mxu0 0.0
        %8149 = vmatpush1.msra.mxu0 0.0
        %8150 = vmatprep.subr.mxu0 0.0
        %8151 = vmatpush1.msra.mxu0 0.0
        %8152 = vmatprep.subr.mxu0 0.0
        %8153 = vmatpush1.msra.mxu0 0.0
        %8154 = vmatprep.subr.mxu0 0.0
        %8155 = vmatpush1.msra.mxu0 0.0
        %8156 = vmatprep.subr.mxu0 0.0
        %8157 = vmatpush1.msra.mxu0 0.0
        %8158 = vmatprep.subr.mxu0 0.0
        %8159 = vmatpush1.msra.mxu0 0.0
        %8160 = vmatprep.subr.mxu0 0.0
        %8161 = vmatpush1.msra.mxu0 0.0
        %8162 = vmatprep.subr.mxu0 0.0
        %8163 = vmatpush1.msra.mxu0 0.0
        %8164 = vmatprep.subr.mxu0 0.0
        %8165 = vmatpush1.msra.mxu0 0.0
        %8166 = vmatprep.subr.mxu0 0.0
        %8167 = vmatpush1.msra.mxu0 0.0
        %8168 = vmatprep.subr.mxu0 0.0
        %8169 = vmatpush1.msra.mxu0 0.0
        %8170 = vmatprep.subr.mxu0 0.0
        %8171 = vmatpush1.msra.mxu0 0.0
        %8172 = vmatprep.subr.mxu0 0.0
        %8173 = vmatpush1.msra.mxu0 0.0
        %8174 = vmatprep.mubr.f32.mxu0 0.0
        %8175 = vmatmul.mubr.f32.gmra.mrb[0].mxu0 %v8105
        %v8176 = vpop.f32.mrb[0].mxu0
        %v8177 = vadd.f32 0.0, %v8176
        %v8178 = vpop.f32.mrb[0].mxu0
        %8179 = vmatprep.mubr.f32.mxu0 0.0
        %8180 = vmatmul.mubr.f32.gmra.mrb[0].mxu0 %v8108
        %v8181 = vpop.f32.mrb[0].mxu0
        %v8182 = vadd.f32 0.0, %v8181
        %v8183 = vpop.f32.mrb[0].mxu0
        %8184 = vdwg.mxu0
        %v8185 = vadd.f32 %v8102, %v8177
        %v8186 = vadd.f32 %v8103, %v8182
        %v8188 = vsel %vm5569, %v7811, 0
        %v8191 = vsel %vm5569, %v7816, 0
        %8193 = vmatprep.subr.mxu0 0.0
        %8194 = vmatpush1.msra.mxu0 %v7176
        %8195 = vmatprep.subr.mxu0 0.0
        %8196 = vmatpush1.msra.mxu0 %v7177
        %8197 = vmatprep.subr.mxu0 0.0
        %8198 = vmatpush1.msra.mxu0 %v7178
        %8199 = vmatprep.subr.mxu0 0.0
        %8200 = vmatpush1.msra.mxu0 %v7179
        %8201 = vmatprep.subr.mxu0 0.0
        %8202 = vmatpush1.msra.mxu0 0.0
        %8203 = vmatprep.subr.mxu0 0.0
        %8204 = vmatpush1.msra.mxu0 0.0
        %8205 = vmatprep.subr.mxu0 0.0
        %8206 = vmatpush1.msra.mxu0 0.0
        %8207 = vmatprep.subr.mxu0 0.0
        %8208 = vmatpush1.msra.mxu0 0.0
        %8209 = vmatprep.subr.mxu0 0.0
        %8210 = vmatpush1.msra.mxu0 0.0
        %8211 = vmatprep.subr.mxu0 0.0
        %8212 = vmatpush1.msra.mxu0 0.0
        %8213 = vmatprep.subr.mxu0 0.0
        %8214 = vmatpush1.msra.mxu0 0.0
        %8215 = vmatprep.subr.mxu0 0.0
        %8216 = vmatpush1.msra.mxu0 0.0
        %8217 = vmatprep.subr.mxu0 0.0
        %8218 = vmatpush1.msra.mxu0 0.0
        %8219 = vmatprep.subr.mxu0 0.0
        %8220 = vmatpush1.msra.mxu0 0.0
        %8221 = vmatprep.subr.mxu0 0.0
        %8222 = vmatpush1.msra.mxu0 0.0
        %8223 = vmatprep.subr.mxu0 0.0
        %8224 = vmatpush1.msra.mxu0 0.0
        %8225 = vmatprep.subr.mxu0 0.0
        %8226 = vmatpush1.msra.mxu0 0.0
        %8227 = vmatprep.subr.mxu0 0.0
        %8228 = vmatpush1.msra.mxu0 0.0
        %8229 = vmatprep.subr.mxu0 0.0
        %8230 = vmatpush1.msra.mxu0 0.0
        %8231 = vmatprep.subr.mxu0 0.0
        %8232 = vmatpush1.msra.mxu0 0.0
        %8233 = vmatprep.subr.mxu0 0.0
        %8234 = vmatpush1.msra.mxu0 0.0
        %8235 = vmatprep.subr.mxu0 0.0
        %8236 = vmatpush1.msra.mxu0 0.0
        %8237 = vmatprep.subr.mxu0 0.0
        %8238 = vmatpush1.msra.mxu0 0.0
        %8239 = vmatprep.subr.mxu0 0.0
        %8240 = vmatpush1.msra.mxu0 0.0
        %8241 = vmatprep.subr.mxu0 0.0
        %8242 = vmatpush1.msra.mxu0 0.0
        %8243 = vmatprep.subr.mxu0 0.0
        %8244 = vmatpush1.msra.mxu0 0.0
        %8245 = vmatprep.subr.mxu0 0.0
        %8246 = vmatpush1.msra.mxu0 0.0
        %8247 = vmatprep.subr.mxu0 0.0
        %8248 = vmatpush1.msra.mxu0 0.0
        %8249 = vmatprep.subr.mxu0 0.0
        %8250 = vmatpush1.msra.mxu0 0.0
        %8251 = vmatprep.subr.mxu0 0.0
        %8252 = vmatpush1.msra.mxu0 0.0
        %8253 = vmatprep.subr.mxu0 0.0
        %8254 = vmatpush1.msra.mxu0 0.0
        %8255 = vmatprep.subr.mxu0 0.0
        %8256 = vmatpush1.msra.mxu0 0.0
        %8257 = vmatprep.mubr.f32.mxu0 0.0
        %8258 = vmatmul.mubr.f32.gmra.mrb[0].mxu0 %v8188
        %v8259 = vpop.f32.mrb[0].mxu0
        %v8260 = vadd.f32 0.0, %v8259
        %v8261 = vpop.f32.mrb[0].mxu0
        %8262 = vmatprep.mubr.f32.mxu0 0.0
        %8263 = vmatmul.mubr.f32.gmra.mrb[0].mxu0 %v8191
        %v8264 = vpop.f32.mrb[0].mxu0
        %v8265 = vadd.f32 0.0, %v8264
        %v8266 = vpop.f32.mrb[0].mxu0
        %8267 = vdwg.mxu0
        %v8268 = vadd.f32 %v8185, %v8260
        %v8269 = vadd.f32 %v8186, %v8265
        %v8271 = vsel %vm5569, %v7821, 0
        %v8274 = vsel %vm5569, %v7826, 0
        %8276 = vmatprep.subr.mxu0 0.0
        %8277 = vmatpush1.msra.mxu0 %v7264
        %8278 = vmatprep.subr.mxu0 0.0
        %8279 = vmatpush1.msra.mxu0 %v7265
        %8280 = vmatprep.subr.mxu0 0.0
        %8281 = vmatpush1.msra.mxu0 %v7266
        %8282 = vmatprep.subr.mxu0 0.0
        %8283 = vmatpush1.msra.mxu0 %v7267
        %8284 = vmatprep.subr.mxu0 0.0
        %8285 = vmatpush1.msra.mxu0 0.0
        %8286 = vmatprep.subr.mxu0 0.0
        %8287 = vmatpush1.msra.mxu0 0.0
        %8288 = vmatprep.subr.mxu0 0.0
        %8289 = vmatpush1.msra.mxu0 0.0
        %8290 = vmatprep.subr.mxu0 0.0
        %8291 = vmatpush1.msra.mxu0 0.0
        %8292 = vmatprep.subr.mxu0 0.0
        %8293 = vmatpush1.msra.mxu0 0.0
        %8294 = vmatprep.subr.mxu0 0.0
        %8295 = vmatpush1.msra.mxu0 0.0
        %8296 = vmatprep.subr.mxu0 0.0
        %8297 = vmatpush1.msra.mxu0 0.0
        %8298 = vmatprep.subr.mxu0 0.0
        %8299 = vmatpush1.msra.mxu0 0.0
        %8300 = vmatprep.subr.mxu0 0.0
        %8301 = vmatpush1.msra.mxu0 0.0
        %8302 = vmatprep.subr.mxu0 0.0
        %8303 = vmatpush1.msra.mxu0 0.0
        %8304 = vmatprep.subr.mxu0 0.0
        %8305 = vmatpush1.msra.mxu0 0.0
        %8306 = vmatprep.subr.mxu0 0.0
        %8307 = vmatpush1.msra.mxu0 0.0
        %8308 = vmatprep.subr.mxu0 0.0
        %8309 = vmatpush1.msra.mxu0 0.0
        %8310 = vmatprep.subr.mxu0 0.0
        %8311 = vmatpush1.msra.mxu0 0.0
        %8312 = vmatprep.subr.mxu0 0.0
        %8313 = vmatpush1.msra.mxu0 0.0
        %8314 = vmatprep.subr.mxu0 0.0
        %8315 = vmatpush1.msra.mxu0 0.0
        %8316 = vmatprep.subr.mxu0 0.0
        %8317 = vmatpush1.msra.mxu0 0.0
        %8318 = vmatprep.subr.mxu0 0.0
        %8319 = vmatpush1.msra.mxu0 0.0
        %8320 = vmatprep.subr.mxu0 0.0
        %8321 = vmatpush1.msra.mxu0 0.0
        %8322 = vmatprep.subr.mxu0 0.0
        %8323 = vmatpush1.msra.mxu0 0.0
        %8324 = vmatprep.subr.mxu0 0.0
        %8325 = vmatpush1.msra.mxu0 0.0
        %8326 = vmatprep.subr.mxu0 0.0
        %8327 = vmatpush1.msra.mxu0 0.0
        %8328 = vmatprep.subr.mxu0 0.0
        %8329 = vmatpush1.msra.mxu0 0.0
        %8330 = vmatprep.subr.mxu0 0.0
        %8331 = vmatpush1.msra.mxu0 0.0
        %8332 = vmatprep.subr.mxu0 0.0
        %8333 = vmatpush1.msra.mxu0 0.0
        %8334 = vmatprep.subr.mxu0 0.0
        %8335 = vmatpush1.msra.mxu0 0.0
        %8336 = vmatprep.subr.mxu0 0.0
        %8337 = vmatpush1.msra.mxu0 0.0
        %8338 = vmatprep.subr.mxu0 0.0
        %8339 = vmatpush1.msra.mxu0 0.0
        %8340 = vmatprep.mubr.f32.mxu0 0.0
        %8341 = vmatmul.mubr.f32.gmra.mrb[0].mxu0 %v8271
        %v8342 = vpop.f32.mrb[0].mxu0
        %v8343 = vadd.f32 0.0, %v8342
        %v8344 = vpop.f32.mrb[0].mxu0
        %8345 = vmatprep.mubr.f32.mxu0 0.0
        %8346 = vmatmul.mubr.f32.gmra.mrb[0].mxu0 %v8274
        %v8347 = vpop.f32.mrb[0].mxu0
        %v8348 = vadd.f32 0.0, %v8347
        %v8349 = vpop.f32.mrb[0].mxu0
        %8350 = vdwg.mxu0
        %v8351 = vadd.f32 %v8268, %v8343
        %v8352 = vadd.f32 %v8269, %v8348
        %v8354 = vsel %vm5569, %v7831, 0
        %v8357 = vsel %vm5569, %v7836, 0
        %8359 = vmatprep.subr.mxu0 0.0
        %8360 = vmatpush1.msra.mxu0 %v7352
        %8361 = vmatprep.subr.mxu0 0.0
        %8362 = vmatpush1.msra.mxu0 %v7353
        %8363 = vmatprep.subr.mxu0 0.0
        %8364 = vmatpush1.msra.mxu0 %v7354
        %8365 = vmatprep.subr.mxu0 0.0
        %8366 = vmatpush1.msra.mxu0 %v7355
        %8367 = vmatprep.subr.mxu0 0.0
        %8368 = vmatpush1.msra.mxu0 0.0
        %8369 = vmatprep.subr.mxu0 0.0
        %8370 = vmatpush1.msra.mxu0 0.0
        %8371 = vmatprep.subr.mxu0 0.0
        %8372 = vmatpush1.msra.mxu0 0.0
        %8373 = vmatprep.subr.mxu0 0.0
        %8374 = vmatpush1.msra.mxu0 0.0
        %8375 = vmatprep.subr.mxu0 0.0
        %8376 = vmatpush1.msra.mxu0 0.0
        %8377 = vmatprep.subr.mxu0 0.0
        %8378 = vmatpush1.msra.mxu0 0.0
        %8379 = vmatprep.subr.mxu0 0.0
        %8380 = vmatpush1.msra.mxu0 0.0
        %8381 = vmatprep.subr.mxu0 0.0
        %8382 = vmatpush1.msra.mxu0 0.0
        %8383 = vmatprep.subr.mxu0 0.0
        %8384 = vmatpush1.msra.mxu0 0.0
        %8385 = vmatprep.subr.mxu0 0.0
        %8386 = vmatpush1.msra.mxu0 0.0
        %8387 = vmatprep.subr.mxu0 0.0
        %8388 = vmatpush1.msra.mxu0 0.0
        %8389 = vmatprep.subr.mxu0 0.0
        %8390 = vmatpush1.msra.mxu0 0.0
        %8391 = vmatprep.subr.mxu0 0.0
        %8392 = vmatpush1.msra.mxu0 0.0
        %8393 = vmatprep.subr.mxu0 0.0
        %8394 = vmatpush1.msra.mxu0 0.0
        %8395 = vmatprep.subr.mxu0 0.0
        %8396 = vmatpush1.msra.mxu0 0.0
        %8397 = vmatprep.subr.mxu0 0.0
        %8398 = vmatpush1.msra.mxu0 0.0
        %8399 = vmatprep.subr.mxu0 0.0
        %8400 = vmatpush1.msra.mxu0 0.0
        %8401 = vmatprep.subr.mxu0 0.0
        %8402 = vmatpush1.msra.mxu0 0.0
        %8403 = vmatprep.subr.mxu0 0.0
        %8404 = vmatpush1.msra.mxu0 0.0
        %8405 = vmatprep.subr.mxu0 0.0
        %8406 = vmatpush1.msra.mxu0 0.0
        %8407 = vmatprep.subr.mxu0 0.0
        %8408 = vmatpush1.msra.mxu0 0.0
        %8409 = vmatprep.subr.mxu0 0.0
        %8410 = vmatpush1.msra.mxu0 0.0
        %8411 = vmatprep.subr.mxu0 0.0
        %8412 = vmatpush1.msra.mxu0 0.0
        %8413 = vmatprep.subr.mxu0 0.0
        %8414 = vmatpush1.msra.mxu0 0.0
        %8415 = vmatprep.subr.mxu0 0.0
        %8416 = vmatpush1.msra.mxu0 0.0
        %8417 = vmatprep.subr.mxu0 0.0
        %8418 = vmatpush1.msra.mxu0 0.0
        %8419 = vmatprep.subr.mxu0 0.0
        %8420 = vmatpush1.msra.mxu0 0.0
        %8421 = vmatprep.subr.mxu0 0.0
        %8422 = vmatpush1.msra.mxu0 0.0
        %8423 = vmatprep.mubr.f32.mxu0 0.0
        %8424 = vmatmul.mubr.f32.gmra.mrb[0].mxu0 %v8354
        %v8425 = vpop.f32.mrb[0].mxu0
        %v8426 = vadd.f32 0.0, %v8425
        %v8427 = vpop.f32.mrb[0].mxu0
        %8428 = vmatprep.mubr.f32.mxu0 0.0
        %8429 = vmatmul.mubr.f32.gmra.mrb[0].mxu0 %v8357
        %v8430 = vpop.f32.mrb[0].mxu0
        %v8431 = vadd.f32 0.0, %v8430
        %v8432 = vpop.f32.mrb[0].mxu0
        %8433 = vdwg.mxu0
        %v8434 = vadd.f32 %v8351, %v8426
        %v8435 = vadd.f32 %v8352, %v8431
        %v8437 = vsel %vm5569, %v7841, 0
        %v8440 = vsel %vm5569, %v7846, 0
        %8442 = vmatprep.subr.mxu0 0.0
        %8443 = vmatpush1.msra.mxu0 %v7440
        %8444 = vmatprep.subr.mxu0 0.0
        %8445 = vmatpush1.msra.mxu0 %v7441
        %8446 = vmatprep.subr.mxu0 0.0
        %8447 = vmatpush1.msra.mxu0 %v7442
        %8448 = vmatprep.subr.mxu0 0.0
        %8449 = vmatpush1.msra.mxu0 %v7443
        %8450 = vmatprep.subr.mxu0 0.0
        %8451 = vmatpush1.msra.mxu0 0.0
        %8452 = vmatprep.subr.mxu0 0.0
        %8453 = vmatpush1.msra.mxu0 0.0
        %8454 = vmatprep.subr.mxu0 0.0
        %8455 = vmatpush1.msra.mxu0 0.0
        %8456 = vmatprep.subr.mxu0 0.0
        %8457 = vmatpush1.msra.mxu0 0.0
        %8458 = vmatprep.subr.mxu0 0.0
        %8459 = vmatpush1.msra.mxu0 0.0
        %8460 = vmatprep.subr.mxu0 0.0
        %8461 = vmatpush1.msra.mxu0 0.0
        %8462 = vmatprep.subr.mxu0 0.0
        %8463 = vmatpush1.msra.mxu0 0.0
        %8464 = vmatprep.subr.mxu0 0.0
        %8465 = vmatpush1.msra.mxu0 0.0
        %8466 = vmatprep.subr.mxu0 0.0
        %8467 = vmatpush1.msra.mxu0 0.0
        %8468 = vmatprep.subr.mxu0 0.0
        %8469 = vmatpush1.msra.mxu0 0.0
        %8470 = vmatprep.subr.mxu0 0.0
        %8471 = vmatpush1.msra.mxu0 0.0
        %8472 = vmatprep.subr.mxu0 0.0
        %8473 = vmatpush1.msra.mxu0 0.0
        %8474 = vmatprep.subr.mxu0 0.0
        %8475 = vmatpush1.msra.mxu0 0.0
        %8476 = vmatprep.subr.mxu0 0.0
        %8477 = vmatpush1.msra.mxu0 0.0
        %8478 = vmatprep.subr.mxu0 0.0
        %8479 = vmatpush1.msra.mxu0 0.0
        %8480 = vmatprep.subr.mxu0 0.0
        %8481 = vmatpush1.msra.mxu0 0.0
        %8482 = vmatprep.subr.mxu0 0.0
        %8483 = vmatpush1.msra.mxu0 0.0
        %8484 = vmatprep.subr.mxu0 0.0
        %8485 = vmatpush1.msra.mxu0 0.0
        %8486 = vmatprep.subr.mxu0 0.0
        %8487 = vmatpush1.msra.mxu0 0.0
        %8488 = vmatprep.subr.mxu0 0.0
        %8489 = vmatpush1.msra.mxu0 0.0
        %8490 = vmatprep.subr.mxu0 0.0
        %8491 = vmatpush1.msra.mxu0 0.0
        %8492 = vmatprep.subr.mxu0 0.0
        %8493 = vmatpush1.msra.mxu0 0.0
        %8494 = vmatprep.subr.mxu0 0.0
        %8495 = vmatpush1.msra.mxu0 0.0
        %8496 = vmatprep.subr.mxu0 0.0
        %8497 = vmatpush1.msra.mxu0 0.0
        %8498 = vmatprep.subr.mxu0 0.0
        %8499 = vmatpush1.msra.mxu0 0.0
        %8500 = vmatprep.subr.mxu0 0.0
        %8501 = vmatpush1.msra.mxu0 0.0
        %8502 = vmatprep.subr.mxu0 0.0
        %8503 = vmatpush1.msra.mxu0 0.0
        %8504 = vmatprep.subr.mxu0 0.0
        %8505 = vmatpush1.msra.mxu0 0.0
        %8506 = vmatprep.mubr.f32.mxu0 0.0
        %8507 = vmatmul.mubr.f32.gmra.mrb[0].mxu0 %v8437
        %v8508 = vpop.f32.mrb[0].mxu0
        %v8509 = vadd.f32 0.0, %v8508
        %v8510 = vpop.f32.mrb[0].mxu0
        %8511 = vmatprep.mubr.f32.mxu0 0.0
        %8512 = vmatmul.mubr.f32.gmra.mrb[0].mxu0 %v8440
        %v8513 = vpop.f32.mrb[0].mxu0
        %v8514 = vadd.f32 0.0, %v8513
        %v8515 = vpop.f32.mrb[0].mxu0
        %8516 = vdwg.mxu0
        %v8517 = vadd.f32 %v8434, %v8509
        %v8518 = vadd.f32 %v8435, %v8514
        %v8520 = vsel %vm5569, %v7851, 0
        %v8523 = vsel %vm5569, %v7856, 0
        %8525 = vmatprep.subr.mxu0 0.0
        %8526 = vmatpush1.msra.mxu0 %v7528
        %8527 = vmatprep.subr.mxu0 0.0
        %8528 = vmatpush1.msra.mxu0 %v7529
        %8529 = vmatprep.subr.mxu0 0.0
        %8530 = vmatpush1.msra.mxu0 %v7530
        %8531 = vmatprep.subr.mxu0 0.0
        %8532 = vmatpush1.msra.mxu0 %v7531
        %8533 = vmatprep.subr.mxu0 0.0
        %8534 = vmatpush1.msra.mxu0 0.0
        %8535 = vmatprep.subr.mxu0 0.0
        %8536 = vmatpush1.msra.mxu0 0.0
        %8537 = vmatprep.subr.mxu0 0.0
        %8538 = vmatpush1.msra.mxu0 0.0
        %8539 = vmatprep.subr.mxu0 0.0
        %8540 = vmatpush1.msra.mxu0 0.0
        %8541 = vmatprep.subr.mxu0 0.0
        %8542 = vmatpush1.msra.mxu0 0.0
        %8543 = vmatprep.subr.mxu0 0.0
        %8544 = vmatpush1.msra.mxu0 0.0
        %8545 = vmatprep.subr.mxu0 0.0
        %8546 = vmatpush1.msra.mxu0 0.0
        %8547 = vmatprep.subr.mxu0 0.0
        %8548 = vmatpush1.msra.mxu0 0.0
        %8549 = vmatprep.subr.mxu0 0.0
        %8550 = vmatpush1.msra.mxu0 0.0
        %8551 = vmatprep.subr.mxu0 0.0
        %8552 = vmatpush1.msra.mxu0 0.0
        %8553 = vmatprep.subr.mxu0 0.0
        %8554 = vmatpush1.msra.mxu0 0.0
        %8555 = vmatprep.subr.mxu0 0.0
        %8556 = vmatpush1.msra.mxu0 0.0
        %8557 = vmatprep.subr.mxu0 0.0
        %8558 = vmatpush1.msra.mxu0 0.0
        %8559 = vmatprep.subr.mxu0 0.0
        %8560 = vmatpush1.msra.mxu0 0.0
        %8561 = vmatprep.subr.mxu0 0.0
        %8562 = vmatpush1.msra.mxu0 0.0
        %8563 = vmatprep.subr.mxu0 0.0
        %8564 = vmatpush1.msra.mxu0 0.0
        %8565 = vmatprep.subr.mxu0 0.0
        %8566 = vmatpush1.msra.mxu0 0.0
        %8567 = vmatprep.subr.mxu0 0.0
        %8568 = vmatpush1.msra.mxu0 0.0
        %8569 = vmatprep.subr.mxu0 0.0
        %8570 = vmatpush1.msra.mxu0 0.0
        %8571 = vmatprep.subr.mxu0 0.0
        %8572 = vmatpush1.msra.mxu0 0.0
        %8573 = vmatprep.subr.mxu0 0.0
        %8574 = vmatpush1.msra.mxu0 0.0
        %8575 = vmatprep.subr.mxu0 0.0
        %8576 = vmatpush1.msra.mxu0 0.0
        %8577 = vmatprep.subr.mxu0 0.0
        %8578 = vmatpush1.msra.mxu0 0.0
        %8579 = vmatprep.subr.mxu0 0.0
        %8580 = vmatpush1.msra.mxu0 0.0
        %8581 = vmatprep.subr.mxu0 0.0
        %8582 = vmatpush1.msra.mxu0 0.0
        %8583 = vmatprep.subr.mxu0 0.0
        %8584 = vmatpush1.msra.mxu0 0.0
        %8585 = vmatprep.subr.mxu0 0.0
        %8586 = vmatpush1.msra.mxu0 0.0
        %8587 = vmatprep.subr.mxu0 0.0
        %8588 = vmatpush1.msra.mxu0 0.0
        %8589 = vmatprep.mubr.f32.mxu0 0.0
        %8590 = vmatmul.mubr.f32.gmra.mrb[0].mxu0 %v8520
        %v8591 = vpop.f32.mrb[0].mxu0
        %v8592 = vadd.f32 0.0, %v8591
        %v8593 = vpop.f32.mrb[0].mxu0
        %8594 = vmatprep.mubr.f32.mxu0 0.0
        %8595 = vmatmul.mubr.f32.gmra.mrb[0].mxu0 %v8523
        %v8596 = vpop.f32.mrb[0].mxu0
        %v8597 = vadd.f32 0.0, %v8596
        %v8598 = vpop.f32.mrb[0].mxu0
        %8599 = vdwg.mxu0
        %v8600 = vadd.f32 %v8517, %v8592
        %v8601 = vadd.f32 %v8518, %v8597
        %v8602 = vmax.f32 %v8600, 0.0
        %v8603 = vmax.f32 %v8601, 0.0
        %v8605 = vsel %vm3824, %v8602, 0
        %v8608 = vsel %vm3824, %v8603, 0
        %8610 = vmatprep.subr.mxu0 0.0
        %8611 = vmatpush1.msra.mxu0 %v7617
        %8612 = vmatprep.subr.mxu0 0.0
        %8613 = vmatpush1.msra.mxu0 %v7618
        %8614 = vmatprep.subr.mxu0 0.0
        %8615 = vmatpush1.msra.mxu0 0.0
        %8616 = vmatprep.subr.mxu0 0.0
        %8617 = vmatpush1.msra.mxu0 0.0
        %8618 = vmatprep.subr.mxu0 0.0
        %8619 = vmatpush1.msra.mxu0 0.0
        %8620 = vmatprep.subr.mxu0 0.0
        %8621 = vmatpush1.msra.mxu0 0.0
        %8622 = vmatprep.subr.mxu0 0.0
        %8623 = vmatpush1.msra.mxu0 0.0
        %8624 = vmatprep.subr.mxu0 0.0
        %8625 = vmatpush1.msra.mxu0 0.0
        %8626 = vmatprep.subr.mxu0 0.0
        %8627 = vmatpush1.msra.mxu0 0.0
        %8628 = vmatprep.subr.mxu0 0.0
        %8629 = vmatpush1.msra.mxu0 0.0
        %8630 = vmatprep.subr.mxu0 0.0
        %8631 = vmatpush1.msra.mxu0 0.0
        %8632 = vmatprep.subr.mxu0 0.0
        %8633 = vmatpush1.msra.mxu0 0.0
        %8634 = vmatprep.subr.mxu0 0.0
        %8635 = vmatpush1.msra.mxu0 0.0
        %8636 = vmatprep.subr.mxu0 0.0
        %8637 = vmatpush1.msra.mxu0 0.0
        %8638 = vmatprep.subr.mxu0 0.0
        %8639 = vmatpush1.msra.mxu0 0.0
        %8640 = vmatprep.subr.mxu0 0.0
        %8641 = vmatpush1.msra.mxu0 0.0
        %8642 = vmatprep.subr.mxu0 0.0
        %8643 = vmatpush1.msra.mxu0 0.0
        %8644 = vmatprep.subr.mxu0 0.0
        %8645 = vmatpush1.msra.mxu0 0.0
        %8646 = vmatprep.subr.mxu0 0.0
        %8647 = vmatpush1.msra.mxu0 0.0
        %8648 = vmatprep.subr.mxu0 0.0
        %8649 = vmatpush1.msra.mxu0 0.0
        %8650 = vmatprep.subr.mxu0 0.0
        %8651 = vmatpush1.msra.mxu0 0.0
        %8652 = vmatprep.subr.mxu0 0.0
        %8653 = vmatpush1.msra.mxu0 0.0
        %8654 = vmatprep.subr.mxu0 0.0
        %8655 = vmatpush1.msra.mxu0 0.0
        %8656 = vmatprep.subr.mxu0 0.0
        %8657 = vmatpush1.msra.mxu0 0.0
        %8658 = vmatprep.subr.mxu0 0.0
        %8659 = vmatpush1.msra.mxu0 0.0
        %8660 = vmatprep.subr.mxu0 0.0
        %8661 = vmatpush1.msra.mxu0 0.0
        %8662 = vmatprep.subr.mxu0 0.0
        %8663 = vmatpush1.msra.mxu0 0.0
        %8664 = vmatprep.subr.mxu0 0.0
        %8665 = vmatpush1.msra.mxu0 0.0
        %8666 = vmatprep.subr.mxu0 0.0
        %8667 = vmatpush1.msra.mxu0 0.0
        %8668 = vmatprep.subr.mxu0 0.0
        %8669 = vmatpush1.msra.mxu0 0.0
        %8670 = vmatprep.subr.mxu0 0.0
        %8671 = vmatpush1.msra.mxu0 0.0
        %8672 = vmatprep.subr.mxu0 0.0
        %8673 = vmatpush1.msra.mxu0 0.0
        %8674 = vmatprep.mubr.f32.mxu0 0.0
        %8675 = vmatmul.mubr.f32.gmra.mrb[0].mxu0 %v8605
        %v8676 = vpop.f32.mrb[0].mxu0
        %v8677 = vadd.f32 0.0, %v8676
        %v8678 = vpop.f32.mrb[0].mxu0
        %8679 = vmatprep.mubr.f32.mxu0 0.0
        %8680 = vmatmul.mubr.f32.gmra.mrb[0].mxu0 %v8608
        %v8681 = vpop.f32.mrb[0].mxu0
        %v8682 = vadd.f32 0.0, %v8681
        %v8683 = vpop.f32.mrb[0].mxu0
        %8684 = vdwg.mxu0
        %v8685 = vadd.f32 %v7700, %v8677
        %v8686 = vadd.f32 %v7701, %v8682
        %v8687 = vmax.f32 %v8685, 0.0
        %v8688 = vmax.f32 %v8686, 0.0
        %8689 = vst.msk [vmem:[%s545] sm:$0xff] %vm5569, %v8687
        %8690 = vst.msk [vmem:[%s545 + $0x8] sm:$0xff] %vm5569, %v8688
        %s8691 = sand.u32 %s303, 1
        %s8692 = scalar_lea.sflag [#allocation4], %s8691
        %s8693 = sand.u32 %s303, 1
        %s8694 = smul.addr %s8693, 64
        %s8695 = scalar_lea.vmem [#allocation7], %s8694
        %s8696 = sand.u32 %s38, 1
        %s8697 = scalar_lea.sflag [#allocation9], %s8696
        %s8698 = sand.u32 %s329, 1
        %s8699 = smul.addr %s8698, 16
        %s8700 = scalar_lea.vmem [#allocation8], %s8699
        %s8701 = sand.u32 %s38, 1
        %s8702 = scalar_lea.sflag [#allocation9], %s8701
        %s8703 = sand.u32 %s355, 1
        %s8704 = smul.addr %s8703, 16
        %s8705 = scalar_lea.vmem [#allocation10], %s8704
        %s8706 = sand.u32 %s381, 1
        %s8707 = scalar_lea.sflag [#allocation12], %s8706
        %s8708 = sand.u32 %s381, 1
        %s8709 = smul.addr %s8708, 16
        %s8710 = scalar_lea.vmem [#allocation11], %s8709
        // Predicated region
        $region77: #{encoder1_forward.1} parent=67 // pred_check
          %p8711 = pneg %p313
        $region78: #{encoder1_forward.1} parent=67 // pred_check_branch
          %8713 = sbr.rel (%p8711) target = $region80
        $region79: #{encoder1_forward.1} parent=67 // pred_region
          %s8715 = ssub.s32 1024, 1024
          %8716 = vsyncadd %s8692, %s8715
          %s8717 = smul.addr %s38, 8
          %s8718 = smul.addr %s8717, 128
          %s8719 = scalar_lea.hbm %s12, %s8718
          %s8720 = sshll.u32 %s8695, 4
          %s8721 = int_to_ptr.vmem [resolvable:$true] %s8720
          %8726 = dma.vmem_to_hbm [thread:$0]  %s8721, 1024, %s8719, %s8692, 128, 128, 8
        $region80: #{encoder1_forward.1} parent=67 // pred_fallthru
          _
        // Predicated region
        $region81: #{encoder1_forward.1} parent=67 // pred_check
          %p8727 = pneg %p339
        $region82: #{encoder1_forward.1} parent=67 // pred_check_branch
          %8729 = sbr.rel (%p8727) target = $region84
        $region83: #{encoder1_forward.1} parent=67 // pred_region
          %s8731 = ssub.s32 256, 256
          %8732 = vsyncadd %s8697, %s8731
          %s8733 = smul.addr %s38, 2
          %s8734 = smul.addr %s8733, 128
          %s8735 = scalar_lea.hbm %s13, %s8734
          %s8736 = sshll.u32 %s8700, 4
          %s8737 = int_to_ptr.vmem [resolvable:$true] %s8736
          %8742 = dma.vmem_to_hbm [thread:$0]  %s8737, 256, %s8735, %s8697, 128, 128, 8
        $region84: #{encoder1_forward.1} parent=67 // pred_fallthru
          _
        // Predicated region
        $region85: #{encoder1_forward.1} parent=67 // pred_check
          %p8743 = pneg %p365
        $region86: #{encoder1_forward.1} parent=67 // pred_check_branch
          %8745 = sbr.rel (%p8743) target = $region88
        $region87: #{encoder1_forward.1} parent=67 // pred_region
          %s8747 = ssub.s32 256, 256
          %8748 = vsyncadd %s8702, %s8747
          %s8749 = smul.addr %s38, 2
          %s8750 = smul.addr %s8749, 128
          %s8751 = scalar_lea.hbm %s14, %s8750
          %s8752 = sshll.u32 %s8705, 4
          %s8753 = int_to_ptr.vmem [resolvable:$true] %s8752
          %8758 = dma.vmem_to_hbm [thread:$0]  %s8753, 256, %s8751, %s8702, 128, 128, 8
        $region88: #{encoder1_forward.1} parent=67 // pred_fallthru
          _
        // Predicated region
        $region89: #{encoder1_forward.1} parent=67 // pred_check
          %p8759 = pneg %p391
        $region90: #{encoder1_forward.1} parent=67 // pred_check_branch
          %8761 = sbr.rel (%p8759) target = $region92
        $region91: #{encoder1_forward.1} parent=67 // pred_region
          %s8763 = ssub.s32 256, 256
          %8764 = vsyncadd %s8707, %s8763
          %s8765 = smul.addr %s38, 2
          %s8766 = smul.addr %s8765, 128
          %s8767 = scalar_lea.hbm %s15, %s8766
          %s8768 = sshll.u32 %s8710, 4
          %s8769 = int_to_ptr.vmem [resolvable:$true] %s8768
          %8774 = dma.vmem_to_hbm [thread:$0]  %s8769, 256, %s8767, %s8707, 128, 128, 8
        $region92: #{encoder1_forward.1} parent=67 // pred_fallthru
          _
      $region68: #{encoder1_forward.1} parent=5 // pred_fallthru
        _
      %p8775 = scmp.le.s32.totalorder 2, %s33
      // Predicated region
      $region93: #{encoder1_forward.1} parent=5 // pred_check
        %p8776 = pneg %p8775
      $region94: #{encoder1_forward.1} parent=5 // pred_check_branch
        %8778 = sbr.rel (%p8776) target = $region96
      $region95: #{encoder1_forward.1} parent=5 // pred_region
        %s8779 = ssub.s32 %s33, 2
        // Predicated region
        $region97: #{encoder1_forward.1} parent=95 // pred_check
          %p8780 = pneg %p319
        $region98: #{encoder1_forward.1} parent=95 // pred_check_branch
          %8782 = sbr.rel (%p8780) target = $region100
        $region99: #{encoder1_forward.1} parent=95 // pred_region
          %s8783 = sand.u32 %s304, 1
          %s8784 = scalar_lea.sflag [#allocation4], %s8783
          %s8785 = sand.u32 %s304, 1
          %s8786 = smul.addr %s8785, 64
          %s8787 = scalar_lea.vmem [#allocation7], %s8786
          %8788 = dma.done %s8784, 1024
        $region100: #{encoder1_forward.1} parent=95 // pred_fallthru
          _
        // Predicated region
        $region101: #{encoder1_forward.1} parent=95 // pred_check
          %p8789 = pneg %p345
        $region102: #{encoder1_forward.1} parent=95 // pred_check_branch
          %8791 = sbr.rel (%p8789) target = $region104
        $region103: #{encoder1_forward.1} parent=95 // pred_region
          %s8792 = sand.u32 %s39, 1
          %s8793 = scalar_lea.sflag [#allocation9], %s8792
          %s8794 = sand.u32 %s330, 1
          %s8795 = smul.addr %s8794, 16
          %s8796 = scalar_lea.vmem [#allocation8], %s8795
          %8797 = dma.done %s8793, 256
        $region104: #{encoder1_forward.1} parent=95 // pred_fallthru
          _
        // Predicated region
        $region105: #{encoder1_forward.1} parent=95 // pred_check
          %p8798 = pneg %p371
        $region106: #{encoder1_forward.1} parent=95 // pred_check_branch
          %8800 = sbr.rel (%p8798) target = $region108
        $region107: #{encoder1_forward.1} parent=95 // pred_region
          %s8801 = sand.u32 %s39, 1
          %s8802 = scalar_lea.sflag [#allocation9], %s8801
          %s8803 = sand.u32 %s356, 1
          %s8804 = smul.addr %s8803, 16
          %s8805 = scalar_lea.vmem [#allocation10], %s8804
          %8806 = dma.done %s8802, 256
        $region108: #{encoder1_forward.1} parent=95 // pred_fallthru
          _
        // Predicated region
        $region109: #{encoder1_forward.1} parent=95 // pred_check
          %p8807 = pneg %p397
        $region110: #{encoder1_forward.1} parent=95 // pred_check_branch
          %8809 = sbr.rel (%p8807) target = $region112
        $region111: #{encoder1_forward.1} parent=95 // pred_region
          %s8810 = sand.u32 %s382, 1
          %s8811 = scalar_lea.sflag [#allocation12], %s8810
          %s8812 = sand.u32 %s382, 1
          %s8813 = smul.addr %s8812, 16
          %s8814 = scalar_lea.vmem [#allocation11], %s8813
          %8815 = dma.done %s8811, 256
        $region112: #{encoder1_forward.1} parent=95 // pred_fallthru
          _
      $region96: #{encoder1_forward.1} parent=5 // pred_fallthru
        _
    $region6: #{encoder1_forward.1} parent=1 // loop_footer
      %s37 = sadd.s32 1, %s33
    $region7: #{encoder1_forward.1} parent=1 // loop_footer_branch
      %32 = sbr.rel target = $region3
    $region8: #{encoder1_forward.1} parent=1 // loop_exit
      _
    %8816 = vsyncpa [#allocation3], 1
    %s8817 = scalar_lea.sflag [#allocation3], 1
    %8818 = vsyncpa %s8817, 1
    %8819 = vsyncpa [#allocation6], 1
    %8820 = vsyncpa [#allocation4], 1
    %s8821 = scalar_lea.sflag [#allocation4], 1
    %8822 = vsyncpa %s8821, 1
    %8823 = vsyncpa [#allocation9], 1
    %s8824 = scalar_lea.sflag [#allocation9], 1
    %8825 = vsyncpa %s8824, 1
    %8826 = vsyncpa [#allocation12], 1
    %s8827 = scalar_lea.sflag [#allocation12], 1
    %8828 = vsyncpa %s8827, 1

</llo_original>
